<compile_context>
chip_gen: v7x
topology: tpu7x:2x2x1
jax: 0.10.0
libtpu: 0.0.40
codegen_flags: <defaults>
</compile_context>

<pallas_src>
import numpy as np
import jax
import jax.numpy as jnp
from jax.experimental import pallas as pl
from jax.experimental.pallas import tpu as pltpu


LEAKY_SLOPE = 0.2
BN_EPS = 0.8
LANE = 128


def _round_up(n, m):
    return (n + m - 1) // m * m


def _leaky(x):
    return jnp.where(x > 0, x, LEAKY_SLOPE * x)


def _mm_q(x_bf16, wq_ref):
    # int8 weight -> bf16 on the VPU (exact), bf16 x bf16 on the MXU, f32 acc.
    # The per-column dequant scale is folded into each caller's epilogue.
    return jnp.dot(x_bf16, wq_ref[...].astype(jnp.bfloat16),
                   preferred_element_type=jnp.float32)


def generator_kernel(z_ref,
                     w1_ref, s1_ref, b1_ref,
                     w2_ref, s2_ref, g2_ref, be2_ref,
                     w3_ref, s3_ref, g3_ref, be3_ref,
                     w4_ref, s4_ref, g4_ref, be4_ref,
                     w5_ref, s5_ref, b5_ref,
                     out_ref):
    def bn_leaky(acc, s, gamma, beta):
        # Training-mode BatchNorm over the resident batch group (biased,
        # one-pass variance).  The int8 dequant scale `s` folds into the
        # per-feature affine, so each element sees a single x*scale + shift.
        mean = jnp.mean(acc, axis=0, keepdims=True)
        ex2 = jnp.mean(acc * acc, axis=0, keepdims=True)
        var = ex2 - mean * mean
        scale = gamma * s * jax.lax.rsqrt(var * (s * s) + BN_EPS)
        shift = beta - mean * scale
        y = acc * scale + shift
        return _leaky(y).astype(jnp.bfloat16)

    # Layer 1: Linear + LeakyReLU (no BN); dequant scale folded into the bias.
    h = _leaky(_mm_q(z_ref[...], w1_ref) * s1_ref[...] + b1_ref[...])
    h = h.astype(jnp.bfloat16)
    # Layers 2-4: Linear biases cancel against BN mean subtraction -> dropped.
    h = bn_leaky(_mm_q(h, w2_ref), s2_ref[...], g2_ref[...], be2_ref[...])
    h = bn_leaky(_mm_q(h, w3_ref), s3_ref[...], g3_ref[...], be3_ref[...])
    h = bn_leaky(_mm_q(h, w4_ref), s4_ref[...], g4_ref[...], be4_ref[...])
    # Output layer: Linear + Sigmoid, lane-dense bf16 store.
    out_ref[...] = jax.nn.sigmoid(
        _mm_q(h, w5_ref) * s5_ref[...] + b5_ref[...]).astype(jnp.bfloat16)


def _quantize_per_column(w):
    amax = jnp.max(jnp.abs(w), axis=0, keepdims=True)
    scale = jnp.where(amax > 0, amax / 127.0, 1.0).astype(jnp.float32)
    wq = jnp.clip(jnp.round(w / scale), -127, 127).astype(jnp.int8)
    return wq, scale


def init_params(key, latent_dim, img_shape):
    """Deterministic init.  Weights are (in, out) = W_pytorch.T, zero-padded
    so the latent / output feature dims are lane multiples, then quantized to
    int8 with a per-output-column f32 scale."""
    out_dim = int(np.prod(img_shape))
    dims = [latent_dim, 128, 256, 512, 1024, out_dim]
    pad_dims = [_round_up(d, LANE) for d in dims]
    params = {}
    keys = jax.random.split(key, len(dims) - 1)
    for i, (din, dout) in enumerate(zip(dims[:-1], dims[1:]), start=1):
        bound = 1.0 / np.sqrt(din)
        kw, kb = jax.random.split(keys[i - 1])
        w = jax.random.uniform(kw, (din, dout), jnp.float32, -bound, bound)
        b = jax.random.uniform(kb, (1, dout), jnp.float32, -bound, bound)
        # Zero-pad to lane-dense shapes; padded weight rows meet zero input
        # columns and padded output columns are sliced off, so results are
        # unchanged.
        w = jnp.pad(w, ((0, pad_dims[i - 1] - din), (0, pad_dims[i] - dout)))
        b = jnp.pad(b, ((0, 0), (0, pad_dims[i] - dout)))
        wq, s = _quantize_per_column(w)
        params[f"w{i}"] = wq           # int8 weights: half the bf16 DMA bytes
        params[f"s{i}"] = s            # per-column dequant scale, f32 (1, N)
        params[f"b{i}"] = b            # biases stay f32
    # BatchNorm affine params for layers 2, 3, 4 (gamma=1, beta=0 like PyTorch)
    for i, dout in zip((2, 3, 4), (256, 512, 1024)):
        params[f"g{i}"] = jnp.ones((1, dout), jnp.float32)
        params[f"be{i}"] = jnp.zeros((1, dout), jnp.float32)
    return params


def generator_forward(z, params, img_shape, bn_batch=256):
    """z: (B, latent) with B a whole number of BatchNorm groups of `bn_batch`
    rows.  Each grid step processes one full BN batch (training-mode stats are
    per group), so tiling never changes BatchNorm semantics."""
    B, latent = z.shape
    assert B % bn_batch == 0, "total batch must be a multiple of bn_batch"
    groups = B // bn_batch
    out_dim = int(np.prod(img_shape))
    lat_pad = params["w1"].shape[0]
    out_pad = params["w5"].shape[1]
    # Lane-dense bf16 input: pad latent up to a lane multiple, halve input DMA.
    z_p = jnp.pad(z, ((0, 0), (0, lat_pad - latent))).astype(jnp.bfloat16)

    args = (
        z_p,
        params["w1"], params["s1"], params["b1"],
        params["w2"], params["s2"], params["g2"], params["be2"],
        params["w3"], params["s3"], params["g3"], params["be3"],
        params["w4"], params["s4"], params["g4"], params["be4"],
        params["w5"], params["s5"], params["b5"],
    )

    def resident(a):
        # Whole-array block + constant index_map: DMA'd once per core, then
        # VMEM-resident across all grid steps.
        nd = a.ndim
        return pl.BlockSpec(a.shape, lambda g, _nd=nd: (0,) * _nd)

    in_specs = [pl.BlockSpec((bn_batch, lat_pad), lambda g: (g, 0))]
    in_specs += [resident(a) for a in args[1:]]
    out_specs = pl.BlockSpec((bn_batch, out_pad), lambda g: (g, 0))

    flat = pl.pallas_call(
        generator_kernel,
        out_shape=jax.ShapeDtypeStruct((B, out_pad), jnp.bfloat16),
        grid_spec=pltpu.PrefetchScalarGridSpec(
            num_scalar_prefetch=0,
            grid=(groups,),
            in_specs=in_specs,
            out_specs=out_specs,
        ),
        compiler_params=pltpu.CompilerParams(
            # Groups are independent BN batches -> safe to shard across both
            # v7x TensorCores; per-step working set ~4 MiB << 32 MiB scoped
            # (valid headroom on v5e/v6e/v7x alike).
            dimension_semantics=("parallel",),
            vmem_limit_bytes=32 * 1024 * 1024,
        ),
    )(*args)
    # Slice off lane padding, restore f32, reshape like img.view(B, *shape).
    return flat[:, :out_dim].astype(jnp.float32).reshape(B, *img_shape)


def generator_reference(z, params, img_shape, bn_batch=256):
    """Pure-JAX reference: PyTorch-faithful structure (pre-BN biases kept,
    two-pass variance, un-fused BN affine), using the same int8 weights /
    bf16 matmul operands as the kernel.  BN stats are per bn_batch group."""
    B, latent = z.shape
    out_dim = int(np.prod(img_shape))
    lat_pad = params["w1"].shape[0]
    zp = jnp.pad(z, ((0, 0), (0, lat_pad - latent))).astype(jnp.bfloat16)

    def mmq(x, wq, s):
        return jnp.dot(x.astype(jnp.bfloat16), wq.astype(jnp.bfloat16),
                       preferred_element_type=jnp.float32) * s

    def bn(x, g, b):
        mean = jnp.mean(x, axis=0, keepdims=True)
        var = jnp.mean((x - mean) ** 2, axis=0, keepdims=True)
        return (x - mean) * jax.lax.rsqrt(var + BN_EPS) * g + b

    outs = []
    for g0 in range(0, B, bn_batch):
        zg = zp[g0:g0 + bn_batch]
        h = _leaky(mmq(zg, params["w1"], params["s1"]) + params["b1"])
        h = h.astype(jnp.bfloat16)
        h = _leaky(bn(mmq(h, params["w2"], params["s2"]) + params["b2"],
                      params["g2"], params["be2"])).astype(jnp.bfloat16)
        h = _leaky(bn(mmq(h, params["w3"], params["s3"]) + params["b3"],
                      params["g3"], params["be3"])).astype(jnp.bfloat16)
        h = _leaky(bn(mmq(h, params["w4"], params["s4"]) + params["b4"],
                      params["g4"], params["be4"])).astype(jnp.bfloat16)
        y = jax.nn.sigmoid(mmq(h, params["w5"], params["s5"]) + params["b5"])
        outs.append(y.astype(jnp.bfloat16))
    y = jnp.concatenate(outs, axis=0)
    return y[:, :out_dim].astype(jnp.float32).reshape(B, *img_shape)


if __name__ == "__main__":
    latent_dim = 100        # module's latent_dim (padded to 128 in the kernel)
    img_shape = (1, 8, 8)   # small synthetic image; prod = 64 (padded to 128)
    bn_batch = 256          # rows per BatchNorm batch (one grid step)
    groups = 2              # independent BN batches -> grid=(2,), 'parallel'

    key = jax.random.PRNGKey(0)
    kz, kp = jax.random.split(key)
    z = jax.random.normal(kz, (groups * bn_batch, latent_dim), jnp.float32)
    params = init_params(kp, latent_dim, img_shape)

    img = jax.block_until_ready(
        generator_forward(z, params, img_shape, bn_batch=bn_batch))
    ref = jax.block_until_ready(
        generator_reference(z, params, img_shape, bn_batch=bn_batch))

    assert img.shape == (groups * bn_batch, *img_shape)
    np.testing.assert_allclose(np.asarray(img), np.asarray(ref),
                               rtol=5e-3, atol=5e-3)
    print("KERNEL_OK")
</pallas_src>

<mosaic_0001>
module attributes {stable_mosaic.version = 11 : i64} {
  func.func @generator_kernel(%arg0: i32, %arg1: memref<256x128xbf16, #tpu.memory_space<vmem>>, %arg2: memref<128x128xi8, #tpu.memory_space<vmem>>, %arg3: memref<1x128xf32, #tpu.memory_space<vmem>>, %arg4: memref<1x128xf32, #tpu.memory_space<vmem>>, %arg5: memref<128x256xi8, #tpu.memory_space<vmem>>, %arg6: memref<1x256xf32, #tpu.memory_space<vmem>>, %arg7: memref<1x256xf32, #tpu.memory_space<vmem>>, %arg8: memref<1x256xf32, #tpu.memory_space<vmem>>, %arg9: memref<256x512xi8, #tpu.memory_space<vmem>>, %arg10: memref<1x512xf32, #tpu.memory_space<vmem>>, %arg11: memref<1x512xf32, #tpu.memory_space<vmem>>, %arg12: memref<1x512xf32, #tpu.memory_space<vmem>>, %arg13: memref<512x1024xi8, #tpu.memory_space<vmem>>, %arg14: memref<1x1024xf32, #tpu.memory_space<vmem>>, %arg15: memref<1x1024xf32, #tpu.memory_space<vmem>>, %arg16: memref<1x1024xf32, #tpu.memory_space<vmem>>, %arg17: memref<1024x128xi8, #tpu.memory_space<vmem>>, %arg18: memref<1x128xf32, #tpu.memory_space<vmem>>, %arg19: memref<1x128xf32, #tpu.memory_space<vmem>>, %arg20: memref<256x128xbf16, #tpu.memory_space<vmem>>) attributes {dimension_semantics = [#tpu.dimension_semantics<parallel>], iteration_bounds = array<i64: 2>, scalar_prefetch = 0 : i64, scratch_operands = 0 : i64, tpu.core_type = #tpu.core_type<tc>, window_params = [{transform_indices = @transform_0, window_bounds = array<i64: 256, 128>}, {pipeline_mode = #tpu.pipeline_mode<synchronous>, transform_indices = @transform_1, window_bounds = array<i64: 128, 128>}, {pipeline_mode = #tpu.pipeline_mode<synchronous>, transform_indices = @transform_2, window_bounds = array<i64: 1, 128>}, {pipeline_mode = #tpu.pipeline_mode<synchronous>, transform_indices = @transform_3, window_bounds = array<i64: 1, 128>}, {pipeline_mode = #tpu.pipeline_mode<synchronous>, transform_indices = @transform_4, window_bounds = array<i64: 128, 256>}, {pipeline_mode = #tpu.pipeline_mode<synchronous>, transform_indices = @transform_5, window_bounds = array<i64: 1, 256>}, {pipeline_mode = #tpu.pipeline_mode<synchronous>, transform_indices = @transform_6, window_bounds = array<i64: 1, 256>}, {pipeline_mode = #tpu.pipeline_mode<synchronous>, transform_indices = @transform_7, window_bounds = array<i64: 1, 256>}, {pipeline_mode = #tpu.pipeline_mode<synchronous>, transform_indices = @transform_8, window_bounds = array<i64: 256, 512>}, {pipeline_mode = #tpu.pipeline_mode<synchronous>, transform_indices = @transform_9, window_bounds = array<i64: 1, 512>}, {pipeline_mode = #tpu.pipeline_mode<synchronous>, transform_indices = @transform_10, window_bounds = array<i64: 1, 512>}, {pipeline_mode = #tpu.pipeline_mode<synchronous>, transform_indices = @transform_11, window_bounds = array<i64: 1, 512>}, {pipeline_mode = #tpu.pipeline_mode<synchronous>, transform_indices = @transform_12, window_bounds = array<i64: 512, 1024>}, {pipeline_mode = #tpu.pipeline_mode<synchronous>, transform_indices = @transform_13, window_bounds = array<i64: 1, 1024>}, {pipeline_mode = #tpu.pipeline_mode<synchronous>, transform_indices = @transform_14, window_bounds = array<i64: 1, 1024>}, {pipeline_mode = #tpu.pipeline_mode<synchronous>, transform_indices = @transform_15, window_bounds = array<i64: 1, 1024>}, {pipeline_mode = #tpu.pipeline_mode<synchronous>, transform_indices = @transform_16, window_bounds = array<i64: 1024, 128>}, {pipeline_mode = #tpu.pipeline_mode<synchronous>, transform_indices = @transform_17, window_bounds = array<i64: 1, 128>}, {pipeline_mode = #tpu.pipeline_mode<synchronous>, transform_indices = @transform_18, window_bounds = array<i64: 1, 128>}, {transform_indices = @transform_19, window_bounds = array<i64: 256, 128>}]} {
    %c0 = arith.constant 0 : index
    %c0_0 = arith.constant 0 : index
    %0 = vector.load %arg1[%c0, %c0_0] : memref<256x128xbf16, #tpu.memory_space<vmem>>, vector<256x128xbf16>
    %c0_1 = arith.constant 0 : index
    %c0_2 = arith.constant 0 : index
    %1 = vector.load %arg2[%c0_1, %c0_2] : memref<128x128xi8, #tpu.memory_space<vmem>>, vector<128x128xi8>
    %2 = arith.sitofp %1 : vector<128x128xi8> to vector<128x128xbf16>
    %cst = arith.constant dense<0.000000e+00> : vector<256x128xf32>
    %3 = tpu.matmul %0, %2, %cst {dimension_numbers = #tpu.dot_dimension_numbers<[1], [0], [0], [1], [0, 0, 1, 1], [], []>} : vector<256x128xbf16>, vector<128x128xbf16>, vector<256x128xf32> -> vector<256x128xf32>
    %c0_3 = arith.constant 0 : index
    %c0_4 = arith.constant 0 : index
    %4 = vector.load %arg3[%c0_3, %c0_4] : memref<1x128xf32, #tpu.memory_space<vmem>>, vector<1x128xf32>
    %5 = vector.broadcast %4 : vector<1x128xf32> to vector<256x128xf32>
    %6 = arith.mulf %3, %5 : vector<256x128xf32>
    %c0_5 = arith.constant 0 : index
    %c0_6 = arith.constant 0 : index
    %7 = vector.load %arg4[%c0_5, %c0_6] : memref<1x128xf32, #tpu.memory_space<vmem>>, vector<1x128xf32>
    %8 = vector.broadcast %7 : vector<1x128xf32> to vector<256x128xf32>
    %9 = arith.addf %6, %8 : vector<256x128xf32>
    %cst_7 = arith.constant 0.000000e+00 : f32
    %10 = vector.broadcast %cst_7 : f32 to vector<256x128xf32>
    %11 = arith.cmpf ogt, %9, %10 : vector<256x128xf32>
    %cst_8 = arith.constant 2.000000e-01 : f32
    %12 = vector.broadcast %cst_8 : f32 to vector<256x128xf32>
    %13 = arith.mulf %12, %9 : vector<256x128xf32>
    %14 = arith.select %11, %9, %13 : vector<256x128xi1>, vector<256x128xf32>
    %15 = arith.truncf %14 : vector<256x128xf32> to vector<256x128xbf16>
    %c0_9 = arith.constant 0 : index
    %c0_10 = arith.constant 0 : index
    %16 = vector.load %arg5[%c0_9, %c0_10] : memref<128x256xi8, #tpu.memory_space<vmem>>, vector<128x256xi8>
    %17 = arith.sitofp %16 : vector<128x256xi8> to vector<128x256xbf16>
    %cst_11 = arith.constant dense<0.000000e+00> : vector<256x256xf32>
    %18 = tpu.matmul %15, %17, %cst_11 {dimension_numbers = #tpu.dot_dimension_numbers<[1], [0], [0], [1], [0, 0, 1, 1], [], []>} : vector<256x128xbf16>, vector<128x256xbf16>, vector<256x256xf32> -> vector<256x256xf32>
    %c0_12 = arith.constant 0 : index
    %c0_13 = arith.constant 0 : index
    %19 = vector.load %arg6[%c0_12, %c0_13] : memref<1x256xf32, #tpu.memory_space<vmem>>, vector<1x256xf32>
    %c0_14 = arith.constant 0 : index
    %c0_15 = arith.constant 0 : index
    %20 = vector.load %arg7[%c0_14, %c0_15] : memref<1x256xf32, #tpu.memory_space<vmem>>, vector<1x256xf32>
    %c0_16 = arith.constant 0 : index
    %c0_17 = arith.constant 0 : index
    %21 = vector.load %arg8[%c0_16, %c0_17] : memref<1x256xf32, #tpu.memory_space<vmem>>, vector<1x256xf32>
    %cst_18 = arith.constant dense<0.000000e+00> : vector<256xf32>
    %22 = vector.multi_reduction <add>, %18, %cst_18 [0] : vector<256x256xf32> to vector<256xf32>
    %23 = vector.shape_cast %22 : vector<256xf32> to vector<1x256xf32>
    %cst_19 = arith.constant 2.560000e+02 : f32
    %24 = vector.broadcast %cst_19 : f32 to vector<1x256xf32>
    %25 = arith.divf %23, %24 : vector<1x256xf32>
    %26 = arith.mulf %18, %18 : vector<256x256xf32>
    %cst_20 = arith.constant dense<0.000000e+00> : vector<256xf32>
    %27 = vector.multi_reduction <add>, %26, %cst_20 [0] : vector<256x256xf32> to vector<256xf32>
    %28 = vector.shape_cast %27 : vector<256xf32> to vector<1x256xf32>
    %cst_21 = arith.constant 2.560000e+02 : f32
    %29 = vector.broadcast %cst_21 : f32 to vector<1x256xf32>
    %30 = arith.divf %28, %29 : vector<1x256xf32>
    %31 = arith.mulf %25, %25 : vector<1x256xf32>
    %32 = arith.subf %30, %31 : vector<1x256xf32>
    %33 = arith.mulf %20, %19 : vector<1x256xf32>
    %34 = arith.mulf %19, %19 : vector<1x256xf32>
    %35 = arith.mulf %32, %34 : vector<1x256xf32>
    %cst_22 = arith.constant 8.000000e-01 : f32
    %36 = vector.broadcast %cst_22 : f32 to vector<1x256xf32>
    %37 = arith.addf %35, %36 : vector<1x256xf32>
    %38 = math.rsqrt %37 : vector<1x256xf32>
    %39 = arith.mulf %33, %38 : vector<1x256xf32>
    %40 = arith.mulf %25, %39 : vector<1x256xf32>
    %41 = arith.subf %21, %40 : vector<1x256xf32>
    %42 = vector.broadcast %39 : vector<1x256xf32> to vector<256x256xf32>
    %43 = arith.mulf %18, %42 : vector<256x256xf32>
    %44 = vector.broadcast %41 : vector<1x256xf32> to vector<256x256xf32>
    %45 = arith.addf %43, %44 : vector<256x256xf32>
    %cst_23 = arith.constant 0.000000e+00 : f32
    %46 = vector.broadcast %cst_23 : f32 to vector<256x256xf32>
    %47 = arith.cmpf ogt, %45, %46 : vector<256x256xf32>
    %cst_24 = arith.constant 2.000000e-01 : f32
    %48 = vector.broadcast %cst_24 : f32 to vector<256x256xf32>
    %49 = arith.mulf %48, %45 : vector<256x256xf32>
    %50 = arith.select %47, %45, %49 : vector<256x256xi1>, vector<256x256xf32>
    %51 = arith.truncf %50 : vector<256x256xf32> to vector<256x256xbf16>
    %c0_25 = arith.constant 0 : index
    %c0_26 = arith.constant 0 : index
    %52 = vector.load %arg9[%c0_25, %c0_26] : memref<256x512xi8, #tpu.memory_space<vmem>>, vector<256x512xi8>
    %53 = arith.sitofp %52 : vector<256x512xi8> to vector<256x512xbf16>
    %cst_27 = arith.constant dense<0.000000e+00> : vector<256x512xf32>
    %54 = tpu.matmul %51, %53, %cst_27 {dimension_numbers = #tpu.dot_dimension_numbers<[1], [0], [0], [1], [0, 0, 1, 1], [], []>} : vector<256x256xbf16>, vector<256x512xbf16>, vector<256x512xf32> -> vector<256x512xf32>
    %c0_28 = arith.constant 0 : index
    %c0_29 = arith.constant 0 : index
    %55 = vector.load %arg10[%c0_28, %c0_29] : memref<1x512xf32, #tpu.memory_space<vmem>>, vector<1x512xf32>
    %c0_30 = arith.constant 0 : index
    %c0_31 = arith.constant 0 : index
    %56 = vector.load %arg11[%c0_30, %c0_31] : memref<1x512xf32, #tpu.memory_space<vmem>>, vector<1x512xf32>
    %c0_32 = arith.constant 0 : index
    %c0_33 = arith.constant 0 : index
    %57 = vector.load %arg12[%c0_32, %c0_33] : memref<1x512xf32, #tpu.memory_space<vmem>>, vector<1x512xf32>
    %cst_34 = arith.constant dense<0.000000e+00> : vector<512xf32>
    %58 = vector.multi_reduction <add>, %54, %cst_34 [0] : vector<256x512xf32> to vector<512xf32>
    %59 = vector.shape_cast %58 : vector<512xf32> to vector<1x512xf32>
    %cst_35 = arith.constant 2.560000e+02 : f32
    %60 = vector.broadcast %cst_35 : f32 to vector<1x512xf32>
    %61 = arith.divf %59, %60 : vector<1x512xf32>
    %62 = arith.mulf %54, %54 : vector<256x512xf32>
    %cst_36 = arith.constant dense<0.000000e+00> : vector<512xf32>
    %63 = vector.multi_reduction <add>, %62, %cst_36 [0] : vector<256x512xf32> to vector<512xf32>
    %64 = vector.shape_cast %63 : vector<512xf32> to vector<1x512xf32>
    %cst_37 = arith.constant 2.560000e+02 : f32
    %65 = vector.broadcast %cst_37 : f32 to vector<1x512xf32>
    %66 = arith.divf %64, %65 : vector<1x512xf32>
    %67 = arith.mulf %61, %61 : vector<1x512xf32>
    %68 = arith.subf %66, %67 : vector<1x512xf32>
    %69 = arith.mulf %56, %55 : vector<1x512xf32>
    %70 = arith.mulf %55, %55 : vector<1x512xf32>
    %71 = arith.mulf %68, %70 : vector<1x512xf32>
    %cst_38 = arith.constant 8.000000e-01 : f32
    %72 = vector.broadcast %cst_38 : f32 to vector<1x512xf32>
    %73 = arith.addf %71, %72 : vector<1x512xf32>
    %74 = math.rsqrt %73 : vector<1x512xf32>
    %75 = arith.mulf %69, %74 : vector<1x512xf32>
    %76 = arith.mulf %61, %75 : vector<1x512xf32>
    %77 = arith.subf %57, %76 : vector<1x512xf32>
    %78 = vector.broadcast %75 : vector<1x512xf32> to vector<256x512xf32>
    %79 = arith.mulf %54, %78 : vector<256x512xf32>
    %80 = vector.broadcast %77 : vector<1x512xf32> to vector<256x512xf32>
    %81 = arith.addf %79, %80 : vector<256x512xf32>
    %cst_39 = arith.constant 0.000000e+00 : f32
    %82 = vector.broadcast %cst_39 : f32 to vector<256x512xf32>
    %83 = arith.cmpf ogt, %81, %82 : vector<256x512xf32>
    %cst_40 = arith.constant 2.000000e-01 : f32
    %84 = vector.broadcast %cst_40 : f32 to vector<256x512xf32>
    %85 = arith.mulf %84, %81 : vector<256x512xf32>
    %86 = arith.select %83, %81, %85 : vector<256x512xi1>, vector<256x512xf32>
    %87 = arith.truncf %86 : vector<256x512xf32> to vector<256x512xbf16>
    %c0_41 = arith.constant 0 : index
    %c0_42 = arith.constant 0 : index
    %88 = vector.load %arg13[%c0_41, %c0_42] : memref<512x1024xi8, #tpu.memory_space<vmem>>, vector<512x1024xi8>
    %89 = arith.sitofp %88 : vector<512x1024xi8> to vector<512x1024xbf16>
    %cst_43 = arith.constant dense<0.000000e+00> : vector<256x1024xf32>
    %90 = tpu.matmul %87, %89, %cst_43 {dimension_numbers = #tpu.dot_dimension_numbers<[1], [0], [0], [1], [0, 0, 1, 1], [], []>} : vector<256x512xbf16>, vector<512x1024xbf16>, vector<256x1024xf32> -> vector<256x1024xf32>
    %c0_44 = arith.constant 0 : index
    %c0_45 = arith.constant 0 : index
    %91 = vector.load %arg14[%c0_44, %c0_45] : memref<1x1024xf32, #tpu.memory_space<vmem>>, vector<1x1024xf32>
    %c0_46 = arith.constant 0 : index
    %c0_47 = arith.constant 0 : index
    %92 = vector.load %arg15[%c0_46, %c0_47] : memref<1x1024xf32, #tpu.memory_space<vmem>>, vector<1x1024xf32>
    %c0_48 = arith.constant 0 : index
    %c0_49 = arith.constant 0 : index
    %93 = vector.load %arg16[%c0_48, %c0_49] : memref<1x1024xf32, #tpu.memory_space<vmem>>, vector<1x1024xf32>
    %cst_50 = arith.constant dense<0.000000e+00> : vector<1024xf32>
    %94 = vector.multi_reduction <add>, %90, %cst_50 [0] : vector<256x1024xf32> to vector<1024xf32>
    %95 = vector.shape_cast %94 : vector<1024xf32> to vector<1x1024xf32>
    %cst_51 = arith.constant 2.560000e+02 : f32
    %96 = vector.broadcast %cst_51 : f32 to vector<1x1024xf32>
    %97 = arith.divf %95, %96 : vector<1x1024xf32>
    %98 = arith.mulf %90, %90 : vector<256x1024xf32>
    %cst_52 = arith.constant dense<0.000000e+00> : vector<1024xf32>
    %99 = vector.multi_reduction <add>, %98, %cst_52 [0] : vector<256x1024xf32> to vector<1024xf32>
    %100 = vector.shape_cast %99 : vector<1024xf32> to vector<1x1024xf32>
    %cst_53 = arith.constant 2.560000e+02 : f32
    %101 = vector.broadcast %cst_53 : f32 to vector<1x1024xf32>
    %102 = arith.divf %100, %101 : vector<1x1024xf32>
    %103 = arith.mulf %97, %97 : vector<1x1024xf32>
    %104 = arith.subf %102, %103 : vector<1x1024xf32>
    %105 = arith.mulf %92, %91 : vector<1x1024xf32>
    %106 = arith.mulf %91, %91 : vector<1x1024xf32>
    %107 = arith.mulf %104, %106 : vector<1x1024xf32>
    %cst_54 = arith.constant 8.000000e-01 : f32
    %108 = vector.broadcast %cst_54 : f32 to vector<1x1024xf32>
    %109 = arith.addf %107, %108 : vector<1x1024xf32>
    %110 = math.rsqrt %109 : vector<1x1024xf32>
    %111 = arith.mulf %105, %110 : vector<1x1024xf32>
    %112 = arith.mulf %97, %111 : vector<1x1024xf32>
    %113 = arith.subf %93, %112 : vector<1x1024xf32>
    %114 = vector.broadcast %111 : vector<1x1024xf32> to vector<256x1024xf32>
    %115 = arith.mulf %90, %114 : vector<256x1024xf32>
    %116 = vector.broadcast %113 : vector<1x1024xf32> to vector<256x1024xf32>
    %117 = arith.addf %115, %116 : vector<256x1024xf32>
    %cst_55 = arith.constant 0.000000e+00 : f32
    %118 = vector.broadcast %cst_55 : f32 to vector<256x1024xf32>
    %119 = arith.cmpf ogt, %117, %118 : vector<256x1024xf32>
    %cst_56 = arith.constant 2.000000e-01 : f32
    %120 = vector.broadcast %cst_56 : f32 to vector<256x1024xf32>
    %121 = arith.mulf %120, %117 : vector<256x1024xf32>
    %122 = arith.select %119, %117, %121 : vector<256x1024xi1>, vector<256x1024xf32>
    %123 = arith.truncf %122 : vector<256x1024xf32> to vector<256x1024xbf16>
    %c0_57 = arith.constant 0 : index
    %c0_58 = arith.constant 0 : index
    %124 = vector.load %arg17[%c0_57, %c0_58] : memref<1024x128xi8, #tpu.memory_space<vmem>>, vector<1024x128xi8>
    %125 = arith.sitofp %124 : vector<1024x128xi8> to vector<1024x128xbf16>
    %cst_59 = arith.constant dense<0.000000e+00> : vector<256x128xf32>
    %126 = tpu.matmul %123, %125, %cst_59 {dimension_numbers = #tpu.dot_dimension_numbers<[1], [0], [0], [1], [0, 0, 1, 1], [], []>} : vector<256x1024xbf16>, vector<1024x128xbf16>, vector<256x128xf32> -> vector<256x128xf32>
    %c0_60 = arith.constant 0 : index
    %c0_61 = arith.constant 0 : index
    %127 = vector.load %arg18[%c0_60, %c0_61] : memref<1x128xf32, #tpu.memory_space<vmem>>, vector<1x128xf32>
    %128 = vector.broadcast %127 : vector<1x128xf32> to vector<256x128xf32>
    %129 = arith.mulf %126, %128 : vector<256x128xf32>
    %c0_62 = arith.constant 0 : index
    %c0_63 = arith.constant 0 : index
    %130 = vector.load %arg19[%c0_62, %c0_63] : memref<1x128xf32, #tpu.memory_space<vmem>>, vector<1x128xf32>
    %131 = vector.broadcast %130 : vector<1x128xf32> to vector<256x128xf32>
    %132 = arith.addf %129, %131 : vector<256x128xf32>
    %133 = arith.negf %132 : vector<256x128xf32>
    %134 = math.exp %133 : vector<256x128xf32>
    %cst_64 = arith.constant 1.000000e+00 : f32
    %135 = vector.broadcast %cst_64 : f32 to vector<256x128xf32>
    %136 = arith.addf %135, %134 : vector<256x128xf32>
    %137 = arith.divf %135, %136 : vector<256x128xf32>
    %138 = arith.truncf %137 : vector<256x128xf32> to vector<256x128xbf16>
    %c0_65 = arith.constant 0 : index
    %c0_66 = arith.constant 0 : index
    %139 = vector.load %arg20[%c0_65, %c0_66] : memref<256x128xbf16, #tpu.memory_space<vmem>>, vector<256x128xbf16>
    tpu.vector_store %arg20[%c0_65, %c0_66], %138 {strides = array<i32>} : memref<256x128xbf16, #tpu.memory_space<vmem>>, vector<256x128xbf16>,
    return
  }
  func.func @transform_0(%arg0: i32) -> (i32, i32) {
    %c0_i32 = arith.constant 0 : i32
    %c0_i32_0 = arith.constant 0 : i32
    return %arg0, %c0_i32 : i32, i32
  }
  func.func @transform_1(%arg0: i32) -> (i32, i32) {
    %c0_i32 = arith.constant 0 : i32
    %c0_i32_0 = arith.constant 0 : i32
    %c0_i32_1 = arith.constant 0 : i32
    return %c0_i32, %c0_i32_0 : i32, i32
  }
  func.func @transform_2(%arg0: i32) -> (i32, i32) {
    %c0_i32 = arith.constant 0 : i32
    %c0_i32_0 = arith.constant 0 : i32
    %c0_i32_1 = arith.constant 0 : i32
    return %c0_i32, %c0_i32_0 : i32, i32
  }
  func.func @transform_3(%arg0: i32) -> (i32, i32) {
    %c0_i32 = arith.constant 0 : i32
    %c0_i32_0 = arith.constant 0 : i32
    %c0_i32_1 = arith.constant 0 : i32
    return %c0_i32, %c0_i32_0 : i32, i32
  }
  func.func @transform_4(%arg0: i32) -> (i32, i32) {
    %c0_i32 = arith.constant 0 : i32
    %c0_i32_0 = arith.constant 0 : i32
    %c0_i32_1 = arith.constant 0 : i32
    return %c0_i32, %c0_i32_0 : i32, i32
  }
  func.func @transform_5(%arg0: i32) -> (i32, i32) {
    %c0_i32 = arith.constant 0 : i32
    %c0_i32_0 = arith.constant 0 : i32
    %c0_i32_1 = arith.constant 0 : i32
    return %c0_i32, %c0_i32_0 : i32, i32
  }
  func.func @transform_6(%arg0: i32) -> (i32, i32) {
    %c0_i32 = arith.constant 0 : i32
    %c0_i32_0 = arith.constant 0 : i32
    %c0_i32_1 = arith.constant 0 : i32
    return %c0_i32, %c0_i32_0 : i32, i32
  }
  func.func @transform_7(%arg0: i32) -> (i32, i32) {
    %c0_i32 = arith.constant 0 : i32
    %c0_i32_0 = arith.constant 0 : i32
    %c0_i32_1 = arith.constant 0 : i32
    return %c0_i32, %c0_i32_0 : i32, i32
  }
  func.func @transform_8(%arg0: i32) -> (i32, i32) {
    %c0_i32 = arith.constant 0 : i32
    %c0_i32_0 = arith.constant 0 : i32
    %c0_i32_1 = arith.constant 0 : i32
    return %c0_i32, %c0_i32_0 : i32, i32
  }
  func.func @transform_9(%arg0: i32) -> (i32, i32) {
    %c0_i32 = arith.constant 0 : i32
    %c0_i32_0 = arith.constant 0 : i32
    %c0_i32_1 = arith.constant 0 : i32
    return %c0_i32, %c0_i32_0 : i32, i32
  }
  func.func @transform_10(%arg0: i32) -> (i32, i32) {
    %c0_i32 = arith.constant 0 : i32
    %c0_i32_0 = arith.constant 0 : i32
    %c0_i32_1 = arith.constant 0 : i32
    return %c0_i32, %c0_i32_0 : i32, i32
  }
  func.func @transform_11(%arg0: i32) -> (i32, i32) {
    %c0_i32 = arith.constant 0 : i32
    %c0_i32_0 = arith.constant 0 : i32
    %c0_i32_1 = arith.constant 0 : i32
    return %c0_i32, %c0_i32_0 : i32, i32
  }
  func.func @transform_12(%arg0: i32) -> (i32, i32) {
    %c0_i32 = arith.constant 0 : i32
    %c0_i32_0 = arith.constant 0 : i32
    %c0_i32_1 = arith.constant 0 : i32
    return %c0_i32, %c0_i32_0 : i32, i32
  }
  func.func @transform_13(%arg0: i32) -> (i32, i32) {
    %c0_i32 = arith.constant 0 : i32
    %c0_i32_0 = arith.constant 0 : i32
    %c0_i32_1 = arith.constant 0 : i32
    return %c0_i32, %c0_i32_0 : i32, i32
  }
  func.func @transform_14(%arg0: i32) -> (i32, i32) {
    %c0_i32 = arith.constant 0 : i32
    %c0_i32_0 = arith.constant 0 : i32
    %c0_i32_1 = arith.constant 0 : i32
    return %c0_i32, %c0_i32_0 : i32, i32
  }
  func.func @transform_15(%arg0: i32) -> (i32, i32) {
    %c0_i32 = arith.constant 0 : i32
    %c0_i32_0 = arith.constant 0 : i32
    %c0_i32_1 = arith.constant 0 : i32
    return %c0_i32, %c0_i32_0 : i32, i32
  }
  func.func @transform_16(%arg0: i32) -> (i32, i32) {
    %c0_i32 = arith.constant 0 : i32
    %c0_i32_0 = arith.constant 0 : i32
    %c0_i32_1 = arith.constant 0 : i32
    return %c0_i32, %c0_i32_0 : i32, i32
  }
  func.func @transform_17(%arg0: i32) -> (i32, i32) {
    %c0_i32 = arith.constant 0 : i32
    %c0_i32_0 = arith.constant 0 : i32
    %c0_i32_1 = arith.constant 0 : i32
    return %c0_i32, %c0_i32_0 : i32, i32
  }
  func.func @transform_18(%arg0: i32) -> (i32, i32) {
    %c0_i32 = arith.constant 0 : i32
    %c0_i32_0 = arith.constant 0 : i32
    %c0_i32_1 = arith.constant 0 : i32
    return %c0_i32, %c0_i32_0 : i32, i32
  }
  func.func @transform_19(%arg0: i32) -> (i32, i32) {
    %c0_i32 = arith.constant 0 : i32
    %c0_i32_0 = arith.constant 0 : i32
    return %arg0, %c0_i32 : i32, i32
  }
}

</mosaic_0001>

<llo_original>
// kernel: tpu_custom_call.1
$region0: #{tpu_custom_call.1}
  #allocation0 [shape = 'u32[]', space=smem, size = 0x4, offset = 0x4, fixed_abs, tag = 'smem constant byte address 0x4 - core index']
  #allocation1 [shape = 'u32[144,128]{1,0:T(1,128)}', space=vmem, size = 0x12000, scoped, tag = 'internal scratch']
  %s0 = inlined_call_operand.hbm [shape: bf16[512,128], index: 0, kind: input, shape index: {}]
  %s1 = inlined_call_operand.hbm [shape: s8[128,128], index: 1, kind: input, shape index: {}]
  %s2 = inlined_call_operand.vmem [shape: f32[1,128], index: 2, kind: input, shape index: {}]
  %s3 = inlined_call_operand.hbm [shape: f32[1,128], index: 3, kind: input, shape index: {}]
  %s4 = inlined_call_operand.hbm [shape: s8[128,256], index: 4, kind: input, shape index: {}]
  %s5 = inlined_call_operand.hbm [shape: f32[1,256], index: 5, kind: input, shape index: {}]
  %s6 = inlined_call_operand.hbm [shape: f32[1,256], index: 6, kind: input, shape index: {}]
  %s7 = inlined_call_operand.hbm [shape: f32[1,256], index: 7, kind: input, shape index: {}]
  %s8 = inlined_call_operand.hbm [shape: s8[256,512], index: 8, kind: input, shape index: {}]
  %s9 = inlined_call_operand.vmem [shape: f32[1,512], index: 9, kind: input, shape index: {}]
  %s10 = inlined_call_operand.vmem [shape: f32[1,512], index: 10, kind: input, shape index: {}]
  %s11 = inlined_call_operand.vmem [shape: f32[1,512], index: 11, kind: input, shape index: {}]
  %s12 = inlined_call_operand.hbm [shape: s8[512,1024], index: 12, kind: input, shape index: {}]
  %s13 = inlined_call_operand.vmem [shape: f32[1,1024], index: 13, kind: input, shape index: {}]
  %s14 = inlined_call_operand.vmem [shape: f32[1,1024], index: 14, kind: input, shape index: {}]
  %s15 = inlined_call_operand.vmem [shape: f32[1,1024], index: 15, kind: input, shape index: {}]
  %s16 = inlined_call_operand.hbm [shape: s8[1024,128], index: 16, kind: input, shape index: {}]
  %s17 = inlined_call_operand.vmem [shape: f32[1,128], index: 17, kind: input, shape index: {}]
  %s18 = inlined_call_operand.vmem [shape: f32[1,128], index: 18, kind: input, shape index: {}]
  %s19 = inlined_call_operand.hbm [shape: bf16[512,128], index: 19, kind: output, shape index: {}]
  %s20 = sld [smem:[#allocation0]]
  $region149: #{tpu_custom_call.1} parent=0
    _
  %s22 = ssub.s32 1, %s20
  %s23 = scalar_select 0, %s22, %s20
  $region1: #{tpu_custom_call.1} parent=0
    #allocation2 [shape = 'u8[131072]{0}', space=vmem, size = 0x20000, scoped, tag = 'input window, operand 0']
    #allocation3 [shape = 's32[2]{0}', space=sflag, size = 0x8, scoped, tag = 'scoped memory for tpu_custom_call.1']
    #allocation4 [shape = 's32[2]{0}', space=sflag, size = 0x8, scoped, tag = 'scoped memory for tpu_custom_call.1']
    #allocation5 [shape = 'u8[16384]{0}', space=vmem, size = 0x4000, scoped, tag = 'input window, operand 1, single buffered']
    #allocation6 [shape = 's32[1]{0}', space=sflag, size = 0x4, scoped, tag = 'scoped memory for tpu_custom_call.1']
    #allocation7 [shape = 'u8[512]{0}', space=vmem, size = 0x400, scoped, tag = 'input window, operand 3, single buffered']
    #allocation8 [shape = 'u8[32768]{0}', space=vmem, size = 0x8000, scoped, tag = 'input window, operand 4, single buffered']
    #allocation9 [shape = 's32[1]{0}', space=sflag, size = 0x4, scoped, tag = 'scoped memory for tpu_custom_call.1']
    #allocation10 [shape = 'u8[1024]{0}', space=vmem, size = 0x400, scoped, tag = 'input window, operand 5, single buffered']
    #allocation11 [shape = 'u8[1024]{0}', space=vmem, size = 0x400, scoped, tag = 'input window, operand 6, single buffered']
    #allocation12 [shape = 's32[1]{0}', space=sflag, size = 0x4, scoped, tag = 'scoped memory for tpu_custom_call.1']
    #allocation13 [shape = 'u8[1024]{0}', space=vmem, size = 0x400, scoped, tag = 'input window, operand 7, single buffered']
    #allocation14 [shape = 'u8[131072]{0}', space=vmem, size = 0x20000, scoped, tag = 'input window, operand 8, single buffered']
    #allocation15 [shape = 's32[1]{0}', space=sflag, size = 0x4, scoped, tag = 'scoped memory for tpu_custom_call.1']
    #allocation16 [shape = 'u8[524288]{0}', space=vmem, size = 0x80000, scoped, tag = 'input window, operand 12, single buffered']
    #allocation17 [shape = 'u8[131072]{0}', space=vmem, size = 0x20000, scoped, tag = 'input window, operand 16, single buffered']
    #allocation18 [shape = 's32[1]{0}', space=sflag, size = 0x4, scoped, tag = 'scoped memory for tpu_custom_call.1']
    #allocation19 [shape = 'u8[131072]{0}', space=vmem, size = 0x20000, scoped, tag = 'output window, operand 0']
    %24 = vsyncpa [#allocation3], 0
    %s25 = scalar_lea.sflag [#allocation3], 1
    %26 = vsyncpa %s25, 0
    %27 = vsyncpa [#allocation6], 0
    %28 = vsyncpa [#allocation9], 0
    %29 = vsyncpa [#allocation12], 0
    %30 = vsyncpa [#allocation15], 0
    %31 = vsyncpa [#allocation18], 0
    %32 = vsyncpa [#allocation4], 0
    %s33 = scalar_lea.sflag [#allocation4], 1
    %34 = vsyncpa %s33, 0
    loop: start=0, step=1, limit=4
    $region2: #{tpu_custom_call.1} parent=1 // loop_pre_header
      _
    $region3: #{tpu_custom_call.1} parent=1 // loop_header
      %s36 = sphi 0, %s40
      %p37 = scmp.ge.s32.totalorder %s36, 4
      %s46 = sphi 0, %s48
      %s49 = sphi 0, %s46
      %s50 = sphi 0, %s49
      %s66 = sphi 0, %s50
      %s70 = sphi 0, %s70
      %s72 = sphi 0, %s70
      %s73 = sphi 0, %s72
      %s87 = sphi 0, %s73
      %s91 = sphi 0, %s91
      %s93 = sphi 0, %s91
      %s94 = sphi 0, %s93
      %s108 = sphi 0, %s94
      %s112 = sphi 0, %s112
      %s114 = sphi 0, %s112
      %s115 = sphi 0, %s114
      %s129 = sphi 0, %s115
      %s133 = sphi 0, %s133
      %s135 = sphi 0, %s133
      %s136 = sphi 0, %s135
      %s150 = sphi 0, %s136
      %s154 = sphi 0, %s154
      %s156 = sphi 0, %s154
      %s157 = sphi 0, %s156
      %s171 = sphi 0, %s157
      %s175 = sphi 0, %s175
      %s177 = sphi 0, %s175
      %s178 = sphi 0, %s177
      %s192 = sphi 0, %s178
      %s196 = sphi 0, %s196
      %s198 = sphi 0, %s196
      %s199 = sphi 0, %s198
      %s213 = sphi 0, %s199
      %s217 = sphi 0, %s217
      %s219 = sphi 0, %s217
      %s220 = sphi 0, %s219
      %s234 = sphi 0, %s220
      %s238 = sphi 0, %s238
      %s240 = sphi 0, %s238
      %s241 = sphi 0, %s240
      %s255 = sphi 0, %s241
      %s259 = sphi 0, %s259
      %s261 = sphi 0, %s259
      %s262 = sphi 0, %s261
      %s276 = sphi 0, %s262
      %s280 = sphi 0, %s280
      %s282 = sphi 0, %s280
      %s283 = sphi 0, %s282
      %s297 = sphi 0, %s283
      %s301 = sphi 0, %s301
      %s303 = sphi 0, %s301
      %s304 = sphi 0, %s303
      %s318 = sphi 0, %s304
      %s322 = sphi 0, %s322
      %s324 = sphi 0, %s322
      %s325 = sphi 0, %s324
      %s339 = sphi 0, %s325
      %s343 = sphi 0, %s343
      %s345 = sphi 0, %s343
      %s346 = sphi 0, %s345
      %s360 = sphi 0, %s346
      %s364 = sphi 0, %s364
      %s366 = sphi 0, %s364
      %s367 = sphi 0, %s366
      %s381 = sphi 0, %s367
      %s385 = sphi 0, %s385
      %s387 = sphi 0, %s385
      %s388 = sphi 0, %s387
      %s402 = sphi 0, %s388
      %s406 = sphi 0, %s406
      %s408 = sphi 0, %s406
      %s409 = sphi 0, %s408
      %s423 = sphi 0, %s409
      %s427 = sphi 0, %s427
      %s429 = sphi 0, %s427
      %s430 = sphi 0, %s429
      %s444 = sphi 0, %s430
      %s450 = sphi 0, %s452
      %s453 = sphi 0, %s450
      %s454 = sphi 0, %s453
      %s470 = sphi 0, %s454
    $region4: #{tpu_custom_call.1} parent=1 // loop_header_branch
      %39 = sbr.rel (%p37) target = $region8
    $region5: #{tpu_custom_call.1} parent=1 // loop_body
      %s41 = ssub.s32 %s36, 1
      %s42 = ssub.s32 %s36, 2
      %s43 = sadd.s32 %s36, 1
      %s44 = ssub.s32 %s36, %s43
      %p45 = scmp.eq.s32.totalorder %s44, 0
      %s47 = sadd.s32 %s46, 1
      %s48 = scalar_select %p45, %s46, %s47
      %p51 = pneg %p45
      %p52 = scmp.eq.s32.totalorder %s36, 1
      %p53 = por %p51, %p52
      %p54 = scmp.ne.s32.totalorder %s46, %s49
      %p55 = scmp.eq.s32.totalorder %s36, 0
      %p56 = por %p54, %p55
      %p57 = scmp.ne.s32.totalorder %s46, %s49
      %p58 = scmp.eq.s32.totalorder %s41, 1
      %p59 = por %p57, %p58
      %p60 = scmp.ne.s32.totalorder %s49, %s50
      %p61 = scmp.eq.s32.totalorder %s41, 0
      %p62 = por %p60, %p61
      %p63 = scmp.ne.s32.totalorder %s49, %s50
      %p64 = scmp.eq.s32.totalorder %s42, 1
      %p65 = por %p63, %p64
      %p67 = scmp.ne.s32.totalorder %s50, %s66
      %p68 = scmp.eq.s32.totalorder %s42, 0
      %p69 = por %p67, %p68
      %s71 = sadd.s32 %s70, 1
      %p74 = scmp.eq.s32.totalorder %s36, 1
      %p75 = scmp.ne.s32.totalorder %s70, %s72
      %p76 = scmp.eq.s32.totalorder %s36, 0
      %p77 = por %p75, %p76
      %p78 = scmp.ne.s32.totalorder %s70, %s72
      %p79 = scmp.eq.s32.totalorder %s41, 1
      %p80 = por %p78, %p79
      %p81 = scmp.ne.s32.totalorder %s72, %s73
      %p82 = scmp.eq.s32.totalorder %s41, 0
      %p83 = por %p81, %p82
      %p84 = scmp.ne.s32.totalorder %s72, %s73
      %p85 = scmp.eq.s32.totalorder %s42, 1
      %p86 = por %p84, %p85
      %p88 = scmp.ne.s32.totalorder %s73, %s87
      %p89 = scmp.eq.s32.totalorder %s42, 0
      %p90 = por %p88, %p89
      %s92 = sadd.s32 %s91, 1
      %p95 = scmp.eq.s32.totalorder %s36, 1
      %p96 = scmp.ne.s32.totalorder %s91, %s93
      %p97 = scmp.eq.s32.totalorder %s36, 0
      %p98 = por %p96, %p97
      %p99 = scmp.ne.s32.totalorder %s91, %s93
      %p100 = scmp.eq.s32.totalorder %s41, 1
      %p101 = por %p99, %p100
      %p102 = scmp.ne.s32.totalorder %s93, %s94
      %p103 = scmp.eq.s32.totalorder %s41, 0
      %p104 = por %p102, %p103
      %p105 = scmp.ne.s32.totalorder %s93, %s94
      %p106 = scmp.eq.s32.totalorder %s42, 1
      %p107 = por %p105, %p106
      %p109 = scmp.ne.s32.totalorder %s94, %s108
      %p110 = scmp.eq.s32.totalorder %s42, 0
      %p111 = por %p109, %p110
      %s113 = sadd.s32 %s112, 1
      %p116 = scmp.eq.s32.totalorder %s36, 1
      %p117 = scmp.ne.s32.totalorder %s112, %s114
      %p118 = scmp.eq.s32.totalorder %s36, 0
      %p119 = por %p117, %p118
      %p120 = scmp.ne.s32.totalorder %s112, %s114
      %p121 = scmp.eq.s32.totalorder %s41, 1
      %p122 = por %p120, %p121
      %p123 = scmp.ne.s32.totalorder %s114, %s115
      %p124 = scmp.eq.s32.totalorder %s41, 0
      %p125 = por %p123, %p124
      %p126 = scmp.ne.s32.totalorder %s114, %s115
      %p127 = scmp.eq.s32.totalorder %s42, 1
      %p128 = por %p126, %p127
      %p130 = scmp.ne.s32.totalorder %s115, %s129
      %p131 = scmp.eq.s32.totalorder %s42, 0
      %p132 = por %p130, %p131
      %s134 = sadd.s32 %s133, 1
      %p137 = scmp.eq.s32.totalorder %s36, 1
      %p138 = scmp.ne.s32.totalorder %s133, %s135
      %p139 = scmp.eq.s32.totalorder %s36, 0
      %p140 = por %p138, %p139
      %p141 = scmp.ne.s32.totalorder %s133, %s135
      %p142 = scmp.eq.s32.totalorder %s41, 1
      %p143 = por %p141, %p142
      %p144 = scmp.ne.s32.totalorder %s135, %s136
      %p145 = scmp.eq.s32.totalorder %s41, 0
      %p146 = por %p144, %p145
      %p147 = scmp.ne.s32.totalorder %s135, %s136
      %p148 = scmp.eq.s32.totalorder %s42, 1
      %p149 = por %p147, %p148
      %p151 = scmp.ne.s32.totalorder %s136, %s150
      %p152 = scmp.eq.s32.totalorder %s42, 0
      %p153 = por %p151, %p152
      %s155 = sadd.s32 %s154, 1
      %p158 = scmp.eq.s32.totalorder %s36, 1
      %p159 = scmp.ne.s32.totalorder %s154, %s156
      %p160 = scmp.eq.s32.totalorder %s36, 0
      %p161 = por %p159, %p160
      %p162 = scmp.ne.s32.totalorder %s154, %s156
      %p163 = scmp.eq.s32.totalorder %s41, 1
      %p164 = por %p162, %p163
      %p165 = scmp.ne.s32.totalorder %s156, %s157
      %p166 = scmp.eq.s32.totalorder %s41, 0
      %p167 = por %p165, %p166
      %p168 = scmp.ne.s32.totalorder %s156, %s157
      %p169 = scmp.eq.s32.totalorder %s42, 1
      %p170 = por %p168, %p169
      %p172 = scmp.ne.s32.totalorder %s157, %s171
      %p173 = scmp.eq.s32.totalorder %s42, 0
      %p174 = por %p172, %p173
      %s176 = sadd.s32 %s175, 1
      %p179 = scmp.eq.s32.totalorder %s36, 1
      %p180 = scmp.ne.s32.totalorder %s175, %s177
      %p181 = scmp.eq.s32.totalorder %s36, 0
      %p182 = por %p180, %p181
      %p183 = scmp.ne.s32.totalorder %s175, %s177
      %p184 = scmp.eq.s32.totalorder %s41, 1
      %p185 = por %p183, %p184
      %p186 = scmp.ne.s32.totalorder %s177, %s178
      %p187 = scmp.eq.s32.totalorder %s41, 0
      %p188 = por %p186, %p187
      %p189 = scmp.ne.s32.totalorder %s177, %s178
      %p190 = scmp.eq.s32.totalorder %s42, 1
      %p191 = por %p189, %p190
      %p193 = scmp.ne.s32.totalorder %s178, %s192
      %p194 = scmp.eq.s32.totalorder %s42, 0
      %p195 = por %p193, %p194
      %s197 = sadd.s32 %s196, 1
      %p200 = scmp.eq.s32.totalorder %s36, 1
      %p201 = scmp.ne.s32.totalorder %s196, %s198
      %p202 = scmp.eq.s32.totalorder %s36, 0
      %p203 = por %p201, %p202
      %p204 = scmp.ne.s32.totalorder %s196, %s198
      %p205 = scmp.eq.s32.totalorder %s41, 1
      %p206 = por %p204, %p205
      %p207 = scmp.ne.s32.totalorder %s198, %s199
      %p208 = scmp.eq.s32.totalorder %s41, 0
      %p209 = por %p207, %p208
      %p210 = scmp.ne.s32.totalorder %s198, %s199
      %p211 = scmp.eq.s32.totalorder %s42, 1
      %p212 = por %p210, %p211
      %p214 = scmp.ne.s32.totalorder %s199, %s213
      %p215 = scmp.eq.s32.totalorder %s42, 0
      %p216 = por %p214, %p215
      %s218 = sadd.s32 %s217, 1
      %p221 = scmp.eq.s32.totalorder %s36, 1
      %p222 = scmp.ne.s32.totalorder %s217, %s219
      %p223 = scmp.eq.s32.totalorder %s36, 0
      %p224 = por %p222, %p223
      %p225 = scmp.ne.s32.totalorder %s217, %s219
      %p226 = scmp.eq.s32.totalorder %s41, 1
      %p227 = por %p225, %p226
      %p228 = scmp.ne.s32.totalorder %s219, %s220
      %p229 = scmp.eq.s32.totalorder %s41, 0
      %p230 = por %p228, %p229
      %p231 = scmp.ne.s32.totalorder %s219, %s220
      %p232 = scmp.eq.s32.totalorder %s42, 1
      %p233 = por %p231, %p232
      %p235 = scmp.ne.s32.totalorder %s220, %s234
      %p236 = scmp.eq.s32.totalorder %s42, 0
      %p237 = por %p235, %p236
      %s239 = sadd.s32 %s238, 1
      %p242 = scmp.eq.s32.totalorder %s36, 1
      %p243 = scmp.ne.s32.totalorder %s238, %s240
      %p244 = scmp.eq.s32.totalorder %s36, 0
      %p245 = por %p243, %p244
      %p246 = scmp.ne.s32.totalorder %s238, %s240
      %p247 = scmp.eq.s32.totalorder %s41, 1
      %p248 = por %p246, %p247
      %p249 = scmp.ne.s32.totalorder %s240, %s241
      %p250 = scmp.eq.s32.totalorder %s41, 0
      %p251 = por %p249, %p250
      %p252 = scmp.ne.s32.totalorder %s240, %s241
      %p253 = scmp.eq.s32.totalorder %s42, 1
      %p254 = por %p252, %p253
      %p256 = scmp.ne.s32.totalorder %s241, %s255
      %p257 = scmp.eq.s32.totalorder %s42, 0
      %p258 = por %p256, %p257
      %s260 = sadd.s32 %s259, 1
      %p263 = scmp.eq.s32.totalorder %s36, 1
      %p264 = scmp.ne.s32.totalorder %s259, %s261
      %p265 = scmp.eq.s32.totalorder %s36, 0
      %p266 = por %p264, %p265
      %p267 = scmp.ne.s32.totalorder %s259, %s261
      %p268 = scmp.eq.s32.totalorder %s41, 1
      %p269 = por %p267, %p268
      %p270 = scmp.ne.s32.totalorder %s261, %s262
      %p271 = scmp.eq.s32.totalorder %s41, 0
      %p272 = por %p270, %p271
      %p273 = scmp.ne.s32.totalorder %s261, %s262
      %p274 = scmp.eq.s32.totalorder %s42, 1
      %p275 = por %p273, %p274
      %p277 = scmp.ne.s32.totalorder %s262, %s276
      %p278 = scmp.eq.s32.totalorder %s42, 0
      %p279 = por %p277, %p278
      %s281 = sadd.s32 %s280, 1
      %p284 = scmp.eq.s32.totalorder %s36, 1
      %p285 = scmp.ne.s32.totalorder %s280, %s282
      %p286 = scmp.eq.s32.totalorder %s36, 0
      %p287 = por %p285, %p286
      %p288 = scmp.ne.s32.totalorder %s280, %s282
      %p289 = scmp.eq.s32.totalorder %s41, 1
      %p290 = por %p288, %p289
      %p291 = scmp.ne.s32.totalorder %s282, %s283
      %p292 = scmp.eq.s32.totalorder %s41, 0
      %p293 = por %p291, %p292
      %p294 = scmp.ne.s32.totalorder %s282, %s283
      %p295 = scmp.eq.s32.totalorder %s42, 1
      %p296 = por %p294, %p295
      %p298 = scmp.ne.s32.totalorder %s283, %s297
      %p299 = scmp.eq.s32.totalorder %s42, 0
      %p300 = por %p298, %p299
      %s302 = sadd.s32 %s301, 1
      %p305 = scmp.eq.s32.totalorder %s36, 1
      %p306 = scmp.ne.s32.totalorder %s301, %s303
      %p307 = scmp.eq.s32.totalorder %s36, 0
      %p308 = por %p306, %p307
      %p309 = scmp.ne.s32.totalorder %s301, %s303
      %p310 = scmp.eq.s32.totalorder %s41, 1
      %p311 = por %p309, %p310
      %p312 = scmp.ne.s32.totalorder %s303, %s304
      %p313 = scmp.eq.s32.totalorder %s41, 0
      %p314 = por %p312, %p313
      %p315 = scmp.ne.s32.totalorder %s303, %s304
      %p316 = scmp.eq.s32.totalorder %s42, 1
      %p317 = por %p315, %p316
      %p319 = scmp.ne.s32.totalorder %s304, %s318
      %p320 = scmp.eq.s32.totalorder %s42, 0
      %p321 = por %p319, %p320
      %s323 = sadd.s32 %s322, 1
      %p326 = scmp.eq.s32.totalorder %s36, 1
      %p327 = scmp.ne.s32.totalorder %s322, %s324
      %p328 = scmp.eq.s32.totalorder %s36, 0
      %p329 = por %p327, %p328
      %p330 = scmp.ne.s32.totalorder %s322, %s324
      %p331 = scmp.eq.s32.totalorder %s41, 1
      %p332 = por %p330, %p331
      %p333 = scmp.ne.s32.totalorder %s324, %s325
      %p334 = scmp.eq.s32.totalorder %s41, 0
      %p335 = por %p333, %p334
      %p336 = scmp.ne.s32.totalorder %s324, %s325
      %p337 = scmp.eq.s32.totalorder %s42, 1
      %p338 = por %p336, %p337
      %p340 = scmp.ne.s32.totalorder %s325, %s339
      %p341 = scmp.eq.s32.totalorder %s42, 0
      %p342 = por %p340, %p341
      %s344 = sadd.s32 %s343, 1
      %p347 = scmp.eq.s32.totalorder %s36, 1
      %p348 = scmp.ne.s32.totalorder %s343, %s345
      %p349 = scmp.eq.s32.totalorder %s36, 0
      %p350 = por %p348, %p349
      %p351 = scmp.ne.s32.totalorder %s343, %s345
      %p352 = scmp.eq.s32.totalorder %s41, 1
      %p353 = por %p351, %p352
      %p354 = scmp.ne.s32.totalorder %s345, %s346
      %p355 = scmp.eq.s32.totalorder %s41, 0
      %p356 = por %p354, %p355
      %p357 = scmp.ne.s32.totalorder %s345, %s346
      %p358 = scmp.eq.s32.totalorder %s42, 1
      %p359 = por %p357, %p358
      %p361 = scmp.ne.s32.totalorder %s346, %s360
      %p362 = scmp.eq.s32.totalorder %s42, 0
      %p363 = por %p361, %p362
      %s365 = sadd.s32 %s364, 1
      %p368 = scmp.eq.s32.totalorder %s36, 1
      %p369 = scmp.ne.s32.totalorder %s364, %s366
      %p370 = scmp.eq.s32.totalorder %s36, 0
      %p371 = por %p369, %p370
      %p372 = scmp.ne.s32.totalorder %s364, %s366
      %p373 = scmp.eq.s32.totalorder %s41, 1
      %p374 = por %p372, %p373
      %p375 = scmp.ne.s32.totalorder %s366, %s367
      %p376 = scmp.eq.s32.totalorder %s41, 0
      %p377 = por %p375, %p376
      %p378 = scmp.ne.s32.totalorder %s366, %s367
      %p379 = scmp.eq.s32.totalorder %s42, 1
      %p380 = por %p378, %p379
      %p382 = scmp.ne.s32.totalorder %s367, %s381
      %p383 = scmp.eq.s32.totalorder %s42, 0
      %p384 = por %p382, %p383
      %s386 = sadd.s32 %s385, 1
      %p389 = scmp.eq.s32.totalorder %s36, 1
      %p390 = scmp.ne.s32.totalorder %s385, %s387
      %p391 = scmp.eq.s32.totalorder %s36, 0
      %p392 = por %p390, %p391
      %p393 = scmp.ne.s32.totalorder %s385, %s387
      %p394 = scmp.eq.s32.totalorder %s41, 1
      %p395 = por %p393, %p394
      %p396 = scmp.ne.s32.totalorder %s387, %s388
      %p397 = scmp.eq.s32.totalorder %s41, 0
      %p398 = por %p396, %p397
      %p399 = scmp.ne.s32.totalorder %s387, %s388
      %p400 = scmp.eq.s32.totalorder %s42, 1
      %p401 = por %p399, %p400
      %p403 = scmp.ne.s32.totalorder %s388, %s402
      %p404 = scmp.eq.s32.totalorder %s42, 0
      %p405 = por %p403, %p404
      %s407 = sadd.s32 %s406, 1
      %p410 = scmp.eq.s32.totalorder %s36, 1
      %p411 = scmp.ne.s32.totalorder %s406, %s408
      %p412 = scmp.eq.s32.totalorder %s36, 0
      %p413 = por %p411, %p412
      %p414 = scmp.ne.s32.totalorder %s406, %s408
      %p415 = scmp.eq.s32.totalorder %s41, 1
      %p416 = por %p414, %p415
      %p417 = scmp.ne.s32.totalorder %s408, %s409
      %p418 = scmp.eq.s32.totalorder %s41, 0
      %p419 = por %p417, %p418
      %p420 = scmp.ne.s32.totalorder %s408, %s409
      %p421 = scmp.eq.s32.totalorder %s42, 1
      %p422 = por %p420, %p421
      %p424 = scmp.ne.s32.totalorder %s409, %s423
      %p425 = scmp.eq.s32.totalorder %s42, 0
      %p426 = por %p424, %p425
      %s428 = sadd.s32 %s427, 1
      %p431 = scmp.eq.s32.totalorder %s36, 1
      %p432 = scmp.ne.s32.totalorder %s427, %s429
      %p433 = scmp.eq.s32.totalorder %s36, 0
      %p434 = por %p432, %p433
      %p435 = scmp.ne.s32.totalorder %s427, %s429
      %p436 = scmp.eq.s32.totalorder %s41, 1
      %p437 = por %p435, %p436
      %p438 = scmp.ne.s32.totalorder %s429, %s430
      %p439 = scmp.eq.s32.totalorder %s41, 0
      %p440 = por %p438, %p439
      %p441 = scmp.ne.s32.totalorder %s429, %s430
      %p442 = scmp.eq.s32.totalorder %s42, 1
      %p443 = por %p441, %p442
      %p445 = scmp.ne.s32.totalorder %s430, %s444
      %p446 = scmp.eq.s32.totalorder %s42, 0
      %p447 = por %p445, %p446
      %s448 = ssub.s32 %s36, %s43
      %p449 = scmp.eq.s32.totalorder %s448, 0
      %s451 = sadd.s32 %s450, 1
      %s452 = scalar_select %p449, %s450, %s451
      %p455 = pneg %p449
      %p456 = scmp.eq.s32.totalorder %s36, 1
      %p457 = por %p455, %p456
      %p458 = scmp.ne.s32.totalorder %s450, %s453
      %p459 = scmp.eq.s32.totalorder %s36, 0
      %p460 = por %p458, %p459
      %p461 = scmp.ne.s32.totalorder %s450, %s453
      %p462 = scmp.eq.s32.totalorder %s41, 1
      %p463 = por %p461, %p462
      %p464 = scmp.ne.s32.totalorder %s453, %s454
      %p465 = scmp.eq.s32.totalorder %s41, 0
      %p466 = por %p464, %p465
      %p467 = scmp.ne.s32.totalorder %s453, %s454
      %p468 = scmp.eq.s32.totalorder %s42, 1
      %p469 = por %p467, %p468
      %p471 = scmp.ne.s32.totalorder %s454, %s470
      %p472 = scmp.eq.s32.totalorder %s42, 0
      %p473 = por %p471, %p472
      %p474 = scmp.le.s32.totalorder 1, %s36
      %p475 = scmp.lt.s32.totalorder %s36, 3
      %p476 = pnand %p474, %p475
      %p477 = pneg %p476
      // Predicated region
      $region9: #{tpu_custom_call.1} parent=5 // pred_check
        _
      $region10: #{tpu_custom_call.1} parent=5 // pred_check_branch
        %479 = sbr.rel (%p476) target = $region12
      $region11: #{tpu_custom_call.1} parent=5 // pred_region
        %s480 = ssub.s32 %s36, 1
        // Predicated region
        $region13: #{tpu_custom_call.1} parent=11 // pred_check
          %p481 = pneg %p83
        $region14: #{tpu_custom_call.1} parent=11 // pred_check_branch
          %483 = sbr.rel (%p481) target = $region16
        $region15: #{tpu_custom_call.1} parent=11 // pred_region
          %s485 = ssub.s32 512, 512
          %486 = vsyncadd [#allocation6], %s485
          %s487 = sshll.u32 [#allocation5], 4
          %s488 = int_to_ptr.vmem [resolvable:$true] %s487
          %493 = dma.hbm_to_vmem [thread:$0]  %s1, 512, %s488, [#allocation6], 128, 128, 8
        $region16: #{tpu_custom_call.1} parent=11 // pred_fallthru
          _
        // Predicated region
        $region17: #{tpu_custom_call.1} parent=11 // pred_check
          %p494 = pneg %p104
        $region18: #{tpu_custom_call.1} parent=11 // pred_check_branch
          %496 = sbr.rel (%p494) target = $region20
        $region19: #{tpu_custom_call.1} parent=11 // pred_region
          _
        $region20: #{tpu_custom_call.1} parent=11 // pred_fallthru
          _
        // Predicated region
        $region21: #{tpu_custom_call.1} parent=11 // pred_check
          %p497 = pneg %p125
        $region22: #{tpu_custom_call.1} parent=11 // pred_check_branch
          %499 = sbr.rel (%p497) target = $region24
        $region23: #{tpu_custom_call.1} parent=11 // pred_region
          %s501 = ssub.s32 16, 16
          %502 = vsyncadd [#allocation6], %s501
          %s504 = sshll.u32 [#allocation7], 4
          %s505 = int_to_ptr.vmem [resolvable:$true] %s504
          %507 = dma.hbm_to_vmem [thread:$0]  %s3, 16, %s505, [#allocation6]
        $region24: #{tpu_custom_call.1} parent=11 // pred_fallthru
          _
        // Predicated region
        $region25: #{tpu_custom_call.1} parent=11 // pred_check
          %p508 = pneg %p146
        $region26: #{tpu_custom_call.1} parent=11 // pred_check_branch
          %510 = sbr.rel (%p508) target = $region28
        $region27: #{tpu_custom_call.1} parent=11 // pred_region
          %s512 = ssub.s32 1024, 1024
          %513 = vsyncadd [#allocation9], %s512
          %s514 = sshll.u32 [#allocation8], 4
          %s515 = int_to_ptr.vmem [resolvable:$true] %s514
          %520 = dma.hbm_to_vmem [thread:$0]  %s4, 1024, %s515, [#allocation9], 256, 256, 16
        $region28: #{tpu_custom_call.1} parent=11 // pred_fallthru
          _
        // Predicated region
        $region29: #{tpu_custom_call.1} parent=11 // pred_check
          %p521 = pneg %p167
        $region30: #{tpu_custom_call.1} parent=11 // pred_check_branch
          %523 = sbr.rel (%p521) target = $region32
        $region31: #{tpu_custom_call.1} parent=11 // pred_region
          %s525 = ssub.s32 32, 32
          %526 = vsyncadd [#allocation9], %s525
          %s528 = sshll.u32 [#allocation10], 4
          %s529 = int_to_ptr.vmem [resolvable:$true] %s528
          %531 = dma.hbm_to_vmem [thread:$0]  %s5, 32, %s529, [#allocation9]
        $region32: #{tpu_custom_call.1} parent=11 // pred_fallthru
          _
        // Predicated region
        $region33: #{tpu_custom_call.1} parent=11 // pred_check
          %p532 = pneg %p188
        $region34: #{tpu_custom_call.1} parent=11 // pred_check_branch
          %534 = sbr.rel (%p532) target = $region36
        $region35: #{tpu_custom_call.1} parent=11 // pred_region
          %s536 = ssub.s32 32, 32
          %537 = vsyncadd [#allocation12], %s536
          %s539 = sshll.u32 [#allocation11], 4
          %s540 = int_to_ptr.vmem [resolvable:$true] %s539
          %542 = dma.hbm_to_vmem [thread:$0]  %s6, 32, %s540, [#allocation12]
        $region36: #{tpu_custom_call.1} parent=11 // pred_fallthru
          _
        // Predicated region
        $region37: #{tpu_custom_call.1} parent=11 // pred_check
          %p543 = pneg %p209
        $region38: #{tpu_custom_call.1} parent=11 // pred_check_branch
          %545 = sbr.rel (%p543) target = $region40
        $region39: #{tpu_custom_call.1} parent=11 // pred_region
          %s547 = ssub.s32 32, 32
          %548 = vsyncadd [#allocation12], %s547
          %s550 = sshll.u32 [#allocation13], 4
          %s551 = int_to_ptr.vmem [resolvable:$true] %s550
          %553 = dma.hbm_to_vmem [thread:$0]  %s7, 32, %s551, [#allocation12]
        $region40: #{tpu_custom_call.1} parent=11 // pred_fallthru
          _
        // Predicated region
        $region41: #{tpu_custom_call.1} parent=11 // pred_check
          %p554 = pneg %p230
        $region42: #{tpu_custom_call.1} parent=11 // pred_check_branch
          %556 = sbr.rel (%p554) target = $region44
        $region43: #{tpu_custom_call.1} parent=11 // pred_region
          %s558 = ssub.s32 4096, 4096
          %559 = vsyncadd [#allocation15], %s558
          %s560 = sshll.u32 [#allocation14], 4
          %s561 = int_to_ptr.vmem [resolvable:$true] %s560
          %566 = dma.hbm_to_vmem [thread:$0]  %s8, 4096, %s561, [#allocation15], 512, 512, 32
        $region44: #{tpu_custom_call.1} parent=11 // pred_fallthru
          _
        // Predicated region
        $region45: #{tpu_custom_call.1} parent=11 // pred_check
          %p567 = pneg %p251
        $region46: #{tpu_custom_call.1} parent=11 // pred_check_branch
          %569 = sbr.rel (%p567) target = $region48
        $region47: #{tpu_custom_call.1} parent=11 // pred_region
          _
        $region48: #{tpu_custom_call.1} parent=11 // pred_fallthru
          _
        // Predicated region
        $region49: #{tpu_custom_call.1} parent=11 // pred_check
          %p570 = pneg %p272
        $region50: #{tpu_custom_call.1} parent=11 // pred_check_branch
          %572 = sbr.rel (%p570) target = $region52
        $region51: #{tpu_custom_call.1} parent=11 // pred_region
          _
        $region52: #{tpu_custom_call.1} parent=11 // pred_fallthru
          _
        // Predicated region
        $region53: #{tpu_custom_call.1} parent=11 // pred_check
          %p573 = pneg %p293
        $region54: #{tpu_custom_call.1} parent=11 // pred_check_branch
          %575 = sbr.rel (%p573) target = $region56
        $region55: #{tpu_custom_call.1} parent=11 // pred_region
          _
        $region56: #{tpu_custom_call.1} parent=11 // pred_fallthru
          _
        // Predicated region
        $region57: #{tpu_custom_call.1} parent=11 // pred_check
          %p576 = pneg %p314
        $region58: #{tpu_custom_call.1} parent=11 // pred_check_branch
          %578 = sbr.rel (%p576) target = $region60
        $region59: #{tpu_custom_call.1} parent=11 // pred_region
          %s580 = ssub.s32 16384, 16384
          %581 = vsyncadd [#allocation15], %s580
          %s582 = sshll.u32 [#allocation16], 4
          %s583 = int_to_ptr.vmem [resolvable:$true] %s582
          %588 = dma.hbm_to_vmem [thread:$0]  %s12, 16384, %s583, [#allocation15], 1024, 1024, 64
        $region60: #{tpu_custom_call.1} parent=11 // pred_fallthru
          _
        // Predicated region
        $region61: #{tpu_custom_call.1} parent=11 // pred_check
          %p589 = pneg %p335
        $region62: #{tpu_custom_call.1} parent=11 // pred_check_branch
          %591 = sbr.rel (%p589) target = $region64
        $region63: #{tpu_custom_call.1} parent=11 // pred_region
          _
        $region64: #{tpu_custom_call.1} parent=11 // pred_fallthru
          _
        // Predicated region
        $region65: #{tpu_custom_call.1} parent=11 // pred_check
          %p592 = pneg %p356
        $region66: #{tpu_custom_call.1} parent=11 // pred_check_branch
          %594 = sbr.rel (%p592) target = $region68
        $region67: #{tpu_custom_call.1} parent=11 // pred_region
          _
        $region68: #{tpu_custom_call.1} parent=11 // pred_fallthru
          _
        // Predicated region
        $region69: #{tpu_custom_call.1} parent=11 // pred_check
          %p595 = pneg %p377
        $region70: #{tpu_custom_call.1} parent=11 // pred_check_branch
          %597 = sbr.rel (%p595) target = $region72
        $region71: #{tpu_custom_call.1} parent=11 // pred_region
          _
        $region72: #{tpu_custom_call.1} parent=11 // pred_fallthru
          _
        // Predicated region
        $region73: #{tpu_custom_call.1} parent=11 // pred_check
          %p598 = pneg %p398
        $region74: #{tpu_custom_call.1} parent=11 // pred_check_branch
          %600 = sbr.rel (%p598) target = $region76
        $region75: #{tpu_custom_call.1} parent=11 // pred_region
          %s602 = ssub.s32 4096, 4096
          %603 = vsyncadd [#allocation18], %s602
          %s604 = sshll.u32 [#allocation17], 4
          %s605 = int_to_ptr.vmem [resolvable:$true] %s604
          %610 = dma.hbm_to_vmem [thread:$0]  %s16, 4096, %s605, [#allocation18], 128, 128, 8
        $region76: #{tpu_custom_call.1} parent=11 // pred_fallthru
          _
        // Predicated region
        $region77: #{tpu_custom_call.1} parent=11 // pred_check
          %p611 = pneg %p419
        $region78: #{tpu_custom_call.1} parent=11 // pred_check_branch
          %613 = sbr.rel (%p611) target = $region80
        $region79: #{tpu_custom_call.1} parent=11 // pred_region
          _
        $region80: #{tpu_custom_call.1} parent=11 // pred_fallthru
          _
        // Predicated region
        $region81: #{tpu_custom_call.1} parent=11 // pred_check
          %p614 = pneg %p440
        $region82: #{tpu_custom_call.1} parent=11 // pred_check_branch
          %616 = sbr.rel (%p614) target = $region84
        $region83: #{tpu_custom_call.1} parent=11 // pred_region
          _
        $region84: #{tpu_custom_call.1} parent=11 // pred_fallthru
          _
      $region12: #{tpu_custom_call.1} parent=5 // pred_fallthru
        _
      %p617 = scmp.lt.s32.totalorder %s36, 2
      // Predicated region
      $region85: #{tpu_custom_call.1} parent=5 // pred_check
        %p618 = pneg %p617
      $region86: #{tpu_custom_call.1} parent=5 // pred_check_branch
        %620 = sbr.rel (%p618) target = $region88
      $region87: #{tpu_custom_call.1} parent=5 // pred_region
        // Predicated region
        $region89: #{tpu_custom_call.1} parent=87 // pred_check
          %p621 = pneg %p56
        $region90: #{tpu_custom_call.1} parent=87 // pred_check_branch
          %623 = sbr.rel (%p621) target = $region92
        $region91: #{tpu_custom_call.1} parent=87 // pred_region
          %s624 = sand.u32 %s46, 1
          %s625 = scalar_lea.sflag [#allocation3], %s624
          %s626 = sand.u32 %s46, 1
          %s627 = smul.addr %s626, 128
          %s628 = scalar_lea.vmem [#allocation2], %s627
          %s629 = smul.u32 32, %s36
          %s631 = ssub.s32 2048, 2048
          %632 = vsyncadd %s625, %s631
          %s633 = smul.addr %s629, 64
          %s634 = scalar_lea.hbm %s0, %s633
          %s635 = sshll.u32 %s628, 4
          %s636 = int_to_ptr.vmem [resolvable:$true] %s635
          %641 = dma.hbm_to_vmem [thread:$0]  %s634, 2048, %s636, %s625, 64, 64, 4
        $region92: #{tpu_custom_call.1} parent=87 // pred_fallthru
          _
      $region88: #{tpu_custom_call.1} parent=5 // pred_fallthru
        _
      %p642 = scmp.le.s32.totalorder 1, %s36
      %p643 = scmp.lt.s32.totalorder %s36, 3
      %p644 = pnand %p642, %p643
      %p645 = pneg %p644
      // Predicated region
      $region93: #{tpu_custom_call.1} parent=5 // pred_check
        _
      $region94: #{tpu_custom_call.1} parent=5 // pred_check_branch
        %647 = sbr.rel (%p644) target = $region96
      $region95: #{tpu_custom_call.1} parent=5 // pred_region
        %s648 = ssub.s32 %s36, 1
        %s649 = sand.u32 %s49, 1
        %s650 = scalar_lea.sflag [#allocation3], %s649
        %s651 = sand.u32 %s49, 1
        %s652 = smul.addr %s651, 128
        %s653 = scalar_lea.vmem [#allocation2], %s652
        // Predicated region
        $region97: #{tpu_custom_call.1} parent=95 // pred_check
          %p654 = pneg %p62
        $region98: #{tpu_custom_call.1} parent=95 // pred_check_branch
          %656 = sbr.rel (%p654) target = $region100
        $region99: #{tpu_custom_call.1} parent=95 // pred_region
          %657 = dma.done %s650, 2048
        $region100: #{tpu_custom_call.1} parent=95 // pred_fallthru
          _
        // Predicated region
        $region101: #{tpu_custom_call.1} parent=95 // pred_check
          %p658 = pneg %p83
        $region102: #{tpu_custom_call.1} parent=95 // pred_check_branch
          %660 = sbr.rel (%p658) target = $region104
        $region103: #{tpu_custom_call.1} parent=95 // pred_region
          %661 = dma.done [#allocation6], 512
        $region104: #{tpu_custom_call.1} parent=95 // pred_fallthru
          _
        // Predicated region
        $region105: #{tpu_custom_call.1} parent=95 // pred_check
          %p662 = pneg %p125
        $region106: #{tpu_custom_call.1} parent=95 // pred_check_branch
          %664 = sbr.rel (%p662) target = $region108
        $region107: #{tpu_custom_call.1} parent=95 // pred_region
          %665 = dma.done [#allocation6], 16
        $region108: #{tpu_custom_call.1} parent=95 // pred_fallthru
          _
        // Predicated region
        $region109: #{tpu_custom_call.1} parent=95 // pred_check
          %p666 = pneg %p146
        $region110: #{tpu_custom_call.1} parent=95 // pred_check_branch
          %668 = sbr.rel (%p666) target = $region112
        $region111: #{tpu_custom_call.1} parent=95 // pred_region
          %669 = dma.done [#allocation9], 1024
        $region112: #{tpu_custom_call.1} parent=95 // pred_fallthru
          _
        // Predicated region
        $region113: #{tpu_custom_call.1} parent=95 // pred_check
          %p670 = pneg %p167
        $region114: #{tpu_custom_call.1} parent=95 // pred_check_branch
          %672 = sbr.rel (%p670) target = $region116
        $region115: #{tpu_custom_call.1} parent=95 // pred_region
          %673 = dma.done [#allocation9], 32
        $region116: #{tpu_custom_call.1} parent=95 // pred_fallthru
          _
        // Predicated region
        $region117: #{tpu_custom_call.1} parent=95 // pred_check
          %p674 = pneg %p188
        $region118: #{tpu_custom_call.1} parent=95 // pred_check_branch
          %676 = sbr.rel (%p674) target = $region120
        $region119: #{tpu_custom_call.1} parent=95 // pred_region
          %677 = dma.done [#allocation12], 32
        $region120: #{tpu_custom_call.1} parent=95 // pred_fallthru
          _
        // Predicated region
        $region121: #{tpu_custom_call.1} parent=95 // pred_check
          %p678 = pneg %p209
        $region122: #{tpu_custom_call.1} parent=95 // pred_check_branch
          %680 = sbr.rel (%p678) target = $region124
        $region123: #{tpu_custom_call.1} parent=95 // pred_region
          %681 = dma.done [#allocation12], 32
        $region124: #{tpu_custom_call.1} parent=95 // pred_fallthru
          _
        // Predicated region
        $region125: #{tpu_custom_call.1} parent=95 // pred_check
          %p682 = pneg %p230
        $region126: #{tpu_custom_call.1} parent=95 // pred_check_branch
          %684 = sbr.rel (%p682) target = $region128
        $region127: #{tpu_custom_call.1} parent=95 // pred_region
          %685 = dma.done [#allocation15], 4096
        $region128: #{tpu_custom_call.1} parent=95 // pred_fallthru
          _
        // Predicated region
        $region129: #{tpu_custom_call.1} parent=95 // pred_check
          %p686 = pneg %p314
        $region130: #{tpu_custom_call.1} parent=95 // pred_check_branch
          %688 = sbr.rel (%p686) target = $region132
        $region131: #{tpu_custom_call.1} parent=95 // pred_region
          %689 = dma.done [#allocation15], 16384
        $region132: #{tpu_custom_call.1} parent=95 // pred_fallthru
          _
        // Predicated region
        $region133: #{tpu_custom_call.1} parent=95 // pred_check
          %p690 = pneg %p398
        $region134: #{tpu_custom_call.1} parent=95 // pred_check_branch
          %692 = sbr.rel (%p690) target = $region136
        $region135: #{tpu_custom_call.1} parent=95 // pred_region
          %693 = dma.done [#allocation18], 4096
        $region136: #{tpu_custom_call.1} parent=95 // pred_fallthru
          _
        %s694 = sand.u32 %s49, 1
        %s695 = scalar_lea.sflag [#allocation3], %s694
        %s696 = sand.u32 %s49, 1
        %s697 = smul.addr %s696, 128
        %s698 = scalar_lea.vmem [#allocation2], %s697
        %p699 = pneg %p62
        %p700 = pneg %p59
        %p701 = pneg %p83
        %p702 = pneg %p80
        %p703 = pneg %p104
        %p704 = pneg %p101
        %p705 = pneg %p125
        %p706 = pneg %p122
        %p707 = pneg %p146
        %p708 = pneg %p143
        %p709 = pneg %p167
        %p710 = pneg %p164
        %p711 = pneg %p188
        %p712 = pneg %p185
        %p713 = pneg %p209
        %p714 = pneg %p206
        %p715 = pneg %p230
        %p716 = pneg %p227
        %p717 = pneg %p251
        %p718 = pneg %p248
        %p719 = pneg %p272
        %p720 = pneg %p269
        %p721 = pneg %p293
        %p722 = pneg %p290
        %p723 = pneg %p314
        %p724 = pneg %p311
        %p725 = pneg %p335
        %p726 = pneg %p332
        %p727 = pneg %p356
        %p728 = pneg %p353
        %p729 = pneg %p377
        %p730 = pneg %p374
        %p731 = pneg %p398
        %p732 = pneg %p395
        %p733 = pneg %p419
        %p734 = pneg %p416
        %p735 = pneg %p440
        %p736 = pneg %p437
        %p737 = pneg %p466
        %p738 = pneg %p463
        %s739 = sand.u32 %s453, 1
        %s740 = scalar_lea.sflag [#allocation4], %s739
        %s741 = sand.u32 %s453, 1
        %s742 = smul.addr %s741, 128
        %s743 = scalar_lea.vmem [#allocation19], %s742
        %s744 = smul.u32 32, %s41
        %s745 = smul.u32 32, %s41
        %v747 = vld [vmem:[%s653] sm:$0xf]
        %v748 = vld [vmem:[%s653 + $0x4] sm:$0xf]
        %v749 = vld [vmem:[%s653 + $0x8] sm:$0xf]
        %v750 = vld [vmem:[%s653 + $0xc] sm:$0xf]
        %v751 = vld [vmem:[%s653 + $0x10] sm:$0xf]
        %v752 = vld [vmem:[%s653 + $0x14] sm:$0xf]
        %v753 = vld [vmem:[%s653 + $0x18] sm:$0xf]
        %v754 = vld [vmem:[%s653 + $0x1c] sm:$0xf]
        %v755 = vld [vmem:[%s653 + $0x20] sm:$0xf]
        %v756 = vld [vmem:[%s653 + $0x24] sm:$0xf]
        %v757 = vld [vmem:[%s653 + $0x28] sm:$0xf]
        %v758 = vld [vmem:[%s653 + $0x2c] sm:$0xf]
        %v759 = vld [vmem:[%s653 + $0x30] sm:$0xf]
        %v760 = vld [vmem:[%s653 + $0x34] sm:$0xf]
        %v761 = vld [vmem:[%s653 + $0x38] sm:$0xf]
        %v762 = vld [vmem:[%s653 + $0x3c] sm:$0xf]
        %v763 = vld [vmem:[%s653 + $0x40] sm:$0xf]
        %v764 = vld [vmem:[%s653 + $0x44] sm:$0xf]
        %v765 = vld [vmem:[%s653 + $0x48] sm:$0xf]
        %v766 = vld [vmem:[%s653 + $0x4c] sm:$0xf]
        %v767 = vld [vmem:[%s653 + $0x50] sm:$0xf]
        %v768 = vld [vmem:[%s653 + $0x54] sm:$0xf]
        %v769 = vld [vmem:[%s653 + $0x58] sm:$0xf]
        %v770 = vld [vmem:[%s653 + $0x5c] sm:$0xf]
        %v771 = vld [vmem:[%s653 + $0x60] sm:$0xf]
        %v772 = vld [vmem:[%s653 + $0x64] sm:$0xf]
        %v773 = vld [vmem:[%s653 + $0x68] sm:$0xf]
        %v774 = vld [vmem:[%s653 + $0x6c] sm:$0xf]
        %v775 = vld [vmem:[%s653 + $0x70] sm:$0xf]
        %v776 = vld [vmem:[%s653 + $0x74] sm:$0xf]
        %v777 = vld [vmem:[%s653 + $0x78] sm:$0xf]
        %v778 = vld [vmem:[%s653 + $0x7c] sm:$0xf]
        %v779 = vld [vmem:[#allocation5] sm:$0xff]
        %v780 = vld [vmem:[#allocation5 + $0x8] sm:$0xff]
        %v781 = vld [vmem:[#allocation5 + $0x10] sm:$0xff]
        %v782 = vld [vmem:[#allocation5 + $0x18] sm:$0xff]
        %v783 = vunpack.c.l.s8.bf16 %v779
        %v784 = vunpack.c.h.s8.bf16 %v779
        %v785 = vunpack.c.l.s8.bf16 %v780
        %v786 = vunpack.c.h.s8.bf16 %v780
        %v787 = vunpack.c.l.s8.bf16 %v781
        %v788 = vunpack.c.h.s8.bf16 %v781
        %v789 = vunpack.c.l.s8.bf16 %v782
        %v790 = vunpack.c.h.s8.bf16 %v782
        %v823 = vunpack.c.l.b16 %v747
        %v824 = vunpack.c.l.b16 %v748
        %v825 = vunpack.c.l.b16 %v749
        %v826 = vunpack.c.l.b16 %v750
        %v827 = vunpack.c.l.b16 %v751
        %v828 = vunpack.c.l.b16 %v752
        %v829 = vunpack.c.l.b16 %v753
        %v830 = vunpack.c.l.b16 %v754
        %v831 = vunpack.c.l.b16 %v755
        %v832 = vunpack.c.l.b16 %v756
        %v833 = vunpack.c.l.b16 %v757
        %v834 = vunpack.c.l.b16 %v758
        %v835 = vunpack.c.l.b16 %v759
        %v836 = vunpack.c.l.b16 %v760
        %v837 = vunpack.c.l.b16 %v761
        %v838 = vunpack.c.l.b16 %v762
        %v839 = vunpack.c.l.b16 %v763
        %v840 = vunpack.c.l.b16 %v764
        %v841 = vunpack.c.l.b16 %v765
        %v842 = vunpack.c.l.b16 %v766
        %v843 = vunpack.c.l.b16 %v767
        %v844 = vunpack.c.l.b16 %v768
        %v845 = vunpack.c.l.b16 %v769
        %v846 = vunpack.c.l.b16 %v770
        %v847 = vunpack.c.l.b16 %v771
        %v848 = vunpack.c.l.b16 %v772
        %v849 = vunpack.c.l.b16 %v773
        %v850 = vunpack.c.l.b16 %v774
        %v851 = vunpack.c.l.b16 %v775
        %v852 = vunpack.c.l.b16 %v776
        %v853 = vunpack.c.l.b16 %v777
        %v854 = vunpack.c.l.b16 %v778
        %v855 = vpack.c.b16 %v824, %v823
        %v856 = vpack.c.b16 %v826, %v825
        %v857 = vpack.c.b16 %v828, %v827
        %v858 = vpack.c.b16 %v830, %v829
        %v859 = vpack.c.b16 %v832, %v831
        %v860 = vpack.c.b16 %v834, %v833
        %v861 = vpack.c.b16 %v836, %v835
        %v862 = vpack.c.b16 %v838, %v837
        %v863 = vpack.c.b16 %v840, %v839
        %v864 = vpack.c.b16 %v842, %v841
        %v865 = vpack.c.b16 %v844, %v843
        %v866 = vpack.c.b16 %v846, %v845
        %v867 = vpack.c.b16 %v848, %v847
        %v868 = vpack.c.b16 %v850, %v849
        %v869 = vpack.c.b16 %v852, %v851
        %v870 = vpack.c.b16 %v854, %v853
        %887 = vmatprep.subr.bf16.mxu0 0
        %888 = vmatpush1.bf16.msra.mxu0 %v783
        %889 = vmatprep.subr.bf16.mxu0 0
        %890 = vmatpush1.bf16.msra.mxu0 %v784
        %891 = vmatprep.subr.bf16.mxu0 0
        %892 = vmatpush1.bf16.msra.mxu0 %v785
        %893 = vmatprep.subr.bf16.mxu0 0
        %894 = vmatpush1.bf16.msra.mxu0 %v786
        %895 = vmatprep.subr.bf16.mxu0 0
        %896 = vmatpush1.bf16.msra.mxu0 %v787
        %897 = vmatprep.subr.bf16.mxu0 0
        %898 = vmatpush1.bf16.msra.mxu0 %v788
        %899 = vmatprep.subr.bf16.mxu0 0
        %900 = vmatpush1.bf16.msra.mxu0 %v789
        %901 = vmatprep.subr.bf16.mxu0 0
        %902 = vmatpush1.bf16.msra.mxu0 %v790
        %903 = vmatprep.subr.bf16.mxu0 0
        %904 = vmatpush1.bf16.msra.mxu0 0
        %905 = vmatprep.subr.bf16.mxu0 0
        %906 = vmatpush1.bf16.msra.mxu0 0
        %907 = vmatprep.subr.bf16.mxu0 0
        %908 = vmatpush1.bf16.msra.mxu0 0
        %909 = vmatprep.subr.bf16.mxu0 0
        %910 = vmatpush1.bf16.msra.mxu0 0
        %911 = vmatprep.subr.bf16.mxu0 0
        %912 = vmatpush1.bf16.msra.mxu0 0
        %913 = vmatprep.subr.bf16.mxu0 0
        %914 = vmatpush1.bf16.msra.mxu0 0
        %915 = vmatprep.subr.bf16.mxu0 0
        %916 = vmatpush1.bf16.msra.mxu0 0
        %917 = vmatprep.subr.bf16.mxu0 0
        %918 = vmatpush1.bf16.msra.mxu0 0
        %919 = vmatprep.mubr.bf16.mxu0 0
        %920 = vmatmul.mubr.bf16.gmra.mrb[0].mxu0 %v855
        %v921 = vpop.f32.mrb[0].mxu0
        %v922 = vadd.f32 0.0, %v921
        %v923 = vpop.f32.mrb[0].mxu0
        %v924 = vpop.f32.mrb[0].mxu0
        %v925 = vadd.f32 0.0, %v924
        %v926 = vpop.f32.mrb[0].mxu0
        %927 = vmatprep.mubr.bf16.mxu0 0
        %928 = vmatmul.mubr.bf16.gmra.mrb[0].mxu0 %v856
        %v929 = vpop.f32.mrb[0].mxu0
        %v930 = vadd.f32 0.0, %v929
        %v931 = vpop.f32.mrb[0].mxu0
        %v932 = vpop.f32.mrb[0].mxu0
        %v933 = vadd.f32 0.0, %v932
        %v934 = vpop.f32.mrb[0].mxu0
        %935 = vmatprep.mubr.bf16.mxu0 0
        %936 = vmatmul.mubr.bf16.gmra.mrb[0].mxu0 %v857
        %v937 = vpop.f32.mrb[0].mxu0
        %v938 = vadd.f32 0.0, %v937
        %v939 = vpop.f32.mrb[0].mxu0
        %v940 = vpop.f32.mrb[0].mxu0
        %v941 = vadd.f32 0.0, %v940
        %v942 = vpop.f32.mrb[0].mxu0
        %943 = vmatprep.mubr.bf16.mxu0 0
        %944 = vmatmul.mubr.bf16.gmra.mrb[0].mxu0 %v858
        %v945 = vpop.f32.mrb[0].mxu0
        %v946 = vadd.f32 0.0, %v945
        %v947 = vpop.f32.mrb[0].mxu0
        %v948 = vpop.f32.mrb[0].mxu0
        %v949 = vadd.f32 0.0, %v948
        %v950 = vpop.f32.mrb[0].mxu0
        %951 = vmatprep.mubr.bf16.mxu0 0
        %952 = vmatmul.mubr.bf16.gmra.mrb[0].mxu0 %v859
        %v953 = vpop.f32.mrb[0].mxu0
        %v954 = vadd.f32 0.0, %v953
        %v955 = vpop.f32.mrb[0].mxu0
        %v956 = vpop.f32.mrb[0].mxu0
        %v957 = vadd.f32 0.0, %v956
        %v958 = vpop.f32.mrb[0].mxu0
        %959 = vmatprep.mubr.bf16.mxu0 0
        %960 = vmatmul.mubr.bf16.gmra.mrb[0].mxu0 %v860
        %v961 = vpop.f32.mrb[0].mxu0
        %v962 = vadd.f32 0.0, %v961
        %v963 = vpop.f32.mrb[0].mxu0
        %v964 = vpop.f32.mrb[0].mxu0
        %v965 = vadd.f32 0.0, %v964
        %v966 = vpop.f32.mrb[0].mxu0
        %967 = vmatprep.mubr.bf16.mxu0 0
        %968 = vmatmul.mubr.bf16.gmra.mrb[0].mxu0 %v861
        %v969 = vpop.f32.mrb[0].mxu0
        %v970 = vadd.f32 0.0, %v969
        %v971 = vpop.f32.mrb[0].mxu0
        %v972 = vpop.f32.mrb[0].mxu0
        %v973 = vadd.f32 0.0, %v972
        %v974 = vpop.f32.mrb[0].mxu0
        %975 = vmatprep.mubr.bf16.mxu0 0
        %976 = vmatmul.mubr.bf16.gmra.mrb[0].mxu0 %v862
        %v977 = vpop.f32.mrb[0].mxu0
        %v978 = vadd.f32 0.0, %v977
        %v979 = vpop.f32.mrb[0].mxu0
        %v980 = vpop.f32.mrb[0].mxu0
        %v981 = vadd.f32 0.0, %v980
        %v982 = vpop.f32.mrb[0].mxu0
        %983 = vmatprep.mubr.bf16.mxu0 0
        %984 = vmatmul.mubr.bf16.gmra.mrb[0].mxu0 %v863
        %v985 = vpop.f32.mrb[0].mxu0
        %v986 = vadd.f32 0.0, %v985
        %v987 = vpop.f32.mrb[0].mxu0
        %v988 = vpop.f32.mrb[0].mxu0
        %v989 = vadd.f32 0.0, %v988
        %v990 = vpop.f32.mrb[0].mxu0
        %991 = vmatprep.mubr.bf16.mxu0 0
        %992 = vmatmul.mubr.bf16.gmra.mrb[0].mxu0 %v864
        %v993 = vpop.f32.mrb[0].mxu0
        %v994 = vadd.f32 0.0, %v993
        %v995 = vpop.f32.mrb[0].mxu0
        %v996 = vpop.f32.mrb[0].mxu0
        %v997 = vadd.f32 0.0, %v996
        %v998 = vpop.f32.mrb[0].mxu0
        %999 = vmatprep.mubr.bf16.mxu0 0
        %1000 = vmatmul.mubr.bf16.gmra.mrb[0].mxu0 %v865
        %v1001 = vpop.f32.mrb[0].mxu0
        %v1002 = vadd.f32 0.0, %v1001
        %v1003 = vpop.f32.mrb[0].mxu0
        %v1004 = vpop.f32.mrb[0].mxu0
        %v1005 = vadd.f32 0.0, %v1004
        %v1006 = vpop.f32.mrb[0].mxu0
        %1007 = vmatprep.mubr.bf16.mxu0 0
        %1008 = vmatmul.mubr.bf16.gmra.mrb[0].mxu0 %v866
        %v1009 = vpop.f32.mrb[0].mxu0
        %v1010 = vadd.f32 0.0, %v1009
        %v1011 = vpop.f32.mrb[0].mxu0
        %v1012 = vpop.f32.mrb[0].mxu0
        %v1013 = vadd.f32 0.0, %v1012
        %v1014 = vpop.f32.mrb[0].mxu0
        %1015 = vmatprep.mubr.bf16.mxu0 0
        %1016 = vmatmul.mubr.bf16.gmra.mrb[0].mxu0 %v867
        %v1017 = vpop.f32.mrb[0].mxu0
        %v1018 = vadd.f32 0.0, %v1017
        %v1019 = vpop.f32.mrb[0].mxu0
        %v1020 = vpop.f32.mrb[0].mxu0
        %v1021 = vadd.f32 0.0, %v1020
        %v1022 = vpop.f32.mrb[0].mxu0
        %1023 = vmatprep.mubr.bf16.mxu0 0
        %1024 = vmatmul.mubr.bf16.gmra.mrb[0].mxu0 %v868
        %v1025 = vpop.f32.mrb[0].mxu0
        %v1026 = vadd.f32 0.0, %v1025
        %v1027 = vpop.f32.mrb[0].mxu0
        %v1028 = vpop.f32.mrb[0].mxu0
        %v1029 = vadd.f32 0.0, %v1028
        %v1030 = vpop.f32.mrb[0].mxu0
        %1031 = vmatprep.mubr.bf16.mxu0 0
        %1032 = vmatmul.mubr.bf16.gmra.mrb[0].mxu0 %v869
        %v1033 = vpop.f32.mrb[0].mxu0
        %v1034 = vadd.f32 0.0, %v1033
        %v1035 = vpop.f32.mrb[0].mxu0
        %v1036 = vpop.f32.mrb[0].mxu0
        %v1037 = vadd.f32 0.0, %v1036
        %v1038 = vpop.f32.mrb[0].mxu0
        %1039 = vmatprep.mubr.bf16.mxu0 0
        %1040 = vmatmul.mubr.bf16.gmra.mrb[0].mxu0 %v870
        %v1041 = vpop.f32.mrb[0].mxu0
        %v1042 = vadd.f32 0.0, %v1041
        %v1043 = vpop.f32.mrb[0].mxu0
        %v1044 = vpop.f32.mrb[0].mxu0
        %v1045 = vadd.f32 0.0, %v1044
        %v1046 = vpop.f32.mrb[0].mxu0
        %1047 = vdwg.mxu0
        %v1048 = vld [vmem:[%s2] sm:$0x1]
        %v1050 = vlaneseq
        %v1051 = vshrl.u32 %v1050, 7
        %v1052 = vsub.s32 0, %v1051
        %v1053 = vrot.slane %v1048, %v1052
        %v1055 = vmul.f32 %v922, %v1053
        %v1056 = vmul.f32 %v925, %v1053
        %v1057 = vmul.f32 %v930, %v1053
        %v1058 = vmul.f32 %v933, %v1053
        %v1059 = vmul.f32 %v938, %v1053
        %v1060 = vmul.f32 %v941, %v1053
        %v1061 = vmul.f32 %v946, %v1053
        %v1062 = vmul.f32 %v949, %v1053
        %v1063 = vmul.f32 %v954, %v1053
        %v1064 = vmul.f32 %v957, %v1053
        %v1065 = vmul.f32 %v962, %v1053
        %v1066 = vmul.f32 %v965, %v1053
        %v1067 = vmul.f32 %v970, %v1053
        %v1068 = vmul.f32 %v973, %v1053
        %v1069 = vmul.f32 %v978, %v1053
        %v1070 = vmul.f32 %v981, %v1053
        %v1071 = vmul.f32 %v986, %v1053
        %v1072 = vmul.f32 %v989, %v1053
        %v1073 = vmul.f32 %v994, %v1053
        %v1074 = vmul.f32 %v997, %v1053
        %v1075 = vmul.f32 %v1002, %v1053
        %v1076 = vmul.f32 %v1005, %v1053
        %v1077 = vmul.f32 %v1010, %v1053
        %v1078 = vmul.f32 %v1013, %v1053
        %v1079 = vmul.f32 %v1018, %v1053
        %v1080 = vmul.f32 %v1021, %v1053
        %v1081 = vmul.f32 %v1026, %v1053
        %v1082 = vmul.f32 %v1029, %v1053
        %v1083 = vmul.f32 %v1034, %v1053
        %v1084 = vmul.f32 %v1037, %v1053
        %v1085 = vmul.f32 %v1042, %v1053
        %v1086 = vmul.f32 %v1045, %v1053
        %v1087 = vld [vmem:[#allocation7] sm:$0x1]
        %v1089 = vlaneseq
        %v1090 = vshrl.u32 %v1089, 7
        %v1091 = vsub.s32 0, %v1090
        %v1092 = vrot.slane %v1087, %v1091
        %v1094 = vadd.f32 %v1055, %v1092
        %v1095 = vadd.f32 %v1056, %v1092
        %v1096 = vadd.f32 %v1057, %v1092
        %v1097 = vadd.f32 %v1058, %v1092
        %v1098 = vadd.f32 %v1059, %v1092
        %v1099 = vadd.f32 %v1060, %v1092
        %v1100 = vadd.f32 %v1061, %v1092
        %v1101 = vadd.f32 %v1062, %v1092
        %v1102 = vadd.f32 %v1063, %v1092
        %v1103 = vadd.f32 %v1064, %v1092
        %v1104 = vadd.f32 %v1065, %v1092
        %v1105 = vadd.f32 %v1066, %v1092
        %v1106 = vadd.f32 %v1067, %v1092
        %v1107 = vadd.f32 %v1068, %v1092
        %v1108 = vadd.f32 %v1069, %v1092
        %v1109 = vadd.f32 %v1070, %v1092
        %v1110 = vadd.f32 %v1071, %v1092
        %v1111 = vadd.f32 %v1072, %v1092
        %v1112 = vadd.f32 %v1073, %v1092
        %v1113 = vadd.f32 %v1074, %v1092
        %v1114 = vadd.f32 %v1075, %v1092
        %v1115 = vadd.f32 %v1076, %v1092
        %v1116 = vadd.f32 %v1077, %v1092
        %v1117 = vadd.f32 %v1078, %v1092
        %v1118 = vadd.f32 %v1079, %v1092
        %v1119 = vadd.f32 %v1080, %v1092
        %v1120 = vadd.f32 %v1081, %v1092
        %v1121 = vadd.f32 %v1082, %v1092
        %v1122 = vadd.f32 %v1083, %v1092
        %v1123 = vadd.f32 %v1084, %v1092
        %v1124 = vadd.f32 %v1085, %v1092
        %v1125 = vadd.f32 %v1086, %v1092
        %vm1126 = vcmp.gt.f32.partialorder %v1094, 0.0
        %vm1127 = vcmp.gt.f32.partialorder %v1095, 0.0
        %vm1128 = vcmp.gt.f32.partialorder %v1096, 0.0
        %vm1129 = vcmp.gt.f32.partialorder %v1097, 0.0
        %vm1130 = vcmp.gt.f32.partialorder %v1098, 0.0
        %vm1131 = vcmp.gt.f32.partialorder %v1099, 0.0
        %vm1132 = vcmp.gt.f32.partialorder %v1100, 0.0
        %vm1133 = vcmp.gt.f32.partialorder %v1101, 0.0
        %vm1134 = vcmp.gt.f32.partialorder %v1102, 0.0
        %vm1135 = vcmp.gt.f32.partialorder %v1103, 0.0
        %vm1136 = vcmp.gt.f32.partialorder %v1104, 0.0
        %vm1137 = vcmp.gt.f32.partialorder %v1105, 0.0
        %vm1138 = vcmp.gt.f32.partialorder %v1106, 0.0
        %vm1139 = vcmp.gt.f32.partialorder %v1107, 0.0
        %vm1140 = vcmp.gt.f32.partialorder %v1108, 0.0
        %vm1141 = vcmp.gt.f32.partialorder %v1109, 0.0
        %vm1142 = vcmp.gt.f32.partialorder %v1110, 0.0
        %vm1143 = vcmp.gt.f32.partialorder %v1111, 0.0
        %vm1144 = vcmp.gt.f32.partialorder %v1112, 0.0
        %vm1145 = vcmp.gt.f32.partialorder %v1113, 0.0
        %vm1146 = vcmp.gt.f32.partialorder %v1114, 0.0
        %vm1147 = vcmp.gt.f32.partialorder %v1115, 0.0
        %vm1148 = vcmp.gt.f32.partialorder %v1116, 0.0
        %vm1149 = vcmp.gt.f32.partialorder %v1117, 0.0
        %vm1150 = vcmp.gt.f32.partialorder %v1118, 0.0
        %vm1151 = vcmp.gt.f32.partialorder %v1119, 0.0
        %vm1152 = vcmp.gt.f32.partialorder %v1120, 0.0
        %vm1153 = vcmp.gt.f32.partialorder %v1121, 0.0
        %vm1154 = vcmp.gt.f32.partialorder %v1122, 0.0
        %vm1155 = vcmp.gt.f32.partialorder %v1123, 0.0
        %vm1156 = vcmp.gt.f32.partialorder %v1124, 0.0
        %vm1157 = vcmp.gt.f32.partialorder %v1125, 0.0
        %v1158 = vmul.f32 %v1094, 0.2
        %v1159 = vmul.f32 %v1095, 0.2
        %v1160 = vmul.f32 %v1096, 0.2
        %v1161 = vmul.f32 %v1097, 0.2
        %v1162 = vmul.f32 %v1098, 0.2
        %v1163 = vmul.f32 %v1099, 0.2
        %v1164 = vmul.f32 %v1100, 0.2
        %v1165 = vmul.f32 %v1101, 0.2
        %v1166 = vmul.f32 %v1102, 0.2
        %v1167 = vmul.f32 %v1103, 0.2
        %v1168 = vmul.f32 %v1104, 0.2
        %v1169 = vmul.f32 %v1105, 0.2
        %v1170 = vmul.f32 %v1106, 0.2
        %v1171 = vmul.f32 %v1107, 0.2
        %v1172 = vmul.f32 %v1108, 0.2
        %v1173 = vmul.f32 %v1109, 0.2
        %v1174 = vmul.f32 %v1110, 0.2
        %v1175 = vmul.f32 %v1111, 0.2
        %v1176 = vmul.f32 %v1112, 0.2
        %v1177 = vmul.f32 %v1113, 0.2
        %v1178 = vmul.f32 %v1114, 0.2
        %v1179 = vmul.f32 %v1115, 0.2
        %v1180 = vmul.f32 %v1116, 0.2
        %v1181 = vmul.f32 %v1117, 0.2
        %v1182 = vmul.f32 %v1118, 0.2
        %v1183 = vmul.f32 %v1119, 0.2
        %v1184 = vmul.f32 %v1120, 0.2
        %v1185 = vmul.f32 %v1121, 0.2
        %v1186 = vmul.f32 %v1122, 0.2
        %v1187 = vmul.f32 %v1123, 0.2
        %v1188 = vmul.f32 %v1124, 0.2
        %v1189 = vmul.f32 %v1125, 0.2
        %v1190 = vsel %vm1126, %v1094, %v1158
        %v1191 = vsel %vm1127, %v1095, %v1159
        %v1192 = vsel %vm1128, %v1096, %v1160
        %v1193 = vsel %vm1129, %v1097, %v1161
        %v1194 = vsel %vm1130, %v1098, %v1162
        %v1195 = vsel %vm1131, %v1099, %v1163
        %v1196 = vsel %vm1132, %v1100, %v1164
        %v1197 = vsel %vm1133, %v1101, %v1165
        %v1198 = vsel %vm1134, %v1102, %v1166
        %v1199 = vsel %vm1135, %v1103, %v1167
        %v1200 = vsel %vm1136, %v1104, %v1168
        %v1201 = vsel %vm1137, %v1105, %v1169
        %v1202 = vsel %vm1138, %v1106, %v1170
        %v1203 = vsel %vm1139, %v1107, %v1171
        %v1204 = vsel %vm1140, %v1108, %v1172
        %v1205 = vsel %vm1141, %v1109, %v1173
        %v1206 = vsel %vm1142, %v1110, %v1174
        %v1207 = vsel %vm1143, %v1111, %v1175
        %v1208 = vsel %vm1144, %v1112, %v1176
        %v1209 = vsel %vm1145, %v1113, %v1177
        %v1210 = vsel %vm1146, %v1114, %v1178
        %v1211 = vsel %vm1147, %v1115, %v1179
        %v1212 = vsel %vm1148, %v1116, %v1180
        %v1213 = vsel %vm1149, %v1117, %v1181
        %v1214 = vsel %vm1150, %v1118, %v1182
        %v1215 = vsel %vm1151, %v1119, %v1183
        %v1216 = vsel %vm1152, %v1120, %v1184
        %v1217 = vsel %vm1153, %v1121, %v1185
        %v1218 = vsel %vm1154, %v1122, %v1186
        %v1219 = vsel %vm1155, %v1123, %v1187
        %v1220 = vsel %vm1156, %v1124, %v1188
        %v1221 = vsel %vm1157, %v1125, %v1189
        %v1222 = vpack.c.bf16 %v1191, %v1190
        %v1223 = vpack.c.bf16 %v1193, %v1192
        %v1224 = vpack.c.bf16 %v1195, %v1194
        %v1225 = vpack.c.bf16 %v1197, %v1196
        %v1226 = vpack.c.bf16 %v1199, %v1198
        %v1227 = vpack.c.bf16 %v1201, %v1200
        %v1228 = vpack.c.bf16 %v1203, %v1202
        %v1229 = vpack.c.bf16 %v1205, %v1204
        %v1230 = vpack.c.bf16 %v1207, %v1206
        %v1231 = vpack.c.bf16 %v1209, %v1208
        %v1232 = vpack.c.bf16 %v1211, %v1210
        %v1233 = vpack.c.bf16 %v1213, %v1212
        %v1234 = vpack.c.bf16 %v1215, %v1214
        %v1235 = vpack.c.bf16 %v1217, %v1216
        %v1236 = vpack.c.bf16 %v1219, %v1218
        %v1237 = vpack.c.bf16 %v1221, %v1220
        %v1238 = vld [vmem:[#allocation8] sm:$0xff]
        %v1239 = vld [vmem:[#allocation8 + $0x8] sm:$0xff]
        %v1240 = vld [vmem:[#allocation8 + $0x10] sm:$0xff]
        %v1241 = vld [vmem:[#allocation8 + $0x18] sm:$0xff]
        %v1242 = vld [vmem:[#allocation8 + $0x20] sm:$0xff]
        %v1243 = vld [vmem:[#allocation8 + $0x28] sm:$0xff]
        %v1244 = vld [vmem:[#allocation8 + $0x30] sm:$0xff]
        %v1245 = vld [vmem:[#allocation8 + $0x38] sm:$0xff]
        %v1246 = vunpack.c.l.s8.bf16 %v1238
        %v1247 = vunpack.c.l.s8.bf16 %v1239
        %v1248 = vunpack.c.h.s8.bf16 %v1238
        %v1249 = vunpack.c.h.s8.bf16 %v1239
        %v1250 = vunpack.c.l.s8.bf16 %v1240
        %v1251 = vunpack.c.l.s8.bf16 %v1241
        %v1252 = vunpack.c.h.s8.bf16 %v1240
        %v1253 = vunpack.c.h.s8.bf16 %v1241
        %v1254 = vunpack.c.l.s8.bf16 %v1242
        %v1255 = vunpack.c.l.s8.bf16 %v1243
        %v1256 = vunpack.c.h.s8.bf16 %v1242
        %v1257 = vunpack.c.h.s8.bf16 %v1243
        %v1258 = vunpack.c.l.s8.bf16 %v1244
        %v1259 = vunpack.c.l.s8.bf16 %v1245
        %v1260 = vunpack.c.h.s8.bf16 %v1244
        %v1261 = vunpack.c.h.s8.bf16 %v1245
        %1262 = vmatprep.subr.bf16.mxu0 %v1247
        %1263 = vmatpush1.bf16.msra.mxu0 %v1246
        %1264 = vmatprep.subr.bf16.mxu0 %v1249
        %1265 = vmatpush1.bf16.msra.mxu0 %v1248
        %1266 = vmatprep.subr.bf16.mxu0 %v1251
        %1267 = vmatpush1.bf16.msra.mxu0 %v1250
        %1268 = vmatprep.subr.bf16.mxu0 %v1253
        %1269 = vmatpush1.bf16.msra.mxu0 %v1252
        %1270 = vmatprep.subr.bf16.mxu0 %v1255
        %1271 = vmatpush1.bf16.msra.mxu0 %v1254
        %1272 = vmatprep.subr.bf16.mxu0 %v1257
        %1273 = vmatpush1.bf16.msra.mxu0 %v1256
        %1274 = vmatprep.subr.bf16.mxu0 %v1259
        %1275 = vmatpush1.bf16.msra.mxu0 %v1258
        %1276 = vmatprep.subr.bf16.mxu0 %v1261
        %1277 = vmatpush1.bf16.msra.mxu0 %v1260
        %1278 = vmatprep.subr.bf16.mxu0 0
        %1279 = vmatpush1.bf16.msra.mxu0 0
        %1280 = vmatprep.subr.bf16.mxu0 0
        %1281 = vmatpush1.bf16.msra.mxu0 0
        %1282 = vmatprep.subr.bf16.mxu0 0
        %1283 = vmatpush1.bf16.msra.mxu0 0
        %1284 = vmatprep.subr.bf16.mxu0 0
        %1285 = vmatpush1.bf16.msra.mxu0 0
        %1286 = vmatprep.subr.bf16.mxu0 0
        %1287 = vmatpush1.bf16.msra.mxu0 0
        %1288 = vmatprep.subr.bf16.mxu0 0
        %1289 = vmatpush1.bf16.msra.mxu0 0
        %1290 = vmatprep.subr.bf16.mxu0 0
        %1291 = vmatpush1.bf16.msra.mxu0 0
        %1292 = vmatprep.subr.bf16.mxu0 0
        %1293 = vmatpush1.bf16.msra.mxu0 0
        %1294 = vmatprep.mubr.bf16.mxu0 0
        %1295 = vmatmul.mubr.bf16.gmra.mrb[0].mxu0 %v1222
        %v1296 = vpop.f32.mrb[0].mxu0
        %v1297 = vadd.f32 0.0, %v1296
        %v1298 = vpop.f32.mrb[0].mxu0
        %v1299 = vadd.f32 0.0, %v1298
        %v1300 = vpop.f32.mrb[0].mxu0
        %v1301 = vadd.f32 0.0, %v1300
        %v1302 = vpop.f32.mrb[0].mxu0
        %v1303 = vadd.f32 0.0, %v1302
        %1304 = vmatprep.mubr.bf16.mxu0 0
        %1305 = vmatmul.mubr.bf16.gmra.mrb[0].mxu0 %v1223
        %v1306 = vpop.f32.mrb[0].mxu0
        %v1307 = vadd.f32 0.0, %v1306
        %v1308 = vpop.f32.mrb[0].mxu0
        %v1309 = vadd.f32 0.0, %v1308
        %v1310 = vpop.f32.mrb[0].mxu0
        %v1311 = vadd.f32 0.0, %v1310
        %v1312 = vpop.f32.mrb[0].mxu0
        %v1313 = vadd.f32 0.0, %v1312
        %1314 = vmatprep.mubr.bf16.mxu0 0
        %1315 = vmatmul.mubr.bf16.gmra.mrb[0].mxu0 %v1224
        %v1316 = vpop.f32.mrb[0].mxu0
        %v1317 = vadd.f32 0.0, %v1316
        %v1318 = vpop.f32.mrb[0].mxu0
        %v1319 = vadd.f32 0.0, %v1318
        %v1320 = vpop.f32.mrb[0].mxu0
        %v1321 = vadd.f32 0.0, %v1320
        %v1322 = vpop.f32.mrb[0].mxu0
        %v1323 = vadd.f32 0.0, %v1322
        %1324 = vmatprep.mubr.bf16.mxu0 0
        %1325 = vmatmul.mubr.bf16.gmra.mrb[0].mxu0 %v1225
        %v1326 = vpop.f32.mrb[0].mxu0
        %v1327 = vadd.f32 0.0, %v1326
        %v1328 = vpop.f32.mrb[0].mxu0
        %v1329 = vadd.f32 0.0, %v1328
        %v1330 = vpop.f32.mrb[0].mxu0
        %v1331 = vadd.f32 0.0, %v1330
        %v1332 = vpop.f32.mrb[0].mxu0
        %v1333 = vadd.f32 0.0, %v1332
        %1334 = vmatprep.mubr.bf16.mxu0 0
        %1335 = vmatmul.mubr.bf16.gmra.mrb[0].mxu0 %v1226
        %v1336 = vpop.f32.mrb[0].mxu0
        %v1337 = vadd.f32 0.0, %v1336
        %v1338 = vpop.f32.mrb[0].mxu0
        %v1339 = vadd.f32 0.0, %v1338
        %v1340 = vpop.f32.mrb[0].mxu0
        %v1341 = vadd.f32 0.0, %v1340
        %v1342 = vpop.f32.mrb[0].mxu0
        %v1343 = vadd.f32 0.0, %v1342
        %1344 = vmatprep.mubr.bf16.mxu0 0
        %1345 = vmatmul.mubr.bf16.gmra.mrb[0].mxu0 %v1227
        %v1346 = vpop.f32.mrb[0].mxu0
        %v1347 = vadd.f32 0.0, %v1346
        %v1348 = vpop.f32.mrb[0].mxu0
        %v1349 = vadd.f32 0.0, %v1348
        %v1350 = vpop.f32.mrb[0].mxu0
        %v1351 = vadd.f32 0.0, %v1350
        %v1352 = vpop.f32.mrb[0].mxu0
        %v1353 = vadd.f32 0.0, %v1352
        %1354 = vmatprep.mubr.bf16.mxu0 0
        %1355 = vmatmul.mubr.bf16.gmra.mrb[0].mxu0 %v1228
        %v1356 = vpop.f32.mrb[0].mxu0
        %v1357 = vadd.f32 0.0, %v1356
        %v1358 = vpop.f32.mrb[0].mxu0
        %v1359 = vadd.f32 0.0, %v1358
        %v1360 = vpop.f32.mrb[0].mxu0
        %v1361 = vadd.f32 0.0, %v1360
        %v1362 = vpop.f32.mrb[0].mxu0
        %v1363 = vadd.f32 0.0, %v1362
        %1364 = vmatprep.mubr.bf16.mxu0 0
        %1365 = vmatmul.mubr.bf16.gmra.mrb[0].mxu0 %v1229
        %v1366 = vpop.f32.mrb[0].mxu0
        %v1367 = vadd.f32 0.0, %v1366
        %v1368 = vpop.f32.mrb[0].mxu0
        %v1369 = vadd.f32 0.0, %v1368
        %v1370 = vpop.f32.mrb[0].mxu0
        %v1371 = vadd.f32 0.0, %v1370
        %v1372 = vpop.f32.mrb[0].mxu0
        %v1373 = vadd.f32 0.0, %v1372
        %1374 = vmatprep.mubr.bf16.mxu0 0
        %1375 = vmatmul.mubr.bf16.gmra.mrb[0].mxu0 %v1230
        %v1376 = vpop.f32.mrb[0].mxu0
        %v1377 = vadd.f32 0.0, %v1376
        %v1378 = vpop.f32.mrb[0].mxu0
        %v1379 = vadd.f32 0.0, %v1378
        %v1380 = vpop.f32.mrb[0].mxu0
        %v1381 = vadd.f32 0.0, %v1380
        %v1382 = vpop.f32.mrb[0].mxu0
        %v1383 = vadd.f32 0.0, %v1382
        %1384 = vmatprep.mubr.bf16.mxu0 0
        %1385 = vmatmul.mubr.bf16.gmra.mrb[0].mxu0 %v1231
        %v1386 = vpop.f32.mrb[0].mxu0
        %v1387 = vadd.f32 0.0, %v1386
        %v1388 = vpop.f32.mrb[0].mxu0
        %v1389 = vadd.f32 0.0, %v1388
        %v1390 = vpop.f32.mrb[0].mxu0
        %v1391 = vadd.f32 0.0, %v1390
        %v1392 = vpop.f32.mrb[0].mxu0
        %v1393 = vadd.f32 0.0, %v1392
        %1394 = vmatprep.mubr.bf16.mxu0 0
        %1395 = vmatmul.mubr.bf16.gmra.mrb[0].mxu0 %v1232
        %v1396 = vpop.f32.mrb[0].mxu0
        %v1397 = vadd.f32 0.0, %v1396
        %v1398 = vpop.f32.mrb[0].mxu0
        %v1399 = vadd.f32 0.0, %v1398
        %v1400 = vpop.f32.mrb[0].mxu0
        %v1401 = vadd.f32 0.0, %v1400
        %v1402 = vpop.f32.mrb[0].mxu0
        %v1403 = vadd.f32 0.0, %v1402
        %1404 = vmatprep.mubr.bf16.mxu0 0
        %1405 = vmatmul.mubr.bf16.gmra.mrb[0].mxu0 %v1233
        %v1406 = vpop.f32.mrb[0].mxu0
        %v1407 = vadd.f32 0.0, %v1406
        %v1408 = vpop.f32.mrb[0].mxu0
        %v1409 = vadd.f32 0.0, %v1408
        %v1410 = vpop.f32.mrb[0].mxu0
        %v1411 = vadd.f32 0.0, %v1410
        %v1412 = vpop.f32.mrb[0].mxu0
        %v1413 = vadd.f32 0.0, %v1412
        %1414 = vmatprep.mubr.bf16.mxu0 0
        %1415 = vmatmul.mubr.bf16.gmra.mrb[0].mxu0 %v1234
        %v1416 = vpop.f32.mrb[0].mxu0
        %v1417 = vadd.f32 0.0, %v1416
        %v1418 = vpop.f32.mrb[0].mxu0
        %v1419 = vadd.f32 0.0, %v1418
        %v1420 = vpop.f32.mrb[0].mxu0
        %v1421 = vadd.f32 0.0, %v1420
        %v1422 = vpop.f32.mrb[0].mxu0
        %v1423 = vadd.f32 0.0, %v1422
        %1424 = vmatprep.mubr.bf16.mxu0 0
        %1425 = vmatmul.mubr.bf16.gmra.mrb[0].mxu0 %v1235
        %v1426 = vpop.f32.mrb[0].mxu0
        %v1427 = vadd.f32 0.0, %v1426
        %v1428 = vpop.f32.mrb[0].mxu0
        %v1429 = vadd.f32 0.0, %v1428
        %v1430 = vpop.f32.mrb[0].mxu0
        %v1431 = vadd.f32 0.0, %v1430
        %v1432 = vpop.f32.mrb[0].mxu0
        %v1433 = vadd.f32 0.0, %v1432
        %1434 = vmatprep.mubr.bf16.mxu0 0
        %1435 = vmatmul.mubr.bf16.gmra.mrb[0].mxu0 %v1236
        %v1436 = vpop.f32.mrb[0].mxu0
        %v1437 = vadd.f32 0.0, %v1436
        %v1438 = vpop.f32.mrb[0].mxu0
        %v1439 = vadd.f32 0.0, %v1438
        %v1440 = vpop.f32.mrb[0].mxu0
        %v1441 = vadd.f32 0.0, %v1440
        %v1442 = vpop.f32.mrb[0].mxu0
        %v1443 = vadd.f32 0.0, %v1442
        %1444 = vmatprep.mubr.bf16.mxu0 0
        %1445 = vmatmul.mubr.bf16.gmra.mrb[0].mxu0 %v1237
        %v1446 = vpop.f32.mrb[0].mxu0
        %v1447 = vadd.f32 0.0, %v1446
        %v1448 = vpop.f32.mrb[0].mxu0
        %v1449 = vadd.f32 0.0, %v1448
        %v1450 = vpop.f32.mrb[0].mxu0
        %v1451 = vadd.f32 0.0, %v1450
        %v1452 = vpop.f32.mrb[0].mxu0
        %v1453 = vadd.f32 0.0, %v1452
        %1454 = vdwg.mxu0
        %v1455 = vld [vmem:[#allocation10] sm:$0x3]
        %v1456 = vld [vmem:[#allocation11] sm:$0x3]
        %v1457 = vld [vmem:[#allocation13] sm:$0x3]
        %v1458 = vadd.f32 %v1297, %v1301
        %v1459 = vadd.f32 %v1458, %v1307
        %v1460 = vadd.f32 %v1459, %v1311
        %v1461 = vadd.f32 %v1460, %v1317
        %v1462 = vadd.f32 %v1461, %v1321
        %v1463 = vadd.f32 %v1462, %v1327
        %v1464 = vadd.f32 %v1463, %v1331
        %v1465 = vadd.f32 %v1464, %v1337
        %v1466 = vadd.f32 %v1465, %v1341
        %v1467 = vadd.f32 %v1466, %v1347
        %v1468 = vadd.f32 %v1467, %v1351
        %v1469 = vadd.f32 %v1468, %v1357
        %v1470 = vadd.f32 %v1469, %v1361
        %v1471 = vadd.f32 %v1470, %v1367
        %v1472 = vadd.f32 %v1471, %v1371
        %v1473 = vadd.f32 %v1472, %v1377
        %v1474 = vadd.f32 %v1473, %v1381
        %v1475 = vadd.f32 %v1474, %v1387
        %v1476 = vadd.f32 %v1475, %v1391
        %v1477 = vadd.f32 %v1476, %v1397
        %v1478 = vadd.f32 %v1477, %v1401
        %v1479 = vadd.f32 %v1478, %v1407
        %v1480 = vadd.f32 %v1479, %v1411
        %v1481 = vadd.f32 %v1480, %v1417
        %v1482 = vadd.f32 %v1481, %v1421
        %v1483 = vadd.f32 %v1482, %v1427
        %v1484 = vadd.f32 %v1483, %v1431
        %v1485 = vadd.f32 %v1484, %v1437
        %v1486 = vadd.f32 %v1485, %v1441
        %v1487 = vadd.f32 %v1486, %v1447
        %v1488 = vadd.f32 %v1487, %v1451
        %v1489 = vrot.slane %v1488, 4
        %v1490 = vadd.f32 %v1488, %v1489
        %v1491 = vrot.slane %v1490, 2
        %v1492 = vadd.f32 %v1490, %v1491
        %v1493 = vrot.slane %v1492, 1
        %v1494 = vadd.f32 %v1492, %v1493
        %v1495 = vadd.f32 %v1299, %v1303
        %v1496 = vadd.f32 %v1495, %v1309
        %v1497 = vadd.f32 %v1496, %v1313
        %v1498 = vadd.f32 %v1497, %v1319
        %v1499 = vadd.f32 %v1498, %v1323
        %v1500 = vadd.f32 %v1499, %v1329
        %v1501 = vadd.f32 %v1500, %v1333
        %v1502 = vadd.f32 %v1501, %v1339
        %v1503 = vadd.f32 %v1502, %v1343
        %v1504 = vadd.f32 %v1503, %v1349
        %v1505 = vadd.f32 %v1504, %v1353
        %v1506 = vadd.f32 %v1505, %v1359
        %v1507 = vadd.f32 %v1506, %v1363
        %v1508 = vadd.f32 %v1507, %v1369
        %v1509 = vadd.f32 %v1508, %v1373
        %v1510 = vadd.f32 %v1509, %v1379
        %v1511 = vadd.f32 %v1510, %v1383
        %v1512 = vadd.f32 %v1511, %v1389
        %v1513 = vadd.f32 %v1512, %v1393
        %v1514 = vadd.f32 %v1513, %v1399
        %v1515 = vadd.f32 %v1514, %v1403
        %v1516 = vadd.f32 %v1515, %v1409
        %v1517 = vadd.f32 %v1516, %v1413
        %v1518 = vadd.f32 %v1517, %v1419
        %v1519 = vadd.f32 %v1518, %v1423
        %v1520 = vadd.f32 %v1519, %v1429
        %v1521 = vadd.f32 %v1520, %v1433
        %v1522 = vadd.f32 %v1521, %v1439
        %v1523 = vadd.f32 %v1522, %v1443
        %v1524 = vadd.f32 %v1523, %v1449
        %v1525 = vadd.f32 %v1524, %v1453
        %v1526 = vrot.slane %v1525, 4
        %v1527 = vadd.f32 %v1525, %v1526
        %v1528 = vrot.slane %v1527, 2
        %v1529 = vadd.f32 %v1527, %v1528
        %v1530 = vrot.slane %v1529, 1
        %v1531 = vadd.f32 %v1529, %v1530
        %v1532 = vrcp.pop 256.0
        %v1533 = vmul.f32 %v1494, %v1532
        %v1534 = vmul.f32 %v1531, %v1532
        %v1535 = vmul.f32 %v1297, %v1297
        %v1536 = vmul.f32 %v1299, %v1299
        %v1537 = vmul.f32 %v1301, %v1301
        %v1538 = vmul.f32 %v1303, %v1303
        %v1539 = vmul.f32 %v1307, %v1307
        %v1540 = vmul.f32 %v1309, %v1309
        %v1541 = vmul.f32 %v1311, %v1311
        %v1542 = vmul.f32 %v1313, %v1313
        %v1543 = vmul.f32 %v1317, %v1317
        %v1544 = vmul.f32 %v1319, %v1319
        %v1545 = vmul.f32 %v1321, %v1321
        %v1546 = vmul.f32 %v1323, %v1323
        %v1547 = vmul.f32 %v1327, %v1327
        %v1548 = vmul.f32 %v1329, %v1329
        %v1549 = vmul.f32 %v1331, %v1331
        %v1550 = vmul.f32 %v1333, %v1333
        %v1551 = vmul.f32 %v1337, %v1337
        %v1552 = vmul.f32 %v1339, %v1339
        %v1553 = vmul.f32 %v1341, %v1341
        %v1554 = vmul.f32 %v1343, %v1343
        %v1555 = vmul.f32 %v1347, %v1347
        %v1556 = vmul.f32 %v1349, %v1349
        %v1557 = vmul.f32 %v1351, %v1351
        %v1558 = vmul.f32 %v1353, %v1353
        %v1559 = vmul.f32 %v1357, %v1357
        %v1560 = vmul.f32 %v1359, %v1359
        %v1561 = vmul.f32 %v1361, %v1361
        %v1562 = vmul.f32 %v1363, %v1363
        %v1563 = vmul.f32 %v1367, %v1367
        %v1564 = vmul.f32 %v1369, %v1369
        %v1565 = vmul.f32 %v1371, %v1371
        %v1566 = vmul.f32 %v1373, %v1373
        %v1567 = vmul.f32 %v1377, %v1377
        %v1568 = vmul.f32 %v1379, %v1379
        %v1569 = vmul.f32 %v1381, %v1381
        %v1570 = vmul.f32 %v1383, %v1383
        %v1571 = vmul.f32 %v1387, %v1387
        %v1572 = vmul.f32 %v1389, %v1389
        %v1573 = vmul.f32 %v1391, %v1391
        %v1574 = vmul.f32 %v1393, %v1393
        %v1575 = vmul.f32 %v1397, %v1397
        %v1576 = vmul.f32 %v1399, %v1399
        %v1577 = vmul.f32 %v1401, %v1401
        %v1578 = vmul.f32 %v1403, %v1403
        %v1579 = vmul.f32 %v1407, %v1407
        %v1580 = vmul.f32 %v1409, %v1409
        %v1581 = vmul.f32 %v1411, %v1411
        %v1582 = vmul.f32 %v1413, %v1413
        %v1583 = vmul.f32 %v1417, %v1417
        %v1584 = vmul.f32 %v1419, %v1419
        %v1585 = vmul.f32 %v1421, %v1421
        %v1586 = vmul.f32 %v1423, %v1423
        %v1587 = vmul.f32 %v1427, %v1427
        %v1588 = vmul.f32 %v1429, %v1429
        %v1589 = vmul.f32 %v1431, %v1431
        %v1590 = vmul.f32 %v1433, %v1433
        %v1591 = vmul.f32 %v1437, %v1437
        %v1592 = vmul.f32 %v1439, %v1439
        %v1593 = vmul.f32 %v1441, %v1441
        %v1594 = vmul.f32 %v1443, %v1443
        %v1595 = vmul.f32 %v1447, %v1447
        %v1596 = vmul.f32 %v1449, %v1449
        %v1597 = vmul.f32 %v1451, %v1451
        %v1598 = vmul.f32 %v1453, %v1453
        %v1599 = vadd.f32 %v1535, %v1537
        %v1600 = vadd.f32 %v1599, %v1539
        %v1601 = vadd.f32 %v1600, %v1541
        %v1602 = vadd.f32 %v1601, %v1543
        %v1603 = vadd.f32 %v1602, %v1545
        %v1604 = vadd.f32 %v1603, %v1547
        %v1605 = vadd.f32 %v1604, %v1549
        %v1606 = vadd.f32 %v1605, %v1551
        %v1607 = vadd.f32 %v1606, %v1553
        %v1608 = vadd.f32 %v1607, %v1555
        %v1609 = vadd.f32 %v1608, %v1557
        %v1610 = vadd.f32 %v1609, %v1559
        %v1611 = vadd.f32 %v1610, %v1561
        %v1612 = vadd.f32 %v1611, %v1563
        %v1613 = vadd.f32 %v1612, %v1565
        %v1614 = vadd.f32 %v1613, %v1567
        %v1615 = vadd.f32 %v1614, %v1569
        %v1616 = vadd.f32 %v1615, %v1571
        %v1617 = vadd.f32 %v1616, %v1573
        %v1618 = vadd.f32 %v1617, %v1575
        %v1619 = vadd.f32 %v1618, %v1577
        %v1620 = vadd.f32 %v1619, %v1579
        %v1621 = vadd.f32 %v1620, %v1581
        %v1622 = vadd.f32 %v1621, %v1583
        %v1623 = vadd.f32 %v1622, %v1585
        %v1624 = vadd.f32 %v1623, %v1587
        %v1625 = vadd.f32 %v1624, %v1589
        %v1626 = vadd.f32 %v1625, %v1591
        %v1627 = vadd.f32 %v1626, %v1593
        %v1628 = vadd.f32 %v1627, %v1595
        %v1629 = vadd.f32 %v1628, %v1597
        %v1630 = vrot.slane %v1629, 4
        %v1631 = vadd.f32 %v1629, %v1630
        %v1632 = vrot.slane %v1631, 2
        %v1633 = vadd.f32 %v1631, %v1632
        %v1634 = vrot.slane %v1633, 1
        %v1635 = vadd.f32 %v1633, %v1634
        %v1636 = vadd.f32 %v1536, %v1538
        %v1637 = vadd.f32 %v1636, %v1540
        %v1638 = vadd.f32 %v1637, %v1542
        %v1639 = vadd.f32 %v1638, %v1544
        %v1640 = vadd.f32 %v1639, %v1546
        %v1641 = vadd.f32 %v1640, %v1548
        %v1642 = vadd.f32 %v1641, %v1550
        %v1643 = vadd.f32 %v1642, %v1552
        %v1644 = vadd.f32 %v1643, %v1554
        %v1645 = vadd.f32 %v1644, %v1556
        %v1646 = vadd.f32 %v1645, %v1558
        %v1647 = vadd.f32 %v1646, %v1560
        %v1648 = vadd.f32 %v1647, %v1562
        %v1649 = vadd.f32 %v1648, %v1564
        %v1650 = vadd.f32 %v1649, %v1566
        %v1651 = vadd.f32 %v1650, %v1568
        %v1652 = vadd.f32 %v1651, %v1570
        %v1653 = vadd.f32 %v1652, %v1572
        %v1654 = vadd.f32 %v1653, %v1574
        %v1655 = vadd.f32 %v1654, %v1576
        %v1656 = vadd.f32 %v1655, %v1578
        %v1657 = vadd.f32 %v1656, %v1580
        %v1658 = vadd.f32 %v1657, %v1582
        %v1659 = vadd.f32 %v1658, %v1584
        %v1660 = vadd.f32 %v1659, %v1586
        %v1661 = vadd.f32 %v1660, %v1588
        %v1662 = vadd.f32 %v1661, %v1590
        %v1663 = vadd.f32 %v1662, %v1592
        %v1664 = vadd.f32 %v1663, %v1594
        %v1665 = vadd.f32 %v1664, %v1596
        %v1666 = vadd.f32 %v1665, %v1598
        %v1667 = vrot.slane %v1666, 4
        %v1668 = vadd.f32 %v1666, %v1667
        %v1669 = vrot.slane %v1668, 2
        %v1670 = vadd.f32 %v1668, %v1669
        %v1671 = vrot.slane %v1670, 1
        %v1672 = vadd.f32 %v1670, %v1671
        %v1673 = vmul.f32 %v1635, %v1532
        %v1674 = vmul.f32 %v1672, %v1532
        %v1675 = vmul.f32 %v1533, %v1533
        %v1676 = vmul.f32 %v1534, %v1534
        %v1677 = vsub.f32 %v1673, %v1675
        %v1678 = vsub.f32 %v1674, %v1676
        %v1679 = vmul.f32 %v1456, %v1455
        %v1680 = vmul.f32 %v1455, %v1455
        %v1682 = vlaneseq
        %v1683 = vshrl.u32 %v1682, 7
        %v1684 = vsub.s32 0, %v1683
        %v1685 = vrot.slane %v1680, %v1684
        %v1686 = vlaneseq
        %v1687 = vshrl.u32 %v1686, 7
        %v1688 = vsub.s32 1, %v1687
        %v1689 = vrot.slane %v1680, %v1688
        %v1692 = vmul.f32 %v1677, %v1685
        %v1693 = vmul.f32 %v1678, %v1689
        %v1694 = vadd.f32 %v1692, 0.8
        %v1695 = vadd.f32 %v1693, 0.8
        %v1696 = vrsqrt.pop %v1694
        %v1697 = vrsqrt.pop %v1695
        %v1700 = vcombine.low %v1696, %v1697
        %v1702 = vunpack.c.l.s4 1966171168
        %v1703 = vunpack.c.0.s8 %v1702
        %v1704 = vlaneseq
        %v1705 = vshrl.u32 %v1704, 7
        %v1706 = vsub.s32 %v1703, %v1705
        %v1707 = vrot.slane %v1700, %v1706
        %v1709 = vunpack.c.l.s4 1966171168
        %v1710 = vunpack.c.0.s8 %v1709
        %v1711 = vlaneseq
        %v1712 = vshrl.u32 %v1711, 7
        %v1713 = vsub.s32 %v1710, %v1712
        %v1714 = vrot.slane %v1707, %v1713
        %v1716 = vmul.f32 %v1679, %v1714
        %v1718 = vlaneseq
        %v1719 = vshrl.u32 %v1718, 7
        %v1720 = vsub.s32 0, %v1719
        %v1721 = vrot.slane %v1716, %v1720
        %v1722 = vlaneseq
        %v1723 = vshrl.u32 %v1722, 7
        %v1724 = vsub.s32 1, %v1723
        %v1725 = vrot.slane %v1716, %v1724
        %v1728 = vmul.f32 %v1533, %v1721
        %v1729 = vmul.f32 %v1534, %v1725
        %v1732 = vcombine.low %v1728, %v1729
        %v1734 = vunpack.c.l.s4 1966171168
        %v1735 = vunpack.c.0.s8 %v1734
        %v1736 = vlaneseq
        %v1737 = vshrl.u32 %v1736, 7
        %v1738 = vsub.s32 %v1735, %v1737
        %v1739 = vrot.slane %v1732, %v1738
        %v1741 = vunpack.c.l.s4 1966171168
        %v1742 = vunpack.c.0.s8 %v1741
        %v1743 = vlaneseq
        %v1744 = vshrl.u32 %v1743, 7
        %v1745 = vsub.s32 %v1742, %v1744
        %v1746 = vrot.slane %v1739, %v1745
        %v1748 = vsub.f32 %v1457, %v1746
        %v1749 = vmul.f32 %v1297, %v1721
        %v1750 = vmul.f32 %v1299, %v1725
        %v1751 = vmul.f32 %v1301, %v1721
        %v1752 = vmul.f32 %v1303, %v1725
        %v1753 = vmul.f32 %v1307, %v1721
        %v1754 = vmul.f32 %v1309, %v1725
        %v1755 = vmul.f32 %v1311, %v1721
        %v1756 = vmul.f32 %v1313, %v1725
        %v1757 = vmul.f32 %v1317, %v1721
        %v1758 = vmul.f32 %v1319, %v1725
        %v1759 = vmul.f32 %v1321, %v1721
        %v1760 = vmul.f32 %v1323, %v1725
        %v1761 = vmul.f32 %v1327, %v1721
        %v1762 = vmul.f32 %v1329, %v1725
        %v1763 = vmul.f32 %v1331, %v1721
        %v1764 = vmul.f32 %v1333, %v1725
        %v1765 = vmul.f32 %v1337, %v1721
        %v1766 = vmul.f32 %v1339, %v1725
        %v1767 = vmul.f32 %v1341, %v1721
        %v1768 = vmul.f32 %v1343, %v1725
        %v1769 = vmul.f32 %v1347, %v1721
        %v1770 = vmul.f32 %v1349, %v1725
        %v1771 = vmul.f32 %v1351, %v1721
        %v1772 = vmul.f32 %v1353, %v1725
        %v1773 = vmul.f32 %v1357, %v1721
        %v1774 = vmul.f32 %v1359, %v1725
        %v1775 = vmul.f32 %v1361, %v1721
        %v1776 = vmul.f32 %v1363, %v1725
        %v1777 = vmul.f32 %v1367, %v1721
        %v1778 = vmul.f32 %v1369, %v1725
        %v1779 = vmul.f32 %v1371, %v1721
        %v1780 = vmul.f32 %v1373, %v1725
        %v1781 = vmul.f32 %v1377, %v1721
        %v1782 = vmul.f32 %v1379, %v1725
        %v1783 = vmul.f32 %v1381, %v1721
        %v1784 = vmul.f32 %v1383, %v1725
        %v1785 = vmul.f32 %v1387, %v1721
        %v1786 = vmul.f32 %v1389, %v1725
        %v1787 = vmul.f32 %v1391, %v1721
        %v1788 = vmul.f32 %v1393, %v1725
        %v1789 = vmul.f32 %v1397, %v1721
        %v1790 = vmul.f32 %v1399, %v1725
        %v1791 = vmul.f32 %v1401, %v1721
        %v1792 = vmul.f32 %v1403, %v1725
        %v1793 = vmul.f32 %v1407, %v1721
        %v1794 = vmul.f32 %v1409, %v1725
        %v1795 = vmul.f32 %v1411, %v1721
        %v1796 = vmul.f32 %v1413, %v1725
        %v1797 = vmul.f32 %v1417, %v1721
        %v1798 = vmul.f32 %v1419, %v1725
        %v1799 = vmul.f32 %v1421, %v1721
        %v1800 = vmul.f32 %v1423, %v1725
        %v1801 = vmul.f32 %v1427, %v1721
        %v1802 = vmul.f32 %v1429, %v1725
        %v1803 = vmul.f32 %v1431, %v1721
        %v1804 = vmul.f32 %v1433, %v1725
        %v1805 = vmul.f32 %v1437, %v1721
        %v1806 = vmul.f32 %v1439, %v1725
        %v1807 = vmul.f32 %v1441, %v1721
        %v1808 = vmul.f32 %v1443, %v1725
        %v1809 = vmul.f32 %v1447, %v1721
        %v1810 = vmul.f32 %v1449, %v1725
        %v1811 = vmul.f32 %v1451, %v1721
        %v1812 = vmul.f32 %v1453, %v1725
        %v1814 = vlaneseq
        %v1815 = vshrl.u32 %v1814, 7
        %v1816 = vsub.s32 0, %v1815
        %v1817 = vrot.slane %v1748, %v1816
        %v1818 = vlaneseq
        %v1819 = vshrl.u32 %v1818, 7
        %v1820 = vsub.s32 1, %v1819
        %v1821 = vrot.slane %v1748, %v1820
        %v1824 = vadd.f32 %v1749, %v1817
        %v1825 = vadd.f32 %v1750, %v1821
        %v1826 = vadd.f32 %v1751, %v1817
        %v1827 = vadd.f32 %v1752, %v1821
        %v1828 = vadd.f32 %v1753, %v1817
        %v1829 = vadd.f32 %v1754, %v1821
        %v1830 = vadd.f32 %v1755, %v1817
        %v1831 = vadd.f32 %v1756, %v1821
        %v1832 = vadd.f32 %v1757, %v1817
        %v1833 = vadd.f32 %v1758, %v1821
        %v1834 = vadd.f32 %v1759, %v1817
        %v1835 = vadd.f32 %v1760, %v1821
        %v1836 = vadd.f32 %v1761, %v1817
        %v1837 = vadd.f32 %v1762, %v1821
        %v1838 = vadd.f32 %v1763, %v1817
        %v1839 = vadd.f32 %v1764, %v1821
        %v1840 = vadd.f32 %v1765, %v1817
        %v1841 = vadd.f32 %v1766, %v1821
        %v1842 = vadd.f32 %v1767, %v1817
        %v1843 = vadd.f32 %v1768, %v1821
        %v1844 = vadd.f32 %v1769, %v1817
        %v1845 = vadd.f32 %v1770, %v1821
        %v1846 = vadd.f32 %v1771, %v1817
        %v1847 = vadd.f32 %v1772, %v1821
        %v1848 = vadd.f32 %v1773, %v1817
        %v1849 = vadd.f32 %v1774, %v1821
        %v1850 = vadd.f32 %v1775, %v1817
        %v1851 = vadd.f32 %v1776, %v1821
        %v1852 = vadd.f32 %v1777, %v1817
        %v1853 = vadd.f32 %v1778, %v1821
        %v1854 = vadd.f32 %v1779, %v1817
        %v1855 = vadd.f32 %v1780, %v1821
        %v1856 = vadd.f32 %v1781, %v1817
        %v1857 = vadd.f32 %v1782, %v1821
        %v1858 = vadd.f32 %v1783, %v1817
        %v1859 = vadd.f32 %v1784, %v1821
        %v1860 = vadd.f32 %v1785, %v1817
        %v1861 = vadd.f32 %v1786, %v1821
        %v1862 = vadd.f32 %v1787, %v1817
        %v1863 = vadd.f32 %v1788, %v1821
        %v1864 = vadd.f32 %v1789, %v1817
        %v1865 = vadd.f32 %v1790, %v1821
        %v1866 = vadd.f32 %v1791, %v1817
        %v1867 = vadd.f32 %v1792, %v1821
        %v1868 = vadd.f32 %v1793, %v1817
        %v1869 = vadd.f32 %v1794, %v1821
        %v1870 = vadd.f32 %v1795, %v1817
        %v1871 = vadd.f32 %v1796, %v1821
        %v1872 = vadd.f32 %v1797, %v1817
        %v1873 = vadd.f32 %v1798, %v1821
        %v1874 = vadd.f32 %v1799, %v1817
        %v1875 = vadd.f32 %v1800, %v1821
        %v1876 = vadd.f32 %v1801, %v1817
        %v1877 = vadd.f32 %v1802, %v1821
        %v1878 = vadd.f32 %v1803, %v1817
        %v1879 = vadd.f32 %v1804, %v1821
        %v1880 = vadd.f32 %v1805, %v1817
        %v1881 = vadd.f32 %v1806, %v1821
        %v1882 = vadd.f32 %v1807, %v1817
        %v1883 = vadd.f32 %v1808, %v1821
        %v1884 = vadd.f32 %v1809, %v1817
        %v1885 = vadd.f32 %v1810, %v1821
        %v1886 = vadd.f32 %v1811, %v1817
        %v1887 = vadd.f32 %v1812, %v1821
        %vm1888 = vcmp.gt.f32.partialorder %v1824, 0.0
        %vm1889 = vcmp.gt.f32.partialorder %v1825, 0.0
        %vm1890 = vcmp.gt.f32.partialorder %v1826, 0.0
        %vm1891 = vcmp.gt.f32.partialorder %v1827, 0.0
        %vm1892 = vcmp.gt.f32.partialorder %v1828, 0.0
        %vm1893 = vcmp.gt.f32.partialorder %v1829, 0.0
        %vm1894 = vcmp.gt.f32.partialorder %v1830, 0.0
        %vm1895 = vcmp.gt.f32.partialorder %v1831, 0.0
        %vm1896 = vcmp.gt.f32.partialorder %v1832, 0.0
        %vm1897 = vcmp.gt.f32.partialorder %v1833, 0.0
        %vm1898 = vcmp.gt.f32.partialorder %v1834, 0.0
        %vm1899 = vcmp.gt.f32.partialorder %v1835, 0.0
        %vm1900 = vcmp.gt.f32.partialorder %v1836, 0.0
        %vm1901 = vcmp.gt.f32.partialorder %v1837, 0.0
        %vm1902 = vcmp.gt.f32.partialorder %v1838, 0.0
        %vm1903 = vcmp.gt.f32.partialorder %v1839, 0.0
        %vm1904 = vcmp.gt.f32.partialorder %v1840, 0.0
        %vm1905 = vcmp.gt.f32.partialorder %v1841, 0.0
        %vm1906 = vcmp.gt.f32.partialorder %v1842, 0.0
        %vm1907 = vcmp.gt.f32.partialorder %v1843, 0.0
        %vm1908 = vcmp.gt.f32.partialorder %v1844, 0.0
        %vm1909 = vcmp.gt.f32.partialorder %v1845, 0.0
        %vm1910 = vcmp.gt.f32.partialorder %v1846, 0.0
        %vm1911 = vcmp.gt.f32.partialorder %v1847, 0.0
        %vm1912 = vcmp.gt.f32.partialorder %v1848, 0.0
        %vm1913 = vcmp.gt.f32.partialorder %v1849, 0.0
        %vm1914 = vcmp.gt.f32.partialorder %v1850, 0.0
        %vm1915 = vcmp.gt.f32.partialorder %v1851, 0.0
        %vm1916 = vcmp.gt.f32.partialorder %v1852, 0.0
        %vm1917 = vcmp.gt.f32.partialorder %v1853, 0.0
        %vm1918 = vcmp.gt.f32.partialorder %v1854, 0.0
        %vm1919 = vcmp.gt.f32.partialorder %v1855, 0.0
        %vm1920 = vcmp.gt.f32.partialorder %v1856, 0.0
        %vm1921 = vcmp.gt.f32.partialorder %v1857, 0.0
        %vm1922 = vcmp.gt.f32.partialorder %v1858, 0.0
        %vm1923 = vcmp.gt.f32.partialorder %v1859, 0.0
        %vm1924 = vcmp.gt.f32.partialorder %v1860, 0.0
        %vm1925 = vcmp.gt.f32.partialorder %v1861, 0.0
        %vm1926 = vcmp.gt.f32.partialorder %v1862, 0.0
        %vm1927 = vcmp.gt.f32.partialorder %v1863, 0.0
        %vm1928 = vcmp.gt.f32.partialorder %v1864, 0.0
        %vm1929 = vcmp.gt.f32.partialorder %v1865, 0.0
        %vm1930 = vcmp.gt.f32.partialorder %v1866, 0.0
        %vm1931 = vcmp.gt.f32.partialorder %v1867, 0.0
        %vm1932 = vcmp.gt.f32.partialorder %v1868, 0.0
        %vm1933 = vcmp.gt.f32.partialorder %v1869, 0.0
        %vm1934 = vcmp.gt.f32.partialorder %v1870, 0.0
        %vm1935 = vcmp.gt.f32.partialorder %v1871, 0.0
        %vm1936 = vcmp.gt.f32.partialorder %v1872, 0.0
        %vm1937 = vcmp.gt.f32.partialorder %v1873, 0.0
        %vm1938 = vcmp.gt.f32.partialorder %v1874, 0.0
        %vm1939 = vcmp.gt.f32.partialorder %v1875, 0.0
        %vm1940 = vcmp.gt.f32.partialorder %v1876, 0.0
        %vm1941 = vcmp.gt.f32.partialorder %v1877, 0.0
        %vm1942 = vcmp.gt.f32.partialorder %v1878, 0.0
        %vm1943 = vcmp.gt.f32.partialorder %v1879, 0.0
        %vm1944 = vcmp.gt.f32.partialorder %v1880, 0.0
        %vm1945 = vcmp.gt.f32.partialorder %v1881, 0.0
        %vm1946 = vcmp.gt.f32.partialorder %v1882, 0.0
        %vm1947 = vcmp.gt.f32.partialorder %v1883, 0.0
        %vm1948 = vcmp.gt.f32.partialorder %v1884, 0.0
        %vm1949 = vcmp.gt.f32.partialorder %v1885, 0.0
        %vm1950 = vcmp.gt.f32.partialorder %v1886, 0.0
        %vm1951 = vcmp.gt.f32.partialorder %v1887, 0.0
        %v1952 = vmul.f32 %v1824, 0.2
        %v1953 = vmul.f32 %v1825, 0.2
        %v1954 = vmul.f32 %v1826, 0.2
        %v1955 = vmul.f32 %v1827, 0.2
        %v1956 = vmul.f32 %v1828, 0.2
        %v1957 = vmul.f32 %v1829, 0.2
        %v1958 = vmul.f32 %v1830, 0.2
        %v1959 = vmul.f32 %v1831, 0.2
        %v1960 = vmul.f32 %v1832, 0.2
        %v1961 = vmul.f32 %v1833, 0.2
        %v1962 = vmul.f32 %v1834, 0.2
        %v1963 = vmul.f32 %v1835, 0.2
        %v1964 = vmul.f32 %v1836, 0.2
        %v1965 = vmul.f32 %v1837, 0.2
        %v1966 = vmul.f32 %v1838, 0.2
        %v1967 = vmul.f32 %v1839, 0.2
        %v1968 = vmul.f32 %v1840, 0.2
        %v1969 = vmul.f32 %v1841, 0.2
        %v1970 = vmul.f32 %v1842, 0.2
        %v1971 = vmul.f32 %v1843, 0.2
        %v1972 = vmul.f32 %v1844, 0.2
        %v1973 = vmul.f32 %v1845, 0.2
        %v1974 = vmul.f32 %v1846, 0.2
        %v1975 = vmul.f32 %v1847, 0.2
        %v1976 = vmul.f32 %v1848, 0.2
        %v1977 = vmul.f32 %v1849, 0.2
        %v1978 = vmul.f32 %v1850, 0.2
        %v1979 = vmul.f32 %v1851, 0.2
        %v1980 = vmul.f32 %v1852, 0.2
        %v1981 = vmul.f32 %v1853, 0.2
        %v1982 = vmul.f32 %v1854, 0.2
        %v1983 = vmul.f32 %v1855, 0.2
        %v1984 = vmul.f32 %v1856, 0.2
        %v1985 = vmul.f32 %v1857, 0.2
        %v1986 = vmul.f32 %v1858, 0.2
        %v1987 = vmul.f32 %v1859, 0.2
        %v1988 = vmul.f32 %v1860, 0.2
        %v1989 = vmul.f32 %v1861, 0.2
        %v1990 = vmul.f32 %v1862, 0.2
        %v1991 = vmul.f32 %v1863, 0.2
        %v1992 = vmul.f32 %v1864, 0.2
        %v1993 = vmul.f32 %v1865, 0.2
        %v1994 = vmul.f32 %v1866, 0.2
        %v1995 = vmul.f32 %v1867, 0.2
        %v1996 = vmul.f32 %v1868, 0.2
        %v1997 = vmul.f32 %v1869, 0.2
        %v1998 = vmul.f32 %v1870, 0.2
        %v1999 = vmul.f32 %v1871, 0.2
        %v2000 = vmul.f32 %v1872, 0.2
        %v2001 = vmul.f32 %v1873, 0.2
        %v2002 = vmul.f32 %v1874, 0.2
        %v2003 = vmul.f32 %v1875, 0.2
        %v2004 = vmul.f32 %v1876, 0.2
        %v2005 = vmul.f32 %v1877, 0.2
        %v2006 = vmul.f32 %v1878, 0.2
        %v2007 = vmul.f32 %v1879, 0.2
        %v2008 = vmul.f32 %v1880, 0.2
        %v2009 = vmul.f32 %v1881, 0.2
        %v2010 = vmul.f32 %v1882, 0.2
        %v2011 = vmul.f32 %v1883, 0.2
        %v2012 = vmul.f32 %v1884, 0.2
        %v2013 = vmul.f32 %v1885, 0.2
        %v2014 = vmul.f32 %v1886, 0.2
        %v2015 = vmul.f32 %v1887, 0.2
        %v2016 = vsel %vm1888, %v1824, %v1952
        %v2017 = vsel %vm1889, %v1825, %v1953
        %v2018 = vsel %vm1890, %v1826, %v1954
        %v2019 = vsel %vm1891, %v1827, %v1955
        %v2020 = vsel %vm1892, %v1828, %v1956
        %v2021 = vsel %vm1893, %v1829, %v1957
        %v2022 = vsel %vm1894, %v1830, %v1958
        %v2023 = vsel %vm1895, %v1831, %v1959
        %v2024 = vsel %vm1896, %v1832, %v1960
        %v2025 = vsel %vm1897, %v1833, %v1961
        %v2026 = vsel %vm1898, %v1834, %v1962
        %v2027 = vsel %vm1899, %v1835, %v1963
        %v2028 = vsel %vm1900, %v1836, %v1964
        %v2029 = vsel %vm1901, %v1837, %v1965
        %v2030 = vsel %vm1902, %v1838, %v1966
        %v2031 = vsel %vm1903, %v1839, %v1967
        %v2032 = vsel %vm1904, %v1840, %v1968
        %v2033 = vsel %vm1905, %v1841, %v1969
        %v2034 = vsel %vm1906, %v1842, %v1970
        %v2035 = vsel %vm1907, %v1843, %v1971
        %v2036 = vsel %vm1908, %v1844, %v1972
        %v2037 = vsel %vm1909, %v1845, %v1973
        %v2038 = vsel %vm1910, %v1846, %v1974
        %v2039 = vsel %vm1911, %v1847, %v1975
        %v2040 = vsel %vm1912, %v1848, %v1976
        %v2041 = vsel %vm1913, %v1849, %v1977
        %v2042 = vsel %vm1914, %v1850, %v1978
        %v2043 = vsel %vm1915, %v1851, %v1979
        %v2044 = vsel %vm1916, %v1852, %v1980
        %v2045 = vsel %vm1917, %v1853, %v1981
        %v2046 = vsel %vm1918, %v1854, %v1982
        %v2047 = vsel %vm1919, %v1855, %v1983
        %v2048 = vsel %vm1920, %v1856, %v1984
        %v2049 = vsel %vm1921, %v1857, %v1985
        %v2050 = vsel %vm1922, %v1858, %v1986
        %v2051 = vsel %vm1923, %v1859, %v1987
        %v2052 = vsel %vm1924, %v1860, %v1988
        %v2053 = vsel %vm1925, %v1861, %v1989
        %v2054 = vsel %vm1926, %v1862, %v1990
        %v2055 = vsel %vm1927, %v1863, %v1991
        %v2056 = vsel %vm1928, %v1864, %v1992
        %v2057 = vsel %vm1929, %v1865, %v1993
        %v2058 = vsel %vm1930, %v1866, %v1994
        %v2059 = vsel %vm1931, %v1867, %v1995
        %v2060 = vsel %vm1932, %v1868, %v1996
        %v2061 = vsel %vm1933, %v1869, %v1997
        %v2062 = vsel %vm1934, %v1870, %v1998
        %v2063 = vsel %vm1935, %v1871, %v1999
        %v2064 = vsel %vm1936, %v1872, %v2000
        %v2065 = vsel %vm1937, %v1873, %v2001
        %v2066 = vsel %vm1938, %v1874, %v2002
        %v2067 = vsel %vm1939, %v1875, %v2003
        %v2068 = vsel %vm1940, %v1876, %v2004
        %v2069 = vsel %vm1941, %v1877, %v2005
        %v2070 = vsel %vm1942, %v1878, %v2006
        %v2071 = vsel %vm1943, %v1879, %v2007
        %v2072 = vsel %vm1944, %v1880, %v2008
        %v2073 = vsel %vm1945, %v1881, %v2009
        %v2074 = vsel %vm1946, %v1882, %v2010
        %v2075 = vsel %vm1947, %v1883, %v2011
        %v2076 = vsel %vm1948, %v1884, %v2012
        %v2077 = vsel %vm1949, %v1885, %v2013
        %v2078 = vsel %vm1950, %v1886, %v2014
        %v2079 = vsel %vm1951, %v1887, %v2015
        %v2080 = vpack.c.bf16 %v2018, %v2016
        %v2081 = vpack.c.bf16 %v2019, %v2017
        %v2082 = vpack.c.bf16 %v2022, %v2020
        %v2083 = vpack.c.bf16 %v2023, %v2021
        %v2084 = vpack.c.bf16 %v2026, %v2024
        %v2085 = vpack.c.bf16 %v2027, %v2025
        %v2086 = vpack.c.bf16 %v2030, %v2028
        %v2087 = vpack.c.bf16 %v2031, %v2029
        %v2088 = vpack.c.bf16 %v2034, %v2032
        %v2089 = vpack.c.bf16 %v2035, %v2033
        %v2090 = vpack.c.bf16 %v2038, %v2036
        %v2091 = vpack.c.bf16 %v2039, %v2037
        %v2092 = vpack.c.bf16 %v2042, %v2040
        %v2093 = vpack.c.bf16 %v2043, %v2041
        %v2094 = vpack.c.bf16 %v2046, %v2044
        %v2095 = vpack.c.bf16 %v2047, %v2045
        %v2096 = vpack.c.bf16 %v2050, %v2048
        %v2097 = vpack.c.bf16 %v2051, %v2049
        %v2098 = vpack.c.bf16 %v2054, %v2052
        %v2099 = vpack.c.bf16 %v2055, %v2053
        %v2100 = vpack.c.bf16 %v2058, %v2056
        %v2101 = vpack.c.bf16 %v2059, %v2057
        %v2102 = vpack.c.bf16 %v2062, %v2060
        %v2103 = vpack.c.bf16 %v2063, %v2061
        %v2104 = vpack.c.bf16 %v2066, %v2064
        %v2105 = vpack.c.bf16 %v2067, %v2065
        %v2106 = vpack.c.bf16 %v2070, %v2068
        %v2107 = vpack.c.bf16 %v2071, %v2069
        %v2108 = vpack.c.bf16 %v2074, %v2072
        %v2109 = vpack.c.bf16 %v2075, %v2073
        %v2110 = vpack.c.bf16 %v2078, %v2076
        %v2111 = vpack.c.bf16 %v2079, %v2077
        %v2112 = vld [vmem:[#allocation14] sm:$0xff]
        %v2113 = vld [vmem:[#allocation14 + $0x8] sm:$0xff]
        %v2114 = vld [vmem:[#allocation14 + $0x10] sm:$0xff]
        %v2115 = vld [vmem:[#allocation14 + $0x18] sm:$0xff]
        %v2116 = vld [vmem:[#allocation14 + $0x20] sm:$0xff]
        %v2117 = vld [vmem:[#allocation14 + $0x28] sm:$0xff]
        %v2118 = vld [vmem:[#allocation14 + $0x30] sm:$0xff]
        %v2119 = vld [vmem:[#allocation14 + $0x38] sm:$0xff]
        %v2120 = vld [vmem:[#allocation14 + $0x40] sm:$0xff]
        %v2121 = vld [vmem:[#allocation14 + $0x48] sm:$0xff]
        %v2122 = vld [vmem:[#allocation14 + $0x50] sm:$0xff]
        %v2123 = vld [vmem:[#allocation14 + $0x58] sm:$0xff]
        %v2124 = vld [vmem:[#allocation14 + $0x60] sm:$0xff]
        %v2125 = vld [vmem:[#allocation14 + $0x68] sm:$0xff]
        %v2126 = vld [vmem:[#allocation14 + $0x70] sm:$0xff]
        %v2127 = vld [vmem:[#allocation14 + $0x78] sm:$0xff]
        %v2128 = vld [vmem:[#allocation14 + $0x80] sm:$0xff]
        %v2129 = vld [vmem:[#allocation14 + $0x88] sm:$0xff]
        %v2130 = vld [vmem:[#allocation14 + $0x90] sm:$0xff]
        %v2131 = vld [vmem:[#allocation14 + $0x98] sm:$0xff]
        %v2132 = vld [vmem:[#allocation14 + $0xa0] sm:$0xff]
        %v2133 = vld [vmem:[#allocation14 + $0xa8] sm:$0xff]
        %v2134 = vld [vmem:[#allocation14 + $0xb0] sm:$0xff]
        %v2135 = vld [vmem:[#allocation14 + $0xb8] sm:$0xff]
        %v2136 = vld [vmem:[#allocation14 + $0xc0] sm:$0xff]
        %v2137 = vld [vmem:[#allocation14 + $0xc8] sm:$0xff]
        %v2138 = vld [vmem:[#allocation14 + $0xd0] sm:$0xff]
        %v2139 = vld [vmem:[#allocation14 + $0xd8] sm:$0xff]
        %v2140 = vld [vmem:[#allocation14 + $0xe0] sm:$0xff]
        %v2141 = vld [vmem:[#allocation14 + $0xe8] sm:$0xff]
        %v2142 = vld [vmem:[#allocation14 + $0xf0] sm:$0xff]
        %v2143 = vld [vmem:[#allocation14 + $0xf8] sm:$0xff]
        %v2144 = vunpack.c.l.s8.bf16 %v2112
        %v2145 = vunpack.c.l.s8.bf16 %v2113
        %v2146 = vunpack.c.l.s8.bf16 %v2114
        %v2147 = vunpack.c.l.s8.bf16 %v2115
        %v2148 = vunpack.c.h.s8.bf16 %v2112
        %v2149 = vunpack.c.h.s8.bf16 %v2113
        %v2150 = vunpack.c.h.s8.bf16 %v2114
        %v2151 = vunpack.c.h.s8.bf16 %v2115
        %v2152 = vunpack.c.l.s8.bf16 %v2116
        %v2153 = vunpack.c.l.s8.bf16 %v2117
        %v2154 = vunpack.c.l.s8.bf16 %v2118
        %v2155 = vunpack.c.l.s8.bf16 %v2119
        %v2156 = vunpack.c.h.s8.bf16 %v2116
        %v2157 = vunpack.c.h.s8.bf16 %v2117
        %v2158 = vunpack.c.h.s8.bf16 %v2118
        %v2159 = vunpack.c.h.s8.bf16 %v2119
        %v2160 = vunpack.c.l.s8.bf16 %v2120
        %v2161 = vunpack.c.l.s8.bf16 %v2121
        %v2162 = vunpack.c.l.s8.bf16 %v2122
        %v2163 = vunpack.c.l.s8.bf16 %v2123
        %v2164 = vunpack.c.h.s8.bf16 %v2120
        %v2165 = vunpack.c.h.s8.bf16 %v2121
        %v2166 = vunpack.c.h.s8.bf16 %v2122
        %v2167 = vunpack.c.h.s8.bf16 %v2123
        %v2168 = vunpack.c.l.s8.bf16 %v2124
        %v2169 = vunpack.c.l.s8.bf16 %v2125
        %v2170 = vunpack.c.l.s8.bf16 %v2126
        %v2171 = vunpack.c.l.s8.bf16 %v2127
        %v2172 = vunpack.c.h.s8.bf16 %v2124
        %v2173 = vunpack.c.h.s8.bf16 %v2125
        %v2174 = vunpack.c.h.s8.bf16 %v2126
        %v2175 = vunpack.c.h.s8.bf16 %v2127
        %v2176 = vunpack.c.l.s8.bf16 %v2128
        %v2177 = vunpack.c.l.s8.bf16 %v2129
        %v2178 = vunpack.c.l.s8.bf16 %v2130
        %v2179 = vunpack.c.l.s8.bf16 %v2131
        %v2180 = vunpack.c.h.s8.bf16 %v2128
        %v2181 = vunpack.c.h.s8.bf16 %v2129
        %v2182 = vunpack.c.h.s8.bf16 %v2130
        %v2183 = vunpack.c.h.s8.bf16 %v2131
        %v2184 = vunpack.c.l.s8.bf16 %v2132
        %v2185 = vunpack.c.l.s8.bf16 %v2133
        %v2186 = vunpack.c.l.s8.bf16 %v2134
        %v2187 = vunpack.c.l.s8.bf16 %v2135
        %v2188 = vunpack.c.h.s8.bf16 %v2132
        %v2189 = vunpack.c.h.s8.bf16 %v2133
        %v2190 = vunpack.c.h.s8.bf16 %v2134
        %v2191 = vunpack.c.h.s8.bf16 %v2135
        %v2192 = vunpack.c.l.s8.bf16 %v2136
        %v2193 = vunpack.c.l.s8.bf16 %v2137
        %v2194 = vunpack.c.l.s8.bf16 %v2138
        %v2195 = vunpack.c.l.s8.bf16 %v2139
        %v2196 = vunpack.c.h.s8.bf16 %v2136
        %v2197 = vunpack.c.h.s8.bf16 %v2137
        %v2198 = vunpack.c.h.s8.bf16 %v2138
        %v2199 = vunpack.c.h.s8.bf16 %v2139
        %v2200 = vunpack.c.l.s8.bf16 %v2140
        %v2201 = vunpack.c.l.s8.bf16 %v2141
        %v2202 = vunpack.c.l.s8.bf16 %v2142
        %v2203 = vunpack.c.l.s8.bf16 %v2143
        %v2204 = vunpack.c.h.s8.bf16 %v2140
        %v2205 = vunpack.c.h.s8.bf16 %v2141
        %v2206 = vunpack.c.h.s8.bf16 %v2142
        %v2207 = vunpack.c.h.s8.bf16 %v2143
        %2208 = vmatprep.subr.bf16.mxu0 %v2145
        %2209 = vmatpush1.bf16.msra.mxu0 %v2144
        %2210 = vmatprep.subr.bf16.mxu0 %v2149
        %2211 = vmatpush1.bf16.msra.mxu0 %v2148
        %2212 = vmatprep.subr.bf16.mxu0 %v2153
        %2213 = vmatpush1.bf16.msra.mxu0 %v2152
        %2214 = vmatprep.subr.bf16.mxu0 %v2157
        %2215 = vmatpush1.bf16.msra.mxu0 %v2156
        %2216 = vmatprep.subr.bf16.mxu0 %v2161
        %2217 = vmatpush1.bf16.msra.mxu0 %v2160
        %2218 = vmatprep.subr.bf16.mxu0 %v2165
        %2219 = vmatpush1.bf16.msra.mxu0 %v2164
        %2220 = vmatprep.subr.bf16.mxu0 %v2169
        %2221 = vmatpush1.bf16.msra.mxu0 %v2168
        %2222 = vmatprep.subr.bf16.mxu0 %v2173
        %2223 = vmatpush1.bf16.msra.mxu0 %v2172
        %2224 = vmatprep.subr.bf16.mxu0 %v2177
        %2225 = vmatpush1.bf16.msra.mxu0 %v2176
        %2226 = vmatprep.subr.bf16.mxu0 %v2181
        %2227 = vmatpush1.bf16.msra.mxu0 %v2180
        %2228 = vmatprep.subr.bf16.mxu0 %v2185
        %2229 = vmatpush1.bf16.msra.mxu0 %v2184
        %2230 = vmatprep.subr.bf16.mxu0 %v2189
        %2231 = vmatpush1.bf16.msra.mxu0 %v2188
        %2232 = vmatprep.subr.bf16.mxu0 %v2193
        %2233 = vmatpush1.bf16.msra.mxu0 %v2192
        %2234 = vmatprep.subr.bf16.mxu0 %v2197
        %2235 = vmatpush1.bf16.msra.mxu0 %v2196
        %2236 = vmatprep.subr.bf16.mxu0 %v2201
        %2237 = vmatpush1.bf16.msra.mxu0 %v2200
        %2238 = vmatprep.subr.bf16.mxu0 %v2205
        %2239 = vmatpush1.bf16.msra.mxu0 %v2204
        %2240 = vmatprep.mubr.bf16.mxu0 %v2081
        %2241 = vmatmul.mubr.bf16.gmra.mrb[0].mxu0 %v2080
        %v2242 = vpop.f32.mrb[0].mxu0
        %v2243 = vadd.f32 0.0, %v2242
        %v2244 = vpop.f32.mrb[0].mxu0
        %v2245 = vadd.f32 0.0, %v2244
        %v2246 = vpop.f32.mrb[0].mxu0
        %v2247 = vadd.f32 0.0, %v2246
        %v2248 = vpop.f32.mrb[0].mxu0
        %v2249 = vadd.f32 0.0, %v2248
        %2250 = vmatprep.mubr.bf16.mxu0 %v2083
        %2251 = vmatmul.mubr.bf16.gmra.mrb[0].mxu0 %v2082
        %v2252 = vpop.f32.mrb[0].mxu0
        %v2253 = vadd.f32 0.0, %v2252
        %v2254 = vpop.f32.mrb[0].mxu0
        %v2255 = vadd.f32 0.0, %v2254
        %v2256 = vpop.f32.mrb[0].mxu0
        %v2257 = vadd.f32 0.0, %v2256
        %v2258 = vpop.f32.mrb[0].mxu0
        %v2259 = vadd.f32 0.0, %v2258
        %2260 = vmatprep.mubr.bf16.mxu0 %v2085
        %2261 = vmatmul.mubr.bf16.gmra.mrb[0].mxu0 %v2084
        %v2262 = vpop.f32.mrb[0].mxu0
        %v2263 = vadd.f32 0.0, %v2262
        %v2264 = vpop.f32.mrb[0].mxu0
        %v2265 = vadd.f32 0.0, %v2264
        %v2266 = vpop.f32.mrb[0].mxu0
        %v2267 = vadd.f32 0.0, %v2266
        %v2268 = vpop.f32.mrb[0].mxu0
        %v2269 = vadd.f32 0.0, %v2268
        %2270 = vmatprep.mubr.bf16.mxu0 %v2087
        %2271 = vmatmul.mubr.bf16.gmra.mrb[0].mxu0 %v2086
        %v2272 = vpop.f32.mrb[0].mxu0
        %v2273 = vadd.f32 0.0, %v2272
        %v2274 = vpop.f32.mrb[0].mxu0
        %v2275 = vadd.f32 0.0, %v2274
        %v2276 = vpop.f32.mrb[0].mxu0
        %v2277 = vadd.f32 0.0, %v2276
        %v2278 = vpop.f32.mrb[0].mxu0
        %v2279 = vadd.f32 0.0, %v2278
        %2280 = vmatprep.mubr.bf16.mxu0 %v2089
        %2281 = vmatmul.mubr.bf16.gmra.mrb[0].mxu0 %v2088
        %v2282 = vpop.f32.mrb[0].mxu0
        %v2283 = vadd.f32 0.0, %v2282
        %v2284 = vpop.f32.mrb[0].mxu0
        %v2285 = vadd.f32 0.0, %v2284
        %v2286 = vpop.f32.mrb[0].mxu0
        %v2287 = vadd.f32 0.0, %v2286
        %v2288 = vpop.f32.mrb[0].mxu0
        %v2289 = vadd.f32 0.0, %v2288
        %2290 = vmatprep.mubr.bf16.mxu0 %v2091
        %2291 = vmatmul.mubr.bf16.gmra.mrb[0].mxu0 %v2090
        %v2292 = vpop.f32.mrb[0].mxu0
        %v2293 = vadd.f32 0.0, %v2292
        %v2294 = vpop.f32.mrb[0].mxu0
        %v2295 = vadd.f32 0.0, %v2294
        %v2296 = vpop.f32.mrb[0].mxu0
        %v2297 = vadd.f32 0.0, %v2296
        %v2298 = vpop.f32.mrb[0].mxu0
        %v2299 = vadd.f32 0.0, %v2298
        %2300 = vmatprep.mubr.bf16.mxu0 %v2093
        %2301 = vmatmul.mubr.bf16.gmra.mrb[0].mxu0 %v2092
        %v2302 = vpop.f32.mrb[0].mxu0
        %v2303 = vadd.f32 0.0, %v2302
        %v2304 = vpop.f32.mrb[0].mxu0
        %v2305 = vadd.f32 0.0, %v2304
        %v2306 = vpop.f32.mrb[0].mxu0
        %v2307 = vadd.f32 0.0, %v2306
        %v2308 = vpop.f32.mrb[0].mxu0
        %v2309 = vadd.f32 0.0, %v2308
        %2310 = vmatprep.mubr.bf16.mxu0 %v2095
        %2311 = vmatmul.mubr.bf16.gmra.mrb[0].mxu0 %v2094
        %v2312 = vpop.f32.mrb[0].mxu0
        %v2313 = vadd.f32 0.0, %v2312
        %v2314 = vpop.f32.mrb[0].mxu0
        %v2315 = vadd.f32 0.0, %v2314
        %v2316 = vpop.f32.mrb[0].mxu0
        %v2317 = vadd.f32 0.0, %v2316
        %v2318 = vpop.f32.mrb[0].mxu0
        %v2319 = vadd.f32 0.0, %v2318
        %2320 = vmatprep.mubr.bf16.mxu0 %v2097
        %2321 = vmatmul.mubr.bf16.gmra.mrb[0].mxu0 %v2096
        %v2322 = vpop.f32.mrb[0].mxu0
        %v2323 = vadd.f32 0.0, %v2322
        %v2324 = vpop.f32.mrb[0].mxu0
        %v2325 = vadd.f32 0.0, %v2324
        %v2326 = vpop.f32.mrb[0].mxu0
        %v2327 = vadd.f32 0.0, %v2326
        %v2328 = vpop.f32.mrb[0].mxu0
        %v2329 = vadd.f32 0.0, %v2328
        %2330 = vmatprep.mubr.bf16.mxu0 %v2099
        %2331 = vmatmul.mubr.bf16.gmra.mrb[0].mxu0 %v2098
        %v2332 = vpop.f32.mrb[0].mxu0
        %v2333 = vadd.f32 0.0, %v2332
        %v2334 = vpop.f32.mrb[0].mxu0
        %v2335 = vadd.f32 0.0, %v2334
        %v2336 = vpop.f32.mrb[0].mxu0
        %v2337 = vadd.f32 0.0, %v2336
        %v2338 = vpop.f32.mrb[0].mxu0
        %v2339 = vadd.f32 0.0, %v2338
        %2340 = vmatprep.mubr.bf16.mxu0 %v2101
        %2341 = vmatmul.mubr.bf16.gmra.mrb[0].mxu0 %v2100
        %v2342 = vpop.f32.mrb[0].mxu0
        %v2343 = vadd.f32 0.0, %v2342
        %v2344 = vpop.f32.mrb[0].mxu0
        %v2345 = vadd.f32 0.0, %v2344
        %v2346 = vpop.f32.mrb[0].mxu0
        %v2347 = vadd.f32 0.0, %v2346
        %v2348 = vpop.f32.mrb[0].mxu0
        %v2349 = vadd.f32 0.0, %v2348
        %2350 = vmatprep.mubr.bf16.mxu0 %v2103
        %2351 = vmatmul.mubr.bf16.gmra.mrb[0].mxu0 %v2102
        %v2352 = vpop.f32.mrb[0].mxu0
        %v2353 = vadd.f32 0.0, %v2352
        %v2354 = vpop.f32.mrb[0].mxu0
        %v2355 = vadd.f32 0.0, %v2354
        %v2356 = vpop.f32.mrb[0].mxu0
        %v2357 = vadd.f32 0.0, %v2356
        %v2358 = vpop.f32.mrb[0].mxu0
        %v2359 = vadd.f32 0.0, %v2358
        %2360 = vmatprep.mubr.bf16.mxu0 %v2105
        %2361 = vmatmul.mubr.bf16.gmra.mrb[0].mxu0 %v2104
        %v2362 = vpop.f32.mrb[0].mxu0
        %v2363 = vadd.f32 0.0, %v2362
        %v2364 = vpop.f32.mrb[0].mxu0
        %v2365 = vadd.f32 0.0, %v2364
        %v2366 = vpop.f32.mrb[0].mxu0
        %v2367 = vadd.f32 0.0, %v2366
        %v2368 = vpop.f32.mrb[0].mxu0
        %v2369 = vadd.f32 0.0, %v2368
        %2370 = vmatprep.mubr.bf16.mxu0 %v2107
        %2371 = vmatmul.mubr.bf16.gmra.mrb[0].mxu0 %v2106
        %v2372 = vpop.f32.mrb[0].mxu0
        %v2373 = vadd.f32 0.0, %v2372
        %v2374 = vpop.f32.mrb[0].mxu0
        %v2375 = vadd.f32 0.0, %v2374
        %v2376 = vpop.f32.mrb[0].mxu0
        %v2377 = vadd.f32 0.0, %v2376
        %v2378 = vpop.f32.mrb[0].mxu0
        %v2379 = vadd.f32 0.0, %v2378
        %2380 = vmatprep.mubr.bf16.mxu0 %v2109
        %2381 = vmatmul.mubr.bf16.gmra.mrb[0].mxu0 %v2108
        %v2382 = vpop.f32.mrb[0].mxu0
        %v2383 = vadd.f32 0.0, %v2382
        %v2384 = vpop.f32.mrb[0].mxu0
        %v2385 = vadd.f32 0.0, %v2384
        %v2386 = vpop.f32.mrb[0].mxu0
        %v2387 = vadd.f32 0.0, %v2386
        %v2388 = vpop.f32.mrb[0].mxu0
        %v2389 = vadd.f32 0.0, %v2388
        %2390 = vmatprep.mubr.bf16.mxu0 %v2111
        %2391 = vmatmul.mubr.bf16.gmra.mrb[0].mxu0 %v2110
        %v2392 = vpop.f32.mrb[0].mxu0
        %v2393 = vadd.f32 0.0, %v2392
        %v2394 = vpop.f32.mrb[0].mxu0
        %v2395 = vadd.f32 0.0, %v2394
        %v2396 = vpop.f32.mrb[0].mxu0
        %v2397 = vadd.f32 0.0, %v2396
        %v2398 = vpop.f32.mrb[0].mxu0
        %v2399 = vadd.f32 0.0, %v2398
        %2400 = vdwg.mxu0
        %2401 = vmatprep.subr.bf16.mxu0 %v2147
        %2402 = vmatpush1.bf16.msra.mxu0 %v2146
        %2403 = vmatprep.subr.bf16.mxu0 %v2151
        %2404 = vmatpush1.bf16.msra.mxu0 %v2150
        %2405 = vmatprep.subr.bf16.mxu0 %v2155
        %2406 = vmatpush1.bf16.msra.mxu0 %v2154
        %2407 = vmatprep.subr.bf16.mxu0 %v2159
        %2408 = vmatpush1.bf16.msra.mxu0 %v2158
        %2409 = vmatprep.subr.bf16.mxu0 %v2163
        %2410 = vmatpush1.bf16.msra.mxu0 %v2162
        %2411 = vmatprep.subr.bf16.mxu0 %v2167
        %2412 = vmatpush1.bf16.msra.mxu0 %v2166
        %2413 = vmatprep.subr.bf16.mxu0 %v2171
        %2414 = vmatpush1.bf16.msra.mxu0 %v2170
        %2415 = vmatprep.subr.bf16.mxu0 %v2175
        %2416 = vmatpush1.bf16.msra.mxu0 %v2174
        %2417 = vmatprep.subr.bf16.mxu0 %v2179
        %2418 = vmatpush1.bf16.msra.mxu0 %v2178
        %2419 = vmatprep.subr.bf16.mxu0 %v2183
        %2420 = vmatpush1.bf16.msra.mxu0 %v2182
        %2421 = vmatprep.subr.bf16.mxu0 %v2187
        %2422 = vmatpush1.bf16.msra.mxu0 %v2186
        %2423 = vmatprep.subr.bf16.mxu0 %v2191
        %2424 = vmatpush1.bf16.msra.mxu0 %v2190
        %2425 = vmatprep.subr.bf16.mxu0 %v2195
        %2426 = vmatpush1.bf16.msra.mxu0 %v2194
        %2427 = vmatprep.subr.bf16.mxu0 %v2199
        %2428 = vmatpush1.bf16.msra.mxu0 %v2198
        %2429 = vmatprep.subr.bf16.mxu0 %v2203
        %2430 = vmatpush1.bf16.msra.mxu0 %v2202
        %2431 = vmatprep.subr.bf16.mxu0 %v2207
        %2432 = vmatpush1.bf16.msra.mxu0 %v2206
        %2433 = vmatprep.mubr.bf16.mxu0 %v2081
        %2434 = vmatmul.mubr.bf16.gmra.mrb[0].mxu0 %v2080
        %v2435 = vpop.f32.mrb[0].mxu0
        %v2436 = vadd.f32 0.0, %v2435
        %v2437 = vpop.f32.mrb[0].mxu0
        %v2438 = vadd.f32 0.0, %v2437
        %v2439 = vpop.f32.mrb[0].mxu0
        %v2440 = vadd.f32 0.0, %v2439
        %v2441 = vpop.f32.mrb[0].mxu0
        %v2442 = vadd.f32 0.0, %v2441
        %2443 = vmatprep.mubr.bf16.mxu0 %v2083
        %2444 = vmatmul.mubr.bf16.gmra.mrb[0].mxu0 %v2082
        %v2445 = vpop.f32.mrb[0].mxu0
        %v2446 = vadd.f32 0.0, %v2445
        %v2447 = vpop.f32.mrb[0].mxu0
        %v2448 = vadd.f32 0.0, %v2447
        %v2449 = vpop.f32.mrb[0].mxu0
        %v2450 = vadd.f32 0.0, %v2449
        %v2451 = vpop.f32.mrb[0].mxu0
        %v2452 = vadd.f32 0.0, %v2451
        %2453 = vmatprep.mubr.bf16.mxu0 %v2085
        %2454 = vmatmul.mubr.bf16.gmra.mrb[0].mxu0 %v2084
        %v2455 = vpop.f32.mrb[0].mxu0
        %v2456 = vadd.f32 0.0, %v2455
        %v2457 = vpop.f32.mrb[0].mxu0
        %v2458 = vadd.f32 0.0, %v2457
        %v2459 = vpop.f32.mrb[0].mxu0
        %v2460 = vadd.f32 0.0, %v2459
        %v2461 = vpop.f32.mrb[0].mxu0
        %v2462 = vadd.f32 0.0, %v2461
        %2463 = vmatprep.mubr.bf16.mxu0 %v2087
        %2464 = vmatmul.mubr.bf16.gmra.mrb[0].mxu0 %v2086
        %v2465 = vpop.f32.mrb[0].mxu0
        %v2466 = vadd.f32 0.0, %v2465
        %v2467 = vpop.f32.mrb[0].mxu0
        %v2468 = vadd.f32 0.0, %v2467
        %v2469 = vpop.f32.mrb[0].mxu0
        %v2470 = vadd.f32 0.0, %v2469
        %v2471 = vpop.f32.mrb[0].mxu0
        %v2472 = vadd.f32 0.0, %v2471
        %2473 = vmatprep.mubr.bf16.mxu0 %v2089
        %2474 = vmatmul.mubr.bf16.gmra.mrb[0].mxu0 %v2088
        %v2475 = vpop.f32.mrb[0].mxu0
        %v2476 = vadd.f32 0.0, %v2475
        %v2477 = vpop.f32.mrb[0].mxu0
        %v2478 = vadd.f32 0.0, %v2477
        %v2479 = vpop.f32.mrb[0].mxu0
        %v2480 = vadd.f32 0.0, %v2479
        %v2481 = vpop.f32.mrb[0].mxu0
        %v2482 = vadd.f32 0.0, %v2481
        %2483 = vmatprep.mubr.bf16.mxu0 %v2091
        %2484 = vmatmul.mubr.bf16.gmra.mrb[0].mxu0 %v2090
        %v2485 = vpop.f32.mrb[0].mxu0
        %v2486 = vadd.f32 0.0, %v2485
        %v2487 = vpop.f32.mrb[0].mxu0
        %v2488 = vadd.f32 0.0, %v2487
        %v2489 = vpop.f32.mrb[0].mxu0
        %v2490 = vadd.f32 0.0, %v2489
        %v2491 = vpop.f32.mrb[0].mxu0
        %v2492 = vadd.f32 0.0, %v2491
        %2493 = vmatprep.mubr.bf16.mxu0 %v2093
        %2494 = vmatmul.mubr.bf16.gmra.mrb[0].mxu0 %v2092
        %v2495 = vpop.f32.mrb[0].mxu0
        %v2496 = vadd.f32 0.0, %v2495
        %v2497 = vpop.f32.mrb[0].mxu0
        %v2498 = vadd.f32 0.0, %v2497
        %v2499 = vpop.f32.mrb[0].mxu0
        %v2500 = vadd.f32 0.0, %v2499
        %v2501 = vpop.f32.mrb[0].mxu0
        %v2502 = vadd.f32 0.0, %v2501
        %2503 = vmatprep.mubr.bf16.mxu0 %v2095
        %2504 = vmatmul.mubr.bf16.gmra.mrb[0].mxu0 %v2094
        %v2505 = vpop.f32.mrb[0].mxu0
        %v2506 = vadd.f32 0.0, %v2505
        %v2507 = vpop.f32.mrb[0].mxu0
        %v2508 = vadd.f32 0.0, %v2507
        %v2509 = vpop.f32.mrb[0].mxu0
        %v2510 = vadd.f32 0.0, %v2509
        %v2511 = vpop.f32.mrb[0].mxu0
        %v2512 = vadd.f32 0.0, %v2511
        %2513 = vmatprep.mubr.bf16.mxu0 %v2097
        %2514 = vmatmul.mubr.bf16.gmra.mrb[0].mxu0 %v2096
        %v2515 = vpop.f32.mrb[0].mxu0
        %v2516 = vadd.f32 0.0, %v2515
        %v2517 = vpop.f32.mrb[0].mxu0
        %v2518 = vadd.f32 0.0, %v2517
        %v2519 = vpop.f32.mrb[0].mxu0
        %v2520 = vadd.f32 0.0, %v2519
        %v2521 = vpop.f32.mrb[0].mxu0
        %v2522 = vadd.f32 0.0, %v2521
        %2523 = vmatprep.mubr.bf16.mxu0 %v2099
        %2524 = vmatmul.mubr.bf16.gmra.mrb[0].mxu0 %v2098
        %v2525 = vpop.f32.mrb[0].mxu0
        %v2526 = vadd.f32 0.0, %v2525
        %v2527 = vpop.f32.mrb[0].mxu0
        %v2528 = vadd.f32 0.0, %v2527
        %v2529 = vpop.f32.mrb[0].mxu0
        %v2530 = vadd.f32 0.0, %v2529
        %v2531 = vpop.f32.mrb[0].mxu0
        %v2532 = vadd.f32 0.0, %v2531
        %2533 = vmatprep.mubr.bf16.mxu0 %v2101
        %2534 = vmatmul.mubr.bf16.gmra.mrb[0].mxu0 %v2100
        %v2535 = vpop.f32.mrb[0].mxu0
        %v2536 = vadd.f32 0.0, %v2535
        %v2537 = vpop.f32.mrb[0].mxu0
        %v2538 = vadd.f32 0.0, %v2537
        %v2539 = vpop.f32.mrb[0].mxu0
        %v2540 = vadd.f32 0.0, %v2539
        %v2541 = vpop.f32.mrb[0].mxu0
        %v2542 = vadd.f32 0.0, %v2541
        %2543 = vmatprep.mubr.bf16.mxu0 %v2103
        %2544 = vmatmul.mubr.bf16.gmra.mrb[0].mxu0 %v2102
        %v2545 = vpop.f32.mrb[0].mxu0
        %v2546 = vadd.f32 0.0, %v2545
        %v2547 = vpop.f32.mrb[0].mxu0
        %v2548 = vadd.f32 0.0, %v2547
        %v2549 = vpop.f32.mrb[0].mxu0
        %v2550 = vadd.f32 0.0, %v2549
        %v2551 = vpop.f32.mrb[0].mxu0
        %v2552 = vadd.f32 0.0, %v2551
        %2553 = vmatprep.mubr.bf16.mxu0 %v2105
        %2554 = vmatmul.mubr.bf16.gmra.mrb[0].mxu0 %v2104
        %v2555 = vpop.f32.mrb[0].mxu0
        %v2556 = vadd.f32 0.0, %v2555
        %v2557 = vpop.f32.mrb[0].mxu0
        %v2558 = vadd.f32 0.0, %v2557
        %v2559 = vpop.f32.mrb[0].mxu0
        %v2560 = vadd.f32 0.0, %v2559
        %v2561 = vpop.f32.mrb[0].mxu0
        %v2562 = vadd.f32 0.0, %v2561
        %2563 = vmatprep.mubr.bf16.mxu0 %v2107
        %2564 = vmatmul.mubr.bf16.gmra.mrb[0].mxu0 %v2106
        %v2565 = vpop.f32.mrb[0].mxu0
        %v2566 = vadd.f32 0.0, %v2565
        %v2567 = vpop.f32.mrb[0].mxu0
        %v2568 = vadd.f32 0.0, %v2567
        %v2569 = vpop.f32.mrb[0].mxu0
        %v2570 = vadd.f32 0.0, %v2569
        %v2571 = vpop.f32.mrb[0].mxu0
        %v2572 = vadd.f32 0.0, %v2571
        %2573 = vmatprep.mubr.bf16.mxu0 %v2109
        %2574 = vmatmul.mubr.bf16.gmra.mrb[0].mxu0 %v2108
        %v2575 = vpop.f32.mrb[0].mxu0
        %v2576 = vadd.f32 0.0, %v2575
        %v2577 = vpop.f32.mrb[0].mxu0
        %v2578 = vadd.f32 0.0, %v2577
        %v2579 = vpop.f32.mrb[0].mxu0
        %v2580 = vadd.f32 0.0, %v2579
        %v2581 = vpop.f32.mrb[0].mxu0
        %v2582 = vadd.f32 0.0, %v2581
        %2583 = vmatprep.mubr.bf16.mxu0 %v2111
        %2584 = vmatmul.mubr.bf16.gmra.mrb[0].mxu0 %v2110
        %v2585 = vpop.f32.mrb[0].mxu0
        %v2586 = vadd.f32 0.0, %v2585
        %v2587 = vpop.f32.mrb[0].mxu0
        %v2588 = vadd.f32 0.0, %v2587
        %v2589 = vpop.f32.mrb[0].mxu0
        %v2590 = vadd.f32 0.0, %v2589
        %v2591 = vpop.f32.mrb[0].mxu0
        %v2592 = vadd.f32 0.0, %v2591
        %2593 = vdwg.mxu0
        %v2594 = vld [vmem:[%s9] sm:$0xf]
        %v2595 = vld [vmem:[%s10] sm:$0xf]
        %v2596 = vld [vmem:[%s11] sm:$0xf]
        %v2597 = vadd.f32 %v2243, %v2247
        %v2598 = vadd.f32 %v2597, %v2253
        %v2599 = vadd.f32 %v2598, %v2257
        %v2600 = vadd.f32 %v2599, %v2263
        %v2601 = vadd.f32 %v2600, %v2267
        %v2602 = vadd.f32 %v2601, %v2273
        %v2603 = vadd.f32 %v2602, %v2277
        %v2604 = vadd.f32 %v2603, %v2283
        %v2605 = vadd.f32 %v2604, %v2287
        %v2606 = vadd.f32 %v2605, %v2293
        %v2607 = vadd.f32 %v2606, %v2297
        %v2608 = vadd.f32 %v2607, %v2303
        %v2609 = vadd.f32 %v2608, %v2307
        %v2610 = vadd.f32 %v2609, %v2313
        %v2611 = vadd.f32 %v2610, %v2317
        %v2612 = vadd.f32 %v2611, %v2323
        %v2613 = vadd.f32 %v2612, %v2327
        %v2614 = vadd.f32 %v2613, %v2333
        %v2615 = vadd.f32 %v2614, %v2337
        %v2616 = vadd.f32 %v2615, %v2343
        %v2617 = vadd.f32 %v2616, %v2347
        %v2618 = vadd.f32 %v2617, %v2353
        %v2619 = vadd.f32 %v2618, %v2357
        %v2620 = vadd.f32 %v2619, %v2363
        %v2621 = vadd.f32 %v2620, %v2367
        %v2622 = vadd.f32 %v2621, %v2373
        %v2623 = vadd.f32 %v2622, %v2377
        %v2624 = vadd.f32 %v2623, %v2383
        %v2625 = vadd.f32 %v2624, %v2387
        %v2626 = vadd.f32 %v2625, %v2393
        %v2627 = vadd.f32 %v2626, %v2397
        %v2628 = vrot.slane %v2627, 4
        %v2629 = vadd.f32 %v2627, %v2628
        %v2630 = vrot.slane %v2629, 2
        %v2631 = vadd.f32 %v2629, %v2630
        %v2632 = vrot.slane %v2631, 1
        %v2633 = vadd.f32 %v2631, %v2632
        %v2634 = vadd.f32 %v2245, %v2249
        %v2635 = vadd.f32 %v2634, %v2255
        %v2636 = vadd.f32 %v2635, %v2259
        %v2637 = vadd.f32 %v2636, %v2265
        %v2638 = vadd.f32 %v2637, %v2269
        %v2639 = vadd.f32 %v2638, %v2275
        %v2640 = vadd.f32 %v2639, %v2279
        %v2641 = vadd.f32 %v2640, %v2285
        %v2642 = vadd.f32 %v2641, %v2289
        %v2643 = vadd.f32 %v2642, %v2295
        %v2644 = vadd.f32 %v2643, %v2299
        %v2645 = vadd.f32 %v2644, %v2305
        %v2646 = vadd.f32 %v2645, %v2309
        %v2647 = vadd.f32 %v2646, %v2315
        %v2648 = vadd.f32 %v2647, %v2319
        %v2649 = vadd.f32 %v2648, %v2325
        %v2650 = vadd.f32 %v2649, %v2329
        %v2651 = vadd.f32 %v2650, %v2335
        %v2652 = vadd.f32 %v2651, %v2339
        %v2653 = vadd.f32 %v2652, %v2345
        %v2654 = vadd.f32 %v2653, %v2349
        %v2655 = vadd.f32 %v2654, %v2355
        %v2656 = vadd.f32 %v2655, %v2359
        %v2657 = vadd.f32 %v2656, %v2365
        %v2658 = vadd.f32 %v2657, %v2369
        %v2659 = vadd.f32 %v2658, %v2375
        %v2660 = vadd.f32 %v2659, %v2379
        %v2661 = vadd.f32 %v2660, %v2385
        %v2662 = vadd.f32 %v2661, %v2389
        %v2663 = vadd.f32 %v2662, %v2395
        %v2664 = vadd.f32 %v2663, %v2399
        %v2665 = vrot.slane %v2664, 4
        %v2666 = vadd.f32 %v2664, %v2665
        %v2667 = vrot.slane %v2666, 2
        %v2668 = vadd.f32 %v2666, %v2667
        %v2669 = vrot.slane %v2668, 1
        %v2670 = vadd.f32 %v2668, %v2669
        %v2671 = vadd.f32 %v2436, %v2440
        %v2672 = vadd.f32 %v2671, %v2446
        %v2673 = vadd.f32 %v2672, %v2450
        %v2674 = vadd.f32 %v2673, %v2456
        %v2675 = vadd.f32 %v2674, %v2460
        %v2676 = vadd.f32 %v2675, %v2466
        %v2677 = vadd.f32 %v2676, %v2470
        %v2678 = vadd.f32 %v2677, %v2476
        %v2679 = vadd.f32 %v2678, %v2480
        %v2680 = vadd.f32 %v2679, %v2486
        %v2681 = vadd.f32 %v2680, %v2490
        %v2682 = vadd.f32 %v2681, %v2496
        %v2683 = vadd.f32 %v2682, %v2500
        %v2684 = vadd.f32 %v2683, %v2506
        %v2685 = vadd.f32 %v2684, %v2510
        %v2686 = vadd.f32 %v2685, %v2516
        %v2687 = vadd.f32 %v2686, %v2520
        %v2688 = vadd.f32 %v2687, %v2526
        %v2689 = vadd.f32 %v2688, %v2530
        %v2690 = vadd.f32 %v2689, %v2536
        %v2691 = vadd.f32 %v2690, %v2540
        %v2692 = vadd.f32 %v2691, %v2546
        %v2693 = vadd.f32 %v2692, %v2550
        %v2694 = vadd.f32 %v2693, %v2556
        %v2695 = vadd.f32 %v2694, %v2560
        %v2696 = vadd.f32 %v2695, %v2566
        %v2697 = vadd.f32 %v2696, %v2570
        %v2698 = vadd.f32 %v2697, %v2576
        %v2699 = vadd.f32 %v2698, %v2580
        %v2700 = vadd.f32 %v2699, %v2586
        %v2701 = vadd.f32 %v2700, %v2590
        %v2702 = vrot.slane %v2701, 4
        %v2703 = vadd.f32 %v2701, %v2702
        %v2704 = vrot.slane %v2703, 2
        %v2705 = vadd.f32 %v2703, %v2704
        %v2706 = vrot.slane %v2705, 1
        %v2707 = vadd.f32 %v2705, %v2706
        %v2708 = vadd.f32 %v2438, %v2442
        %v2709 = vadd.f32 %v2708, %v2448
        %v2710 = vadd.f32 %v2709, %v2452
        %v2711 = vadd.f32 %v2710, %v2458
        %v2712 = vadd.f32 %v2711, %v2462
        %v2713 = vadd.f32 %v2712, %v2468
        %v2714 = vadd.f32 %v2713, %v2472
        %v2715 = vadd.f32 %v2714, %v2478
        %v2716 = vadd.f32 %v2715, %v2482
        %v2717 = vadd.f32 %v2716, %v2488
        %v2718 = vadd.f32 %v2717, %v2492
        %v2719 = vadd.f32 %v2718, %v2498
        %v2720 = vadd.f32 %v2719, %v2502
        %v2721 = vadd.f32 %v2720, %v2508
        %v2722 = vadd.f32 %v2721, %v2512
        %v2723 = vadd.f32 %v2722, %v2518
        %v2724 = vadd.f32 %v2723, %v2522
        %v2725 = vadd.f32 %v2724, %v2528
        %v2726 = vadd.f32 %v2725, %v2532
        %v2727 = vadd.f32 %v2726, %v2538
        %v2728 = vadd.f32 %v2727, %v2542
        %v2729 = vadd.f32 %v2728, %v2548
        %v2730 = vadd.f32 %v2729, %v2552
        %v2731 = vadd.f32 %v2730, %v2558
        %v2732 = vadd.f32 %v2731, %v2562
        %v2733 = vadd.f32 %v2732, %v2568
        %v2734 = vadd.f32 %v2733, %v2572
        %v2735 = vadd.f32 %v2734, %v2578
        %v2736 = vadd.f32 %v2735, %v2582
        %v2737 = vadd.f32 %v2736, %v2588
        %v2738 = vadd.f32 %v2737, %v2592
        %v2739 = vrot.slane %v2738, 4
        %v2740 = vadd.f32 %v2738, %v2739
        %v2741 = vrot.slane %v2740, 2
        %v2742 = vadd.f32 %v2740, %v2741
        %v2743 = vrot.slane %v2742, 1
        %v2744 = vadd.f32 %v2742, %v2743
        %v2745 = vmul.f32 %v2633, %v1532
        %v2746 = vmul.f32 %v2670, %v1532
        %v2747 = vmul.f32 %v2707, %v1532
        %v2748 = vmul.f32 %v2744, %v1532
        %v2749 = vmul.f32 %v2243, %v2243
        %v2750 = vmul.f32 %v2245, %v2245
        %v2751 = vmul.f32 %v2436, %v2436
        %v2752 = vmul.f32 %v2438, %v2438
        %v2753 = vmul.f32 %v2247, %v2247
        %v2754 = vmul.f32 %v2249, %v2249
        %v2755 = vmul.f32 %v2440, %v2440
        %v2756 = vmul.f32 %v2442, %v2442
        %v2757 = vmul.f32 %v2253, %v2253
        %v2758 = vmul.f32 %v2255, %v2255
        %v2759 = vmul.f32 %v2446, %v2446
        %v2760 = vmul.f32 %v2448, %v2448
        %v2761 = vmul.f32 %v2257, %v2257
        %v2762 = vmul.f32 %v2259, %v2259
        %v2763 = vmul.f32 %v2450, %v2450
        %v2764 = vmul.f32 %v2452, %v2452
        %v2765 = vmul.f32 %v2263, %v2263
        %v2766 = vmul.f32 %v2265, %v2265
        %v2767 = vmul.f32 %v2456, %v2456
        %v2768 = vmul.f32 %v2458, %v2458
        %v2769 = vmul.f32 %v2267, %v2267
        %v2770 = vmul.f32 %v2269, %v2269
        %v2771 = vmul.f32 %v2460, %v2460
        %v2772 = vmul.f32 %v2462, %v2462
        %v2773 = vmul.f32 %v2273, %v2273
        %v2774 = vmul.f32 %v2275, %v2275
        %v2775 = vmul.f32 %v2466, %v2466
        %v2776 = vmul.f32 %v2468, %v2468
        %v2777 = vmul.f32 %v2277, %v2277
        %v2778 = vmul.f32 %v2279, %v2279
        %v2779 = vmul.f32 %v2470, %v2470
        %v2780 = vmul.f32 %v2472, %v2472
        %v2781 = vmul.f32 %v2283, %v2283
        %v2782 = vmul.f32 %v2285, %v2285
        %v2783 = vmul.f32 %v2476, %v2476
        %v2784 = vmul.f32 %v2478, %v2478
        %v2785 = vmul.f32 %v2287, %v2287
        %v2786 = vmul.f32 %v2289, %v2289
        %v2787 = vmul.f32 %v2480, %v2480
        %v2788 = vmul.f32 %v2482, %v2482
        %v2789 = vmul.f32 %v2293, %v2293
        %v2790 = vmul.f32 %v2295, %v2295
        %v2791 = vmul.f32 %v2486, %v2486
        %v2792 = vmul.f32 %v2488, %v2488
        %v2793 = vmul.f32 %v2297, %v2297
        %v2794 = vmul.f32 %v2299, %v2299
        %v2795 = vmul.f32 %v2490, %v2490
        %v2796 = vmul.f32 %v2492, %v2492
        %v2797 = vmul.f32 %v2303, %v2303
        %v2798 = vmul.f32 %v2305, %v2305
        %v2799 = vmul.f32 %v2496, %v2496
        %v2800 = vmul.f32 %v2498, %v2498
        %v2801 = vmul.f32 %v2307, %v2307
        %v2802 = vmul.f32 %v2309, %v2309
        %v2803 = vmul.f32 %v2500, %v2500
        %v2804 = vmul.f32 %v2502, %v2502
        %v2805 = vmul.f32 %v2313, %v2313
        %v2806 = vmul.f32 %v2315, %v2315
        %v2807 = vmul.f32 %v2506, %v2506
        %v2808 = vmul.f32 %v2508, %v2508
        %v2809 = vmul.f32 %v2317, %v2317
        %v2810 = vmul.f32 %v2319, %v2319
        %v2811 = vmul.f32 %v2510, %v2510
        %v2812 = vmul.f32 %v2512, %v2512
        %v2813 = vmul.f32 %v2323, %v2323
        %v2814 = vmul.f32 %v2325, %v2325
        %v2815 = vmul.f32 %v2516, %v2516
        %v2816 = vmul.f32 %v2518, %v2518
        %v2817 = vmul.f32 %v2327, %v2327
        %v2818 = vmul.f32 %v2329, %v2329
        %v2819 = vmul.f32 %v2520, %v2520
        %v2820 = vmul.f32 %v2522, %v2522
        %v2821 = vmul.f32 %v2333, %v2333
        %v2822 = vmul.f32 %v2335, %v2335
        %v2823 = vmul.f32 %v2526, %v2526
        %v2824 = vmul.f32 %v2528, %v2528
        %v2825 = vmul.f32 %v2337, %v2337
        %v2826 = vmul.f32 %v2339, %v2339
        %v2827 = vmul.f32 %v2530, %v2530
        %v2828 = vmul.f32 %v2532, %v2532
        %v2829 = vmul.f32 %v2343, %v2343
        %v2830 = vmul.f32 %v2345, %v2345
        %v2831 = vmul.f32 %v2536, %v2536
        %v2832 = vmul.f32 %v2538, %v2538
        %v2833 = vmul.f32 %v2347, %v2347
        %v2834 = vmul.f32 %v2349, %v2349
        %v2835 = vmul.f32 %v2540, %v2540
        %v2836 = vmul.f32 %v2542, %v2542
        %v2837 = vmul.f32 %v2353, %v2353
        %v2838 = vmul.f32 %v2355, %v2355
        %v2839 = vmul.f32 %v2546, %v2546
        %v2840 = vmul.f32 %v2548, %v2548
        %v2841 = vmul.f32 %v2357, %v2357
        %v2842 = vmul.f32 %v2359, %v2359
        %v2843 = vmul.f32 %v2550, %v2550
        %v2844 = vmul.f32 %v2552, %v2552
        %v2845 = vmul.f32 %v2363, %v2363
        %v2846 = vmul.f32 %v2365, %v2365
        %v2847 = vmul.f32 %v2556, %v2556
        %v2848 = vmul.f32 %v2558, %v2558
        %v2849 = vmul.f32 %v2367, %v2367
        %v2850 = vmul.f32 %v2369, %v2369
        %v2851 = vmul.f32 %v2560, %v2560
        %v2852 = vmul.f32 %v2562, %v2562
        %v2853 = vmul.f32 %v2373, %v2373
        %v2854 = vmul.f32 %v2375, %v2375
        %v2855 = vmul.f32 %v2566, %v2566
        %v2856 = vmul.f32 %v2568, %v2568
        %v2857 = vmul.f32 %v2377, %v2377
        %v2858 = vmul.f32 %v2379, %v2379
        %v2859 = vmul.f32 %v2570, %v2570
        %v2860 = vmul.f32 %v2572, %v2572
        %v2861 = vmul.f32 %v2383, %v2383
        %v2862 = vmul.f32 %v2385, %v2385
        %v2863 = vmul.f32 %v2576, %v2576
        %v2864 = vmul.f32 %v2578, %v2578
        %v2865 = vmul.f32 %v2387, %v2387
        %v2866 = vmul.f32 %v2389, %v2389
        %v2867 = vmul.f32 %v2580, %v2580
        %v2868 = vmul.f32 %v2582, %v2582
        %v2869 = vmul.f32 %v2393, %v2393
        %v2870 = vmul.f32 %v2395, %v2395
        %v2871 = vmul.f32 %v2586, %v2586
        %v2872 = vmul.f32 %v2588, %v2588
        %v2873 = vmul.f32 %v2397, %v2397
        %v2874 = vmul.f32 %v2399, %v2399
        %v2875 = vmul.f32 %v2590, %v2590
        %v2876 = vmul.f32 %v2592, %v2592
        %v2877 = vadd.f32 %v2749, %v2753
        %v2878 = vadd.f32 %v2877, %v2757
        %v2879 = vadd.f32 %v2878, %v2761
        %v2880 = vadd.f32 %v2879, %v2765
        %v2881 = vadd.f32 %v2880, %v2769
        %v2882 = vadd.f32 %v2881, %v2773
        %v2883 = vadd.f32 %v2882, %v2777
        %v2884 = vadd.f32 %v2883, %v2781
        %v2885 = vadd.f32 %v2884, %v2785
        %v2886 = vadd.f32 %v2885, %v2789
        %v2887 = vadd.f32 %v2886, %v2793
        %v2888 = vadd.f32 %v2887, %v2797
        %v2889 = vadd.f32 %v2888, %v2801
        %v2890 = vadd.f32 %v2889, %v2805
        %v2891 = vadd.f32 %v2890, %v2809
        %v2892 = vadd.f32 %v2891, %v2813
        %v2893 = vadd.f32 %v2892, %v2817
        %v2894 = vadd.f32 %v2893, %v2821
        %v2895 = vadd.f32 %v2894, %v2825
        %v2896 = vadd.f32 %v2895, %v2829
        %v2897 = vadd.f32 %v2896, %v2833
        %v2898 = vadd.f32 %v2897, %v2837
        %v2899 = vadd.f32 %v2898, %v2841
        %v2900 = vadd.f32 %v2899, %v2845
        %v2901 = vadd.f32 %v2900, %v2849
        %v2902 = vadd.f32 %v2901, %v2853
        %v2903 = vadd.f32 %v2902, %v2857
        %v2904 = vadd.f32 %v2903, %v2861
        %v2905 = vadd.f32 %v2904, %v2865
        %v2906 = vadd.f32 %v2905, %v2869
        %v2907 = vadd.f32 %v2906, %v2873
        %v2908 = vrot.slane %v2907, 4
        %v2909 = vadd.f32 %v2907, %v2908
        %v2910 = vrot.slane %v2909, 2
        %v2911 = vadd.f32 %v2909, %v2910
        %v2912 = vrot.slane %v2911, 1
        %v2913 = vadd.f32 %v2911, %v2912
        %v2914 = vadd.f32 %v2750, %v2754
        %v2915 = vadd.f32 %v2914, %v2758
        %v2916 = vadd.f32 %v2915, %v2762
        %v2917 = vadd.f32 %v2916, %v2766
        %v2918 = vadd.f32 %v2917, %v2770
        %v2919 = vadd.f32 %v2918, %v2774
        %v2920 = vadd.f32 %v2919, %v2778
        %v2921 = vadd.f32 %v2920, %v2782
        %v2922 = vadd.f32 %v2921, %v2786
        %v2923 = vadd.f32 %v2922, %v2790
        %v2924 = vadd.f32 %v2923, %v2794
        %v2925 = vadd.f32 %v2924, %v2798
        %v2926 = vadd.f32 %v2925, %v2802
        %v2927 = vadd.f32 %v2926, %v2806
        %v2928 = vadd.f32 %v2927, %v2810
        %v2929 = vadd.f32 %v2928, %v2814
        %v2930 = vadd.f32 %v2929, %v2818
        %v2931 = vadd.f32 %v2930, %v2822
        %v2932 = vadd.f32 %v2931, %v2826
        %v2933 = vadd.f32 %v2932, %v2830
        %v2934 = vadd.f32 %v2933, %v2834
        %v2935 = vadd.f32 %v2934, %v2838
        %v2936 = vadd.f32 %v2935, %v2842
        %v2937 = vadd.f32 %v2936, %v2846
        %v2938 = vadd.f32 %v2937, %v2850
        %v2939 = vadd.f32 %v2938, %v2854
        %v2940 = vadd.f32 %v2939, %v2858
        %v2941 = vadd.f32 %v2940, %v2862
        %v2942 = vadd.f32 %v2941, %v2866
        %v2943 = vadd.f32 %v2942, %v2870
        %v2944 = vadd.f32 %v2943, %v2874
        %v2945 = vrot.slane %v2944, 4
        %v2946 = vadd.f32 %v2944, %v2945
        %v2947 = vrot.slane %v2946, 2
        %v2948 = vadd.f32 %v2946, %v2947
        %v2949 = vrot.slane %v2948, 1
        %v2950 = vadd.f32 %v2948, %v2949
        %v2951 = vadd.f32 %v2751, %v2755
        %v2952 = vadd.f32 %v2951, %v2759
        %v2953 = vadd.f32 %v2952, %v2763
        %v2954 = vadd.f32 %v2953, %v2767
        %v2955 = vadd.f32 %v2954, %v2771
        %v2956 = vadd.f32 %v2955, %v2775
        %v2957 = vadd.f32 %v2956, %v2779
        %v2958 = vadd.f32 %v2957, %v2783
        %v2959 = vadd.f32 %v2958, %v2787
        %v2960 = vadd.f32 %v2959, %v2791
        %v2961 = vadd.f32 %v2960, %v2795
        %v2962 = vadd.f32 %v2961, %v2799
        %v2963 = vadd.f32 %v2962, %v2803
        %v2964 = vadd.f32 %v2963, %v2807
        %v2965 = vadd.f32 %v2964, %v2811
        %v2966 = vadd.f32 %v2965, %v2815
        %v2967 = vadd.f32 %v2966, %v2819
        %v2968 = vadd.f32 %v2967, %v2823
        %v2969 = vadd.f32 %v2968, %v2827
        %v2970 = vadd.f32 %v2969, %v2831
        %v2971 = vadd.f32 %v2970, %v2835
        %v2972 = vadd.f32 %v2971, %v2839
        %v2973 = vadd.f32 %v2972, %v2843
        %v2974 = vadd.f32 %v2973, %v2847
        %v2975 = vadd.f32 %v2974, %v2851
        %v2976 = vadd.f32 %v2975, %v2855
        %v2977 = vadd.f32 %v2976, %v2859
        %v2978 = vadd.f32 %v2977, %v2863
        %v2979 = vadd.f32 %v2978, %v2867
        %v2980 = vadd.f32 %v2979, %v2871
        %v2981 = vadd.f32 %v2980, %v2875
        %v2982 = vrot.slane %v2981, 4
        %v2983 = vadd.f32 %v2981, %v2982
        %v2984 = vrot.slane %v2983, 2
        %v2985 = vadd.f32 %v2983, %v2984
        %v2986 = vrot.slane %v2985, 1
        %v2987 = vadd.f32 %v2985, %v2986
        %v2988 = vadd.f32 %v2752, %v2756
        %v2989 = vadd.f32 %v2988, %v2760
        %v2990 = vadd.f32 %v2989, %v2764
        %v2991 = vadd.f32 %v2990, %v2768
        %v2992 = vadd.f32 %v2991, %v2772
        %v2993 = vadd.f32 %v2992, %v2776
        %v2994 = vadd.f32 %v2993, %v2780
        %v2995 = vadd.f32 %v2994, %v2784
        %v2996 = vadd.f32 %v2995, %v2788
        %v2997 = vadd.f32 %v2996, %v2792
        %v2998 = vadd.f32 %v2997, %v2796
        %v2999 = vadd.f32 %v2998, %v2800
        %v3000 = vadd.f32 %v2999, %v2804
        %v3001 = vadd.f32 %v3000, %v2808
        %v3002 = vadd.f32 %v3001, %v2812
        %v3003 = vadd.f32 %v3002, %v2816
        %v3004 = vadd.f32 %v3003, %v2820
        %v3005 = vadd.f32 %v3004, %v2824
        %v3006 = vadd.f32 %v3005, %v2828
        %v3007 = vadd.f32 %v3006, %v2832
        %v3008 = vadd.f32 %v3007, %v2836
        %v3009 = vadd.f32 %v3008, %v2840
        %v3010 = vadd.f32 %v3009, %v2844
        %v3011 = vadd.f32 %v3010, %v2848
        %v3012 = vadd.f32 %v3011, %v2852
        %v3013 = vadd.f32 %v3012, %v2856
        %v3014 = vadd.f32 %v3013, %v2860
        %v3015 = vadd.f32 %v3014, %v2864
        %v3016 = vadd.f32 %v3015, %v2868
        %v3017 = vadd.f32 %v3016, %v2872
        %v3018 = vadd.f32 %v3017, %v2876
        %v3019 = vrot.slane %v3018, 4
        %v3020 = vadd.f32 %v3018, %v3019
        %v3021 = vrot.slane %v3020, 2
        %v3022 = vadd.f32 %v3020, %v3021
        %v3023 = vrot.slane %v3022, 1
        %v3024 = vadd.f32 %v3022, %v3023
        %v3025 = vmul.f32 %v2913, %v1532
        %v3026 = vmul.f32 %v2950, %v1532
        %v3027 = vmul.f32 %v2987, %v1532
        %v3028 = vmul.f32 %v3024, %v1532
        %v3029 = vmul.f32 %v2745, %v2745
        %v3030 = vmul.f32 %v2746, %v2746
        %v3031 = vmul.f32 %v2747, %v2747
        %v3032 = vmul.f32 %v2748, %v2748
        %v3033 = vsub.f32 %v3025, %v3029
        %v3034 = vsub.f32 %v3026, %v3030
        %v3035 = vsub.f32 %v3027, %v3031
        %v3036 = vsub.f32 %v3028, %v3032
        %v3037 = vmul.f32 %v2595, %v2594
        %v3038 = vmul.f32 %v2594, %v2594
        %v3040 = vlaneseq
        %v3041 = vshrl.u32 %v3040, 7
        %v3042 = vsub.s32 0, %v3041
        %v3043 = vrot.slane %v3038, %v3042
        %v3044 = vlaneseq
        %v3045 = vshrl.u32 %v3044, 7
        %v3046 = vsub.s32 1, %v3045
        %v3047 = vrot.slane %v3038, %v3046
        %v3048 = vlaneseq
        %v3049 = vshrl.u32 %v3048, 7
        %v3050 = vsub.s32 2, %v3049
        %v3051 = vrot.slane %v3038, %v3050
        %v3052 = vlaneseq
        %v3053 = vshrl.u32 %v3052, 7
        %v3054 = vsub.s32 3, %v3053
        %v3055 = vrot.slane %v3038, %v3054
        %v3060 = vmul.f32 %v3033, %v3043
        %v3061 = vmul.f32 %v3034, %v3047
        %v3062 = vmul.f32 %v3035, %v3051
        %v3063 = vmul.f32 %v3036, %v3055
        %v3064 = vadd.f32 %v3060, 0.8
        %v3065 = vadd.f32 %v3061, 0.8
        %v3066 = vadd.f32 %v3062, 0.8
        %v3067 = vadd.f32 %v3063, 0.8
        %v3068 = vrsqrt.pop %v3064
        %v3069 = vrsqrt.pop %v3065
        %v3070 = vrsqrt.pop %v3066
        %v3071 = vrsqrt.pop %v3067
        %v3076 = vcombine.low %v3068, %v3069
        %v3077 = vcombine.low %v3070, %v3071
        %v3079 = vunpack.c.l.s4 1966171168
        %v3080 = vunpack.c.0.s8 %v3079
        %v3081 = vlaneseq
        %v3082 = vshrl.u32 %v3081, 7
        %v3083 = vsub.s32 %v3080, %v3082
        %v3084 = vrot.slane %v3076, %v3083
        %v3086 = vunpack.c.l.s4 1966171168
        %v3087 = vunpack.c.0.s8 %v3086
        %v3088 = vlaneseq
        %v3089 = vshrl.u32 %v3088, 7
        %v3090 = vsub.s32 %v3087, %v3089
        %v3091 = vrot.slane %v3077, %v3090
        %v3092 = vcombine.low %v3084, %v3091
        %v3094 = vunpack.c.l.s4 1966171168
        %v3095 = vunpack.c.0.s8 %v3094
        %v3096 = vlaneseq
        %v3097 = vshrl.u32 %v3096, 7
        %v3098 = vsub.s32 %v3095, %v3097
        %v3099 = vrot.slane %v3092, %v3098
        %v3101 = vmul.f32 %v3037, %v3099
        %v3103 = vlaneseq
        %v3104 = vshrl.u32 %v3103, 7
        %v3105 = vsub.s32 0, %v3104
        %v3106 = vrot.slane %v3101, %v3105
        %v3107 = vlaneseq
        %v3108 = vshrl.u32 %v3107, 7
        %v3109 = vsub.s32 1, %v3108
        %v3110 = vrot.slane %v3101, %v3109
        %v3111 = vlaneseq
        %v3112 = vshrl.u32 %v3111, 7
        %v3113 = vsub.s32 2, %v3112
        %v3114 = vrot.slane %v3101, %v3113
        %v3115 = vlaneseq
        %v3116 = vshrl.u32 %v3115, 7
        %v3117 = vsub.s32 3, %v3116
        %v3118 = vrot.slane %v3101, %v3117
        %v3123 = vmul.f32 %v2745, %v3106
        %v3124 = vmul.f32 %v2746, %v3110
        %v3125 = vmul.f32 %v2747, %v3114
        %v3126 = vmul.f32 %v2748, %v3118
        %v3131 = vcombine.low %v3123, %v3124
        %v3132 = vcombine.low %v3125, %v3126
        %v3134 = vunpack.c.l.s4 1966171168
        %v3135 = vunpack.c.0.s8 %v3134
        %v3136 = vlaneseq
        %v3137 = vshrl.u32 %v3136, 7
        %v3138 = vsub.s32 %v3135, %v3137
        %v3139 = vrot.slane %v3131, %v3138
        %v3141 = vunpack.c.l.s4 1966171168
        %v3142 = vunpack.c.0.s8 %v3141
        %v3143 = vlaneseq
        %v3144 = vshrl.u32 %v3143, 7
        %v3145 = vsub.s32 %v3142, %v3144
        %v3146 = vrot.slane %v3132, %v3145
        %v3147 = vcombine.low %v3139, %v3146
        %v3149 = vunpack.c.l.s4 1966171168
        %v3150 = vunpack.c.0.s8 %v3149
        %v3151 = vlaneseq
        %v3152 = vshrl.u32 %v3151, 7
        %v3153 = vsub.s32 %v3150, %v3152
        %v3154 = vrot.slane %v3147, %v3153
        %v3156 = vsub.f32 %v2596, %v3154
        %v3157 = vmul.f32 %v2243, %v3106
        %v3158 = vmul.f32 %v2245, %v3110
        %v3159 = vmul.f32 %v2436, %v3114
        %v3160 = vmul.f32 %v2438, %v3118
        %v3161 = vmul.f32 %v2247, %v3106
        %v3162 = vmul.f32 %v2249, %v3110
        %v3163 = vmul.f32 %v2440, %v3114
        %v3164 = vmul.f32 %v2442, %v3118
        %v3165 = vmul.f32 %v2253, %v3106
        %v3166 = vmul.f32 %v2255, %v3110
        %v3167 = vmul.f32 %v2446, %v3114
        %v3168 = vmul.f32 %v2448, %v3118
        %v3169 = vmul.f32 %v2257, %v3106
        %v3170 = vmul.f32 %v2259, %v3110
        %v3171 = vmul.f32 %v2450, %v3114
        %v3172 = vmul.f32 %v2452, %v3118
        %v3173 = vmul.f32 %v2263, %v3106
        %v3174 = vmul.f32 %v2265, %v3110
        %v3175 = vmul.f32 %v2456, %v3114
        %v3176 = vmul.f32 %v2458, %v3118
        %v3177 = vmul.f32 %v2267, %v3106
        %v3178 = vmul.f32 %v2269, %v3110
        %v3179 = vmul.f32 %v2460, %v3114
        %v3180 = vmul.f32 %v2462, %v3118
        %v3181 = vmul.f32 %v2273, %v3106
        %v3182 = vmul.f32 %v2275, %v3110
        %v3183 = vmul.f32 %v2466, %v3114
        %v3184 = vmul.f32 %v2468, %v3118
        %v3185 = vmul.f32 %v2277, %v3106
        %v3186 = vmul.f32 %v2279, %v3110
        %v3187 = vmul.f32 %v2470, %v3114
        %v3188 = vmul.f32 %v2472, %v3118
        %v3189 = vmul.f32 %v2283, %v3106
        %v3190 = vmul.f32 %v2285, %v3110
        %v3191 = vmul.f32 %v2476, %v3114
        %v3192 = vmul.f32 %v2478, %v3118
        %v3193 = vmul.f32 %v2287, %v3106
        %v3194 = vmul.f32 %v2289, %v3110
        %v3195 = vmul.f32 %v2480, %v3114
        %v3196 = vmul.f32 %v2482, %v3118
        %v3197 = vmul.f32 %v2293, %v3106
        %v3198 = vmul.f32 %v2295, %v3110
        %v3199 = vmul.f32 %v2486, %v3114
        %v3200 = vmul.f32 %v2488, %v3118
        %v3201 = vmul.f32 %v2297, %v3106
        %v3202 = vmul.f32 %v2299, %v3110
        %v3203 = vmul.f32 %v2490, %v3114
        %v3204 = vmul.f32 %v2492, %v3118
        %v3205 = vmul.f32 %v2303, %v3106
        %v3206 = vmul.f32 %v2305, %v3110
        %v3207 = vmul.f32 %v2496, %v3114
        %v3208 = vmul.f32 %v2498, %v3118
        %v3209 = vmul.f32 %v2307, %v3106
        %v3210 = vmul.f32 %v2309, %v3110
        %v3211 = vmul.f32 %v2500, %v3114
        %v3212 = vmul.f32 %v2502, %v3118
        %v3213 = vmul.f32 %v2313, %v3106
        %v3214 = vmul.f32 %v2315, %v3110
        %v3215 = vmul.f32 %v2506, %v3114
        %v3216 = vmul.f32 %v2508, %v3118
        %v3217 = vmul.f32 %v2317, %v3106
        %v3218 = vmul.f32 %v2319, %v3110
        %v3219 = vmul.f32 %v2510, %v3114
        %v3220 = vmul.f32 %v2512, %v3118
        %v3221 = vmul.f32 %v2323, %v3106
        %v3222 = vmul.f32 %v2325, %v3110
        %v3223 = vmul.f32 %v2516, %v3114
        %v3224 = vmul.f32 %v2518, %v3118
        %v3225 = vmul.f32 %v2327, %v3106
        %v3226 = vmul.f32 %v2329, %v3110
        %v3227 = vmul.f32 %v2520, %v3114
        %v3228 = vmul.f32 %v2522, %v3118
        %v3229 = vmul.f32 %v2333, %v3106
        %v3230 = vmul.f32 %v2335, %v3110
        %v3231 = vmul.f32 %v2526, %v3114
        %v3232 = vmul.f32 %v2528, %v3118
        %v3233 = vmul.f32 %v2337, %v3106
        %v3234 = vmul.f32 %v2339, %v3110
        %v3235 = vmul.f32 %v2530, %v3114
        %v3236 = vmul.f32 %v2532, %v3118
        %v3237 = vmul.f32 %v2343, %v3106
        %v3238 = vmul.f32 %v2345, %v3110
        %v3239 = vmul.f32 %v2536, %v3114
        %v3240 = vmul.f32 %v2538, %v3118
        %v3241 = vmul.f32 %v2347, %v3106
        %v3242 = vmul.f32 %v2349, %v3110
        %v3243 = vmul.f32 %v2540, %v3114
        %v3244 = vmul.f32 %v2542, %v3118
        %v3245 = vmul.f32 %v2353, %v3106
        %v3246 = vmul.f32 %v2355, %v3110
        %v3247 = vmul.f32 %v2546, %v3114
        %v3248 = vmul.f32 %v2548, %v3118
        %v3249 = vmul.f32 %v2357, %v3106
        %v3250 = vmul.f32 %v2359, %v3110
        %v3251 = vmul.f32 %v2550, %v3114
        %v3252 = vmul.f32 %v2552, %v3118
        %v3253 = vmul.f32 %v2363, %v3106
        %v3254 = vmul.f32 %v2365, %v3110
        %v3255 = vmul.f32 %v2556, %v3114
        %v3256 = vmul.f32 %v2558, %v3118
        %v3257 = vmul.f32 %v2367, %v3106
        %v3258 = vmul.f32 %v2369, %v3110
        %v3259 = vmul.f32 %v2560, %v3114
        %v3260 = vmul.f32 %v2562, %v3118
        %v3261 = vmul.f32 %v2373, %v3106
        %v3262 = vmul.f32 %v2375, %v3110
        %v3263 = vmul.f32 %v2566, %v3114
        %v3264 = vmul.f32 %v2568, %v3118
        %v3265 = vmul.f32 %v2377, %v3106
        %v3266 = vmul.f32 %v2379, %v3110
        %v3267 = vmul.f32 %v2570, %v3114
        %v3268 = vmul.f32 %v2572, %v3118
        %v3269 = vmul.f32 %v2383, %v3106
        %v3270 = vmul.f32 %v2385, %v3110
        %v3271 = vmul.f32 %v2576, %v3114
        %v3272 = vmul.f32 %v2578, %v3118
        %v3273 = vmul.f32 %v2387, %v3106
        %v3274 = vmul.f32 %v2389, %v3110
        %v3275 = vmul.f32 %v2580, %v3114
        %v3276 = vmul.f32 %v2582, %v3118
        %v3277 = vmul.f32 %v2393, %v3106
        %v3278 = vmul.f32 %v2395, %v3110
        %v3279 = vmul.f32 %v2586, %v3114
        %v3280 = vmul.f32 %v2588, %v3118
        %v3281 = vmul.f32 %v2397, %v3106
        %v3282 = vmul.f32 %v2399, %v3110
        %v3283 = vmul.f32 %v2590, %v3114
        %v3284 = vmul.f32 %v2592, %v3118
        %v3286 = vlaneseq
        %v3287 = vshrl.u32 %v3286, 7
        %v3288 = vsub.s32 0, %v3287
        %v3289 = vrot.slane %v3156, %v3288
        %v3290 = vlaneseq
        %v3291 = vshrl.u32 %v3290, 7
        %v3292 = vsub.s32 1, %v3291
        %v3293 = vrot.slane %v3156, %v3292
        %v3294 = vlaneseq
        %v3295 = vshrl.u32 %v3294, 7
        %v3296 = vsub.s32 2, %v3295
        %v3297 = vrot.slane %v3156, %v3296
        %v3298 = vlaneseq
        %v3299 = vshrl.u32 %v3298, 7
        %v3300 = vsub.s32 3, %v3299
        %v3301 = vrot.slane %v3156, %v3300
        %v3306 = vadd.f32 %v3157, %v3289
        %v3307 = vadd.f32 %v3158, %v3293
        %v3308 = vadd.f32 %v3159, %v3297
        %v3309 = vadd.f32 %v3160, %v3301
        %v3310 = vadd.f32 %v3161, %v3289
        %v3311 = vadd.f32 %v3162, %v3293
        %v3312 = vadd.f32 %v3163, %v3297
        %v3313 = vadd.f32 %v3164, %v3301
        %v3314 = vadd.f32 %v3165, %v3289
        %v3315 = vadd.f32 %v3166, %v3293
        %v3316 = vadd.f32 %v3167, %v3297
        %v3317 = vadd.f32 %v3168, %v3301
        %v3318 = vadd.f32 %v3169, %v3289
        %v3319 = vadd.f32 %v3170, %v3293
        %v3320 = vadd.f32 %v3171, %v3297
        %v3321 = vadd.f32 %v3172, %v3301
        %v3322 = vadd.f32 %v3173, %v3289
        %v3323 = vadd.f32 %v3174, %v3293
        %v3324 = vadd.f32 %v3175, %v3297
        %v3325 = vadd.f32 %v3176, %v3301
        %v3326 = vadd.f32 %v3177, %v3289
        %v3327 = vadd.f32 %v3178, %v3293
        %v3328 = vadd.f32 %v3179, %v3297
        %v3329 = vadd.f32 %v3180, %v3301
        %v3330 = vadd.f32 %v3181, %v3289
        %v3331 = vadd.f32 %v3182, %v3293
        %v3332 = vadd.f32 %v3183, %v3297
        %v3333 = vadd.f32 %v3184, %v3301
        %v3334 = vadd.f32 %v3185, %v3289
        %v3335 = vadd.f32 %v3186, %v3293
        %v3336 = vadd.f32 %v3187, %v3297
        %v3337 = vadd.f32 %v3188, %v3301
        %v3338 = vadd.f32 %v3189, %v3289
        %v3339 = vadd.f32 %v3190, %v3293
        %v3340 = vadd.f32 %v3191, %v3297
        %v3341 = vadd.f32 %v3192, %v3301
        %v3342 = vadd.f32 %v3193, %v3289
        %v3343 = vadd.f32 %v3194, %v3293
        %v3344 = vadd.f32 %v3195, %v3297
        %v3345 = vadd.f32 %v3196, %v3301
        %v3346 = vadd.f32 %v3197, %v3289
        %v3347 = vadd.f32 %v3198, %v3293
        %v3348 = vadd.f32 %v3199, %v3297
        %v3349 = vadd.f32 %v3200, %v3301
        %v3350 = vadd.f32 %v3201, %v3289
        %v3351 = vadd.f32 %v3202, %v3293
        %v3352 = vadd.f32 %v3203, %v3297
        %v3353 = vadd.f32 %v3204, %v3301
        %v3354 = vadd.f32 %v3205, %v3289
        %v3355 = vadd.f32 %v3206, %v3293
        %v3356 = vadd.f32 %v3207, %v3297
        %v3357 = vadd.f32 %v3208, %v3301
        %v3358 = vadd.f32 %v3209, %v3289
        %v3359 = vadd.f32 %v3210, %v3293
        %v3360 = vadd.f32 %v3211, %v3297
        %v3361 = vadd.f32 %v3212, %v3301
        %v3362 = vadd.f32 %v3213, %v3289
        %v3363 = vadd.f32 %v3214, %v3293
        %v3364 = vadd.f32 %v3215, %v3297
        %v3365 = vadd.f32 %v3216, %v3301
        %v3366 = vadd.f32 %v3217, %v3289
        %v3367 = vadd.f32 %v3218, %v3293
        %v3368 = vadd.f32 %v3219, %v3297
        %v3369 = vadd.f32 %v3220, %v3301
        %v3370 = vadd.f32 %v3221, %v3289
        %v3371 = vadd.f32 %v3222, %v3293
        %v3372 = vadd.f32 %v3223, %v3297
        %v3373 = vadd.f32 %v3224, %v3301
        %v3374 = vadd.f32 %v3225, %v3289
        %v3375 = vadd.f32 %v3226, %v3293
        %v3376 = vadd.f32 %v3227, %v3297
        %v3377 = vadd.f32 %v3228, %v3301
        %v3378 = vadd.f32 %v3229, %v3289
        %v3379 = vadd.f32 %v3230, %v3293
        %v3380 = vadd.f32 %v3231, %v3297
        %v3381 = vadd.f32 %v3232, %v3301
        %v3382 = vadd.f32 %v3233, %v3289
        %v3383 = vadd.f32 %v3234, %v3293
        %v3384 = vadd.f32 %v3235, %v3297
        %v3385 = vadd.f32 %v3236, %v3301
        %v3386 = vadd.f32 %v3237, %v3289
        %v3387 = vadd.f32 %v3238, %v3293
        %v3388 = vadd.f32 %v3239, %v3297
        %v3389 = vadd.f32 %v3240, %v3301
        %v3390 = vadd.f32 %v3241, %v3289
        %v3391 = vadd.f32 %v3242, %v3293
        %v3392 = vadd.f32 %v3243, %v3297
        %v3393 = vadd.f32 %v3244, %v3301
        %v3394 = vadd.f32 %v3245, %v3289
        %v3395 = vadd.f32 %v3246, %v3293
        %v3396 = vadd.f32 %v3247, %v3297
        %v3397 = vadd.f32 %v3248, %v3301
        %v3398 = vadd.f32 %v3249, %v3289
        %v3399 = vadd.f32 %v3250, %v3293
        %v3400 = vadd.f32 %v3251, %v3297
        %v3401 = vadd.f32 %v3252, %v3301
        %v3402 = vadd.f32 %v3253, %v3289
        %v3403 = vadd.f32 %v3254, %v3293
        %v3404 = vadd.f32 %v3255, %v3297
        %v3405 = vadd.f32 %v3256, %v3301
        %v3406 = vadd.f32 %v3257, %v3289
        %v3407 = vadd.f32 %v3258, %v3293
        %v3408 = vadd.f32 %v3259, %v3297
        %v3409 = vadd.f32 %v3260, %v3301
        %v3410 = vadd.f32 %v3261, %v3289
        %v3411 = vadd.f32 %v3262, %v3293
        %v3412 = vadd.f32 %v3263, %v3297
        %v3413 = vadd.f32 %v3264, %v3301
        %v3414 = vadd.f32 %v3265, %v3289
        %v3415 = vadd.f32 %v3266, %v3293
        %v3416 = vadd.f32 %v3267, %v3297
        %v3417 = vadd.f32 %v3268, %v3301
        %v3418 = vadd.f32 %v3269, %v3289
        %v3419 = vadd.f32 %v3270, %v3293
        %v3420 = vadd.f32 %v3271, %v3297
        %v3421 = vadd.f32 %v3272, %v3301
        %v3422 = vadd.f32 %v3273, %v3289
        %v3423 = vadd.f32 %v3274, %v3293
        %v3424 = vadd.f32 %v3275, %v3297
        %v3425 = vadd.f32 %v3276, %v3301
        %v3426 = vadd.f32 %v3277, %v3289
        %v3427 = vadd.f32 %v3278, %v3293
        %v3428 = vadd.f32 %v3279, %v3297
        %v3429 = vadd.f32 %v3280, %v3301
        %v3430 = vadd.f32 %v3281, %v3289
        %v3431 = vadd.f32 %v3282, %v3293
        %v3432 = vadd.f32 %v3283, %v3297
        %v3433 = vadd.f32 %v3284, %v3301
        %vm3434 = vcmp.gt.f32.partialorder %v3306, 0.0
        %vm3435 = vcmp.gt.f32.partialorder %v3307, 0.0
        %vm3436 = vcmp.gt.f32.partialorder %v3308, 0.0
        %vm3437 = vcmp.gt.f32.partialorder %v3309, 0.0
        %vm3438 = vcmp.gt.f32.partialorder %v3310, 0.0
        %vm3439 = vcmp.gt.f32.partialorder %v3311, 0.0
        %vm3440 = vcmp.gt.f32.partialorder %v3312, 0.0
        %vm3441 = vcmp.gt.f32.partialorder %v3313, 0.0
        %vm3442 = vcmp.gt.f32.partialorder %v3314, 0.0
        %vm3443 = vcmp.gt.f32.partialorder %v3315, 0.0
        %vm3444 = vcmp.gt.f32.partialorder %v3316, 0.0
        %vm3445 = vcmp.gt.f32.partialorder %v3317, 0.0
        %vm3446 = vcmp.gt.f32.partialorder %v3318, 0.0
        %vm3447 = vcmp.gt.f32.partialorder %v3319, 0.0
        %vm3448 = vcmp.gt.f32.partialorder %v3320, 0.0
        %vm3449 = vcmp.gt.f32.partialorder %v3321, 0.0
        %vm3450 = vcmp.gt.f32.partialorder %v3322, 0.0
        %vm3451 = vcmp.gt.f32.partialorder %v3323, 0.0
        %vm3452 = vcmp.gt.f32.partialorder %v3324, 0.0
        %vm3453 = vcmp.gt.f32.partialorder %v3325, 0.0
        %vm3454 = vcmp.gt.f32.partialorder %v3326, 0.0
        %vm3455 = vcmp.gt.f32.partialorder %v3327, 0.0
        %vm3456 = vcmp.gt.f32.partialorder %v3328, 0.0
        %vm3457 = vcmp.gt.f32.partialorder %v3329, 0.0
        %vm3458 = vcmp.gt.f32.partialorder %v3330, 0.0
        %vm3459 = vcmp.gt.f32.partialorder %v3331, 0.0
        %vm3460 = vcmp.gt.f32.partialorder %v3332, 0.0
        %vm3461 = vcmp.gt.f32.partialorder %v3333, 0.0
        %vm3462 = vcmp.gt.f32.partialorder %v3334, 0.0
        %vm3463 = vcmp.gt.f32.partialorder %v3335, 0.0
        %vm3464 = vcmp.gt.f32.partialorder %v3336, 0.0
        %vm3465 = vcmp.gt.f32.partialorder %v3337, 0.0
        %vm3466 = vcmp.gt.f32.partialorder %v3338, 0.0
        %vm3467 = vcmp.gt.f32.partialorder %v3339, 0.0
        %vm3468 = vcmp.gt.f32.partialorder %v3340, 0.0
        %vm3469 = vcmp.gt.f32.partialorder %v3341, 0.0
        %vm3470 = vcmp.gt.f32.partialorder %v3342, 0.0
        %vm3471 = vcmp.gt.f32.partialorder %v3343, 0.0
        %vm3472 = vcmp.gt.f32.partialorder %v3344, 0.0
        %vm3473 = vcmp.gt.f32.partialorder %v3345, 0.0
        %vm3474 = vcmp.gt.f32.partialorder %v3346, 0.0
        %vm3475 = vcmp.gt.f32.partialorder %v3347, 0.0
        %vm3476 = vcmp.gt.f32.partialorder %v3348, 0.0
        %vm3477 = vcmp.gt.f32.partialorder %v3349, 0.0
        %vm3478 = vcmp.gt.f32.partialorder %v3350, 0.0
        %vm3479 = vcmp.gt.f32.partialorder %v3351, 0.0
        %vm3480 = vcmp.gt.f32.partialorder %v3352, 0.0
        %vm3481 = vcmp.gt.f32.partialorder %v3353, 0.0
        %vm3482 = vcmp.gt.f32.partialorder %v3354, 0.0
        %vm3483 = vcmp.gt.f32.partialorder %v3355, 0.0
        %vm3484 = vcmp.gt.f32.partialorder %v3356, 0.0
        %vm3485 = vcmp.gt.f32.partialorder %v3357, 0.0
        %vm3486 = vcmp.gt.f32.partialorder %v3358, 0.0
        %vm3487 = vcmp.gt.f32.partialorder %v3359, 0.0
        %vm3488 = vcmp.gt.f32.partialorder %v3360, 0.0
        %vm3489 = vcmp.gt.f32.partialorder %v3361, 0.0
        %vm3490 = vcmp.gt.f32.partialorder %v3362, 0.0
        %vm3491 = vcmp.gt.f32.partialorder %v3363, 0.0
        %vm3492 = vcmp.gt.f32.partialorder %v3364, 0.0
        %vm3493 = vcmp.gt.f32.partialorder %v3365, 0.0
        %vm3494 = vcmp.gt.f32.partialorder %v3366, 0.0
        %vm3495 = vcmp.gt.f32.partialorder %v3367, 0.0
        %vm3496 = vcmp.gt.f32.partialorder %v3368, 0.0
        %vm3497 = vcmp.gt.f32.partialorder %v3369, 0.0
        %vm3498 = vcmp.gt.f32.partialorder %v3370, 0.0
        %vm3499 = vcmp.gt.f32.partialorder %v3371, 0.0
        %vm3500 = vcmp.gt.f32.partialorder %v3372, 0.0
        %vm3501 = vcmp.gt.f32.partialorder %v3373, 0.0
        %vm3502 = vcmp.gt.f32.partialorder %v3374, 0.0
        %vm3503 = vcmp.gt.f32.partialorder %v3375, 0.0
        %vm3504 = vcmp.gt.f32.partialorder %v3376, 0.0
        %vm3505 = vcmp.gt.f32.partialorder %v3377, 0.0
        %vm3506 = vcmp.gt.f32.partialorder %v3378, 0.0
        %vm3507 = vcmp.gt.f32.partialorder %v3379, 0.0
        %vm3508 = vcmp.gt.f32.partialorder %v3380, 0.0
        %vm3509 = vcmp.gt.f32.partialorder %v3381, 0.0
        %vm3510 = vcmp.gt.f32.partialorder %v3382, 0.0
        %vm3511 = vcmp.gt.f32.partialorder %v3383, 0.0
        %vm3512 = vcmp.gt.f32.partialorder %v3384, 0.0
        %vm3513 = vcmp.gt.f32.partialorder %v3385, 0.0
        %vm3514 = vcmp.gt.f32.partialorder %v3386, 0.0
        %vm3515 = vcmp.gt.f32.partialorder %v3387, 0.0
        %vm3516 = vcmp.gt.f32.partialorder %v3388, 0.0
        %vm3517 = vcmp.gt.f32.partialorder %v3389, 0.0
        %vm3518 = vcmp.gt.f32.partialorder %v3390, 0.0
        %vm3519 = vcmp.gt.f32.partialorder %v3391, 0.0
        %vm3520 = vcmp.gt.f32.partialorder %v3392, 0.0
        %vm3521 = vcmp.gt.f32.partialorder %v3393, 0.0
        %vm3522 = vcmp.gt.f32.partialorder %v3394, 0.0
        %vm3523 = vcmp.gt.f32.partialorder %v3395, 0.0
        %vm3524 = vcmp.gt.f32.partialorder %v3396, 0.0
        %vm3525 = vcmp.gt.f32.partialorder %v3397, 0.0
        %vm3526 = vcmp.gt.f32.partialorder %v3398, 0.0
        %vm3527 = vcmp.gt.f32.partialorder %v3399, 0.0
        %vm3528 = vcmp.gt.f32.partialorder %v3400, 0.0
        %vm3529 = vcmp.gt.f32.partialorder %v3401, 0.0
        %vm3530 = vcmp.gt.f32.partialorder %v3402, 0.0
        %vm3531 = vcmp.gt.f32.partialorder %v3403, 0.0
        %vm3532 = vcmp.gt.f32.partialorder %v3404, 0.0
        %vm3533 = vcmp.gt.f32.partialorder %v3405, 0.0
        %vm3534 = vcmp.gt.f32.partialorder %v3406, 0.0
        %vm3535 = vcmp.gt.f32.partialorder %v3407, 0.0
        %vm3536 = vcmp.gt.f32.partialorder %v3408, 0.0
        %vm3537 = vcmp.gt.f32.partialorder %v3409, 0.0
        %vm3538 = vcmp.gt.f32.partialorder %v3410, 0.0
        %vm3539 = vcmp.gt.f32.partialorder %v3411, 0.0
        %vm3540 = vcmp.gt.f32.partialorder %v3412, 0.0
        %vm3541 = vcmp.gt.f32.partialorder %v3413, 0.0
        %vm3542 = vcmp.gt.f32.partialorder %v3414, 0.0
        %vm3543 = vcmp.gt.f32.partialorder %v3415, 0.0
        %vm3544 = vcmp.gt.f32.partialorder %v3416, 0.0
        %vm3545 = vcmp.gt.f32.partialorder %v3417, 0.0
        %vm3546 = vcmp.gt.f32.partialorder %v3418, 0.0
        %vm3547 = vcmp.gt.f32.partialorder %v3419, 0.0
        %vm3548 = vcmp.gt.f32.partialorder %v3420, 0.0
        %vm3549 = vcmp.gt.f32.partialorder %v3421, 0.0
        %vm3550 = vcmp.gt.f32.partialorder %v3422, 0.0
        %vm3551 = vcmp.gt.f32.partialorder %v3423, 0.0
        %vm3552 = vcmp.gt.f32.partialorder %v3424, 0.0
        %vm3553 = vcmp.gt.f32.partialorder %v3425, 0.0
        %vm3554 = vcmp.gt.f32.partialorder %v3426, 0.0
        %vm3555 = vcmp.gt.f32.partialorder %v3427, 0.0
        %vm3556 = vcmp.gt.f32.partialorder %v3428, 0.0
        %vm3557 = vcmp.gt.f32.partialorder %v3429, 0.0
        %vm3558 = vcmp.gt.f32.partialorder %v3430, 0.0
        %vm3559 = vcmp.gt.f32.partialorder %v3431, 0.0
        %vm3560 = vcmp.gt.f32.partialorder %v3432, 0.0
        %vm3561 = vcmp.gt.f32.partialorder %v3433, 0.0
        %v3562 = vmul.f32 %v3306, 0.2
        %v3563 = vmul.f32 %v3307, 0.2
        %v3564 = vmul.f32 %v3308, 0.2
        %v3565 = vmul.f32 %v3309, 0.2
        %v3566 = vmul.f32 %v3310, 0.2
        %v3567 = vmul.f32 %v3311, 0.2
        %v3568 = vmul.f32 %v3312, 0.2
        %v3569 = vmul.f32 %v3313, 0.2
        %v3570 = vmul.f32 %v3314, 0.2
        %v3571 = vmul.f32 %v3315, 0.2
        %v3572 = vmul.f32 %v3316, 0.2
        %v3573 = vmul.f32 %v3317, 0.2
        %v3574 = vmul.f32 %v3318, 0.2
        %v3575 = vmul.f32 %v3319, 0.2
        %v3576 = vmul.f32 %v3320, 0.2
        %v3577 = vmul.f32 %v3321, 0.2
        %v3578 = vmul.f32 %v3322, 0.2
        %v3579 = vmul.f32 %v3323, 0.2
        %v3580 = vmul.f32 %v3324, 0.2
        %v3581 = vmul.f32 %v3325, 0.2
        %v3582 = vmul.f32 %v3326, 0.2
        %v3583 = vmul.f32 %v3327, 0.2
        %v3584 = vmul.f32 %v3328, 0.2
        %v3585 = vmul.f32 %v3329, 0.2
        %v3586 = vmul.f32 %v3330, 0.2
        %v3587 = vmul.f32 %v3331, 0.2
        %v3588 = vmul.f32 %v3332, 0.2
        %v3589 = vmul.f32 %v3333, 0.2
        %v3590 = vmul.f32 %v3334, 0.2
        %v3591 = vmul.f32 %v3335, 0.2
        %v3592 = vmul.f32 %v3336, 0.2
        %v3593 = vmul.f32 %v3337, 0.2
        %v3594 = vmul.f32 %v3338, 0.2
        %v3595 = vmul.f32 %v3339, 0.2
        %v3596 = vmul.f32 %v3340, 0.2
        %v3597 = vmul.f32 %v3341, 0.2
        %v3598 = vmul.f32 %v3342, 0.2
        %v3599 = vmul.f32 %v3343, 0.2
        %v3600 = vmul.f32 %v3344, 0.2
        %v3601 = vmul.f32 %v3345, 0.2
        %v3602 = vmul.f32 %v3346, 0.2
        %v3603 = vmul.f32 %v3347, 0.2
        %v3604 = vmul.f32 %v3348, 0.2
        %v3605 = vmul.f32 %v3349, 0.2
        %v3606 = vmul.f32 %v3350, 0.2
        %v3607 = vmul.f32 %v3351, 0.2
        %v3608 = vmul.f32 %v3352, 0.2
        %v3609 = vmul.f32 %v3353, 0.2
        %v3610 = vmul.f32 %v3354, 0.2
        %v3611 = vmul.f32 %v3355, 0.2
        %v3612 = vmul.f32 %v3356, 0.2
        %v3613 = vmul.f32 %v3357, 0.2
        %v3614 = vmul.f32 %v3358, 0.2
        %v3615 = vmul.f32 %v3359, 0.2
        %v3616 = vmul.f32 %v3360, 0.2
        %v3617 = vmul.f32 %v3361, 0.2
        %v3618 = vmul.f32 %v3362, 0.2
        %v3619 = vmul.f32 %v3363, 0.2
        %v3620 = vmul.f32 %v3364, 0.2
        %v3621 = vmul.f32 %v3365, 0.2
        %v3622 = vmul.f32 %v3366, 0.2
        %v3623 = vmul.f32 %v3367, 0.2
        %v3624 = vmul.f32 %v3368, 0.2
        %v3625 = vmul.f32 %v3369, 0.2
        %v3626 = vmul.f32 %v3370, 0.2
        %v3627 = vmul.f32 %v3371, 0.2
        %v3628 = vmul.f32 %v3372, 0.2
        %v3629 = vmul.f32 %v3373, 0.2
        %v3630 = vmul.f32 %v3374, 0.2
        %v3631 = vmul.f32 %v3375, 0.2
        %v3632 = vmul.f32 %v3376, 0.2
        %v3633 = vmul.f32 %v3377, 0.2
        %v3634 = vmul.f32 %v3378, 0.2
        %v3635 = vmul.f32 %v3379, 0.2
        %v3636 = vmul.f32 %v3380, 0.2
        %v3637 = vmul.f32 %v3381, 0.2
        %v3638 = vmul.f32 %v3382, 0.2
        %v3639 = vmul.f32 %v3383, 0.2
        %v3640 = vmul.f32 %v3384, 0.2
        %v3641 = vmul.f32 %v3385, 0.2
        %v3642 = vmul.f32 %v3386, 0.2
        %v3643 = vmul.f32 %v3387, 0.2
        %v3644 = vmul.f32 %v3388, 0.2
        %v3645 = vmul.f32 %v3389, 0.2
        %v3646 = vmul.f32 %v3390, 0.2
        %v3647 = vmul.f32 %v3391, 0.2
        %v3648 = vmul.f32 %v3392, 0.2
        %v3649 = vmul.f32 %v3393, 0.2
        %v3650 = vmul.f32 %v3394, 0.2
        %v3651 = vmul.f32 %v3395, 0.2
        %v3652 = vmul.f32 %v3396, 0.2
        %v3653 = vmul.f32 %v3397, 0.2
        %v3654 = vmul.f32 %v3398, 0.2
        %v3655 = vmul.f32 %v3399, 0.2
        %v3656 = vmul.f32 %v3400, 0.2
        %v3657 = vmul.f32 %v3401, 0.2
        %v3658 = vmul.f32 %v3402, 0.2
        %v3659 = vmul.f32 %v3403, 0.2
        %v3660 = vmul.f32 %v3404, 0.2
        %v3661 = vmul.f32 %v3405, 0.2
        %v3662 = vmul.f32 %v3406, 0.2
        %v3663 = vmul.f32 %v3407, 0.2
        %v3664 = vmul.f32 %v3408, 0.2
        %v3665 = vmul.f32 %v3409, 0.2
        %v3666 = vmul.f32 %v3410, 0.2
        %v3667 = vmul.f32 %v3411, 0.2
        %v3668 = vmul.f32 %v3412, 0.2
        %v3669 = vmul.f32 %v3413, 0.2
        %v3670 = vmul.f32 %v3414, 0.2
        %v3671 = vmul.f32 %v3415, 0.2
        %v3672 = vmul.f32 %v3416, 0.2
        %v3673 = vmul.f32 %v3417, 0.2
        %v3674 = vmul.f32 %v3418, 0.2
        %v3675 = vmul.f32 %v3419, 0.2
        %v3676 = vmul.f32 %v3420, 0.2
        %v3677 = vmul.f32 %v3421, 0.2
        %v3678 = vmul.f32 %v3422, 0.2
        %v3679 = vmul.f32 %v3423, 0.2
        %v3680 = vmul.f32 %v3424, 0.2
        %v3681 = vmul.f32 %v3425, 0.2
        %v3682 = vmul.f32 %v3426, 0.2
        %v3683 = vmul.f32 %v3427, 0.2
        %v3684 = vmul.f32 %v3428, 0.2
        %v3685 = vmul.f32 %v3429, 0.2
        %v3686 = vmul.f32 %v3430, 0.2
        %v3687 = vmul.f32 %v3431, 0.2
        %v3688 = vmul.f32 %v3432, 0.2
        %v3689 = vmul.f32 %v3433, 0.2
        %v3690 = vsel %vm3434, %v3306, %v3562
        %v3691 = vsel %vm3435, %v3307, %v3563
        %v3692 = vsel %vm3436, %v3308, %v3564
        %v3693 = vsel %vm3437, %v3309, %v3565
        %v3694 = vsel %vm3438, %v3310, %v3566
        %v3695 = vsel %vm3439, %v3311, %v3567
        %v3696 = vsel %vm3440, %v3312, %v3568
        %v3697 = vsel %vm3441, %v3313, %v3569
        %v3698 = vsel %vm3442, %v3314, %v3570
        %v3699 = vsel %vm3443, %v3315, %v3571
        %v3700 = vsel %vm3444, %v3316, %v3572
        %v3701 = vsel %vm3445, %v3317, %v3573
        %v3702 = vsel %vm3446, %v3318, %v3574
        %v3703 = vsel %vm3447, %v3319, %v3575
        %v3704 = vsel %vm3448, %v3320, %v3576
        %v3705 = vsel %vm3449, %v3321, %v3577
        %v3706 = vsel %vm3450, %v3322, %v3578
        %v3707 = vsel %vm3451, %v3323, %v3579
        %v3708 = vsel %vm3452, %v3324, %v3580
        %v3709 = vsel %vm3453, %v3325, %v3581
        %v3710 = vsel %vm3454, %v3326, %v3582
        %v3711 = vsel %vm3455, %v3327, %v3583
        %v3712 = vsel %vm3456, %v3328, %v3584
        %v3713 = vsel %vm3457, %v3329, %v3585
        %v3714 = vsel %vm3458, %v3330, %v3586
        %v3715 = vsel %vm3459, %v3331, %v3587
        %v3716 = vsel %vm3460, %v3332, %v3588
        %v3717 = vsel %vm3461, %v3333, %v3589
        %v3718 = vsel %vm3462, %v3334, %v3590
        %v3719 = vsel %vm3463, %v3335, %v3591
        %v3720 = vsel %vm3464, %v3336, %v3592
        %v3721 = vsel %vm3465, %v3337, %v3593
        %v3722 = vsel %vm3466, %v3338, %v3594
        %v3723 = vsel %vm3467, %v3339, %v3595
        %v3724 = vsel %vm3468, %v3340, %v3596
        %v3725 = vsel %vm3469, %v3341, %v3597
        %v3726 = vsel %vm3470, %v3342, %v3598
        %v3727 = vsel %vm3471, %v3343, %v3599
        %v3728 = vsel %vm3472, %v3344, %v3600
        %v3729 = vsel %vm3473, %v3345, %v3601
        %v3730 = vsel %vm3474, %v3346, %v3602
        %v3731 = vsel %vm3475, %v3347, %v3603
        %v3732 = vsel %vm3476, %v3348, %v3604
        %v3733 = vsel %vm3477, %v3349, %v3605
        %v3734 = vsel %vm3478, %v3350, %v3606
        %v3735 = vsel %vm3479, %v3351, %v3607
        %v3736 = vsel %vm3480, %v3352, %v3608
        %v3737 = vsel %vm3481, %v3353, %v3609
        %v3738 = vsel %vm3482, %v3354, %v3610
        %v3739 = vsel %vm3483, %v3355, %v3611
        %v3740 = vsel %vm3484, %v3356, %v3612
        %v3741 = vsel %vm3485, %v3357, %v3613
        %v3742 = vsel %vm3486, %v3358, %v3614
        %v3743 = vsel %vm3487, %v3359, %v3615
        %v3744 = vsel %vm3488, %v3360, %v3616
        %v3745 = vsel %vm3489, %v3361, %v3617
        %v3746 = vsel %vm3490, %v3362, %v3618
        %v3747 = vsel %vm3491, %v3363, %v3619
        %v3748 = vsel %vm3492, %v3364, %v3620
        %v3749 = vsel %vm3493, %v3365, %v3621
        %v3750 = vsel %vm3494, %v3366, %v3622
        %v3751 = vsel %vm3495, %v3367, %v3623
        %v3752 = vsel %vm3496, %v3368, %v3624
        %v3753 = vsel %vm3497, %v3369, %v3625
        %v3754 = vsel %vm3498, %v3370, %v3626
        %v3755 = vsel %vm3499, %v3371, %v3627
        %v3756 = vsel %vm3500, %v3372, %v3628
        %v3757 = vsel %vm3501, %v3373, %v3629
        %v3758 = vsel %vm3502, %v3374, %v3630
        %v3759 = vsel %vm3503, %v3375, %v3631
        %v3760 = vsel %vm3504, %v3376, %v3632
        %v3761 = vsel %vm3505, %v3377, %v3633
        %v3762 = vsel %vm3506, %v3378, %v3634
        %v3763 = vsel %vm3507, %v3379, %v3635
        %v3764 = vsel %vm3508, %v3380, %v3636
        %v3765 = vsel %vm3509, %v3381, %v3637
        %v3766 = vsel %vm3510, %v3382, %v3638
        %v3767 = vsel %vm3511, %v3383, %v3639
        %v3768 = vsel %vm3512, %v3384, %v3640
        %v3769 = vsel %vm3513, %v3385, %v3641
        %v3770 = vsel %vm3514, %v3386, %v3642
        %v3771 = vsel %vm3515, %v3387, %v3643
        %v3772 = vsel %vm3516, %v3388, %v3644
        %v3773 = vsel %vm3517, %v3389, %v3645
        %v3774 = vsel %vm3518, %v3390, %v3646
        %v3775 = vsel %vm3519, %v3391, %v3647
        %v3776 = vsel %vm3520, %v3392, %v3648
        %v3777 = vsel %vm3521, %v3393, %v3649
        %v3778 = vsel %vm3522, %v3394, %v3650
        %v3779 = vsel %vm3523, %v3395, %v3651
        %v3780 = vsel %vm3524, %v3396, %v3652
        %v3781 = vsel %vm3525, %v3397, %v3653
        %v3782 = vsel %vm3526, %v3398, %v3654
        %v3783 = vsel %vm3527, %v3399, %v3655
        %v3784 = vsel %vm3528, %v3400, %v3656
        %v3785 = vsel %vm3529, %v3401, %v3657
        %v3786 = vsel %vm3530, %v3402, %v3658
        %v3787 = vsel %vm3531, %v3403, %v3659
        %v3788 = vsel %vm3532, %v3404, %v3660
        %v3789 = vsel %vm3533, %v3405, %v3661
        %v3790 = vsel %vm3534, %v3406, %v3662
        %v3791 = vsel %vm3535, %v3407, %v3663
        %v3792 = vsel %vm3536, %v3408, %v3664
        %v3793 = vsel %vm3537, %v3409, %v3665
        %v3794 = vsel %vm3538, %v3410, %v3666
        %v3795 = vsel %vm3539, %v3411, %v3667
        %v3796 = vsel %vm3540, %v3412, %v3668
        %v3797 = vsel %vm3541, %v3413, %v3669
        %v3798 = vsel %vm3542, %v3414, %v3670
        %v3799 = vsel %vm3543, %v3415, %v3671
        %v3800 = vsel %vm3544, %v3416, %v3672
        %v3801 = vsel %vm3545, %v3417, %v3673
        %v3802 = vsel %vm3546, %v3418, %v3674
        %v3803 = vsel %vm3547, %v3419, %v3675
        %v3804 = vsel %vm3548, %v3420, %v3676
        %v3805 = vsel %vm3549, %v3421, %v3677
        %v3806 = vsel %vm3550, %v3422, %v3678
        %v3807 = vsel %vm3551, %v3423, %v3679
        %v3808 = vsel %vm3552, %v3424, %v3680
        %v3809 = vsel %vm3553, %v3425, %v3681
        %v3810 = vsel %vm3554, %v3426, %v3682
        %v3811 = vsel %vm3555, %v3427, %v3683
        %v3812 = vsel %vm3556, %v3428, %v3684
        %v3813 = vsel %vm3557, %v3429, %v3685
        %v3814 = vsel %vm3558, %v3430, %v3686
        %v3815 = vsel %vm3559, %v3431, %v3687
        %v3816 = vsel %vm3560, %v3432, %v3688
        %v3817 = vsel %vm3561, %v3433, %v3689
        %v3818 = vpack.c.bf16 %v3694, %v3690
        %v3819 = vpack.c.bf16 %v3695, %v3691
        %v3820 = vpack.c.bf16 %v3696, %v3692
        %v3821 = vpack.c.bf16 %v3697, %v3693
        %v3822 = vpack.c.bf16 %v3702, %v3698
        %v3823 = vpack.c.bf16 %v3703, %v3699
        %v3824 = vpack.c.bf16 %v3704, %v3700
        %v3825 = vpack.c.bf16 %v3705, %v3701
        %v3826 = vpack.c.bf16 %v3710, %v3706
        %v3827 = vpack.c.bf16 %v3711, %v3707
        %v3828 = vpack.c.bf16 %v3712, %v3708
        %v3829 = vpack.c.bf16 %v3713, %v3709
        %v3830 = vpack.c.bf16 %v3718, %v3714
        %v3831 = vpack.c.bf16 %v3719, %v3715
        %v3832 = vpack.c.bf16 %v3720, %v3716
        %v3833 = vpack.c.bf16 %v3721, %v3717
        %v3834 = vpack.c.bf16 %v3726, %v3722
        %v3835 = vpack.c.bf16 %v3727, %v3723
        %v3836 = vpack.c.bf16 %v3728, %v3724
        %v3837 = vpack.c.bf16 %v3729, %v3725
        %v3838 = vpack.c.bf16 %v3734, %v3730
        %v3839 = vpack.c.bf16 %v3735, %v3731
        %v3840 = vpack.c.bf16 %v3736, %v3732
        %v3841 = vpack.c.bf16 %v3737, %v3733
        %v3842 = vpack.c.bf16 %v3742, %v3738
        %v3843 = vpack.c.bf16 %v3743, %v3739
        %v3844 = vpack.c.bf16 %v3744, %v3740
        %v3845 = vpack.c.bf16 %v3745, %v3741
        %v3846 = vpack.c.bf16 %v3750, %v3746
        %v3847 = vpack.c.bf16 %v3751, %v3747
        %v3848 = vpack.c.bf16 %v3752, %v3748
        %v3849 = vpack.c.bf16 %v3753, %v3749
        %v3850 = vpack.c.bf16 %v3758, %v3754
        %v3851 = vpack.c.bf16 %v3759, %v3755
        %v3852 = vpack.c.bf16 %v3760, %v3756
        %v3853 = vpack.c.bf16 %v3761, %v3757
        %v3854 = vpack.c.bf16 %v3766, %v3762
        %v3855 = vpack.c.bf16 %v3767, %v3763
        %v3856 = vpack.c.bf16 %v3768, %v3764
        %v3857 = vpack.c.bf16 %v3769, %v3765
        %v3858 = vpack.c.bf16 %v3774, %v3770
        %v3859 = vpack.c.bf16 %v3775, %v3771
        %v3860 = vpack.c.bf16 %v3776, %v3772
        %v3861 = vpack.c.bf16 %v3777, %v3773
        %v3862 = vpack.c.bf16 %v3782, %v3778
        %v3863 = vpack.c.bf16 %v3783, %v3779
        %v3864 = vpack.c.bf16 %v3784, %v3780
        %v3865 = vpack.c.bf16 %v3785, %v3781
        %v3866 = vpack.c.bf16 %v3790, %v3786
        %v3867 = vpack.c.bf16 %v3791, %v3787
        %v3868 = vpack.c.bf16 %v3792, %v3788
        %v3869 = vpack.c.bf16 %v3793, %v3789
        %v3870 = vpack.c.bf16 %v3798, %v3794
        %v3871 = vpack.c.bf16 %v3799, %v3795
        %v3872 = vpack.c.bf16 %v3800, %v3796
        %v3873 = vpack.c.bf16 %v3801, %v3797
        %v3874 = vpack.c.bf16 %v3806, %v3802
        %v3875 = vpack.c.bf16 %v3807, %v3803
        %v3876 = vpack.c.bf16 %v3808, %v3804
        %v3877 = vpack.c.bf16 %v3809, %v3805
        %v3878 = vpack.c.bf16 %v3814, %v3810
        %v3879 = vpack.c.bf16 %v3815, %v3811
        %v3880 = vpack.c.bf16 %v3816, %v3812
        %v3881 = vpack.c.bf16 %v3817, %v3813
        %v3882 = vld [vmem:[#allocation16] sm:$0xff]
        %v3883 = vld [vmem:[#allocation16 + $0x8] sm:$0xff]
        %v3884 = vld [vmem:[#allocation16 + $0x10] sm:$0xff]
        %v3885 = vld [vmem:[#allocation16 + $0x18] sm:$0xff]
        %v3886 = vld [vmem:[#allocation16 + $0x20] sm:$0xff]
        %v3887 = vld [vmem:[#allocation16 + $0x28] sm:$0xff]
        %v3888 = vld [vmem:[#allocation16 + $0x30] sm:$0xff]
        %v3889 = vld [vmem:[#allocation16 + $0x38] sm:$0xff]
        %v3890 = vld [vmem:[#allocation16 + $0x40] sm:$0xff]
        %v3891 = vld [vmem:[#allocation16 + $0x48] sm:$0xff]
        %v3892 = vld [vmem:[#allocation16 + $0x50] sm:$0xff]
        %v3893 = vld [vmem:[#allocation16 + $0x58] sm:$0xff]
        %v3894 = vld [vmem:[#allocation16 + $0x60] sm:$0xff]
        %v3895 = vld [vmem:[#allocation16 + $0x68] sm:$0xff]
        %v3896 = vld [vmem:[#allocation16 + $0x70] sm:$0xff]
        %v3897 = vld [vmem:[#allocation16 + $0x78] sm:$0xff]
        %v3898 = vld [vmem:[#allocation16 + $0x80] sm:$0xff]
        %v3899 = vld [vmem:[#allocation16 + $0x88] sm:$0xff]
        %v3900 = vld [vmem:[#allocation16 + $0x90] sm:$0xff]
        %v3901 = vld [vmem:[#allocation16 + $0x98] sm:$0xff]
        %v3902 = vld [vmem:[#allocation16 + $0xa0] sm:$0xff]
        %v3903 = vld [vmem:[#allocation16 + $0xa8] sm:$0xff]
        %v3904 = vld [vmem:[#allocation16 + $0xb0] sm:$0xff]
        %v3905 = vld [vmem:[#allocation16 + $0xb8] sm:$0xff]
        %v3906 = vld [vmem:[#allocation16 + $0xc0] sm:$0xff]
        %v3907 = vld [vmem:[#allocation16 + $0xc8] sm:$0xff]
        %v3908 = vld [vmem:[#allocation16 + $0xd0] sm:$0xff]
        %v3909 = vld [vmem:[#allocation16 + $0xd8] sm:$0xff]
        %v3910 = vld [vmem:[#allocation16 + $0xe0] sm:$0xff]
        %v3911 = vld [vmem:[#allocation16 + $0xe8] sm:$0xff]
        %v3912 = vld [vmem:[#allocation16 + $0xf0] sm:$0xff]
        %v3913 = vld [vmem:[#allocation16 + $0xf8] sm:$0xff]
        %v3914 = vld [vmem:[#allocation16 + $0x100] sm:$0xff]
        %v3915 = vld [vmem:[#allocation16 + $0x108] sm:$0xff]
        %v3916 = vld [vmem:[#allocation16 + $0x110] sm:$0xff]
        %v3917 = vld [vmem:[#allocation16 + $0x118] sm:$0xff]
        %v3918 = vld [vmem:[#allocation16 + $0x120] sm:$0xff]
        %v3919 = vld [vmem:[#allocation16 + $0x128] sm:$0xff]
        %v3920 = vld [vmem:[#allocation16 + $0x130] sm:$0xff]
        %v3921 = vld [vmem:[#allocation16 + $0x138] sm:$0xff]
        %v3922 = vld [vmem:[#allocation16 + $0x140] sm:$0xff]
        %v3923 = vld [vmem:[#allocation16 + $0x148] sm:$0xff]
        %v3924 = vld [vmem:[#allocation16 + $0x150] sm:$0xff]
        %v3925 = vld [vmem:[#allocation16 + $0x158] sm:$0xff]
        %v3926 = vld [vmem:[#allocation16 + $0x160] sm:$0xff]
        %v3927 = vld [vmem:[#allocation16 + $0x168] sm:$0xff]
        %v3928 = vld [vmem:[#allocation16 + $0x170] sm:$0xff]
        %v3929 = vld [vmem:[#allocation16 + $0x178] sm:$0xff]
        %v3930 = vld [vmem:[#allocation16 + $0x180] sm:$0xff]
        %v3931 = vld [vmem:[#allocation16 + $0x188] sm:$0xff]
        %v3932 = vld [vmem:[#allocation16 + $0x190] sm:$0xff]
        %v3933 = vld [vmem:[#allocation16 + $0x198] sm:$0xff]
        %v3934 = vld [vmem:[#allocation16 + $0x1a0] sm:$0xff]
        %v3935 = vld [vmem:[#allocation16 + $0x1a8] sm:$0xff]
        %v3936 = vld [vmem:[#allocation16 + $0x1b0] sm:$0xff]
        %v3937 = vld [vmem:[#allocation16 + $0x1b8] sm:$0xff]
        %v3938 = vld [vmem:[#allocation16 + $0x1c0] sm:$0xff]
        %v3939 = vld [vmem:[#allocation16 + $0x1c8] sm:$0xff]
        %v3940 = vld [vmem:[#allocation16 + $0x1d0] sm:$0xff]
        %v3941 = vld [vmem:[#allocation16 + $0x1d8] sm:$0xff]
        %v3942 = vld [vmem:[#allocation16 + $0x1e0] sm:$0xff]
        %v3943 = vld [vmem:[#allocation16 + $0x1e8] sm:$0xff]
        %v3944 = vld [vmem:[#allocation16 + $0x1f0] sm:$0xff]
        %v3945 = vld [vmem:[#allocation16 + $0x1f8] sm:$0xff]
        %v3946 = vld [vmem:[#allocation16 + $0x200] sm:$0xff]
        %v3947 = vld [vmem:[#allocation16 + $0x208] sm:$0xff]
        %v3948 = vld [vmem:[#allocation16 + $0x210] sm:$0xff]
        %v3949 = vld [vmem:[#allocation16 + $0x218] sm:$0xff]
        %v3950 = vld [vmem:[#allocation16 + $0x220] sm:$0xff]
        %v3951 = vld [vmem:[#allocation16 + $0x228] sm:$0xff]
        %v3952 = vld [vmem:[#allocation16 + $0x230] sm:$0xff]
        %v3953 = vld [vmem:[#allocation16 + $0x238] sm:$0xff]
        %v3954 = vld [vmem:[#allocation16 + $0x240] sm:$0xff]
        %v3955 = vld [vmem:[#allocation16 + $0x248] sm:$0xff]
        %v3956 = vld [vmem:[#allocation16 + $0x250] sm:$0xff]
        %v3957 = vld [vmem:[#allocation16 + $0x258] sm:$0xff]
        %v3958 = vld [vmem:[#allocation16 + $0x260] sm:$0xff]
        %v3959 = vld [vmem:[#allocation16 + $0x268] sm:$0xff]
        %v3960 = vld [vmem:[#allocation16 + $0x270] sm:$0xff]
        %v3961 = vld [vmem:[#allocation16 + $0x278] sm:$0xff]
        %v3962 = vld [vmem:[#allocation16 + $0x280] sm:$0xff]
        %v3963 = vld [vmem:[#allocation16 + $0x288] sm:$0xff]
        %v3964 = vld [vmem:[#allocation16 + $0x290] sm:$0xff]
        %v3965 = vld [vmem:[#allocation16 + $0x298] sm:$0xff]
        %v3966 = vld [vmem:[#allocation16 + $0x2a0] sm:$0xff]
        %v3967 = vld [vmem:[#allocation16 + $0x2a8] sm:$0xff]
        %v3968 = vld [vmem:[#allocation16 + $0x2b0] sm:$0xff]
        %v3969 = vld [vmem:[#allocation16 + $0x2b8] sm:$0xff]
        %v3970 = vld [vmem:[#allocation16 + $0x2c0] sm:$0xff]
        %v3971 = vld [vmem:[#allocation16 + $0x2c8] sm:$0xff]
        %v3972 = vld [vmem:[#allocation16 + $0x2d0] sm:$0xff]
        %v3973 = vld [vmem:[#allocation16 + $0x2d8] sm:$0xff]
        %v3974 = vld [vmem:[#allocation16 + $0x2e0] sm:$0xff]
        %v3975 = vld [vmem:[#allocation16 + $0x2e8] sm:$0xff]
        %v3976 = vld [vmem:[#allocation16 + $0x2f0] sm:$0xff]
        %v3977 = vld [vmem:[#allocation16 + $0x2f8] sm:$0xff]
        %v3978 = vld [vmem:[#allocation16 + $0x300] sm:$0xff]
        %v3979 = vld [vmem:[#allocation16 + $0x308] sm:$0xff]
        %v3980 = vld [vmem:[#allocation16 + $0x310] sm:$0xff]
        %v3981 = vld [vmem:[#allocation16 + $0x318] sm:$0xff]
        %v3982 = vld [vmem:[#allocation16 + $0x320] sm:$0xff]
        %v3983 = vld [vmem:[#allocation16 + $0x328] sm:$0xff]
        %v3984 = vld [vmem:[#allocation16 + $0x330] sm:$0xff]
        %v3985 = vld [vmem:[#allocation16 + $0x338] sm:$0xff]
        %v3986 = vld [vmem:[#allocation16 + $0x340] sm:$0xff]
        %v3987 = vld [vmem:[#allocation16 + $0x348] sm:$0xff]
        %v3988 = vld [vmem:[#allocation16 + $0x350] sm:$0xff]
        %v3989 = vld [vmem:[#allocation16 + $0x358] sm:$0xff]
        %v3990 = vld [vmem:[#allocation16 + $0x360] sm:$0xff]
        %v3991 = vld [vmem:[#allocation16 + $0x368] sm:$0xff]
        %v3992 = vld [vmem:[#allocation16 + $0x370] sm:$0xff]
        %v3993 = vld [vmem:[#allocation16 + $0x378] sm:$0xff]
        %v3994 = vld [vmem:[#allocation16 + $0x380] sm:$0xff]
        %v3995 = vld [vmem:[#allocation16 + $0x388] sm:$0xff]
        %v3996 = vld [vmem:[#allocation16 + $0x390] sm:$0xff]
        %v3997 = vld [vmem:[#allocation16 + $0x398] sm:$0xff]
        %v3998 = vld [vmem:[#allocation16 + $0x3a0] sm:$0xff]
        %v3999 = vld [vmem:[#allocation16 + $0x3a8] sm:$0xff]
        %v4000 = vld [vmem:[#allocation16 + $0x3b0] sm:$0xff]
        %v4001 = vld [vmem:[#allocation16 + $0x3b8] sm:$0xff]
        %v4002 = vld [vmem:[#allocation16 + $0x3c0] sm:$0xff]
        %v4003 = vld [vmem:[#allocation16 + $0x3c8] sm:$0xff]
        %v4004 = vld [vmem:[#allocation16 + $0x3d0] sm:$0xff]
        %v4005 = vld [vmem:[#allocation16 + $0x3d8] sm:$0xff]
        %v4006 = vld [vmem:[#allocation16 + $0x3e0] sm:$0xff]
        %v4007 = vld [vmem:[#allocation16 + $0x3e8] sm:$0xff]
        %v4008 = vld [vmem:[#allocation16 + $0x3f0] sm:$0xff]
        %v4009 = vld [vmem:[#allocation16 + $0x3f8] sm:$0xff]
        %v4010 = vunpack.c.l.s8.bf16 %v3882
        %v4011 = vunpack.c.l.s8.bf16 %v3883
        %v4012 = vunpack.c.l.s8.bf16 %v3884
        %v4013 = vunpack.c.l.s8.bf16 %v3885
        %v4014 = vunpack.c.l.s8.bf16 %v3886
        %v4015 = vunpack.c.l.s8.bf16 %v3887
        %v4016 = vunpack.c.l.s8.bf16 %v3888
        %v4017 = vunpack.c.l.s8.bf16 %v3889
        %v4018 = vunpack.c.h.s8.bf16 %v3882
        %v4019 = vunpack.c.h.s8.bf16 %v3883
        %v4020 = vunpack.c.h.s8.bf16 %v3884
        %v4021 = vunpack.c.h.s8.bf16 %v3885
        %v4022 = vunpack.c.h.s8.bf16 %v3886
        %v4023 = vunpack.c.h.s8.bf16 %v3887
        %v4024 = vunpack.c.h.s8.bf16 %v3888
        %v4025 = vunpack.c.h.s8.bf16 %v3889
        %v4026 = vunpack.c.l.s8.bf16 %v3890
        %v4027 = vunpack.c.l.s8.bf16 %v3891
        %v4028 = vunpack.c.l.s8.bf16 %v3892
        %v4029 = vunpack.c.l.s8.bf16 %v3893
        %v4030 = vunpack.c.l.s8.bf16 %v3894
        %v4031 = vunpack.c.l.s8.bf16 %v3895
        %v4032 = vunpack.c.l.s8.bf16 %v3896
        %v4033 = vunpack.c.l.s8.bf16 %v3897
        %v4034 = vunpack.c.h.s8.bf16 %v3890
        %v4035 = vunpack.c.h.s8.bf16 %v3891
        %v4036 = vunpack.c.h.s8.bf16 %v3892
        %v4037 = vunpack.c.h.s8.bf16 %v3893
        %v4038 = vunpack.c.h.s8.bf16 %v3894
        %v4039 = vunpack.c.h.s8.bf16 %v3895
        %v4040 = vunpack.c.h.s8.bf16 %v3896
        %v4041 = vunpack.c.h.s8.bf16 %v3897
        %v4042 = vunpack.c.l.s8.bf16 %v3898
        %v4043 = vunpack.c.l.s8.bf16 %v3899
        %v4044 = vunpack.c.l.s8.bf16 %v3900
        %v4045 = vunpack.c.l.s8.bf16 %v3901
        %v4046 = vunpack.c.l.s8.bf16 %v3902
        %v4047 = vunpack.c.l.s8.bf16 %v3903
        %v4048 = vunpack.c.l.s8.bf16 %v3904
        %v4049 = vunpack.c.l.s8.bf16 %v3905
        %v4050 = vunpack.c.h.s8.bf16 %v3898
        %v4051 = vunpack.c.h.s8.bf16 %v3899
        %v4052 = vunpack.c.h.s8.bf16 %v3900
        %v4053 = vunpack.c.h.s8.bf16 %v3901
        %v4054 = vunpack.c.h.s8.bf16 %v3902
        %v4055 = vunpack.c.h.s8.bf16 %v3903
        %v4056 = vunpack.c.h.s8.bf16 %v3904
        %v4057 = vunpack.c.h.s8.bf16 %v3905
        %v4058 = vunpack.c.l.s8.bf16 %v3906
        %v4059 = vunpack.c.l.s8.bf16 %v3907
        %v4060 = vunpack.c.l.s8.bf16 %v3908
        %v4061 = vunpack.c.l.s8.bf16 %v3909
        %v4062 = vunpack.c.l.s8.bf16 %v3910
        %v4063 = vunpack.c.l.s8.bf16 %v3911
        %v4064 = vunpack.c.l.s8.bf16 %v3912
        %v4065 = vunpack.c.l.s8.bf16 %v3913
        %v4066 = vunpack.c.h.s8.bf16 %v3906
        %v4067 = vunpack.c.h.s8.bf16 %v3907
        %v4068 = vunpack.c.h.s8.bf16 %v3908
        %v4069 = vunpack.c.h.s8.bf16 %v3909
        %v4070 = vunpack.c.h.s8.bf16 %v3910
        %v4071 = vunpack.c.h.s8.bf16 %v3911
        %v4072 = vunpack.c.h.s8.bf16 %v3912
        %v4073 = vunpack.c.h.s8.bf16 %v3913
        %v4074 = vunpack.c.l.s8.bf16 %v3914
        %v4075 = vunpack.c.l.s8.bf16 %v3915
        %v4076 = vunpack.c.l.s8.bf16 %v3916
        %v4077 = vunpack.c.l.s8.bf16 %v3917
        %v4078 = vunpack.c.l.s8.bf16 %v3918
        %v4079 = vunpack.c.l.s8.bf16 %v3919
        %v4080 = vunpack.c.l.s8.bf16 %v3920
        %v4081 = vunpack.c.l.s8.bf16 %v3921
        %v4082 = vunpack.c.h.s8.bf16 %v3914
        %v4083 = vunpack.c.h.s8.bf16 %v3915
        %v4084 = vunpack.c.h.s8.bf16 %v3916
        %v4085 = vunpack.c.h.s8.bf16 %v3917
        %v4086 = vunpack.c.h.s8.bf16 %v3918
        %v4087 = vunpack.c.h.s8.bf16 %v3919
        %v4088 = vunpack.c.h.s8.bf16 %v3920
        %v4089 = vunpack.c.h.s8.bf16 %v3921
        %v4090 = vunpack.c.l.s8.bf16 %v3922
        %v4091 = vunpack.c.l.s8.bf16 %v3923
        %v4092 = vunpack.c.l.s8.bf16 %v3924
        %v4093 = vunpack.c.l.s8.bf16 %v3925
        %v4094 = vunpack.c.l.s8.bf16 %v3926
        %v4095 = vunpack.c.l.s8.bf16 %v3927
        %v4096 = vunpack.c.l.s8.bf16 %v3928
        %v4097 = vunpack.c.l.s8.bf16 %v3929
        %v4098 = vunpack.c.h.s8.bf16 %v3922
        %v4099 = vunpack.c.h.s8.bf16 %v3923
        %v4100 = vunpack.c.h.s8.bf16 %v3924
        %v4101 = vunpack.c.h.s8.bf16 %v3925
        %v4102 = vunpack.c.h.s8.bf16 %v3926
        %v4103 = vunpack.c.h.s8.bf16 %v3927
        %v4104 = vunpack.c.h.s8.bf16 %v3928
        %v4105 = vunpack.c.h.s8.bf16 %v3929
        %v4106 = vunpack.c.l.s8.bf16 %v3930
        %v4107 = vunpack.c.l.s8.bf16 %v3931
        %v4108 = vunpack.c.l.s8.bf16 %v3932
        %v4109 = vunpack.c.l.s8.bf16 %v3933
        %v4110 = vunpack.c.l.s8.bf16 %v3934
        %v4111 = vunpack.c.l.s8.bf16 %v3935
        %v4112 = vunpack.c.l.s8.bf16 %v3936
        %v4113 = vunpack.c.l.s8.bf16 %v3937
        %v4114 = vunpack.c.h.s8.bf16 %v3930
        %v4115 = vunpack.c.h.s8.bf16 %v3931
        %v4116 = vunpack.c.h.s8.bf16 %v3932
        %v4117 = vunpack.c.h.s8.bf16 %v3933
        %v4118 = vunpack.c.h.s8.bf16 %v3934
        %v4119 = vunpack.c.h.s8.bf16 %v3935
        %v4120 = vunpack.c.h.s8.bf16 %v3936
        %v4121 = vunpack.c.h.s8.bf16 %v3937
        %v4122 = vunpack.c.l.s8.bf16 %v3938
        %v4123 = vunpack.c.l.s8.bf16 %v3939
        %v4124 = vunpack.c.l.s8.bf16 %v3940
        %v4125 = vunpack.c.l.s8.bf16 %v3941
        %v4126 = vunpack.c.l.s8.bf16 %v3942
        %v4127 = vunpack.c.l.s8.bf16 %v3943
        %v4128 = vunpack.c.l.s8.bf16 %v3944
        %v4129 = vunpack.c.l.s8.bf16 %v3945
        %v4130 = vunpack.c.h.s8.bf16 %v3938
        %v4131 = vunpack.c.h.s8.bf16 %v3939
        %v4132 = vunpack.c.h.s8.bf16 %v3940
        %v4133 = vunpack.c.h.s8.bf16 %v3941
        %v4134 = vunpack.c.h.s8.bf16 %v3942
        %v4135 = vunpack.c.h.s8.bf16 %v3943
        %v4136 = vunpack.c.h.s8.bf16 %v3944
        %v4137 = vunpack.c.h.s8.bf16 %v3945
        %v4138 = vunpack.c.l.s8.bf16 %v3946
        %v4139 = vunpack.c.l.s8.bf16 %v3947
        %v4140 = vunpack.c.l.s8.bf16 %v3948
        %v4141 = vunpack.c.l.s8.bf16 %v3949
        %v4142 = vunpack.c.l.s8.bf16 %v3950
        %v4143 = vunpack.c.l.s8.bf16 %v3951
        %v4144 = vunpack.c.l.s8.bf16 %v3952
        %v4145 = vunpack.c.l.s8.bf16 %v3953
        %v4146 = vunpack.c.h.s8.bf16 %v3946
        %v4147 = vunpack.c.h.s8.bf16 %v3947
        %v4148 = vunpack.c.h.s8.bf16 %v3948
        %v4149 = vunpack.c.h.s8.bf16 %v3949
        %v4150 = vunpack.c.h.s8.bf16 %v3950
        %v4151 = vunpack.c.h.s8.bf16 %v3951
        %v4152 = vunpack.c.h.s8.bf16 %v3952
        %v4153 = vunpack.c.h.s8.bf16 %v3953
        %v4154 = vunpack.c.l.s8.bf16 %v3954
        %v4155 = vunpack.c.l.s8.bf16 %v3955
        %v4156 = vunpack.c.l.s8.bf16 %v3956
        %v4157 = vunpack.c.l.s8.bf16 %v3957
        %v4158 = vunpack.c.l.s8.bf16 %v3958
        %v4159 = vunpack.c.l.s8.bf16 %v3959
        %v4160 = vunpack.c.l.s8.bf16 %v3960
        %v4161 = vunpack.c.l.s8.bf16 %v3961
        %v4162 = vunpack.c.h.s8.bf16 %v3954
        %v4163 = vunpack.c.h.s8.bf16 %v3955
        %v4164 = vunpack.c.h.s8.bf16 %v3956
        %v4165 = vunpack.c.h.s8.bf16 %v3957
        %v4166 = vunpack.c.h.s8.bf16 %v3958
        %v4167 = vunpack.c.h.s8.bf16 %v3959
        %v4168 = vunpack.c.h.s8.bf16 %v3960
        %v4169 = vunpack.c.h.s8.bf16 %v3961
        %v4170 = vunpack.c.l.s8.bf16 %v3962
        %v4171 = vunpack.c.l.s8.bf16 %v3963
        %v4172 = vunpack.c.l.s8.bf16 %v3964
        %v4173 = vunpack.c.l.s8.bf16 %v3965
        %v4174 = vunpack.c.l.s8.bf16 %v3966
        %v4175 = vunpack.c.l.s8.bf16 %v3967
        %v4176 = vunpack.c.l.s8.bf16 %v3968
        %v4177 = vunpack.c.l.s8.bf16 %v3969
        %v4178 = vunpack.c.h.s8.bf16 %v3962
        %v4179 = vunpack.c.h.s8.bf16 %v3963
        %v4180 = vunpack.c.h.s8.bf16 %v3964
        %v4181 = vunpack.c.h.s8.bf16 %v3965
        %v4182 = vunpack.c.h.s8.bf16 %v3966
        %v4183 = vunpack.c.h.s8.bf16 %v3967
        %v4184 = vunpack.c.h.s8.bf16 %v3968
        %v4185 = vunpack.c.h.s8.bf16 %v3969
        %v4186 = vunpack.c.l.s8.bf16 %v3970
        %v4187 = vunpack.c.l.s8.bf16 %v3971
        %v4188 = vunpack.c.l.s8.bf16 %v3972
        %v4189 = vunpack.c.l.s8.bf16 %v3973
        %v4190 = vunpack.c.l.s8.bf16 %v3974
        %v4191 = vunpack.c.l.s8.bf16 %v3975
        %v4192 = vunpack.c.l.s8.bf16 %v3976
        %v4193 = vunpack.c.l.s8.bf16 %v3977
        %v4194 = vunpack.c.h.s8.bf16 %v3970
        %v4195 = vunpack.c.h.s8.bf16 %v3971
        %v4196 = vunpack.c.h.s8.bf16 %v3972
        %v4197 = vunpack.c.h.s8.bf16 %v3973
        %v4198 = vunpack.c.h.s8.bf16 %v3974
        %v4199 = vunpack.c.h.s8.bf16 %v3975
        %v4200 = vunpack.c.h.s8.bf16 %v3976
        %v4201 = vunpack.c.h.s8.bf16 %v3977
        %v4202 = vunpack.c.l.s8.bf16 %v3978
        %v4203 = vunpack.c.l.s8.bf16 %v3979
        %v4204 = vunpack.c.l.s8.bf16 %v3980
        %v4205 = vunpack.c.l.s8.bf16 %v3981
        %v4206 = vunpack.c.l.s8.bf16 %v3982
        %v4207 = vunpack.c.l.s8.bf16 %v3983
        %v4208 = vunpack.c.l.s8.bf16 %v3984
        %v4209 = vunpack.c.l.s8.bf16 %v3985
        %v4210 = vunpack.c.h.s8.bf16 %v3978
        %v4211 = vunpack.c.h.s8.bf16 %v3979
        %v4212 = vunpack.c.h.s8.bf16 %v3980
        %v4213 = vunpack.c.h.s8.bf16 %v3981
        %v4214 = vunpack.c.h.s8.bf16 %v3982
        %v4215 = vunpack.c.h.s8.bf16 %v3983
        %v4216 = vunpack.c.h.s8.bf16 %v3984
        %v4217 = vunpack.c.h.s8.bf16 %v3985
        %v4218 = vunpack.c.l.s8.bf16 %v3986
        %v4219 = vunpack.c.l.s8.bf16 %v3987
        %v4220 = vunpack.c.l.s8.bf16 %v3988
        %v4221 = vunpack.c.l.s8.bf16 %v3989
        %v4222 = vunpack.c.l.s8.bf16 %v3990
        %v4223 = vunpack.c.l.s8.bf16 %v3991
        %v4224 = vunpack.c.l.s8.bf16 %v3992
        %v4225 = vunpack.c.l.s8.bf16 %v3993
        %v4226 = vunpack.c.h.s8.bf16 %v3986
        %v4227 = vunpack.c.h.s8.bf16 %v3987
        %v4228 = vunpack.c.h.s8.bf16 %v3988
        %v4229 = vunpack.c.h.s8.bf16 %v3989
        %v4230 = vunpack.c.h.s8.bf16 %v3990
        %v4231 = vunpack.c.h.s8.bf16 %v3991
        %v4232 = vunpack.c.h.s8.bf16 %v3992
        %v4233 = vunpack.c.h.s8.bf16 %v3993
        %v4234 = vunpack.c.l.s8.bf16 %v3994
        %v4235 = vunpack.c.l.s8.bf16 %v3995
        %v4236 = vunpack.c.l.s8.bf16 %v3996
        %v4237 = vunpack.c.l.s8.bf16 %v3997
        %v4238 = vunpack.c.l.s8.bf16 %v3998
        %v4239 = vunpack.c.l.s8.bf16 %v3999
        %v4240 = vunpack.c.l.s8.bf16 %v4000
        %v4241 = vunpack.c.l.s8.bf16 %v4001
        %v4242 = vunpack.c.h.s8.bf16 %v3994
        %v4243 = vunpack.c.h.s8.bf16 %v3995
        %v4244 = vunpack.c.h.s8.bf16 %v3996
        %v4245 = vunpack.c.h.s8.bf16 %v3997
        %v4246 = vunpack.c.h.s8.bf16 %v3998
        %v4247 = vunpack.c.h.s8.bf16 %v3999
        %v4248 = vunpack.c.h.s8.bf16 %v4000
        %v4249 = vunpack.c.h.s8.bf16 %v4001
        %v4250 = vunpack.c.l.s8.bf16 %v4002
        %v4251 = vunpack.c.l.s8.bf16 %v4003
        %v4252 = vunpack.c.l.s8.bf16 %v4004
        %v4253 = vunpack.c.l.s8.bf16 %v4005
        %v4254 = vunpack.c.l.s8.bf16 %v4006
        %v4255 = vunpack.c.l.s8.bf16 %v4007
        %v4256 = vunpack.c.l.s8.bf16 %v4008
        %v4257 = vunpack.c.l.s8.bf16 %v4009
        %v4258 = vunpack.c.h.s8.bf16 %v4002
        %v4259 = vunpack.c.h.s8.bf16 %v4003
        %v4260 = vunpack.c.h.s8.bf16 %v4004
        %v4261 = vunpack.c.h.s8.bf16 %v4005
        %v4262 = vunpack.c.h.s8.bf16 %v4006
        %v4263 = vunpack.c.h.s8.bf16 %v4007
        %v4264 = vunpack.c.h.s8.bf16 %v4008
        %v4265 = vunpack.c.h.s8.bf16 %v4009
        %4266 = vmatprep.subr.bf16.mxu0 %v4011
        %4267 = vmatpush1.bf16.msra.mxu0 %v4010
        %4268 = vmatprep.subr.bf16.mxu0 %v4019
        %4269 = vmatpush1.bf16.msra.mxu0 %v4018
        %4270 = vmatprep.subr.bf16.mxu0 %v4027
        %4271 = vmatpush1.bf16.msra.mxu0 %v4026
        %4272 = vmatprep.subr.bf16.mxu0 %v4035
        %4273 = vmatpush1.bf16.msra.mxu0 %v4034
        %4274 = vmatprep.subr.bf16.mxu0 %v4043
        %4275 = vmatpush1.bf16.msra.mxu0 %v4042
        %4276 = vmatprep.subr.bf16.mxu0 %v4051
        %4277 = vmatpush1.bf16.msra.mxu0 %v4050
        %4278 = vmatprep.subr.bf16.mxu0 %v4059
        %4279 = vmatpush1.bf16.msra.mxu0 %v4058
        %4280 = vmatprep.subr.bf16.mxu0 %v4067
        %4281 = vmatpush1.bf16.msra.mxu0 %v4066
        %4282 = vmatprep.subr.bf16.mxu0 %v4075
        %4283 = vmatpush1.bf16.msra.mxu0 %v4074
        %4284 = vmatprep.subr.bf16.mxu0 %v4083
        %4285 = vmatpush1.bf16.msra.mxu0 %v4082
        %4286 = vmatprep.subr.bf16.mxu0 %v4091
        %4287 = vmatpush1.bf16.msra.mxu0 %v4090
        %4288 = vmatprep.subr.bf16.mxu0 %v4099
        %4289 = vmatpush1.bf16.msra.mxu0 %v4098
        %4290 = vmatprep.subr.bf16.mxu0 %v4107
        %4291 = vmatpush1.bf16.msra.mxu0 %v4106
        %4292 = vmatprep.subr.bf16.mxu0 %v4115
        %4293 = vmatpush1.bf16.msra.mxu0 %v4114
        %4294 = vmatprep.subr.bf16.mxu0 %v4123
        %4295 = vmatpush1.bf16.msra.mxu0 %v4122
        %4296 = vmatprep.subr.bf16.mxu0 %v4131
        %4297 = vmatpush1.bf16.msra.mxu0 %v4130
        %4298 = vmatprep.mubr.bf16.mxu0 %v3819
        %4299 = vmatmul.mubr.bf16.gmra.mrb[0].mxu0 %v3818
        %v4300 = vpop.f32.mrb[0].mxu0
        %v4301 = vadd.f32 0.0, %v4300
        %v4302 = vpop.f32.mrb[0].mxu0
        %v4303 = vadd.f32 0.0, %v4302
        %v4304 = vpop.f32.mrb[0].mxu0
        %v4305 = vadd.f32 0.0, %v4304
        %v4306 = vpop.f32.mrb[0].mxu0
        %v4307 = vadd.f32 0.0, %v4306
        %4308 = vmatprep.mubr.bf16.mxu0 %v3823
        %4309 = vmatmul.mubr.bf16.gmra.mrb[0].mxu0 %v3822
        %v4310 = vpop.f32.mrb[0].mxu0
        %v4311 = vadd.f32 0.0, %v4310
        %v4312 = vpop.f32.mrb[0].mxu0
        %v4313 = vadd.f32 0.0, %v4312
        %v4314 = vpop.f32.mrb[0].mxu0
        %v4315 = vadd.f32 0.0, %v4314
        %v4316 = vpop.f32.mrb[0].mxu0
        %v4317 = vadd.f32 0.0, %v4316
        %4318 = vmatprep.mubr.bf16.mxu0 %v3827
        %4319 = vmatmul.mubr.bf16.gmra.mrb[0].mxu0 %v3826
        %v4320 = vpop.f32.mrb[0].mxu0
        %v4321 = vadd.f32 0.0, %v4320
        %v4322 = vpop.f32.mrb[0].mxu0
        %v4323 = vadd.f32 0.0, %v4322
        %v4324 = vpop.f32.mrb[0].mxu0
        %v4325 = vadd.f32 0.0, %v4324
        %v4326 = vpop.f32.mrb[0].mxu0
        %v4327 = vadd.f32 0.0, %v4326
        %4328 = vmatprep.mubr.bf16.mxu0 %v3831
        %4329 = vmatmul.mubr.bf16.gmra.mrb[0].mxu0 %v3830
        %v4330 = vpop.f32.mrb[0].mxu0
        %v4331 = vadd.f32 0.0, %v4330
        %v4332 = vpop.f32.mrb[0].mxu0
        %v4333 = vadd.f32 0.0, %v4332
        %v4334 = vpop.f32.mrb[0].mxu0
        %v4335 = vadd.f32 0.0, %v4334
        %v4336 = vpop.f32.mrb[0].mxu0
        %v4337 = vadd.f32 0.0, %v4336
        %4338 = vmatprep.mubr.bf16.mxu0 %v3835
        %4339 = vmatmul.mubr.bf16.gmra.mrb[0].mxu0 %v3834
        %v4340 = vpop.f32.mrb[0].mxu0
        %v4341 = vadd.f32 0.0, %v4340
        %v4342 = vpop.f32.mrb[0].mxu0
        %v4343 = vadd.f32 0.0, %v4342
        %v4344 = vpop.f32.mrb[0].mxu0
        %v4345 = vadd.f32 0.0, %v4344
        %v4346 = vpop.f32.mrb[0].mxu0
        %v4347 = vadd.f32 0.0, %v4346
        %4348 = vmatprep.mubr.bf16.mxu0 %v3839
        %4349 = vmatmul.mubr.bf16.gmra.mrb[0].mxu0 %v3838
        %v4350 = vpop.f32.mrb[0].mxu0
        %v4351 = vadd.f32 0.0, %v4350
        %v4352 = vpop.f32.mrb[0].mxu0
        %v4353 = vadd.f32 0.0, %v4352
        %v4354 = vpop.f32.mrb[0].mxu0
        %v4355 = vadd.f32 0.0, %v4354
        %v4356 = vpop.f32.mrb[0].mxu0
        %v4357 = vadd.f32 0.0, %v4356
        %4358 = vmatprep.mubr.bf16.mxu0 %v3843
        %4359 = vmatmul.mubr.bf16.gmra.mrb[0].mxu0 %v3842
        %v4360 = vpop.f32.mrb[0].mxu0
        %v4361 = vadd.f32 0.0, %v4360
        %v4362 = vpop.f32.mrb[0].mxu0
        %v4363 = vadd.f32 0.0, %v4362
        %v4364 = vpop.f32.mrb[0].mxu0
        %v4365 = vadd.f32 0.0, %v4364
        %v4366 = vpop.f32.mrb[0].mxu0
        %v4367 = vadd.f32 0.0, %v4366
        %4368 = vmatprep.mubr.bf16.mxu0 %v3847
        %4369 = vmatmul.mubr.bf16.gmra.mrb[0].mxu0 %v3846
        %v4370 = vpop.f32.mrb[0].mxu0
        %v4371 = vadd.f32 0.0, %v4370
        %v4372 = vpop.f32.mrb[0].mxu0
        %v4373 = vadd.f32 0.0, %v4372
        %v4374 = vpop.f32.mrb[0].mxu0
        %v4375 = vadd.f32 0.0, %v4374
        %v4376 = vpop.f32.mrb[0].mxu0
        %v4377 = vadd.f32 0.0, %v4376
        %4378 = vmatprep.mubr.bf16.mxu0 %v3851
        %4379 = vmatmul.mubr.bf16.gmra.mrb[0].mxu0 %v3850
        %v4380 = vpop.f32.mrb[0].mxu0
        %v4381 = vadd.f32 0.0, %v4380
        %v4382 = vpop.f32.mrb[0].mxu0
        %v4383 = vadd.f32 0.0, %v4382
        %v4384 = vpop.f32.mrb[0].mxu0
        %v4385 = vadd.f32 0.0, %v4384
        %v4386 = vpop.f32.mrb[0].mxu0
        %v4387 = vadd.f32 0.0, %v4386
        %4388 = vmatprep.mubr.bf16.mxu0 %v3855
        %4389 = vmatmul.mubr.bf16.gmra.mrb[0].mxu0 %v3854
        %v4390 = vpop.f32.mrb[0].mxu0
        %v4391 = vadd.f32 0.0, %v4390
        %v4392 = vpop.f32.mrb[0].mxu0
        %v4393 = vadd.f32 0.0, %v4392
        %v4394 = vpop.f32.mrb[0].mxu0
        %v4395 = vadd.f32 0.0, %v4394
        %v4396 = vpop.f32.mrb[0].mxu0
        %v4397 = vadd.f32 0.0, %v4396
        %4398 = vmatprep.mubr.bf16.mxu0 %v3859
        %4399 = vmatmul.mubr.bf16.gmra.mrb[0].mxu0 %v3858
        %v4400 = vpop.f32.mrb[0].mxu0
        %v4401 = vadd.f32 0.0, %v4400
        %v4402 = vpop.f32.mrb[0].mxu0
        %v4403 = vadd.f32 0.0, %v4402
        %v4404 = vpop.f32.mrb[0].mxu0
        %v4405 = vadd.f32 0.0, %v4404
        %v4406 = vpop.f32.mrb[0].mxu0
        %v4407 = vadd.f32 0.0, %v4406
        %4408 = vmatprep.mubr.bf16.mxu0 %v3863
        %4409 = vmatmul.mubr.bf16.gmra.mrb[0].mxu0 %v3862
        %v4410 = vpop.f32.mrb[0].mxu0
        %v4411 = vadd.f32 0.0, %v4410
        %v4412 = vpop.f32.mrb[0].mxu0
        %v4413 = vadd.f32 0.0, %v4412
        %v4414 = vpop.f32.mrb[0].mxu0
        %v4415 = vadd.f32 0.0, %v4414
        %v4416 = vpop.f32.mrb[0].mxu0
        %v4417 = vadd.f32 0.0, %v4416
        %4418 = vmatprep.mubr.bf16.mxu0 %v3867
        %4419 = vmatmul.mubr.bf16.gmra.mrb[0].mxu0 %v3866
        %v4420 = vpop.f32.mrb[0].mxu0
        %v4421 = vadd.f32 0.0, %v4420
        %v4422 = vpop.f32.mrb[0].mxu0
        %v4423 = vadd.f32 0.0, %v4422
        %v4424 = vpop.f32.mrb[0].mxu0
        %v4425 = vadd.f32 0.0, %v4424
        %v4426 = vpop.f32.mrb[0].mxu0
        %v4427 = vadd.f32 0.0, %v4426
        %4428 = vmatprep.mubr.bf16.mxu0 %v3871
        %4429 = vmatmul.mubr.bf16.gmra.mrb[0].mxu0 %v3870
        %v4430 = vpop.f32.mrb[0].mxu0
        %v4431 = vadd.f32 0.0, %v4430
        %v4432 = vpop.f32.mrb[0].mxu0
        %v4433 = vadd.f32 0.0, %v4432
        %v4434 = vpop.f32.mrb[0].mxu0
        %v4435 = vadd.f32 0.0, %v4434
        %v4436 = vpop.f32.mrb[0].mxu0
        %v4437 = vadd.f32 0.0, %v4436
        %4438 = vmatprep.mubr.bf16.mxu0 %v3875
        %4439 = vmatmul.mubr.bf16.gmra.mrb[0].mxu0 %v3874
        %v4440 = vpop.f32.mrb[0].mxu0
        %v4441 = vadd.f32 0.0, %v4440
        %v4442 = vpop.f32.mrb[0].mxu0
        %v4443 = vadd.f32 0.0, %v4442
        %v4444 = vpop.f32.mrb[0].mxu0
        %v4445 = vadd.f32 0.0, %v4444
        %v4446 = vpop.f32.mrb[0].mxu0
        %v4447 = vadd.f32 0.0, %v4446
        %4448 = vmatprep.mubr.bf16.mxu0 %v3879
        %4449 = vmatmul.mubr.bf16.gmra.mrb[0].mxu0 %v3878
        %v4450 = vpop.f32.mrb[0].mxu0
        %v4451 = vadd.f32 0.0, %v4450
        %v4452 = vpop.f32.mrb[0].mxu0
        %v4453 = vadd.f32 0.0, %v4452
        %v4454 = vpop.f32.mrb[0].mxu0
        %v4455 = vadd.f32 0.0, %v4454
        %v4456 = vpop.f32.mrb[0].mxu0
        %v4457 = vadd.f32 0.0, %v4456
        %4458 = vdwg.mxu0
        %4459 = vmatprep.subr.bf16.mxu0 %v4139
        %4460 = vmatpush1.bf16.msra.mxu0 %v4138
        %4461 = vmatprep.subr.bf16.mxu0 %v4147
        %4462 = vmatpush1.bf16.msra.mxu0 %v4146
        %4463 = vmatprep.subr.bf16.mxu0 %v4155
        %4464 = vmatpush1.bf16.msra.mxu0 %v4154
        %4465 = vmatprep.subr.bf16.mxu0 %v4163
        %4466 = vmatpush1.bf16.msra.mxu0 %v4162
        %4467 = vmatprep.subr.bf16.mxu0 %v4171
        %4468 = vmatpush1.bf16.msra.mxu0 %v4170
        %4469 = vmatprep.subr.bf16.mxu0 %v4179
        %4470 = vmatpush1.bf16.msra.mxu0 %v4178
        %4471 = vmatprep.subr.bf16.mxu0 %v4187
        %4472 = vmatpush1.bf16.msra.mxu0 %v4186
        %4473 = vmatprep.subr.bf16.mxu0 %v4195
        %4474 = vmatpush1.bf16.msra.mxu0 %v4194
        %4475 = vmatprep.subr.bf16.mxu0 %v4203
        %4476 = vmatpush1.bf16.msra.mxu0 %v4202
        %4477 = vmatprep.subr.bf16.mxu0 %v4211
        %4478 = vmatpush1.bf16.msra.mxu0 %v4210
        %4479 = vmatprep.subr.bf16.mxu0 %v4219
        %4480 = vmatpush1.bf16.msra.mxu0 %v4218
        %4481 = vmatprep.subr.bf16.mxu0 %v4227
        %4482 = vmatpush1.bf16.msra.mxu0 %v4226
        %4483 = vmatprep.subr.bf16.mxu0 %v4235
        %4484 = vmatpush1.bf16.msra.mxu0 %v4234
        %4485 = vmatprep.subr.bf16.mxu0 %v4243
        %4486 = vmatpush1.bf16.msra.mxu0 %v4242
        %4487 = vmatprep.subr.bf16.mxu0 %v4251
        %4488 = vmatpush1.bf16.msra.mxu0 %v4250
        %4489 = vmatprep.subr.bf16.mxu0 %v4259
        %4490 = vmatpush1.bf16.msra.mxu0 %v4258
        %4491 = vmatprep.mubr.bf16.mxu0 %v3821
        %4492 = vmatmul.mubr.bf16.gmra.mrb[0].mxu0 %v3820
        %v4493 = vpop.f32.mrb[0].mxu0
        %v4494 = vadd.f32 %v4301, %v4493
        %v4495 = vpop.f32.mrb[0].mxu0
        %v4496 = vadd.f32 %v4303, %v4495
        %v4497 = vpop.f32.mrb[0].mxu0
        %v4498 = vadd.f32 %v4305, %v4497
        %v4499 = vpop.f32.mrb[0].mxu0
        %v4500 = vadd.f32 %v4307, %v4499
        %4501 = vmatprep.mubr.bf16.mxu0 %v3825
        %4502 = vmatmul.mubr.bf16.gmra.mrb[0].mxu0 %v3824
        %v4503 = vpop.f32.mrb[0].mxu0
        %v4504 = vadd.f32 %v4311, %v4503
        %v4505 = vpop.f32.mrb[0].mxu0
        %v4506 = vadd.f32 %v4313, %v4505
        %v4507 = vpop.f32.mrb[0].mxu0
        %v4508 = vadd.f32 %v4315, %v4507
        %v4509 = vpop.f32.mrb[0].mxu0
        %v4510 = vadd.f32 %v4317, %v4509
        %4511 = vmatprep.mubr.bf16.mxu0 %v3829
        %4512 = vmatmul.mubr.bf16.gmra.mrb[0].mxu0 %v3828
        %v4513 = vpop.f32.mrb[0].mxu0
        %v4514 = vadd.f32 %v4321, %v4513
        %v4515 = vpop.f32.mrb[0].mxu0
        %v4516 = vadd.f32 %v4323, %v4515
        %v4517 = vpop.f32.mrb[0].mxu0
        %v4518 = vadd.f32 %v4325, %v4517
        %v4519 = vpop.f32.mrb[0].mxu0
        %v4520 = vadd.f32 %v4327, %v4519
        %4521 = vmatprep.mubr.bf16.mxu0 %v3833
        %4522 = vmatmul.mubr.bf16.gmra.mrb[0].mxu0 %v3832
        %v4523 = vpop.f32.mrb[0].mxu0
        %v4524 = vadd.f32 %v4331, %v4523
        %v4525 = vpop.f32.mrb[0].mxu0
        %v4526 = vadd.f32 %v4333, %v4525
        %v4527 = vpop.f32.mrb[0].mxu0
        %v4528 = vadd.f32 %v4335, %v4527
        %v4529 = vpop.f32.mrb[0].mxu0
        %v4530 = vadd.f32 %v4337, %v4529
        %4531 = vmatprep.mubr.bf16.mxu0 %v3837
        %4532 = vmatmul.mubr.bf16.gmra.mrb[0].mxu0 %v3836
        %v4533 = vpop.f32.mrb[0].mxu0
        %v4534 = vadd.f32 %v4341, %v4533
        %v4535 = vpop.f32.mrb[0].mxu0
        %v4536 = vadd.f32 %v4343, %v4535
        %v4537 = vpop.f32.mrb[0].mxu0
        %v4538 = vadd.f32 %v4345, %v4537
        %v4539 = vpop.f32.mrb[0].mxu0
        %v4540 = vadd.f32 %v4347, %v4539
        %4541 = vmatprep.mubr.bf16.mxu0 %v3841
        %4542 = vmatmul.mubr.bf16.gmra.mrb[0].mxu0 %v3840
        %v4543 = vpop.f32.mrb[0].mxu0
        %v4544 = vadd.f32 %v4351, %v4543
        %v4545 = vpop.f32.mrb[0].mxu0
        %v4546 = vadd.f32 %v4353, %v4545
        %v4547 = vpop.f32.mrb[0].mxu0
        %v4548 = vadd.f32 %v4355, %v4547
        %v4549 = vpop.f32.mrb[0].mxu0
        %v4550 = vadd.f32 %v4357, %v4549
        %4551 = vmatprep.mubr.bf16.mxu0 %v3845
        %4552 = vmatmul.mubr.bf16.gmra.mrb[0].mxu0 %v3844
        %v4553 = vpop.f32.mrb[0].mxu0
        %v4554 = vadd.f32 %v4361, %v4553
        %v4555 = vpop.f32.mrb[0].mxu0
        %v4556 = vadd.f32 %v4363, %v4555
        %v4557 = vpop.f32.mrb[0].mxu0
        %v4558 = vadd.f32 %v4365, %v4557
        %v4559 = vpop.f32.mrb[0].mxu0
        %v4560 = vadd.f32 %v4367, %v4559
        %4561 = vmatprep.mubr.bf16.mxu0 %v3849
        %4562 = vmatmul.mubr.bf16.gmra.mrb[0].mxu0 %v3848
        %v4563 = vpop.f32.mrb[0].mxu0
        %v4564 = vadd.f32 %v4371, %v4563
        %v4565 = vpop.f32.mrb[0].mxu0
        %v4566 = vadd.f32 %v4373, %v4565
        %v4567 = vpop.f32.mrb[0].mxu0
        %v4568 = vadd.f32 %v4375, %v4567
        %v4569 = vpop.f32.mrb[0].mxu0
        %v4570 = vadd.f32 %v4377, %v4569
        %4571 = vmatprep.mubr.bf16.mxu0 %v3853
        %4572 = vmatmul.mubr.bf16.gmra.mrb[0].mxu0 %v3852
        %v4573 = vpop.f32.mrb[0].mxu0
        %v4574 = vadd.f32 %v4381, %v4573
        %v4575 = vpop.f32.mrb[0].mxu0
        %v4576 = vadd.f32 %v4383, %v4575
        %v4577 = vpop.f32.mrb[0].mxu0
        %v4578 = vadd.f32 %v4385, %v4577
        %v4579 = vpop.f32.mrb[0].mxu0
        %v4580 = vadd.f32 %v4387, %v4579
        %4581 = vmatprep.mubr.bf16.mxu0 %v3857
        %4582 = vmatmul.mubr.bf16.gmra.mrb[0].mxu0 %v3856
        %v4583 = vpop.f32.mrb[0].mxu0
        %v4584 = vadd.f32 %v4391, %v4583
        %v4585 = vpop.f32.mrb[0].mxu0
        %v4586 = vadd.f32 %v4393, %v4585
        %v4587 = vpop.f32.mrb[0].mxu0
        %v4588 = vadd.f32 %v4395, %v4587
        %v4589 = vpop.f32.mrb[0].mxu0
        %v4590 = vadd.f32 %v4397, %v4589
        %4591 = vmatprep.mubr.bf16.mxu0 %v3861
        %4592 = vmatmul.mubr.bf16.gmra.mrb[0].mxu0 %v3860
        %v4593 = vpop.f32.mrb[0].mxu0
        %v4594 = vadd.f32 %v4401, %v4593
        %v4595 = vpop.f32.mrb[0].mxu0
        %v4596 = vadd.f32 %v4403, %v4595
        %v4597 = vpop.f32.mrb[0].mxu0
        %v4598 = vadd.f32 %v4405, %v4597
        %v4599 = vpop.f32.mrb[0].mxu0
        %v4600 = vadd.f32 %v4407, %v4599
        %4601 = vmatprep.mubr.bf16.mxu0 %v3865
        %4602 = vmatmul.mubr.bf16.gmra.mrb[0].mxu0 %v3864
        %v4603 = vpop.f32.mrb[0].mxu0
        %v4604 = vadd.f32 %v4411, %v4603
        %v4605 = vpop.f32.mrb[0].mxu0
        %v4606 = vadd.f32 %v4413, %v4605
        %v4607 = vpop.f32.mrb[0].mxu0
        %v4608 = vadd.f32 %v4415, %v4607
        %v4609 = vpop.f32.mrb[0].mxu0
        %v4610 = vadd.f32 %v4417, %v4609
        %4611 = vmatprep.mubr.bf16.mxu0 %v3869
        %4612 = vmatmul.mubr.bf16.gmra.mrb[0].mxu0 %v3868
        %v4613 = vpop.f32.mrb[0].mxu0
        %v4614 = vadd.f32 %v4421, %v4613
        %v4615 = vpop.f32.mrb[0].mxu0
        %v4616 = vadd.f32 %v4423, %v4615
        %v4617 = vpop.f32.mrb[0].mxu0
        %v4618 = vadd.f32 %v4425, %v4617
        %v4619 = vpop.f32.mrb[0].mxu0
        %v4620 = vadd.f32 %v4427, %v4619
        %4621 = vmatprep.mubr.bf16.mxu0 %v3873
        %4622 = vmatmul.mubr.bf16.gmra.mrb[0].mxu0 %v3872
        %v4623 = vpop.f32.mrb[0].mxu0
        %v4624 = vadd.f32 %v4431, %v4623
        %v4625 = vpop.f32.mrb[0].mxu0
        %v4626 = vadd.f32 %v4433, %v4625
        %v4627 = vpop.f32.mrb[0].mxu0
        %v4628 = vadd.f32 %v4435, %v4627
        %v4629 = vpop.f32.mrb[0].mxu0
        %v4630 = vadd.f32 %v4437, %v4629
        %4631 = vmatprep.mubr.bf16.mxu0 %v3877
        %4632 = vmatmul.mubr.bf16.gmra.mrb[0].mxu0 %v3876
        %v4633 = vpop.f32.mrb[0].mxu0
        %v4634 = vadd.f32 %v4441, %v4633
        %v4635 = vpop.f32.mrb[0].mxu0
        %v4636 = vadd.f32 %v4443, %v4635
        %v4637 = vpop.f32.mrb[0].mxu0
        %v4638 = vadd.f32 %v4445, %v4637
        %v4639 = vpop.f32.mrb[0].mxu0
        %v4640 = vadd.f32 %v4447, %v4639
        %4641 = vmatprep.mubr.bf16.mxu0 %v3881
        %4642 = vmatmul.mubr.bf16.gmra.mrb[0].mxu0 %v3880
        %v4643 = vpop.f32.mrb[0].mxu0
        %v4644 = vadd.f32 %v4451, %v4643
        %v4645 = vpop.f32.mrb[0].mxu0
        %v4646 = vadd.f32 %v4453, %v4645
        %v4647 = vpop.f32.mrb[0].mxu0
        %v4648 = vadd.f32 %v4455, %v4647
        %v4649 = vpop.f32.mrb[0].mxu0
        %v4650 = vadd.f32 %v4457, %v4649
        %4651 = vdwg.mxu0
        %4652 = vmatprep.subr.bf16.mxu0 %v4013
        %4653 = vmatpush1.bf16.msra.mxu0 %v4012
        %4654 = vmatprep.subr.bf16.mxu0 %v4021
        %4655 = vmatpush1.bf16.msra.mxu0 %v4020
        %4656 = vmatprep.subr.bf16.mxu0 %v4029
        %4657 = vmatpush1.bf16.msra.mxu0 %v4028
        %4658 = vmatprep.subr.bf16.mxu0 %v4037
        %4659 = vmatpush1.bf16.msra.mxu0 %v4036
        %4660 = vmatprep.subr.bf16.mxu0 %v4045
        %4661 = vmatpush1.bf16.msra.mxu0 %v4044
        %4662 = vmatprep.subr.bf16.mxu0 %v4053
        %4663 = vmatpush1.bf16.msra.mxu0 %v4052
        %4664 = vmatprep.subr.bf16.mxu0 %v4061
        %4665 = vmatpush1.bf16.msra.mxu0 %v4060
        %4666 = vmatprep.subr.bf16.mxu0 %v4069
        %4667 = vmatpush1.bf16.msra.mxu0 %v4068
        %4668 = vmatprep.subr.bf16.mxu0 %v4077
        %4669 = vmatpush1.bf16.msra.mxu0 %v4076
        %4670 = vmatprep.subr.bf16.mxu0 %v4085
        %4671 = vmatpush1.bf16.msra.mxu0 %v4084
        %4672 = vmatprep.subr.bf16.mxu0 %v4093
        %4673 = vmatpush1.bf16.msra.mxu0 %v4092
        %4674 = vmatprep.subr.bf16.mxu0 %v4101
        %4675 = vmatpush1.bf16.msra.mxu0 %v4100
        %4676 = vmatprep.subr.bf16.mxu0 %v4109
        %4677 = vmatpush1.bf16.msra.mxu0 %v4108
        %4678 = vmatprep.subr.bf16.mxu0 %v4117
        %4679 = vmatpush1.bf16.msra.mxu0 %v4116
        %4680 = vmatprep.subr.bf16.mxu0 %v4125
        %4681 = vmatpush1.bf16.msra.mxu0 %v4124
        %4682 = vmatprep.subr.bf16.mxu0 %v4133
        %4683 = vmatpush1.bf16.msra.mxu0 %v4132
        %4684 = vmatprep.mubr.bf16.mxu0 %v3819
        %4685 = vmatmul.mubr.bf16.gmra.mrb[0].mxu0 %v3818
        %v4686 = vpop.f32.mrb[0].mxu0
        %v4687 = vadd.f32 0.0, %v4686
        %v4688 = vpop.f32.mrb[0].mxu0
        %v4689 = vadd.f32 0.0, %v4688
        %v4690 = vpop.f32.mrb[0].mxu0
        %v4691 = vadd.f32 0.0, %v4690
        %v4692 = vpop.f32.mrb[0].mxu0
        %v4693 = vadd.f32 0.0, %v4692
        %4694 = vmatprep.mubr.bf16.mxu0 %v3823
        %4695 = vmatmul.mubr.bf16.gmra.mrb[0].mxu0 %v3822
        %v4696 = vpop.f32.mrb[0].mxu0
        %v4697 = vadd.f32 0.0, %v4696
        %v4698 = vpop.f32.mrb[0].mxu0
        %v4699 = vadd.f32 0.0, %v4698
        %v4700 = vpop.f32.mrb[0].mxu0
        %v4701 = vadd.f32 0.0, %v4700
        %v4702 = vpop.f32.mrb[0].mxu0
        %v4703 = vadd.f32 0.0, %v4702
        %4704 = vmatprep.mubr.bf16.mxu0 %v3827
        %4705 = vmatmul.mubr.bf16.gmra.mrb[0].mxu0 %v3826
        %v4706 = vpop.f32.mrb[0].mxu0
        %v4707 = vadd.f32 0.0, %v4706
        %v4708 = vpop.f32.mrb[0].mxu0
        %v4709 = vadd.f32 0.0, %v4708
        %v4710 = vpop.f32.mrb[0].mxu0
        %v4711 = vadd.f32 0.0, %v4710
        %v4712 = vpop.f32.mrb[0].mxu0
        %v4713 = vadd.f32 0.0, %v4712
        %4714 = vmatprep.mubr.bf16.mxu0 %v3831
        %4715 = vmatmul.mubr.bf16.gmra.mrb[0].mxu0 %v3830
        %v4716 = vpop.f32.mrb[0].mxu0
        %v4717 = vadd.f32 0.0, %v4716
        %v4718 = vpop.f32.mrb[0].mxu0
        %v4719 = vadd.f32 0.0, %v4718
        %v4720 = vpop.f32.mrb[0].mxu0
        %v4721 = vadd.f32 0.0, %v4720
        %v4722 = vpop.f32.mrb[0].mxu0
        %v4723 = vadd.f32 0.0, %v4722
        %4724 = vmatprep.mubr.bf16.mxu0 %v3835
        %4725 = vmatmul.mubr.bf16.gmra.mrb[0].mxu0 %v3834
        %v4726 = vpop.f32.mrb[0].mxu0
        %v4727 = vadd.f32 0.0, %v4726
        %v4728 = vpop.f32.mrb[0].mxu0
        %v4729 = vadd.f32 0.0, %v4728
        %v4730 = vpop.f32.mrb[0].mxu0
        %v4731 = vadd.f32 0.0, %v4730
        %v4732 = vpop.f32.mrb[0].mxu0
        %v4733 = vadd.f32 0.0, %v4732
        %4734 = vmatprep.mubr.bf16.mxu0 %v3839
        %4735 = vmatmul.mubr.bf16.gmra.mrb[0].mxu0 %v3838
        %v4736 = vpop.f32.mrb[0].mxu0
        %v4737 = vadd.f32 0.0, %v4736
        %v4738 = vpop.f32.mrb[0].mxu0
        %v4739 = vadd.f32 0.0, %v4738
        %v4740 = vpop.f32.mrb[0].mxu0
        %v4741 = vadd.f32 0.0, %v4740
        %v4742 = vpop.f32.mrb[0].mxu0
        %v4743 = vadd.f32 0.0, %v4742
        %4744 = vmatprep.mubr.bf16.mxu0 %v3843
        %4745 = vmatmul.mubr.bf16.gmra.mrb[0].mxu0 %v3842
        %v4746 = vpop.f32.mrb[0].mxu0
        %v4747 = vadd.f32 0.0, %v4746
        %v4748 = vpop.f32.mrb[0].mxu0
        %v4749 = vadd.f32 0.0, %v4748
        %v4750 = vpop.f32.mrb[0].mxu0
        %v4751 = vadd.f32 0.0, %v4750
        %v4752 = vpop.f32.mrb[0].mxu0
        %v4753 = vadd.f32 0.0, %v4752
        %4754 = vmatprep.mubr.bf16.mxu0 %v3847
        %4755 = vmatmul.mubr.bf16.gmra.mrb[0].mxu0 %v3846
        %v4756 = vpop.f32.mrb[0].mxu0
        %v4757 = vadd.f32 0.0, %v4756
        %v4758 = vpop.f32.mrb[0].mxu0
        %v4759 = vadd.f32 0.0, %v4758
        %v4760 = vpop.f32.mrb[0].mxu0
        %v4761 = vadd.f32 0.0, %v4760
        %v4762 = vpop.f32.mrb[0].mxu0
        %v4763 = vadd.f32 0.0, %v4762
        %4764 = vmatprep.mubr.bf16.mxu0 %v3851
        %4765 = vmatmul.mubr.bf16.gmra.mrb[0].mxu0 %v3850
        %v4766 = vpop.f32.mrb[0].mxu0
        %v4767 = vadd.f32 0.0, %v4766
        %v4768 = vpop.f32.mrb[0].mxu0
        %v4769 = vadd.f32 0.0, %v4768
        %v4770 = vpop.f32.mrb[0].mxu0
        %v4771 = vadd.f32 0.0, %v4770
        %v4772 = vpop.f32.mrb[0].mxu0
        %v4773 = vadd.f32 0.0, %v4772
        %4774 = vmatprep.mubr.bf16.mxu0 %v3855
        %4775 = vmatmul.mubr.bf16.gmra.mrb[0].mxu0 %v3854
        %v4776 = vpop.f32.mrb[0].mxu0
        %v4777 = vadd.f32 0.0, %v4776
        %v4778 = vpop.f32.mrb[0].mxu0
        %v4779 = vadd.f32 0.0, %v4778
        %v4780 = vpop.f32.mrb[0].mxu0
        %v4781 = vadd.f32 0.0, %v4780
        %v4782 = vpop.f32.mrb[0].mxu0
        %v4783 = vadd.f32 0.0, %v4782
        %4784 = vmatprep.mubr.bf16.mxu0 %v3859
        %4785 = vmatmul.mubr.bf16.gmra.mrb[0].mxu0 %v3858
        %v4786 = vpop.f32.mrb[0].mxu0
        %v4787 = vadd.f32 0.0, %v4786
        %v4788 = vpop.f32.mrb[0].mxu0
        %v4789 = vadd.f32 0.0, %v4788
        %v4790 = vpop.f32.mrb[0].mxu0
        %v4791 = vadd.f32 0.0, %v4790
        %v4792 = vpop.f32.mrb[0].mxu0
        %v4793 = vadd.f32 0.0, %v4792
        %4794 = vmatprep.mubr.bf16.mxu0 %v3863
        %4795 = vmatmul.mubr.bf16.gmra.mrb[0].mxu0 %v3862
        %v4796 = vpop.f32.mrb[0].mxu0
        %v4797 = vadd.f32 0.0, %v4796
        %v4798 = vpop.f32.mrb[0].mxu0
        %v4799 = vadd.f32 0.0, %v4798
        %v4800 = vpop.f32.mrb[0].mxu0
        %v4801 = vadd.f32 0.0, %v4800
        %v4802 = vpop.f32.mrb[0].mxu0
        %v4803 = vadd.f32 0.0, %v4802
        %4804 = vmatprep.mubr.bf16.mxu0 %v3867
        %4805 = vmatmul.mubr.bf16.gmra.mrb[0].mxu0 %v3866
        %v4806 = vpop.f32.mrb[0].mxu0
        %v4807 = vadd.f32 0.0, %v4806
        %v4808 = vpop.f32.mrb[0].mxu0
        %v4809 = vadd.f32 0.0, %v4808
        %v4810 = vpop.f32.mrb[0].mxu0
        %v4811 = vadd.f32 0.0, %v4810
        %v4812 = vpop.f32.mrb[0].mxu0
        %v4813 = vadd.f32 0.0, %v4812
        %4814 = vmatprep.mubr.bf16.mxu0 %v3871
        %4815 = vmatmul.mubr.bf16.gmra.mrb[0].mxu0 %v3870
        %v4816 = vpop.f32.mrb[0].mxu0
        %v4817 = vadd.f32 0.0, %v4816
        %v4818 = vpop.f32.mrb[0].mxu0
        %v4819 = vadd.f32 0.0, %v4818
        %v4820 = vpop.f32.mrb[0].mxu0
        %v4821 = vadd.f32 0.0, %v4820
        %v4822 = vpop.f32.mrb[0].mxu0
        %v4823 = vadd.f32 0.0, %v4822
        %4824 = vmatprep.mubr.bf16.mxu0 %v3875
        %4825 = vmatmul.mubr.bf16.gmra.mrb[0].mxu0 %v3874
        %v4826 = vpop.f32.mrb[0].mxu0
        %v4827 = vadd.f32 0.0, %v4826
        %v4828 = vpop.f32.mrb[0].mxu0
        %v4829 = vadd.f32 0.0, %v4828
        %v4830 = vpop.f32.mrb[0].mxu0
        %v4831 = vadd.f32 0.0, %v4830
        %v4832 = vpop.f32.mrb[0].mxu0
        %v4833 = vadd.f32 0.0, %v4832
        %4834 = vmatprep.mubr.bf16.mxu0 %v3879
        %4835 = vmatmul.mubr.bf16.gmra.mrb[0].mxu0 %v3878
        %v4836 = vpop.f32.mrb[0].mxu0
        %v4837 = vadd.f32 0.0, %v4836
        %v4838 = vpop.f32.mrb[0].mxu0
        %v4839 = vadd.f32 0.0, %v4838
        %v4840 = vpop.f32.mrb[0].mxu0
        %v4841 = vadd.f32 0.0, %v4840
        %v4842 = vpop.f32.mrb[0].mxu0
        %v4843 = vadd.f32 0.0, %v4842
        %4844 = vdwg.mxu0
        %4845 = vmatprep.subr.bf16.mxu0 %v4141
        %4846 = vmatpush1.bf16.msra.mxu0 %v4140
        %4847 = vmatprep.subr.bf16.mxu0 %v4149
        %4848 = vmatpush1.bf16.msra.mxu0 %v4148
        %4849 = vmatprep.subr.bf16.mxu0 %v4157
        %4850 = vmatpush1.bf16.msra.mxu0 %v4156
        %4851 = vmatprep.subr.bf16.mxu0 %v4165
        %4852 = vmatpush1.bf16.msra.mxu0 %v4164
        %4853 = vmatprep.subr.bf16.mxu0 %v4173
        %4854 = vmatpush1.bf16.msra.mxu0 %v4172
        %4855 = vmatprep.subr.bf16.mxu0 %v4181
        %4856 = vmatpush1.bf16.msra.mxu0 %v4180
        %4857 = vmatprep.subr.bf16.mxu0 %v4189
        %4858 = vmatpush1.bf16.msra.mxu0 %v4188
        %4859 = vmatprep.subr.bf16.mxu0 %v4197
        %4860 = vmatpush1.bf16.msra.mxu0 %v4196
        %4861 = vmatprep.subr.bf16.mxu0 %v4205
        %4862 = vmatpush1.bf16.msra.mxu0 %v4204
        %4863 = vmatprep.subr.bf16.mxu0 %v4213
        %4864 = vmatpush1.bf16.msra.mxu0 %v4212
        %4865 = vmatprep.subr.bf16.mxu0 %v4221
        %4866 = vmatpush1.bf16.msra.mxu0 %v4220
        %4867 = vmatprep.subr.bf16.mxu0 %v4229
        %4868 = vmatpush1.bf16.msra.mxu0 %v4228
        %4869 = vmatprep.subr.bf16.mxu0 %v4237
        %4870 = vmatpush1.bf16.msra.mxu0 %v4236
        %4871 = vmatprep.subr.bf16.mxu0 %v4245
        %4872 = vmatpush1.bf16.msra.mxu0 %v4244
        %4873 = vmatprep.subr.bf16.mxu0 %v4253
        %4874 = vmatpush1.bf16.msra.mxu0 %v4252
        %4875 = vmatprep.subr.bf16.mxu0 %v4261
        %4876 = vmatpush1.bf16.msra.mxu0 %v4260
        %4877 = vmatprep.mubr.bf16.mxu0 %v3821
        %4878 = vmatmul.mubr.bf16.gmra.mrb[0].mxu0 %v3820
        %v4879 = vpop.f32.mrb[0].mxu0
        %v4880 = vadd.f32 %v4687, %v4879
        %v4881 = vpop.f32.mrb[0].mxu0
        %v4882 = vadd.f32 %v4689, %v4881
        %v4883 = vpop.f32.mrb[0].mxu0
        %v4884 = vadd.f32 %v4691, %v4883
        %v4885 = vpop.f32.mrb[0].mxu0
        %v4886 = vadd.f32 %v4693, %v4885
        %4887 = vmatprep.mubr.bf16.mxu0 %v3825
        %4888 = vmatmul.mubr.bf16.gmra.mrb[0].mxu0 %v3824
        %v4889 = vpop.f32.mrb[0].mxu0
        %v4890 = vadd.f32 %v4697, %v4889
        %v4891 = vpop.f32.mrb[0].mxu0
        %v4892 = vadd.f32 %v4699, %v4891
        %v4893 = vpop.f32.mrb[0].mxu0
        %v4894 = vadd.f32 %v4701, %v4893
        %v4895 = vpop.f32.mrb[0].mxu0
        %v4896 = vadd.f32 %v4703, %v4895
        %4897 = vmatprep.mubr.bf16.mxu0 %v3829
        %4898 = vmatmul.mubr.bf16.gmra.mrb[0].mxu0 %v3828
        %v4899 = vpop.f32.mrb[0].mxu0
        %v4900 = vadd.f32 %v4707, %v4899
        %v4901 = vpop.f32.mrb[0].mxu0
        %v4902 = vadd.f32 %v4709, %v4901
        %v4903 = vpop.f32.mrb[0].mxu0
        %v4904 = vadd.f32 %v4711, %v4903
        %v4905 = vpop.f32.mrb[0].mxu0
        %v4906 = vadd.f32 %v4713, %v4905
        %4907 = vmatprep.mubr.bf16.mxu0 %v3833
        %4908 = vmatmul.mubr.bf16.gmra.mrb[0].mxu0 %v3832
        %v4909 = vpop.f32.mrb[0].mxu0
        %v4910 = vadd.f32 %v4717, %v4909
        %v4911 = vpop.f32.mrb[0].mxu0
        %v4912 = vadd.f32 %v4719, %v4911
        %v4913 = vpop.f32.mrb[0].mxu0
        %v4914 = vadd.f32 %v4721, %v4913
        %v4915 = vpop.f32.mrb[0].mxu0
        %v4916 = vadd.f32 %v4723, %v4915
        %4917 = vmatprep.mubr.bf16.mxu0 %v3837
        %4918 = vmatmul.mubr.bf16.gmra.mrb[0].mxu0 %v3836
        %v4919 = vpop.f32.mrb[0].mxu0
        %v4920 = vadd.f32 %v4727, %v4919
        %v4921 = vpop.f32.mrb[0].mxu0
        %v4922 = vadd.f32 %v4729, %v4921
        %v4923 = vpop.f32.mrb[0].mxu0
        %v4924 = vadd.f32 %v4731, %v4923
        %v4925 = vpop.f32.mrb[0].mxu0
        %v4926 = vadd.f32 %v4733, %v4925
        %4927 = vmatprep.mubr.bf16.mxu0 %v3841
        %4928 = vmatmul.mubr.bf16.gmra.mrb[0].mxu0 %v3840
        %v4929 = vpop.f32.mrb[0].mxu0
        %v4930 = vadd.f32 %v4737, %v4929
        %v4931 = vpop.f32.mrb[0].mxu0
        %v4932 = vadd.f32 %v4739, %v4931
        %v4933 = vpop.f32.mrb[0].mxu0
        %v4934 = vadd.f32 %v4741, %v4933
        %v4935 = vpop.f32.mrb[0].mxu0
        %v4936 = vadd.f32 %v4743, %v4935
        %4937 = vmatprep.mubr.bf16.mxu0 %v3845
        %4938 = vmatmul.mubr.bf16.gmra.mrb[0].mxu0 %v3844
        %v4939 = vpop.f32.mrb[0].mxu0
        %v4940 = vadd.f32 %v4747, %v4939
        %v4941 = vpop.f32.mrb[0].mxu0
        %v4942 = vadd.f32 %v4749, %v4941
        %v4943 = vpop.f32.mrb[0].mxu0
        %v4944 = vadd.f32 %v4751, %v4943
        %v4945 = vpop.f32.mrb[0].mxu0
        %v4946 = vadd.f32 %v4753, %v4945
        %4947 = vmatprep.mubr.bf16.mxu0 %v3849
        %4948 = vmatmul.mubr.bf16.gmra.mrb[0].mxu0 %v3848
        %v4949 = vpop.f32.mrb[0].mxu0
        %v4950 = vadd.f32 %v4757, %v4949
        %v4951 = vpop.f32.mrb[0].mxu0
        %v4952 = vadd.f32 %v4759, %v4951
        %v4953 = vpop.f32.mrb[0].mxu0
        %v4954 = vadd.f32 %v4761, %v4953
        %v4955 = vpop.f32.mrb[0].mxu0
        %v4956 = vadd.f32 %v4763, %v4955
        %4957 = vmatprep.mubr.bf16.mxu0 %v3853
        %4958 = vmatmul.mubr.bf16.gmra.mrb[0].mxu0 %v3852
        %v4959 = vpop.f32.mrb[0].mxu0
        %v4960 = vadd.f32 %v4767, %v4959
        %v4961 = vpop.f32.mrb[0].mxu0
        %v4962 = vadd.f32 %v4769, %v4961
        %v4963 = vpop.f32.mrb[0].mxu0
        %v4964 = vadd.f32 %v4771, %v4963
        %v4965 = vpop.f32.mrb[0].mxu0
        %v4966 = vadd.f32 %v4773, %v4965
        %4967 = vmatprep.mubr.bf16.mxu0 %v3857
        %4968 = vmatmul.mubr.bf16.gmra.mrb[0].mxu0 %v3856
        %v4969 = vpop.f32.mrb[0].mxu0
        %v4970 = vadd.f32 %v4777, %v4969
        %v4971 = vpop.f32.mrb[0].mxu0
        %v4972 = vadd.f32 %v4779, %v4971
        %v4973 = vpop.f32.mrb[0].mxu0
        %v4974 = vadd.f32 %v4781, %v4973
        %v4975 = vpop.f32.mrb[0].mxu0
        %v4976 = vadd.f32 %v4783, %v4975
        %4977 = vmatprep.mubr.bf16.mxu0 %v3861
        %4978 = vmatmul.mubr.bf16.gmra.mrb[0].mxu0 %v3860
        %v4979 = vpop.f32.mrb[0].mxu0
        %v4980 = vadd.f32 %v4787, %v4979
        %v4981 = vpop.f32.mrb[0].mxu0
        %v4982 = vadd.f32 %v4789, %v4981
        %v4983 = vpop.f32.mrb[0].mxu0
        %v4984 = vadd.f32 %v4791, %v4983
        %v4985 = vpop.f32.mrb[0].mxu0
        %v4986 = vadd.f32 %v4793, %v4985
        %4987 = vmatprep.mubr.bf16.mxu0 %v3865
        %4988 = vmatmul.mubr.bf16.gmra.mrb[0].mxu0 %v3864
        %v4989 = vpop.f32.mrb[0].mxu0
        %v4990 = vadd.f32 %v4797, %v4989
        %v4991 = vpop.f32.mrb[0].mxu0
        %v4992 = vadd.f32 %v4799, %v4991
        %v4993 = vpop.f32.mrb[0].mxu0
        %v4994 = vadd.f32 %v4801, %v4993
        %v4995 = vpop.f32.mrb[0].mxu0
        %v4996 = vadd.f32 %v4803, %v4995
        %4997 = vmatprep.mubr.bf16.mxu0 %v3869
        %4998 = vmatmul.mubr.bf16.gmra.mrb[0].mxu0 %v3868
        %v4999 = vpop.f32.mrb[0].mxu0
        %v5000 = vadd.f32 %v4807, %v4999
        %v5001 = vpop.f32.mrb[0].mxu0
        %v5002 = vadd.f32 %v4809, %v5001
        %v5003 = vpop.f32.mrb[0].mxu0
        %v5004 = vadd.f32 %v4811, %v5003
        %v5005 = vpop.f32.mrb[0].mxu0
        %v5006 = vadd.f32 %v4813, %v5005
        %5007 = vmatprep.mubr.bf16.mxu0 %v3873
        %5008 = vmatmul.mubr.bf16.gmra.mrb[0].mxu0 %v3872
        %v5009 = vpop.f32.mrb[0].mxu0
        %v5010 = vadd.f32 %v4817, %v5009
        %v5011 = vpop.f32.mrb[0].mxu0
        %v5012 = vadd.f32 %v4819, %v5011
        %v5013 = vpop.f32.mrb[0].mxu0
        %v5014 = vadd.f32 %v4821, %v5013
        %v5015 = vpop.f32.mrb[0].mxu0
        %v5016 = vadd.f32 %v4823, %v5015
        %5017 = vmatprep.mubr.bf16.mxu0 %v3877
        %5018 = vmatmul.mubr.bf16.gmra.mrb[0].mxu0 %v3876
        %v5019 = vpop.f32.mrb[0].mxu0
        %v5020 = vadd.f32 %v4827, %v5019
        %v5021 = vpop.f32.mrb[0].mxu0
        %v5022 = vadd.f32 %v4829, %v5021
        %v5023 = vpop.f32.mrb[0].mxu0
        %v5024 = vadd.f32 %v4831, %v5023
        %v5025 = vpop.f32.mrb[0].mxu0
        %v5026 = vadd.f32 %v4833, %v5025
        %5027 = vmatprep.mubr.bf16.mxu0 %v3881
        %5028 = vmatmul.mubr.bf16.gmra.mrb[0].mxu0 %v3880
        %v5029 = vpop.f32.mrb[0].mxu0
        %v5030 = vadd.f32 %v4837, %v5029
        %v5031 = vpop.f32.mrb[0].mxu0
        %v5032 = vadd.f32 %v4839, %v5031
        %v5033 = vpop.f32.mrb[0].mxu0
        %v5034 = vadd.f32 %v4841, %v5033
        %v5035 = vpop.f32.mrb[0].mxu0
        %v5036 = vadd.f32 %v4843, %v5035
        %5037 = vdwg.mxu0
        %5038 = vmatprep.subr.bf16.mxu0 %v4015
        %5039 = vmatpush1.bf16.msra.mxu0 %v4014
        %5040 = vmatprep.subr.bf16.mxu0 %v4023
        %5041 = vmatpush1.bf16.msra.mxu0 %v4022
        %5042 = vmatprep.subr.bf16.mxu0 %v4031
        %5043 = vmatpush1.bf16.msra.mxu0 %v4030
        %5044 = vmatprep.subr.bf16.mxu0 %v4039
        %5045 = vmatpush1.bf16.msra.mxu0 %v4038
        %5046 = vmatprep.subr.bf16.mxu0 %v4047
        %5047 = vmatpush1.bf16.msra.mxu0 %v4046
        %5048 = vmatprep.subr.bf16.mxu0 %v4055
        %5049 = vmatpush1.bf16.msra.mxu0 %v4054
        %5050 = vmatprep.subr.bf16.mxu0 %v4063
        %5051 = vmatpush1.bf16.msra.mxu0 %v4062
        %5052 = vmatprep.subr.bf16.mxu0 %v4071
        %5053 = vmatpush1.bf16.msra.mxu0 %v4070
        %5054 = vmatprep.subr.bf16.mxu0 %v4079
        %5055 = vmatpush1.bf16.msra.mxu0 %v4078
        %5056 = vmatprep.subr.bf16.mxu0 %v4087
        %5057 = vmatpush1.bf16.msra.mxu0 %v4086
        %5058 = vmatprep.subr.bf16.mxu0 %v4095
        %5059 = vmatpush1.bf16.msra.mxu0 %v4094
        %5060 = vmatprep.subr.bf16.mxu0 %v4103
        %5061 = vmatpush1.bf16.msra.mxu0 %v4102
        %5062 = vmatprep.subr.bf16.mxu0 %v4111
        %5063 = vmatpush1.bf16.msra.mxu0 %v4110
        %5064 = vmatprep.subr.bf16.mxu0 %v4119
        %5065 = vmatpush1.bf16.msra.mxu0 %v4118
        %5066 = vmatprep.subr.bf16.mxu0 %v4127
        %5067 = vmatpush1.bf16.msra.mxu0 %v4126
        %5068 = vmatprep.subr.bf16.mxu0 %v4135
        %5069 = vmatpush1.bf16.msra.mxu0 %v4134
        %5070 = vmatprep.mubr.bf16.mxu0 %v3819
        %5071 = vmatmul.mubr.bf16.gmra.mrb[0].mxu0 %v3818
        %v5072 = vpop.f32.mrb[0].mxu0
        %v5073 = vadd.f32 0.0, %v5072
        %v5074 = vpop.f32.mrb[0].mxu0
        %v5075 = vadd.f32 0.0, %v5074
        %v5076 = vpop.f32.mrb[0].mxu0
        %v5077 = vadd.f32 0.0, %v5076
        %v5078 = vpop.f32.mrb[0].mxu0
        %v5079 = vadd.f32 0.0, %v5078
        %5080 = vmatprep.mubr.bf16.mxu0 %v3823
        %5081 = vmatmul.mubr.bf16.gmra.mrb[0].mxu0 %v3822
        %v5082 = vpop.f32.mrb[0].mxu0
        %v5083 = vadd.f32 0.0, %v5082
        %v5084 = vpop.f32.mrb[0].mxu0
        %v5085 = vadd.f32 0.0, %v5084
        %v5086 = vpop.f32.mrb[0].mxu0
        %v5087 = vadd.f32 0.0, %v5086
        %v5088 = vpop.f32.mrb[0].mxu0
        %v5089 = vadd.f32 0.0, %v5088
        %5090 = vmatprep.mubr.bf16.mxu0 %v3827
        %5091 = vmatmul.mubr.bf16.gmra.mrb[0].mxu0 %v3826
        %v5092 = vpop.f32.mrb[0].mxu0
        %v5093 = vadd.f32 0.0, %v5092
        %v5094 = vpop.f32.mrb[0].mxu0
        %v5095 = vadd.f32 0.0, %v5094
        %v5096 = vpop.f32.mrb[0].mxu0
        %v5097 = vadd.f32 0.0, %v5096
        %v5098 = vpop.f32.mrb[0].mxu0
        %v5099 = vadd.f32 0.0, %v5098
        %5100 = vmatprep.mubr.bf16.mxu0 %v3831
        %5101 = vmatmul.mubr.bf16.gmra.mrb[0].mxu0 %v3830
        %v5102 = vpop.f32.mrb[0].mxu0
        %v5103 = vadd.f32 0.0, %v5102
        %v5104 = vpop.f32.mrb[0].mxu0
        %v5105 = vadd.f32 0.0, %v5104
        %v5106 = vpop.f32.mrb[0].mxu0
        %v5107 = vadd.f32 0.0, %v5106
        %v5108 = vpop.f32.mrb[0].mxu0
        %v5109 = vadd.f32 0.0, %v5108
        %5110 = vmatprep.mubr.bf16.mxu0 %v3835
        %5111 = vmatmul.mubr.bf16.gmra.mrb[0].mxu0 %v3834
        %v5112 = vpop.f32.mrb[0].mxu0
        %v5113 = vadd.f32 0.0, %v5112
        %v5114 = vpop.f32.mrb[0].mxu0
        %v5115 = vadd.f32 0.0, %v5114
        %v5116 = vpop.f32.mrb[0].mxu0
        %v5117 = vadd.f32 0.0, %v5116
        %v5118 = vpop.f32.mrb[0].mxu0
        %v5119 = vadd.f32 0.0, %v5118
        %5120 = vmatprep.mubr.bf16.mxu0 %v3839
        %5121 = vmatmul.mubr.bf16.gmra.mrb[0].mxu0 %v3838
        %v5122 = vpop.f32.mrb[0].mxu0
        %v5123 = vadd.f32 0.0, %v5122
        %v5124 = vpop.f32.mrb[0].mxu0
        %v5125 = vadd.f32 0.0, %v5124
        %v5126 = vpop.f32.mrb[0].mxu0
        %v5127 = vadd.f32 0.0, %v5126
        %v5128 = vpop.f32.mrb[0].mxu0
        %v5129 = vadd.f32 0.0, %v5128
        %5130 = vmatprep.mubr.bf16.mxu0 %v3843
        %5131 = vmatmul.mubr.bf16.gmra.mrb[0].mxu0 %v3842
        %v5132 = vpop.f32.mrb[0].mxu0
        %v5133 = vadd.f32 0.0, %v5132
        %v5134 = vpop.f32.mrb[0].mxu0
        %v5135 = vadd.f32 0.0, %v5134
        %v5136 = vpop.f32.mrb[0].mxu0
        %v5137 = vadd.f32 0.0, %v5136
        %v5138 = vpop.f32.mrb[0].mxu0
        %v5139 = vadd.f32 0.0, %v5138
        %5140 = vmatprep.mubr.bf16.mxu0 %v3847
        %5141 = vmatmul.mubr.bf16.gmra.mrb[0].mxu0 %v3846
        %v5142 = vpop.f32.mrb[0].mxu0
        %v5143 = vadd.f32 0.0, %v5142
        %v5144 = vpop.f32.mrb[0].mxu0
        %v5145 = vadd.f32 0.0, %v5144
        %v5146 = vpop.f32.mrb[0].mxu0
        %v5147 = vadd.f32 0.0, %v5146
        %v5148 = vpop.f32.mrb[0].mxu0
        %v5149 = vadd.f32 0.0, %v5148
        %5150 = vmatprep.mubr.bf16.mxu0 %v3851
        %5151 = vmatmul.mubr.bf16.gmra.mrb[0].mxu0 %v3850
        %v5152 = vpop.f32.mrb[0].mxu0
        %v5153 = vadd.f32 0.0, %v5152
        %v5154 = vpop.f32.mrb[0].mxu0
        %v5155 = vadd.f32 0.0, %v5154
        %v5156 = vpop.f32.mrb[0].mxu0
        %v5157 = vadd.f32 0.0, %v5156
        %v5158 = vpop.f32.mrb[0].mxu0
        %v5159 = vadd.f32 0.0, %v5158
        %5160 = vmatprep.mubr.bf16.mxu0 %v3855
        %5161 = vmatmul.mubr.bf16.gmra.mrb[0].mxu0 %v3854
        %v5162 = vpop.f32.mrb[0].mxu0
        %v5163 = vadd.f32 0.0, %v5162
        %v5164 = vpop.f32.mrb[0].mxu0
        %v5165 = vadd.f32 0.0, %v5164
        %v5166 = vpop.f32.mrb[0].mxu0
        %v5167 = vadd.f32 0.0, %v5166
        %v5168 = vpop.f32.mrb[0].mxu0
        %v5169 = vadd.f32 0.0, %v5168
        %5170 = vmatprep.mubr.bf16.mxu0 %v3859
        %5171 = vmatmul.mubr.bf16.gmra.mrb[0].mxu0 %v3858
        %v5172 = vpop.f32.mrb[0].mxu0
        %v5173 = vadd.f32 0.0, %v5172
        %v5174 = vpop.f32.mrb[0].mxu0
        %v5175 = vadd.f32 0.0, %v5174
        %v5176 = vpop.f32.mrb[0].mxu0
        %v5177 = vadd.f32 0.0, %v5176
        %v5178 = vpop.f32.mrb[0].mxu0
        %v5179 = vadd.f32 0.0, %v5178
        %5180 = vmatprep.mubr.bf16.mxu0 %v3863
        %5181 = vmatmul.mubr.bf16.gmra.mrb[0].mxu0 %v3862
        %v5182 = vpop.f32.mrb[0].mxu0
        %v5183 = vadd.f32 0.0, %v5182
        %v5184 = vpop.f32.mrb[0].mxu0
        %v5185 = vadd.f32 0.0, %v5184
        %v5186 = vpop.f32.mrb[0].mxu0
        %v5187 = vadd.f32 0.0, %v5186
        %v5188 = vpop.f32.mrb[0].mxu0
        %v5189 = vadd.f32 0.0, %v5188
        %5190 = vmatprep.mubr.bf16.mxu0 %v3867
        %5191 = vmatmul.mubr.bf16.gmra.mrb[0].mxu0 %v3866
        %v5192 = vpop.f32.mrb[0].mxu0
        %v5193 = vadd.f32 0.0, %v5192
        %v5194 = vpop.f32.mrb[0].mxu0
        %v5195 = vadd.f32 0.0, %v5194
        %v5196 = vpop.f32.mrb[0].mxu0
        %v5197 = vadd.f32 0.0, %v5196
        %v5198 = vpop.f32.mrb[0].mxu0
        %v5199 = vadd.f32 0.0, %v5198
        %5200 = vmatprep.mubr.bf16.mxu0 %v3871
        %5201 = vmatmul.mubr.bf16.gmra.mrb[0].mxu0 %v3870
        %v5202 = vpop.f32.mrb[0].mxu0
        %v5203 = vadd.f32 0.0, %v5202
        %v5204 = vpop.f32.mrb[0].mxu0
        %v5205 = vadd.f32 0.0, %v5204
        %v5206 = vpop.f32.mrb[0].mxu0
        %v5207 = vadd.f32 0.0, %v5206
        %v5208 = vpop.f32.mrb[0].mxu0
        %v5209 = vadd.f32 0.0, %v5208
        %5210 = vmatprep.mubr.bf16.mxu0 %v3875
        %5211 = vmatmul.mubr.bf16.gmra.mrb[0].mxu0 %v3874
        %v5212 = vpop.f32.mrb[0].mxu0
        %v5213 = vadd.f32 0.0, %v5212
        %v5214 = vpop.f32.mrb[0].mxu0
        %v5215 = vadd.f32 0.0, %v5214
        %v5216 = vpop.f32.mrb[0].mxu0
        %v5217 = vadd.f32 0.0, %v5216
        %v5218 = vpop.f32.mrb[0].mxu0
        %v5219 = vadd.f32 0.0, %v5218
        %5220 = vmatprep.mubr.bf16.mxu0 %v3879
        %5221 = vmatmul.mubr.bf16.gmra.mrb[0].mxu0 %v3878
        %v5222 = vpop.f32.mrb[0].mxu0
        %v5223 = vadd.f32 0.0, %v5222
        %v5224 = vpop.f32.mrb[0].mxu0
        %v5225 = vadd.f32 0.0, %v5224
        %v5226 = vpop.f32.mrb[0].mxu0
        %v5227 = vadd.f32 0.0, %v5226
        %v5228 = vpop.f32.mrb[0].mxu0
        %v5229 = vadd.f32 0.0, %v5228
        %5230 = vdwg.mxu0
        %5231 = vmatprep.subr.bf16.mxu0 %v4143
        %5232 = vmatpush1.bf16.msra.mxu0 %v4142
        %5233 = vmatprep.subr.bf16.mxu0 %v4151
        %5234 = vmatpush1.bf16.msra.mxu0 %v4150
        %5235 = vmatprep.subr.bf16.mxu0 %v4159
        %5236 = vmatpush1.bf16.msra.mxu0 %v4158
        %5237 = vmatprep.subr.bf16.mxu0 %v4167
        %5238 = vmatpush1.bf16.msra.mxu0 %v4166
        %5239 = vmatprep.subr.bf16.mxu0 %v4175
        %5240 = vmatpush1.bf16.msra.mxu0 %v4174
        %5241 = vmatprep.subr.bf16.mxu0 %v4183
        %5242 = vmatpush1.bf16.msra.mxu0 %v4182
        %5243 = vmatprep.subr.bf16.mxu0 %v4191
        %5244 = vmatpush1.bf16.msra.mxu0 %v4190
        %5245 = vmatprep.subr.bf16.mxu0 %v4199
        %5246 = vmatpush1.bf16.msra.mxu0 %v4198
        %5247 = vmatprep.subr.bf16.mxu0 %v4207
        %5248 = vmatpush1.bf16.msra.mxu0 %v4206
        %5249 = vmatprep.subr.bf16.mxu0 %v4215
        %5250 = vmatpush1.bf16.msra.mxu0 %v4214
        %5251 = vmatprep.subr.bf16.mxu0 %v4223
        %5252 = vmatpush1.bf16.msra.mxu0 %v4222
        %5253 = vmatprep.subr.bf16.mxu0 %v4231
        %5254 = vmatpush1.bf16.msra.mxu0 %v4230
        %5255 = vmatprep.subr.bf16.mxu0 %v4239
        %5256 = vmatpush1.bf16.msra.mxu0 %v4238
        %5257 = vmatprep.subr.bf16.mxu0 %v4247
        %5258 = vmatpush1.bf16.msra.mxu0 %v4246
        %5259 = vmatprep.subr.bf16.mxu0 %v4255
        %5260 = vmatpush1.bf16.msra.mxu0 %v4254
        %5261 = vmatprep.subr.bf16.mxu0 %v4263
        %5262 = vmatpush1.bf16.msra.mxu0 %v4262
        %5263 = vmatprep.mubr.bf16.mxu0 %v3821
        %5264 = vmatmul.mubr.bf16.gmra.mrb[0].mxu0 %v3820
        %v5265 = vpop.f32.mrb[0].mxu0
        %v5266 = vadd.f32 %v5073, %v5265
        %v5267 = vpop.f32.mrb[0].mxu0
        %v5268 = vadd.f32 %v5075, %v5267
        %v5269 = vpop.f32.mrb[0].mxu0
        %v5270 = vadd.f32 %v5077, %v5269
        %v5271 = vpop.f32.mrb[0].mxu0
        %v5272 = vadd.f32 %v5079, %v5271
        %5273 = vmatprep.mubr.bf16.mxu0 %v3825
        %5274 = vmatmul.mubr.bf16.gmra.mrb[0].mxu0 %v3824
        %v5275 = vpop.f32.mrb[0].mxu0
        %v5276 = vadd.f32 %v5083, %v5275
        %v5277 = vpop.f32.mrb[0].mxu0
        %v5278 = vadd.f32 %v5085, %v5277
        %v5279 = vpop.f32.mrb[0].mxu0
        %v5280 = vadd.f32 %v5087, %v5279
        %v5281 = vpop.f32.mrb[0].mxu0
        %v5282 = vadd.f32 %v5089, %v5281
        %5283 = vmatprep.mubr.bf16.mxu0 %v3829
        %5284 = vmatmul.mubr.bf16.gmra.mrb[0].mxu0 %v3828
        %v5285 = vpop.f32.mrb[0].mxu0
        %v5286 = vadd.f32 %v5093, %v5285
        %v5287 = vpop.f32.mrb[0].mxu0
        %v5288 = vadd.f32 %v5095, %v5287
        %v5289 = vpop.f32.mrb[0].mxu0
        %v5290 = vadd.f32 %v5097, %v5289
        %v5291 = vpop.f32.mrb[0].mxu0
        %v5292 = vadd.f32 %v5099, %v5291
        %5293 = vmatprep.mubr.bf16.mxu0 %v3833
        %5294 = vmatmul.mubr.bf16.gmra.mrb[0].mxu0 %v3832
        %v5295 = vpop.f32.mrb[0].mxu0
        %v5296 = vadd.f32 %v5103, %v5295
        %v5297 = vpop.f32.mrb[0].mxu0
        %v5298 = vadd.f32 %v5105, %v5297
        %v5299 = vpop.f32.mrb[0].mxu0
        %v5300 = vadd.f32 %v5107, %v5299
        %v5301 = vpop.f32.mrb[0].mxu0
        %v5302 = vadd.f32 %v5109, %v5301
        %5303 = vmatprep.mubr.bf16.mxu0 %v3837
        %5304 = vmatmul.mubr.bf16.gmra.mrb[0].mxu0 %v3836
        %v5305 = vpop.f32.mrb[0].mxu0
        %v5306 = vadd.f32 %v5113, %v5305
        %v5307 = vpop.f32.mrb[0].mxu0
        %v5308 = vadd.f32 %v5115, %v5307
        %v5309 = vpop.f32.mrb[0].mxu0
        %v5310 = vadd.f32 %v5117, %v5309
        %v5311 = vpop.f32.mrb[0].mxu0
        %v5312 = vadd.f32 %v5119, %v5311
        %5313 = vmatprep.mubr.bf16.mxu0 %v3841
        %5314 = vmatmul.mubr.bf16.gmra.mrb[0].mxu0 %v3840
        %v5315 = vpop.f32.mrb[0].mxu0
        %v5316 = vadd.f32 %v5123, %v5315
        %v5317 = vpop.f32.mrb[0].mxu0
        %v5318 = vadd.f32 %v5125, %v5317
        %v5319 = vpop.f32.mrb[0].mxu0
        %v5320 = vadd.f32 %v5127, %v5319
        %v5321 = vpop.f32.mrb[0].mxu0
        %v5322 = vadd.f32 %v5129, %v5321
        %5323 = vmatprep.mubr.bf16.mxu0 %v3845
        %5324 = vmatmul.mubr.bf16.gmra.mrb[0].mxu0 %v3844
        %v5325 = vpop.f32.mrb[0].mxu0
        %v5326 = vadd.f32 %v5133, %v5325
        %v5327 = vpop.f32.mrb[0].mxu0
        %v5328 = vadd.f32 %v5135, %v5327
        %v5329 = vpop.f32.mrb[0].mxu0
        %v5330 = vadd.f32 %v5137, %v5329
        %v5331 = vpop.f32.mrb[0].mxu0
        %v5332 = vadd.f32 %v5139, %v5331
        %5333 = vmatprep.mubr.bf16.mxu0 %v3849
        %5334 = vmatmul.mubr.bf16.gmra.mrb[0].mxu0 %v3848
        %v5335 = vpop.f32.mrb[0].mxu0
        %v5336 = vadd.f32 %v5143, %v5335
        %v5337 = vpop.f32.mrb[0].mxu0
        %v5338 = vadd.f32 %v5145, %v5337
        %v5339 = vpop.f32.mrb[0].mxu0
        %v5340 = vadd.f32 %v5147, %v5339
        %v5341 = vpop.f32.mrb[0].mxu0
        %v5342 = vadd.f32 %v5149, %v5341
        %5343 = vmatprep.mubr.bf16.mxu0 %v3853
        %5344 = vmatmul.mubr.bf16.gmra.mrb[0].mxu0 %v3852
        %v5345 = vpop.f32.mrb[0].mxu0
        %v5346 = vadd.f32 %v5153, %v5345
        %v5347 = vpop.f32.mrb[0].mxu0
        %v5348 = vadd.f32 %v5155, %v5347
        %v5349 = vpop.f32.mrb[0].mxu0
        %v5350 = vadd.f32 %v5157, %v5349
        %v5351 = vpop.f32.mrb[0].mxu0
        %v5352 = vadd.f32 %v5159, %v5351
        %5353 = vmatprep.mubr.bf16.mxu0 %v3857
        %5354 = vmatmul.mubr.bf16.gmra.mrb[0].mxu0 %v3856
        %v5355 = vpop.f32.mrb[0].mxu0
        %v5356 = vadd.f32 %v5163, %v5355
        %v5357 = vpop.f32.mrb[0].mxu0
        %v5358 = vadd.f32 %v5165, %v5357
        %v5359 = vpop.f32.mrb[0].mxu0
        %v5360 = vadd.f32 %v5167, %v5359
        %v5361 = vpop.f32.mrb[0].mxu0
        %v5362 = vadd.f32 %v5169, %v5361
        %5363 = vmatprep.mubr.bf16.mxu0 %v3861
        %5364 = vmatmul.mubr.bf16.gmra.mrb[0].mxu0 %v3860
        %v5365 = vpop.f32.mrb[0].mxu0
        %v5366 = vadd.f32 %v5173, %v5365
        %v5367 = vpop.f32.mrb[0].mxu0
        %v5368 = vadd.f32 %v5175, %v5367
        %v5369 = vpop.f32.mrb[0].mxu0
        %v5370 = vadd.f32 %v5177, %v5369
        %v5371 = vpop.f32.mrb[0].mxu0
        %v5372 = vadd.f32 %v5179, %v5371
        %5373 = vmatprep.mubr.bf16.mxu0 %v3865
        %5374 = vmatmul.mubr.bf16.gmra.mrb[0].mxu0 %v3864
        %v5375 = vpop.f32.mrb[0].mxu0
        %v5376 = vadd.f32 %v5183, %v5375
        %v5377 = vpop.f32.mrb[0].mxu0
        %v5378 = vadd.f32 %v5185, %v5377
        %v5379 = vpop.f32.mrb[0].mxu0
        %v5380 = vadd.f32 %v5187, %v5379
        %v5381 = vpop.f32.mrb[0].mxu0
        %v5382 = vadd.f32 %v5189, %v5381
        %5383 = vmatprep.mubr.bf16.mxu0 %v3869
        %5384 = vmatmul.mubr.bf16.gmra.mrb[0].mxu0 %v3868
        %v5385 = vpop.f32.mrb[0].mxu0
        %v5386 = vadd.f32 %v5193, %v5385
        %v5387 = vpop.f32.mrb[0].mxu0
        %v5388 = vadd.f32 %v5195, %v5387
        %v5389 = vpop.f32.mrb[0].mxu0
        %v5390 = vadd.f32 %v5197, %v5389
        %v5391 = vpop.f32.mrb[0].mxu0
        %v5392 = vadd.f32 %v5199, %v5391
        %5393 = vmatprep.mubr.bf16.mxu0 %v3873
        %5394 = vmatmul.mubr.bf16.gmra.mrb[0].mxu0 %v3872
        %v5395 = vpop.f32.mrb[0].mxu0
        %v5396 = vadd.f32 %v5203, %v5395
        %v5397 = vpop.f32.mrb[0].mxu0
        %v5398 = vadd.f32 %v5205, %v5397
        %v5399 = vpop.f32.mrb[0].mxu0
        %v5400 = vadd.f32 %v5207, %v5399
        %v5401 = vpop.f32.mrb[0].mxu0
        %v5402 = vadd.f32 %v5209, %v5401
        %5403 = vmatprep.mubr.bf16.mxu0 %v3877
        %5404 = vmatmul.mubr.bf16.gmra.mrb[0].mxu0 %v3876
        %v5405 = vpop.f32.mrb[0].mxu0
        %v5406 = vadd.f32 %v5213, %v5405
        %v5407 = vpop.f32.mrb[0].mxu0
        %v5408 = vadd.f32 %v5215, %v5407
        %v5409 = vpop.f32.mrb[0].mxu0
        %v5410 = vadd.f32 %v5217, %v5409
        %v5411 = vpop.f32.mrb[0].mxu0
        %v5412 = vadd.f32 %v5219, %v5411
        %5413 = vmatprep.mubr.bf16.mxu0 %v3881
        %5414 = vmatmul.mubr.bf16.gmra.mrb[0].mxu0 %v3880
        %v5415 = vpop.f32.mrb[0].mxu0
        %v5416 = vadd.f32 %v5223, %v5415
        %v5417 = vpop.f32.mrb[0].mxu0
        %v5418 = vadd.f32 %v5225, %v5417
        %v5419 = vpop.f32.mrb[0].mxu0
        %v5420 = vadd.f32 %v5227, %v5419
        %v5421 = vpop.f32.mrb[0].mxu0
        %v5422 = vadd.f32 %v5229, %v5421
        %5423 = vdwg.mxu0
        %5424 = vmatprep.subr.bf16.mxu0 %v4017
        %5425 = vmatpush1.bf16.msra.mxu0 %v4016
        %5426 = vmatprep.subr.bf16.mxu0 %v4025
        %5427 = vmatpush1.bf16.msra.mxu0 %v4024
        %5428 = vmatprep.subr.bf16.mxu0 %v4033
        %5429 = vmatpush1.bf16.msra.mxu0 %v4032
        %5430 = vmatprep.subr.bf16.mxu0 %v4041
        %5431 = vmatpush1.bf16.msra.mxu0 %v4040
        %5432 = vmatprep.subr.bf16.mxu0 %v4049
        %5433 = vmatpush1.bf16.msra.mxu0 %v4048
        %5434 = vmatprep.subr.bf16.mxu0 %v4057
        %5435 = vmatpush1.bf16.msra.mxu0 %v4056
        %5436 = vmatprep.subr.bf16.mxu0 %v4065
        %5437 = vmatpush1.bf16.msra.mxu0 %v4064
        %5438 = vmatprep.subr.bf16.mxu0 %v4073
        %5439 = vmatpush1.bf16.msra.mxu0 %v4072
        %5440 = vmatprep.subr.bf16.mxu0 %v4081
        %5441 = vmatpush1.bf16.msra.mxu0 %v4080
        %5442 = vmatprep.subr.bf16.mxu0 %v4089
        %5443 = vmatpush1.bf16.msra.mxu0 %v4088
        %5444 = vmatprep.subr.bf16.mxu0 %v4097
        %5445 = vmatpush1.bf16.msra.mxu0 %v4096
        %5446 = vmatprep.subr.bf16.mxu0 %v4105
        %5447 = vmatpush1.bf16.msra.mxu0 %v4104
        %5448 = vmatprep.subr.bf16.mxu0 %v4113
        %5449 = vmatpush1.bf16.msra.mxu0 %v4112
        %5450 = vmatprep.subr.bf16.mxu0 %v4121
        %5451 = vmatpush1.bf16.msra.mxu0 %v4120
        %5452 = vmatprep.subr.bf16.mxu0 %v4129
        %5453 = vmatpush1.bf16.msra.mxu0 %v4128
        %5454 = vmatprep.subr.bf16.mxu0 %v4137
        %5455 = vmatpush1.bf16.msra.mxu0 %v4136
        %5456 = vmatprep.mubr.bf16.mxu0 %v3819
        %5457 = vmatmul.mubr.bf16.gmra.mrb[0].mxu0 %v3818
        %v5458 = vpop.f32.mrb[0].mxu0
        %v5459 = vadd.f32 0.0, %v5458
        %v5460 = vpop.f32.mrb[0].mxu0
        %v5461 = vadd.f32 0.0, %v5460
        %v5462 = vpop.f32.mrb[0].mxu0
        %v5463 = vadd.f32 0.0, %v5462
        %v5464 = vpop.f32.mrb[0].mxu0
        %v5465 = vadd.f32 0.0, %v5464
        %5466 = vmatprep.mubr.bf16.mxu0 %v3823
        %5467 = vmatmul.mubr.bf16.gmra.mrb[0].mxu0 %v3822
        %v5468 = vpop.f32.mrb[0].mxu0
        %v5469 = vadd.f32 0.0, %v5468
        %v5470 = vpop.f32.mrb[0].mxu0
        %v5471 = vadd.f32 0.0, %v5470
        %v5472 = vpop.f32.mrb[0].mxu0
        %v5473 = vadd.f32 0.0, %v5472
        %v5474 = vpop.f32.mrb[0].mxu0
        %v5475 = vadd.f32 0.0, %v5474
        %5476 = vmatprep.mubr.bf16.mxu0 %v3827
        %5477 = vmatmul.mubr.bf16.gmra.mrb[0].mxu0 %v3826
        %v5478 = vpop.f32.mrb[0].mxu0
        %v5479 = vadd.f32 0.0, %v5478
        %v5480 = vpop.f32.mrb[0].mxu0
        %v5481 = vadd.f32 0.0, %v5480
        %v5482 = vpop.f32.mrb[0].mxu0
        %v5483 = vadd.f32 0.0, %v5482
        %v5484 = vpop.f32.mrb[0].mxu0
        %v5485 = vadd.f32 0.0, %v5484
        %5486 = vmatprep.mubr.bf16.mxu0 %v3831
        %5487 = vmatmul.mubr.bf16.gmra.mrb[0].mxu0 %v3830
        %v5488 = vpop.f32.mrb[0].mxu0
        %v5489 = vadd.f32 0.0, %v5488
        %v5490 = vpop.f32.mrb[0].mxu0
        %v5491 = vadd.f32 0.0, %v5490
        %v5492 = vpop.f32.mrb[0].mxu0
        %v5493 = vadd.f32 0.0, %v5492
        %v5494 = vpop.f32.mrb[0].mxu0
        %v5495 = vadd.f32 0.0, %v5494
        %5496 = vmatprep.mubr.bf16.mxu0 %v3835
        %5497 = vmatmul.mubr.bf16.gmra.mrb[0].mxu0 %v3834
        %v5498 = vpop.f32.mrb[0].mxu0
        %v5499 = vadd.f32 0.0, %v5498
        %v5500 = vpop.f32.mrb[0].mxu0
        %v5501 = vadd.f32 0.0, %v5500
        %v5502 = vpop.f32.mrb[0].mxu0
        %v5503 = vadd.f32 0.0, %v5502
        %v5504 = vpop.f32.mrb[0].mxu0
        %v5505 = vadd.f32 0.0, %v5504
        %5506 = vmatprep.mubr.bf16.mxu0 %v3839
        %5507 = vmatmul.mubr.bf16.gmra.mrb[0].mxu0 %v3838
        %v5508 = vpop.f32.mrb[0].mxu0
        %v5509 = vadd.f32 0.0, %v5508
        %v5510 = vpop.f32.mrb[0].mxu0
        %v5511 = vadd.f32 0.0, %v5510
        %v5512 = vpop.f32.mrb[0].mxu0
        %v5513 = vadd.f32 0.0, %v5512
        %v5514 = vpop.f32.mrb[0].mxu0
        %v5515 = vadd.f32 0.0, %v5514
        %5516 = vmatprep.mubr.bf16.mxu0 %v3843
        %5517 = vmatmul.mubr.bf16.gmra.mrb[0].mxu0 %v3842
        %v5518 = vpop.f32.mrb[0].mxu0
        %v5519 = vadd.f32 0.0, %v5518
        %v5520 = vpop.f32.mrb[0].mxu0
        %v5521 = vadd.f32 0.0, %v5520
        %v5522 = vpop.f32.mrb[0].mxu0
        %v5523 = vadd.f32 0.0, %v5522
        %v5524 = vpop.f32.mrb[0].mxu0
        %v5525 = vadd.f32 0.0, %v5524
        %5526 = vmatprep.mubr.bf16.mxu0 %v3847
        %5527 = vmatmul.mubr.bf16.gmra.mrb[0].mxu0 %v3846
        %v5528 = vpop.f32.mrb[0].mxu0
        %v5529 = vadd.f32 0.0, %v5528
        %v5530 = vpop.f32.mrb[0].mxu0
        %v5531 = vadd.f32 0.0, %v5530
        %v5532 = vpop.f32.mrb[0].mxu0
        %v5533 = vadd.f32 0.0, %v5532
        %v5534 = vpop.f32.mrb[0].mxu0
        %v5535 = vadd.f32 0.0, %v5534
        %5536 = vmatprep.mubr.bf16.mxu0 %v3851
        %5537 = vmatmul.mubr.bf16.gmra.mrb[0].mxu0 %v3850
        %v5538 = vpop.f32.mrb[0].mxu0
        %v5539 = vadd.f32 0.0, %v5538
        %v5540 = vpop.f32.mrb[0].mxu0
        %v5541 = vadd.f32 0.0, %v5540
        %v5542 = vpop.f32.mrb[0].mxu0
        %v5543 = vadd.f32 0.0, %v5542
        %v5544 = vpop.f32.mrb[0].mxu0
        %v5545 = vadd.f32 0.0, %v5544
        %5546 = vmatprep.mubr.bf16.mxu0 %v3855
        %5547 = vmatmul.mubr.bf16.gmra.mrb[0].mxu0 %v3854
        %v5548 = vpop.f32.mrb[0].mxu0
        %v5549 = vadd.f32 0.0, %v5548
        %v5550 = vpop.f32.mrb[0].mxu0
        %v5551 = vadd.f32 0.0, %v5550
        %v5552 = vpop.f32.mrb[0].mxu0
        %v5553 = vadd.f32 0.0, %v5552
        %v5554 = vpop.f32.mrb[0].mxu0
        %v5555 = vadd.f32 0.0, %v5554
        %5556 = vmatprep.mubr.bf16.mxu0 %v3859
        %5557 = vmatmul.mubr.bf16.gmra.mrb[0].mxu0 %v3858
        %v5558 = vpop.f32.mrb[0].mxu0
        %v5559 = vadd.f32 0.0, %v5558
        %v5560 = vpop.f32.mrb[0].mxu0
        %v5561 = vadd.f32 0.0, %v5560
        %v5562 = vpop.f32.mrb[0].mxu0
        %v5563 = vadd.f32 0.0, %v5562
        %v5564 = vpop.f32.mrb[0].mxu0
        %v5565 = vadd.f32 0.0, %v5564
        %5566 = vmatprep.mubr.bf16.mxu0 %v3863
        %5567 = vmatmul.mubr.bf16.gmra.mrb[0].mxu0 %v3862
        %v5568 = vpop.f32.mrb[0].mxu0
        %v5569 = vadd.f32 0.0, %v5568
        %v5570 = vpop.f32.mrb[0].mxu0
        %v5571 = vadd.f32 0.0, %v5570
        %v5572 = vpop.f32.mrb[0].mxu0
        %v5573 = vadd.f32 0.0, %v5572
        %v5574 = vpop.f32.mrb[0].mxu0
        %v5575 = vadd.f32 0.0, %v5574
        %5576 = vmatprep.mubr.bf16.mxu0 %v3867
        %5577 = vmatmul.mubr.bf16.gmra.mrb[0].mxu0 %v3866
        %v5578 = vpop.f32.mrb[0].mxu0
        %v5579 = vadd.f32 0.0, %v5578
        %v5580 = vpop.f32.mrb[0].mxu0
        %v5581 = vadd.f32 0.0, %v5580
        %v5582 = vpop.f32.mrb[0].mxu0
        %v5583 = vadd.f32 0.0, %v5582
        %v5584 = vpop.f32.mrb[0].mxu0
        %v5585 = vadd.f32 0.0, %v5584
        %5586 = vmatprep.mubr.bf16.mxu0 %v3871
        %5587 = vmatmul.mubr.bf16.gmra.mrb[0].mxu0 %v3870
        %v5588 = vpop.f32.mrb[0].mxu0
        %v5589 = vadd.f32 0.0, %v5588
        %v5590 = vpop.f32.mrb[0].mxu0
        %v5591 = vadd.f32 0.0, %v5590
        %v5592 = vpop.f32.mrb[0].mxu0
        %v5593 = vadd.f32 0.0, %v5592
        %v5594 = vpop.f32.mrb[0].mxu0
        %v5595 = vadd.f32 0.0, %v5594
        %5596 = vmatprep.mubr.bf16.mxu0 %v3875
        %5597 = vmatmul.mubr.bf16.gmra.mrb[0].mxu0 %v3874
        %v5598 = vpop.f32.mrb[0].mxu0
        %v5599 = vadd.f32 0.0, %v5598
        %v5600 = vpop.f32.mrb[0].mxu0
        %v5601 = vadd.f32 0.0, %v5600
        %v5602 = vpop.f32.mrb[0].mxu0
        %v5603 = vadd.f32 0.0, %v5602
        %v5604 = vpop.f32.mrb[0].mxu0
        %v5605 = vadd.f32 0.0, %v5604
        %5606 = vmatprep.mubr.bf16.mxu0 %v3879
        %5607 = vmatmul.mubr.bf16.gmra.mrb[0].mxu0 %v3878
        %v5608 = vpop.f32.mrb[0].mxu0
        %v5609 = vadd.f32 0.0, %v5608
        %v5610 = vpop.f32.mrb[0].mxu0
        %v5611 = vadd.f32 0.0, %v5610
        %v5612 = vpop.f32.mrb[0].mxu0
        %v5613 = vadd.f32 0.0, %v5612
        %v5614 = vpop.f32.mrb[0].mxu0
        %v5615 = vadd.f32 0.0, %v5614
        %5616 = vdwg.mxu0
        %5617 = vmatprep.subr.bf16.mxu0 %v4145
        %5618 = vmatpush1.bf16.msra.mxu0 %v4144
        %5619 = vmatprep.subr.bf16.mxu0 %v4153
        %5620 = vmatpush1.bf16.msra.mxu0 %v4152
        %5621 = vmatprep.subr.bf16.mxu0 %v4161
        %5622 = vmatpush1.bf16.msra.mxu0 %v4160
        %5623 = vmatprep.subr.bf16.mxu0 %v4169
        %5624 = vmatpush1.bf16.msra.mxu0 %v4168
        %5625 = vmatprep.subr.bf16.mxu0 %v4177
        %5626 = vmatpush1.bf16.msra.mxu0 %v4176
        %5627 = vmatprep.subr.bf16.mxu0 %v4185
        %5628 = vmatpush1.bf16.msra.mxu0 %v4184
        %5629 = vmatprep.subr.bf16.mxu0 %v4193
        %5630 = vmatpush1.bf16.msra.mxu0 %v4192
        %5631 = vmatprep.subr.bf16.mxu0 %v4201
        %5632 = vmatpush1.bf16.msra.mxu0 %v4200
        %5633 = vmatprep.subr.bf16.mxu0 %v4209
        %5634 = vmatpush1.bf16.msra.mxu0 %v4208
        %5635 = vmatprep.subr.bf16.mxu0 %v4217
        %5636 = vmatpush1.bf16.msra.mxu0 %v4216
        %5637 = vmatprep.subr.bf16.mxu0 %v4225
        %5638 = vmatpush1.bf16.msra.mxu0 %v4224
        %5639 = vmatprep.subr.bf16.mxu0 %v4233
        %5640 = vmatpush1.bf16.msra.mxu0 %v4232
        %5641 = vmatprep.subr.bf16.mxu0 %v4241
        %5642 = vmatpush1.bf16.msra.mxu0 %v4240
        %5643 = vmatprep.subr.bf16.mxu0 %v4249
        %5644 = vmatpush1.bf16.msra.mxu0 %v4248
        %5645 = vmatprep.subr.bf16.mxu0 %v4257
        %5646 = vmatpush1.bf16.msra.mxu0 %v4256
        %5647 = vmatprep.subr.bf16.mxu0 %v4265
        %5648 = vmatpush1.bf16.msra.mxu0 %v4264
        %5649 = vmatprep.mubr.bf16.mxu0 %v3821
        %5650 = vmatmul.mubr.bf16.gmra.mrb[0].mxu0 %v3820
        %v5651 = vpop.f32.mrb[0].mxu0
        %v5652 = vadd.f32 %v5459, %v5651
        %v5653 = vpop.f32.mrb[0].mxu0
        %v5654 = vadd.f32 %v5461, %v5653
        %v5655 = vpop.f32.mrb[0].mxu0
        %v5656 = vadd.f32 %v5463, %v5655
        %v5657 = vpop.f32.mrb[0].mxu0
        %v5658 = vadd.f32 %v5465, %v5657
        %5659 = vmatprep.mubr.bf16.mxu0 %v3825
        %5660 = vmatmul.mubr.bf16.gmra.mrb[0].mxu0 %v3824
        %v5661 = vpop.f32.mrb[0].mxu0
        %v5662 = vadd.f32 %v5469, %v5661
        %v5663 = vpop.f32.mrb[0].mxu0
        %v5664 = vadd.f32 %v5471, %v5663
        %v5665 = vpop.f32.mrb[0].mxu0
        %v5666 = vadd.f32 %v5473, %v5665
        %v5667 = vpop.f32.mrb[0].mxu0
        %v5668 = vadd.f32 %v5475, %v5667
        %5669 = vmatprep.mubr.bf16.mxu0 %v3829
        %5670 = vmatmul.mubr.bf16.gmra.mrb[0].mxu0 %v3828
        %v5671 = vpop.f32.mrb[0].mxu0
        %v5672 = vadd.f32 %v5479, %v5671
        %v5673 = vpop.f32.mrb[0].mxu0
        %v5674 = vadd.f32 %v5481, %v5673
        %v5675 = vpop.f32.mrb[0].mxu0
        %v5676 = vadd.f32 %v5483, %v5675
        %v5677 = vpop.f32.mrb[0].mxu0
        %v5678 = vadd.f32 %v5485, %v5677
        %5679 = vmatprep.mubr.bf16.mxu0 %v3833
        %5680 = vmatmul.mubr.bf16.gmra.mrb[0].mxu0 %v3832
        %v5681 = vpop.f32.mrb[0].mxu0
        %v5682 = vadd.f32 %v5489, %v5681
        %v5683 = vpop.f32.mrb[0].mxu0
        %v5684 = vadd.f32 %v5491, %v5683
        %v5685 = vpop.f32.mrb[0].mxu0
        %v5686 = vadd.f32 %v5493, %v5685
        %v5687 = vpop.f32.mrb[0].mxu0
        %v5688 = vadd.f32 %v5495, %v5687
        %5689 = vmatprep.mubr.bf16.mxu0 %v3837
        %5690 = vmatmul.mubr.bf16.gmra.mrb[0].mxu0 %v3836
        %v5691 = vpop.f32.mrb[0].mxu0
        %v5692 = vadd.f32 %v5499, %v5691
        %v5693 = vpop.f32.mrb[0].mxu0
        %v5694 = vadd.f32 %v5501, %v5693
        %v5695 = vpop.f32.mrb[0].mxu0
        %v5696 = vadd.f32 %v5503, %v5695
        %v5697 = vpop.f32.mrb[0].mxu0
        %v5698 = vadd.f32 %v5505, %v5697
        %5699 = vmatprep.mubr.bf16.mxu0 %v3841
        %5700 = vmatmul.mubr.bf16.gmra.mrb[0].mxu0 %v3840
        %v5701 = vpop.f32.mrb[0].mxu0
        %v5702 = vadd.f32 %v5509, %v5701
        %v5703 = vpop.f32.mrb[0].mxu0
        %v5704 = vadd.f32 %v5511, %v5703
        %v5705 = vpop.f32.mrb[0].mxu0
        %v5706 = vadd.f32 %v5513, %v5705
        %v5707 = vpop.f32.mrb[0].mxu0
        %v5708 = vadd.f32 %v5515, %v5707
        %5709 = vmatprep.mubr.bf16.mxu0 %v3845
        %5710 = vmatmul.mubr.bf16.gmra.mrb[0].mxu0 %v3844
        %v5711 = vpop.f32.mrb[0].mxu0
        %v5712 = vadd.f32 %v5519, %v5711
        %v5713 = vpop.f32.mrb[0].mxu0
        %v5714 = vadd.f32 %v5521, %v5713
        %v5715 = vpop.f32.mrb[0].mxu0
        %v5716 = vadd.f32 %v5523, %v5715
        %v5717 = vpop.f32.mrb[0].mxu0
        %v5718 = vadd.f32 %v5525, %v5717
        %5719 = vmatprep.mubr.bf16.mxu0 %v3849
        %5720 = vmatmul.mubr.bf16.gmra.mrb[0].mxu0 %v3848
        %v5721 = vpop.f32.mrb[0].mxu0
        %v5722 = vadd.f32 %v5529, %v5721
        %v5723 = vpop.f32.mrb[0].mxu0
        %v5724 = vadd.f32 %v5531, %v5723
        %v5725 = vpop.f32.mrb[0].mxu0
        %v5726 = vadd.f32 %v5533, %v5725
        %v5727 = vpop.f32.mrb[0].mxu0
        %v5728 = vadd.f32 %v5535, %v5727
        %5729 = vmatprep.mubr.bf16.mxu0 %v3853
        %5730 = vmatmul.mubr.bf16.gmra.mrb[0].mxu0 %v3852
        %v5731 = vpop.f32.mrb[0].mxu0
        %v5732 = vadd.f32 %v5539, %v5731
        %v5733 = vpop.f32.mrb[0].mxu0
        %v5734 = vadd.f32 %v5541, %v5733
        %v5735 = vpop.f32.mrb[0].mxu0
        %v5736 = vadd.f32 %v5543, %v5735
        %v5737 = vpop.f32.mrb[0].mxu0
        %v5738 = vadd.f32 %v5545, %v5737
        %5739 = vmatprep.mubr.bf16.mxu0 %v3857
        %5740 = vmatmul.mubr.bf16.gmra.mrb[0].mxu0 %v3856
        %v5741 = vpop.f32.mrb[0].mxu0
        %v5742 = vadd.f32 %v5549, %v5741
        %v5743 = vpop.f32.mrb[0].mxu0
        %v5744 = vadd.f32 %v5551, %v5743
        %v5745 = vpop.f32.mrb[0].mxu0
        %v5746 = vadd.f32 %v5553, %v5745
        %v5747 = vpop.f32.mrb[0].mxu0
        %v5748 = vadd.f32 %v5555, %v5747
        %5749 = vmatprep.mubr.bf16.mxu0 %v3861
        %5750 = vmatmul.mubr.bf16.gmra.mrb[0].mxu0 %v3860
        %v5751 = vpop.f32.mrb[0].mxu0
        %v5752 = vadd.f32 %v5559, %v5751
        %v5753 = vpop.f32.mrb[0].mxu0
        %v5754 = vadd.f32 %v5561, %v5753
        %v5755 = vpop.f32.mrb[0].mxu0
        %v5756 = vadd.f32 %v5563, %v5755
        %v5757 = vpop.f32.mrb[0].mxu0
        %v5758 = vadd.f32 %v5565, %v5757
        %5759 = vmatprep.mubr.bf16.mxu0 %v3865
        %5760 = vmatmul.mubr.bf16.gmra.mrb[0].mxu0 %v3864
        %v5761 = vpop.f32.mrb[0].mxu0
        %v5762 = vadd.f32 %v5569, %v5761
        %v5763 = vpop.f32.mrb[0].mxu0
        %v5764 = vadd.f32 %v5571, %v5763
        %v5765 = vpop.f32.mrb[0].mxu0
        %v5766 = vadd.f32 %v5573, %v5765
        %v5767 = vpop.f32.mrb[0].mxu0
        %v5768 = vadd.f32 %v5575, %v5767
        %5769 = vmatprep.mubr.bf16.mxu0 %v3869
        %5770 = vmatmul.mubr.bf16.gmra.mrb[0].mxu0 %v3868
        %v5771 = vpop.f32.mrb[0].mxu0
        %v5772 = vadd.f32 %v5579, %v5771
        %v5773 = vpop.f32.mrb[0].mxu0
        %v5774 = vadd.f32 %v5581, %v5773
        %v5775 = vpop.f32.mrb[0].mxu0
        %v5776 = vadd.f32 %v5583, %v5775
        %v5777 = vpop.f32.mrb[0].mxu0
        %v5778 = vadd.f32 %v5585, %v5777
        %5779 = vmatprep.mubr.bf16.mxu0 %v3873
        %5780 = vmatmul.mubr.bf16.gmra.mrb[0].mxu0 %v3872
        %v5781 = vpop.f32.mrb[0].mxu0
        %v5782 = vadd.f32 %v5589, %v5781
        %v5783 = vpop.f32.mrb[0].mxu0
        %v5784 = vadd.f32 %v5591, %v5783
        %v5785 = vpop.f32.mrb[0].mxu0
        %v5786 = vadd.f32 %v5593, %v5785
        %v5787 = vpop.f32.mrb[0].mxu0
        %v5788 = vadd.f32 %v5595, %v5787
        %5789 = vmatprep.mubr.bf16.mxu0 %v3877
        %5790 = vmatmul.mubr.bf16.gmra.mrb[0].mxu0 %v3876
        %v5791 = vpop.f32.mrb[0].mxu0
        %v5792 = vadd.f32 %v5599, %v5791
        %v5793 = vpop.f32.mrb[0].mxu0
        %v5794 = vadd.f32 %v5601, %v5793
        %v5795 = vpop.f32.mrb[0].mxu0
        %v5796 = vadd.f32 %v5603, %v5795
        %v5797 = vpop.f32.mrb[0].mxu0
        %v5798 = vadd.f32 %v5605, %v5797
        %5799 = vmatprep.mubr.bf16.mxu0 %v3881
        %5800 = vmatmul.mubr.bf16.gmra.mrb[0].mxu0 %v3880
        %v5801 = vpop.f32.mrb[0].mxu0
        %v5802 = vadd.f32 %v5609, %v5801
        %v5803 = vpop.f32.mrb[0].mxu0
        %v5804 = vadd.f32 %v5611, %v5803
        %v5805 = vpop.f32.mrb[0].mxu0
        %v5806 = vadd.f32 %v5613, %v5805
        %v5807 = vpop.f32.mrb[0].mxu0
        %v5808 = vadd.f32 %v5615, %v5807
        %5809 = vdwg.mxu0
        %v5810 = vld [vmem:[%s13] sm:$0xff]
        %v5811 = vld [vmem:[%s14] sm:$0xff]
        %v5812 = vld [vmem:[%s15] sm:$0xff]
        %v5813 = vadd.f32 %v4494, %v4498
        %v5814 = vadd.f32 %v5813, %v4504
        %v5815 = vadd.f32 %v5814, %v4508
        %v5816 = vadd.f32 %v5815, %v4514
        %v5817 = vadd.f32 %v5816, %v4518
        %v5818 = vadd.f32 %v5817, %v4524
        %v5819 = vadd.f32 %v5818, %v4528
        %v5820 = vadd.f32 %v5819, %v4534
        %v5821 = vadd.f32 %v5820, %v4538
        %v5822 = vadd.f32 %v5821, %v4544
        %v5823 = vadd.f32 %v5822, %v4548
        %v5824 = vadd.f32 %v5823, %v4554
        %v5825 = vadd.f32 %v5824, %v4558
        %v5826 = vadd.f32 %v5825, %v4564
        %v5827 = vadd.f32 %v5826, %v4568
        %v5828 = vadd.f32 %v5827, %v4574
        %v5829 = vadd.f32 %v5828, %v4578
        %v5830 = vadd.f32 %v5829, %v4584
        %v5831 = vadd.f32 %v5830, %v4588
        %v5832 = vadd.f32 %v5831, %v4594
        %v5833 = vadd.f32 %v5832, %v4598
        %v5834 = vadd.f32 %v5833, %v4604
        %v5835 = vadd.f32 %v5834, %v4608
        %v5836 = vadd.f32 %v5835, %v4614
        %v5837 = vadd.f32 %v5836, %v4618
        %v5838 = vadd.f32 %v5837, %v4624
        %v5839 = vadd.f32 %v5838, %v4628
        %v5840 = vadd.f32 %v5839, %v4634
        %v5841 = vadd.f32 %v5840, %v4638
        %v5842 = vadd.f32 %v5841, %v4644
        %v5843 = vadd.f32 %v5842, %v4648
        %v5844 = vrot.slane %v5843, 4
        %v5845 = vadd.f32 %v5843, %v5844
        %v5846 = vrot.slane %v5845, 2
        %v5847 = vadd.f32 %v5845, %v5846
        %v5848 = vrot.slane %v5847, 1
        %v5849 = vadd.f32 %v5847, %v5848
        %v5850 = vadd.f32 %v4496, %v4500
        %v5851 = vadd.f32 %v5850, %v4506
        %v5852 = vadd.f32 %v5851, %v4510
        %v5853 = vadd.f32 %v5852, %v4516
        %v5854 = vadd.f32 %v5853, %v4520
        %v5855 = vadd.f32 %v5854, %v4526
        %v5856 = vadd.f32 %v5855, %v4530
        %v5857 = vadd.f32 %v5856, %v4536
        %v5858 = vadd.f32 %v5857, %v4540
        %v5859 = vadd.f32 %v5858, %v4546
        %v5860 = vadd.f32 %v5859, %v4550
        %v5861 = vadd.f32 %v5860, %v4556
        %v5862 = vadd.f32 %v5861, %v4560
        %v5863 = vadd.f32 %v5862, %v4566
        %v5864 = vadd.f32 %v5863, %v4570
        %v5865 = vadd.f32 %v5864, %v4576
        %v5866 = vadd.f32 %v5865, %v4580
        %v5867 = vadd.f32 %v5866, %v4586
        %v5868 = vadd.f32 %v5867, %v4590
        %v5869 = vadd.f32 %v5868, %v4596
        %v5870 = vadd.f32 %v5869, %v4600
        %v5871 = vadd.f32 %v5870, %v4606
        %v5872 = vadd.f32 %v5871, %v4610
        %v5873 = vadd.f32 %v5872, %v4616
        %v5874 = vadd.f32 %v5873, %v4620
        %v5875 = vadd.f32 %v5874, %v4626
        %v5876 = vadd.f32 %v5875, %v4630
        %v5877 = vadd.f32 %v5876, %v4636
        %v5878 = vadd.f32 %v5877, %v4640
        %v5879 = vadd.f32 %v5878, %v4646
        %v5880 = vadd.f32 %v5879, %v4650
        %v5881 = vrot.slane %v5880, 4
        %v5882 = vadd.f32 %v5880, %v5881
        %v5883 = vrot.slane %v5882, 2
        %v5884 = vadd.f32 %v5882, %v5883
        %v5885 = vrot.slane %v5884, 1
        %v5886 = vadd.f32 %v5884, %v5885
        %v5887 = vadd.f32 %v4880, %v4884
        %v5888 = vadd.f32 %v5887, %v4890
        %v5889 = vadd.f32 %v5888, %v4894
        %v5890 = vadd.f32 %v5889, %v4900
        %v5891 = vadd.f32 %v5890, %v4904
        %v5892 = vadd.f32 %v5891, %v4910
        %v5893 = vadd.f32 %v5892, %v4914
        %v5894 = vadd.f32 %v5893, %v4920
        %v5895 = vadd.f32 %v5894, %v4924
        %v5896 = vadd.f32 %v5895, %v4930
        %v5897 = vadd.f32 %v5896, %v4934
        %v5898 = vadd.f32 %v5897, %v4940
        %v5899 = vadd.f32 %v5898, %v4944
        %v5900 = vadd.f32 %v5899, %v4950
        %v5901 = vadd.f32 %v5900, %v4954
        %v5902 = vadd.f32 %v5901, %v4960
        %v5903 = vadd.f32 %v5902, %v4964
        %v5904 = vadd.f32 %v5903, %v4970
        %v5905 = vadd.f32 %v5904, %v4974
        %v5906 = vadd.f32 %v5905, %v4980
        %v5907 = vadd.f32 %v5906, %v4984
        %v5908 = vadd.f32 %v5907, %v4990
        %v5909 = vadd.f32 %v5908, %v4994
        %v5910 = vadd.f32 %v5909, %v5000
        %v5911 = vadd.f32 %v5910, %v5004
        %v5912 = vadd.f32 %v5911, %v5010
        %v5913 = vadd.f32 %v5912, %v5014
        %v5914 = vadd.f32 %v5913, %v5020
        %v5915 = vadd.f32 %v5914, %v5024
        %v5916 = vadd.f32 %v5915, %v5030
        %v5917 = vadd.f32 %v5916, %v5034
        %v5918 = vrot.slane %v5917, 4
        %v5919 = vadd.f32 %v5917, %v5918
        %v5920 = vrot.slane %v5919, 2
        %v5921 = vadd.f32 %v5919, %v5920
        %v5922 = vrot.slane %v5921, 1
        %v5923 = vadd.f32 %v5921, %v5922
        %v5924 = vadd.f32 %v4882, %v4886
        %v5925 = vadd.f32 %v5924, %v4892
        %v5926 = vadd.f32 %v5925, %v4896
        %v5927 = vadd.f32 %v5926, %v4902
        %v5928 = vadd.f32 %v5927, %v4906
        %v5929 = vadd.f32 %v5928, %v4912
        %v5930 = vadd.f32 %v5929, %v4916
        %v5931 = vadd.f32 %v5930, %v4922
        %v5932 = vadd.f32 %v5931, %v4926
        %v5933 = vadd.f32 %v5932, %v4932
        %v5934 = vadd.f32 %v5933, %v4936
        %v5935 = vadd.f32 %v5934, %v4942
        %v5936 = vadd.f32 %v5935, %v4946
        %v5937 = vadd.f32 %v5936, %v4952
        %v5938 = vadd.f32 %v5937, %v4956
        %v5939 = vadd.f32 %v5938, %v4962
        %v5940 = vadd.f32 %v5939, %v4966
        %v5941 = vadd.f32 %v5940, %v4972
        %v5942 = vadd.f32 %v5941, %v4976
        %v5943 = vadd.f32 %v5942, %v4982
        %v5944 = vadd.f32 %v5943, %v4986
        %v5945 = vadd.f32 %v5944, %v4992
        %v5946 = vadd.f32 %v5945, %v4996
        %v5947 = vadd.f32 %v5946, %v5002
        %v5948 = vadd.f32 %v5947, %v5006
        %v5949 = vadd.f32 %v5948, %v5012
        %v5950 = vadd.f32 %v5949, %v5016
        %v5951 = vadd.f32 %v5950, %v5022
        %v5952 = vadd.f32 %v5951, %v5026
        %v5953 = vadd.f32 %v5952, %v5032
        %v5954 = vadd.f32 %v5953, %v5036
        %v5955 = vrot.slane %v5954, 4
        %v5956 = vadd.f32 %v5954, %v5955
        %v5957 = vrot.slane %v5956, 2
        %v5958 = vadd.f32 %v5956, %v5957
        %v5959 = vrot.slane %v5958, 1
        %v5960 = vadd.f32 %v5958, %v5959
        %v5961 = vadd.f32 %v5266, %v5270
        %v5962 = vadd.f32 %v5961, %v5276
        %v5963 = vadd.f32 %v5962, %v5280
        %v5964 = vadd.f32 %v5963, %v5286
        %v5965 = vadd.f32 %v5964, %v5290
        %v5966 = vadd.f32 %v5965, %v5296
        %v5967 = vadd.f32 %v5966, %v5300
        %v5968 = vadd.f32 %v5967, %v5306
        %v5969 = vadd.f32 %v5968, %v5310
        %v5970 = vadd.f32 %v5969, %v5316
        %v5971 = vadd.f32 %v5970, %v5320
        %v5972 = vadd.f32 %v5971, %v5326
        %v5973 = vadd.f32 %v5972, %v5330
        %v5974 = vadd.f32 %v5973, %v5336
        %v5975 = vadd.f32 %v5974, %v5340
        %v5976 = vadd.f32 %v5975, %v5346
        %v5977 = vadd.f32 %v5976, %v5350
        %v5978 = vadd.f32 %v5977, %v5356
        %v5979 = vadd.f32 %v5978, %v5360
        %v5980 = vadd.f32 %v5979, %v5366
        %v5981 = vadd.f32 %v5980, %v5370
        %v5982 = vadd.f32 %v5981, %v5376
        %v5983 = vadd.f32 %v5982, %v5380
        %v5984 = vadd.f32 %v5983, %v5386
        %v5985 = vadd.f32 %v5984, %v5390
        %v5986 = vadd.f32 %v5985, %v5396
        %v5987 = vadd.f32 %v5986, %v5400
        %v5988 = vadd.f32 %v5987, %v5406
        %v5989 = vadd.f32 %v5988, %v5410
        %v5990 = vadd.f32 %v5989, %v5416
        %v5991 = vadd.f32 %v5990, %v5420
        %v5992 = vrot.slane %v5991, 4
        %v5993 = vadd.f32 %v5991, %v5992
        %v5994 = vrot.slane %v5993, 2
        %v5995 = vadd.f32 %v5993, %v5994
        %v5996 = vrot.slane %v5995, 1
        %v5997 = vadd.f32 %v5995, %v5996
        %v5998 = vadd.f32 %v5268, %v5272
        %v5999 = vadd.f32 %v5998, %v5278
        %v6000 = vadd.f32 %v5999, %v5282
        %v6001 = vadd.f32 %v6000, %v5288
        %v6002 = vadd.f32 %v6001, %v5292
        %v6003 = vadd.f32 %v6002, %v5298
        %v6004 = vadd.f32 %v6003, %v5302
        %v6005 = vadd.f32 %v6004, %v5308
        %v6006 = vadd.f32 %v6005, %v5312
        %v6007 = vadd.f32 %v6006, %v5318
        %v6008 = vadd.f32 %v6007, %v5322
        %v6009 = vadd.f32 %v6008, %v5328
        %v6010 = vadd.f32 %v6009, %v5332
        %v6011 = vadd.f32 %v6010, %v5338
        %v6012 = vadd.f32 %v6011, %v5342
        %v6013 = vadd.f32 %v6012, %v5348
        %v6014 = vadd.f32 %v6013, %v5352
        %v6015 = vadd.f32 %v6014, %v5358
        %v6016 = vadd.f32 %v6015, %v5362
        %v6017 = vadd.f32 %v6016, %v5368
        %v6018 = vadd.f32 %v6017, %v5372
        %v6019 = vadd.f32 %v6018, %v5378
        %v6020 = vadd.f32 %v6019, %v5382
        %v6021 = vadd.f32 %v6020, %v5388
        %v6022 = vadd.f32 %v6021, %v5392
        %v6023 = vadd.f32 %v6022, %v5398
        %v6024 = vadd.f32 %v6023, %v5402
        %v6025 = vadd.f32 %v6024, %v5408
        %v6026 = vadd.f32 %v6025, %v5412
        %v6027 = vadd.f32 %v6026, %v5418
        %v6028 = vadd.f32 %v6027, %v5422
        %v6029 = vrot.slane %v6028, 4
        %v6030 = vadd.f32 %v6028, %v6029
        %v6031 = vrot.slane %v6030, 2
        %v6032 = vadd.f32 %v6030, %v6031
        %v6033 = vrot.slane %v6032, 1
        %v6034 = vadd.f32 %v6032, %v6033
        %v6035 = vadd.f32 %v5652, %v5656
        %v6036 = vadd.f32 %v6035, %v5662
        %v6037 = vadd.f32 %v6036, %v5666
        %v6038 = vadd.f32 %v6037, %v5672
        %v6039 = vadd.f32 %v6038, %v5676
        %v6040 = vadd.f32 %v6039, %v5682
        %v6041 = vadd.f32 %v6040, %v5686
        %v6042 = vadd.f32 %v6041, %v5692
        %v6043 = vadd.f32 %v6042, %v5696
        %v6044 = vadd.f32 %v6043, %v5702
        %v6045 = vadd.f32 %v6044, %v5706
        %v6046 = vadd.f32 %v6045, %v5712
        %v6047 = vadd.f32 %v6046, %v5716
        %v6048 = vadd.f32 %v6047, %v5722
        %v6049 = vadd.f32 %v6048, %v5726
        %v6050 = vadd.f32 %v6049, %v5732
        %v6051 = vadd.f32 %v6050, %v5736
        %v6052 = vadd.f32 %v6051, %v5742
        %v6053 = vadd.f32 %v6052, %v5746
        %v6054 = vadd.f32 %v6053, %v5752
        %v6055 = vadd.f32 %v6054, %v5756
        %v6056 = vadd.f32 %v6055, %v5762
        %v6057 = vadd.f32 %v6056, %v5766
        %v6058 = vadd.f32 %v6057, %v5772
        %v6059 = vadd.f32 %v6058, %v5776
        %v6060 = vadd.f32 %v6059, %v5782
        %v6061 = vadd.f32 %v6060, %v5786
        %v6062 = vadd.f32 %v6061, %v5792
        %v6063 = vadd.f32 %v6062, %v5796
        %v6064 = vadd.f32 %v6063, %v5802
        %v6065 = vadd.f32 %v6064, %v5806
        %v6066 = vrot.slane %v6065, 4
        %v6067 = vadd.f32 %v6065, %v6066
        %v6068 = vrot.slane %v6067, 2
        %v6069 = vadd.f32 %v6067, %v6068
        %v6070 = vrot.slane %v6069, 1
        %v6071 = vadd.f32 %v6069, %v6070
        %v6072 = vadd.f32 %v5654, %v5658
        %v6073 = vadd.f32 %v6072, %v5664
        %v6074 = vadd.f32 %v6073, %v5668
        %v6075 = vadd.f32 %v6074, %v5674
        %v6076 = vadd.f32 %v6075, %v5678
        %v6077 = vadd.f32 %v6076, %v5684
        %v6078 = vadd.f32 %v6077, %v5688
        %v6079 = vadd.f32 %v6078, %v5694
        %v6080 = vadd.f32 %v6079, %v5698
        %v6081 = vadd.f32 %v6080, %v5704
        %v6082 = vadd.f32 %v6081, %v5708
        %v6083 = vadd.f32 %v6082, %v5714
        %v6084 = vadd.f32 %v6083, %v5718
        %v6085 = vadd.f32 %v6084, %v5724
        %v6086 = vadd.f32 %v6085, %v5728
        %v6087 = vadd.f32 %v6086, %v5734
        %v6088 = vadd.f32 %v6087, %v5738
        %v6089 = vadd.f32 %v6088, %v5744
        %v6090 = vadd.f32 %v6089, %v5748
        %v6091 = vadd.f32 %v6090, %v5754
        %v6092 = vadd.f32 %v6091, %v5758
        %v6093 = vadd.f32 %v6092, %v5764
        %v6094 = vadd.f32 %v6093, %v5768
        %v6095 = vadd.f32 %v6094, %v5774
        %v6096 = vadd.f32 %v6095, %v5778
        %v6097 = vadd.f32 %v6096, %v5784
        %v6098 = vadd.f32 %v6097, %v5788
        %v6099 = vadd.f32 %v6098, %v5794
        %v6100 = vadd.f32 %v6099, %v5798
        %v6101 = vadd.f32 %v6100, %v5804
        %v6102 = vadd.f32 %v6101, %v5808
        %v6103 = vrot.slane %v6102, 4
        %v6104 = vadd.f32 %v6102, %v6103
        %v6105 = vrot.slane %v6104, 2
        %v6106 = vadd.f32 %v6104, %v6105
        %v6107 = vrot.slane %v6106, 1
        %v6108 = vadd.f32 %v6106, %v6107
        %v6109 = vmul.f32 %v5849, %v1532
        %v6110 = vmul.f32 %v5886, %v1532
        %v6111 = vmul.f32 %v5923, %v1532
        %v6112 = vmul.f32 %v5960, %v1532
        %v6113 = vmul.f32 %v5997, %v1532
        %v6114 = vmul.f32 %v6034, %v1532
        %v6115 = vmul.f32 %v6071, %v1532
        %v6116 = vmul.f32 %v6108, %v1532
        %v6117 = vmul.f32 %v4494, %v4494
        %v6118 = vmul.f32 %v4496, %v4496
        %v6119 = vmul.f32 %v4880, %v4880
        %v6120 = vmul.f32 %v4882, %v4882
        %v6121 = vmul.f32 %v5266, %v5266
        %v6122 = vmul.f32 %v5268, %v5268
        %v6123 = vmul.f32 %v5652, %v5652
        %v6124 = vmul.f32 %v5654, %v5654
        %v6125 = vmul.f32 %v4498, %v4498
        %v6126 = vmul.f32 %v4500, %v4500
        %v6127 = vmul.f32 %v4884, %v4884
        %v6128 = vmul.f32 %v4886, %v4886
        %v6129 = vmul.f32 %v5270, %v5270
        %v6130 = vmul.f32 %v5272, %v5272
        %v6131 = vmul.f32 %v5656, %v5656
        %v6132 = vmul.f32 %v5658, %v5658
        %v6133 = vmul.f32 %v4504, %v4504
        %v6134 = vmul.f32 %v4506, %v4506
        %v6135 = vmul.f32 %v4890, %v4890
        %v6136 = vmul.f32 %v4892, %v4892
        %v6137 = vmul.f32 %v5276, %v5276
        %v6138 = vmul.f32 %v5278, %v5278
        %v6139 = vmul.f32 %v5662, %v5662
        %v6140 = vmul.f32 %v5664, %v5664
        %v6141 = vmul.f32 %v4508, %v4508
        %v6142 = vmul.f32 %v4510, %v4510
        %v6143 = vmul.f32 %v4894, %v4894
        %v6144 = vmul.f32 %v4896, %v4896
        %v6145 = vmul.f32 %v5280, %v5280
        %v6146 = vmul.f32 %v5282, %v5282
        %v6147 = vmul.f32 %v5666, %v5666
        %v6148 = vmul.f32 %v5668, %v5668
        %v6149 = vmul.f32 %v4514, %v4514
        %v6150 = vmul.f32 %v4516, %v4516
        %v6151 = vmul.f32 %v4900, %v4900
        %v6152 = vmul.f32 %v4902, %v4902
        %v6153 = vmul.f32 %v5286, %v5286
        %v6154 = vmul.f32 %v5288, %v5288
        %v6155 = vmul.f32 %v5672, %v5672
        %v6156 = vmul.f32 %v5674, %v5674
        %v6157 = vmul.f32 %v4518, %v4518
        %v6158 = vmul.f32 %v4520, %v4520
        %v6159 = vmul.f32 %v4904, %v4904
        %v6160 = vmul.f32 %v4906, %v4906
        %v6161 = vmul.f32 %v5290, %v5290
        %v6162 = vmul.f32 %v5292, %v5292
        %v6163 = vmul.f32 %v5676, %v5676
        %v6164 = vmul.f32 %v5678, %v5678
        %v6165 = vmul.f32 %v4524, %v4524
        %v6166 = vmul.f32 %v4526, %v4526
        %v6167 = vmul.f32 %v4910, %v4910
        %v6168 = vmul.f32 %v4912, %v4912
        %v6169 = vmul.f32 %v5296, %v5296
        %v6170 = vmul.f32 %v5298, %v5298
        %v6171 = vmul.f32 %v5682, %v5682
        %v6172 = vmul.f32 %v5684, %v5684
        %v6173 = vmul.f32 %v4528, %v4528
        %v6174 = vmul.f32 %v4530, %v4530
        %v6175 = vmul.f32 %v4914, %v4914
        %v6176 = vmul.f32 %v4916, %v4916
        %v6177 = vmul.f32 %v5300, %v5300
        %v6178 = vmul.f32 %v5302, %v5302
        %v6179 = vmul.f32 %v5686, %v5686
        %v6180 = vmul.f32 %v5688, %v5688
        %v6181 = vmul.f32 %v4534, %v4534
        %v6182 = vmul.f32 %v4536, %v4536
        %v6183 = vmul.f32 %v4920, %v4920
        %v6184 = vmul.f32 %v4922, %v4922
        %v6185 = vmul.f32 %v5306, %v5306
        %v6186 = vmul.f32 %v5308, %v5308
        %v6187 = vmul.f32 %v5692, %v5692
        %v6188 = vmul.f32 %v5694, %v5694
        %v6189 = vmul.f32 %v4538, %v4538
        %v6190 = vmul.f32 %v4540, %v4540
        %v6191 = vmul.f32 %v4924, %v4924
        %v6192 = vmul.f32 %v4926, %v4926
        %v6193 = vmul.f32 %v5310, %v5310
        %v6194 = vmul.f32 %v5312, %v5312
        %v6195 = vmul.f32 %v5696, %v5696
        %v6196 = vmul.f32 %v5698, %v5698
        %v6197 = vmul.f32 %v4544, %v4544
        %v6198 = vmul.f32 %v4546, %v4546
        %v6199 = vmul.f32 %v4930, %v4930
        %v6200 = vmul.f32 %v4932, %v4932
        %v6201 = vmul.f32 %v5316, %v5316
        %v6202 = vmul.f32 %v5318, %v5318
        %v6203 = vmul.f32 %v5702, %v5702
        %v6204 = vmul.f32 %v5704, %v5704
        %v6205 = vmul.f32 %v4548, %v4548
        %v6206 = vmul.f32 %v4550, %v4550
        %v6207 = vmul.f32 %v4934, %v4934
        %v6208 = vmul.f32 %v4936, %v4936
        %v6209 = vmul.f32 %v5320, %v5320
        %v6210 = vmul.f32 %v5322, %v5322
        %v6211 = vmul.f32 %v5706, %v5706
        %v6212 = vmul.f32 %v5708, %v5708
        %v6213 = vmul.f32 %v4554, %v4554
        %v6214 = vmul.f32 %v4556, %v4556
        %v6215 = vmul.f32 %v4940, %v4940
        %v6216 = vmul.f32 %v4942, %v4942
        %v6217 = vmul.f32 %v5326, %v5326
        %v6218 = vmul.f32 %v5328, %v5328
        %v6219 = vmul.f32 %v5712, %v5712
        %v6220 = vmul.f32 %v5714, %v5714
        %v6221 = vmul.f32 %v4558, %v4558
        %v6222 = vmul.f32 %v4560, %v4560
        %v6223 = vmul.f32 %v4944, %v4944
        %v6224 = vmul.f32 %v4946, %v4946
        %v6225 = vmul.f32 %v5330, %v5330
        %v6226 = vmul.f32 %v5332, %v5332
        %v6227 = vmul.f32 %v5716, %v5716
        %v6228 = vmul.f32 %v5718, %v5718
        %v6229 = vmul.f32 %v4564, %v4564
        %v6230 = vmul.f32 %v4566, %v4566
        %v6231 = vmul.f32 %v4950, %v4950
        %v6232 = vmul.f32 %v4952, %v4952
        %v6233 = vmul.f32 %v5336, %v5336
        %v6234 = vmul.f32 %v5338, %v5338
        %v6235 = vmul.f32 %v5722, %v5722
        %v6236 = vmul.f32 %v5724, %v5724
        %v6237 = vmul.f32 %v4568, %v4568
        %v6238 = vmul.f32 %v4570, %v4570
        %v6239 = vmul.f32 %v4954, %v4954
        %v6240 = vmul.f32 %v4956, %v4956
        %v6241 = vmul.f32 %v5340, %v5340
        %v6242 = vmul.f32 %v5342, %v5342
        %v6243 = vmul.f32 %v5726, %v5726
        %v6244 = vmul.f32 %v5728, %v5728
        %v6245 = vmul.f32 %v4574, %v4574
        %v6246 = vmul.f32 %v4576, %v4576
        %v6247 = vmul.f32 %v4960, %v4960
        %v6248 = vmul.f32 %v4962, %v4962
        %v6249 = vmul.f32 %v5346, %v5346
        %v6250 = vmul.f32 %v5348, %v5348
        %v6251 = vmul.f32 %v5732, %v5732
        %v6252 = vmul.f32 %v5734, %v5734
        %v6253 = vmul.f32 %v4578, %v4578
        %v6254 = vmul.f32 %v4580, %v4580
        %v6255 = vmul.f32 %v4964, %v4964
        %v6256 = vmul.f32 %v4966, %v4966
        %v6257 = vmul.f32 %v5350, %v5350
        %v6258 = vmul.f32 %v5352, %v5352
        %v6259 = vmul.f32 %v5736, %v5736
        %v6260 = vmul.f32 %v5738, %v5738
        %v6261 = vmul.f32 %v4584, %v4584
        %v6262 = vmul.f32 %v4586, %v4586
        %v6263 = vmul.f32 %v4970, %v4970
        %v6264 = vmul.f32 %v4972, %v4972
        %v6265 = vmul.f32 %v5356, %v5356
        %v6266 = vmul.f32 %v5358, %v5358
        %v6267 = vmul.f32 %v5742, %v5742
        %v6268 = vmul.f32 %v5744, %v5744
        %v6269 = vmul.f32 %v4588, %v4588
        %v6270 = vmul.f32 %v4590, %v4590
        %v6271 = vmul.f32 %v4974, %v4974
        %v6272 = vmul.f32 %v4976, %v4976
        %v6273 = vmul.f32 %v5360, %v5360
        %v6274 = vmul.f32 %v5362, %v5362
        %v6275 = vmul.f32 %v5746, %v5746
        %v6276 = vmul.f32 %v5748, %v5748
        %v6277 = vmul.f32 %v4594, %v4594
        %v6278 = vmul.f32 %v4596, %v4596
        %v6279 = vmul.f32 %v4980, %v4980
        %v6280 = vmul.f32 %v4982, %v4982
        %v6281 = vmul.f32 %v5366, %v5366
        %v6282 = vmul.f32 %v5368, %v5368
        %v6283 = vmul.f32 %v5752, %v5752
        %v6284 = vmul.f32 %v5754, %v5754
        %v6285 = vmul.f32 %v4598, %v4598
        %v6286 = vmul.f32 %v4600, %v4600
        %v6287 = vmul.f32 %v4984, %v4984
        %v6288 = vmul.f32 %v4986, %v4986
        %v6289 = vmul.f32 %v5370, %v5370
        %v6290 = vmul.f32 %v5372, %v5372
        %v6291 = vmul.f32 %v5756, %v5756
        %v6292 = vmul.f32 %v5758, %v5758
        %v6293 = vmul.f32 %v4604, %v4604
        %v6294 = vmul.f32 %v4606, %v4606
        %v6295 = vmul.f32 %v4990, %v4990
        %v6296 = vmul.f32 %v4992, %v4992
        %v6297 = vmul.f32 %v5376, %v5376
        %v6298 = vmul.f32 %v5378, %v5378
        %v6299 = vmul.f32 %v5762, %v5762
        %v6300 = vmul.f32 %v5764, %v5764
        %v6301 = vmul.f32 %v4608, %v4608
        %v6302 = vmul.f32 %v4610, %v4610
        %v6303 = vmul.f32 %v4994, %v4994
        %v6304 = vmul.f32 %v4996, %v4996
        %v6305 = vmul.f32 %v5380, %v5380
        %v6306 = vmul.f32 %v5382, %v5382
        %v6307 = vmul.f32 %v5766, %v5766
        %v6308 = vmul.f32 %v5768, %v5768
        %v6309 = vmul.f32 %v4614, %v4614
        %v6310 = vmul.f32 %v4616, %v4616
        %v6311 = vmul.f32 %v5000, %v5000
        %v6312 = vmul.f32 %v5002, %v5002
        %v6313 = vmul.f32 %v5386, %v5386
        %v6314 = vmul.f32 %v5388, %v5388
        %v6315 = vmul.f32 %v5772, %v5772
        %v6316 = vmul.f32 %v5774, %v5774
        %v6317 = vmul.f32 %v4618, %v4618
        %v6318 = vmul.f32 %v4620, %v4620
        %v6319 = vmul.f32 %v5004, %v5004
        %v6320 = vmul.f32 %v5006, %v5006
        %v6321 = vmul.f32 %v5390, %v5390
        %v6322 = vmul.f32 %v5392, %v5392
        %v6323 = vmul.f32 %v5776, %v5776
        %v6324 = vmul.f32 %v5778, %v5778
        %v6325 = vmul.f32 %v4624, %v4624
        %v6326 = vmul.f32 %v4626, %v4626
        %v6327 = vmul.f32 %v5010, %v5010
        %v6328 = vmul.f32 %v5012, %v5012
        %v6329 = vmul.f32 %v5396, %v5396
        %v6330 = vmul.f32 %v5398, %v5398
        %v6331 = vmul.f32 %v5782, %v5782
        %v6332 = vmul.f32 %v5784, %v5784
        %v6333 = vmul.f32 %v4628, %v4628
        %v6334 = vmul.f32 %v4630, %v4630
        %v6335 = vmul.f32 %v5014, %v5014
        %v6336 = vmul.f32 %v5016, %v5016
        %v6337 = vmul.f32 %v5400, %v5400
        %v6338 = vmul.f32 %v5402, %v5402
        %v6339 = vmul.f32 %v5786, %v5786
        %v6340 = vmul.f32 %v5788, %v5788
        %v6341 = vmul.f32 %v4634, %v4634
        %v6342 = vmul.f32 %v4636, %v4636
        %v6343 = vmul.f32 %v5020, %v5020
        %v6344 = vmul.f32 %v5022, %v5022
        %v6345 = vmul.f32 %v5406, %v5406
        %v6346 = vmul.f32 %v5408, %v5408
        %v6347 = vmul.f32 %v5792, %v5792
        %v6348 = vmul.f32 %v5794, %v5794
        %v6349 = vmul.f32 %v4638, %v4638
        %v6350 = vmul.f32 %v4640, %v4640
        %v6351 = vmul.f32 %v5024, %v5024
        %v6352 = vmul.f32 %v5026, %v5026
        %v6353 = vmul.f32 %v5410, %v5410
        %v6354 = vmul.f32 %v5412, %v5412
        %v6355 = vmul.f32 %v5796, %v5796
        %v6356 = vmul.f32 %v5798, %v5798
        %v6357 = vmul.f32 %v4644, %v4644
        %v6358 = vmul.f32 %v4646, %v4646
        %v6359 = vmul.f32 %v5030, %v5030
        %v6360 = vmul.f32 %v5032, %v5032
        %v6361 = vmul.f32 %v5416, %v5416
        %v6362 = vmul.f32 %v5418, %v5418
        %v6363 = vmul.f32 %v5802, %v5802
        %v6364 = vmul.f32 %v5804, %v5804
        %v6365 = vmul.f32 %v4648, %v4648
        %v6366 = vmul.f32 %v4650, %v4650
        %v6367 = vmul.f32 %v5034, %v5034
        %v6368 = vmul.f32 %v5036, %v5036
        %v6369 = vmul.f32 %v5420, %v5420
        %v6370 = vmul.f32 %v5422, %v5422
        %v6371 = vmul.f32 %v5806, %v5806
        %v6372 = vmul.f32 %v5808, %v5808
        %v6373 = vadd.f32 %v6117, %v6125
        %v6374 = vadd.f32 %v6373, %v6133
        %v6375 = vadd.f32 %v6374, %v6141
        %v6376 = vadd.f32 %v6375, %v6149
        %v6377 = vadd.f32 %v6376, %v6157
        %v6378 = vadd.f32 %v6377, %v6165
        %v6379 = vadd.f32 %v6378, %v6173
        %v6380 = vadd.f32 %v6379, %v6181
        %v6381 = vadd.f32 %v6380, %v6189
        %v6382 = vadd.f32 %v6381, %v6197
        %v6383 = vadd.f32 %v6382, %v6205
        %v6384 = vadd.f32 %v6383, %v6213
        %v6385 = vadd.f32 %v6384, %v6221
        %v6386 = vadd.f32 %v6385, %v6229
        %v6387 = vadd.f32 %v6386, %v6237
        %v6388 = vadd.f32 %v6387, %v6245
        %v6389 = vadd.f32 %v6388, %v6253
        %v6390 = vadd.f32 %v6389, %v6261
        %v6391 = vadd.f32 %v6390, %v6269
        %v6392 = vadd.f32 %v6391, %v6277
        %v6393 = vadd.f32 %v6392, %v6285
        %v6394 = vadd.f32 %v6393, %v6293
        %v6395 = vadd.f32 %v6394, %v6301
        %v6396 = vadd.f32 %v6395, %v6309
        %v6397 = vadd.f32 %v6396, %v6317
        %v6398 = vadd.f32 %v6397, %v6325
        %v6399 = vadd.f32 %v6398, %v6333
        %v6400 = vadd.f32 %v6399, %v6341
        %v6401 = vadd.f32 %v6400, %v6349
        %v6402 = vadd.f32 %v6401, %v6357
        %v6403 = vadd.f32 %v6402, %v6365
        %v6404 = vrot.slane %v6403, 4
        %v6405 = vadd.f32 %v6403, %v6404
        %v6406 = vrot.slane %v6405, 2
        %v6407 = vadd.f32 %v6405, %v6406
        %v6408 = vrot.slane %v6407, 1
        %v6409 = vadd.f32 %v6407, %v6408
        %v6410 = vadd.f32 %v6118, %v6126
        %v6411 = vadd.f32 %v6410, %v6134
        %v6412 = vadd.f32 %v6411, %v6142
        %v6413 = vadd.f32 %v6412, %v6150
        %v6414 = vadd.f32 %v6413, %v6158
        %v6415 = vadd.f32 %v6414, %v6166
        %v6416 = vadd.f32 %v6415, %v6174
        %v6417 = vadd.f32 %v6416, %v6182
        %v6418 = vadd.f32 %v6417, %v6190
        %v6419 = vadd.f32 %v6418, %v6198
        %v6420 = vadd.f32 %v6419, %v6206
        %v6421 = vadd.f32 %v6420, %v6214
        %v6422 = vadd.f32 %v6421, %v6222
        %v6423 = vadd.f32 %v6422, %v6230
        %v6424 = vadd.f32 %v6423, %v6238
        %v6425 = vadd.f32 %v6424, %v6246
        %v6426 = vadd.f32 %v6425, %v6254
        %v6427 = vadd.f32 %v6426, %v6262
        %v6428 = vadd.f32 %v6427, %v6270
        %v6429 = vadd.f32 %v6428, %v6278
        %v6430 = vadd.f32 %v6429, %v6286
        %v6431 = vadd.f32 %v6430, %v6294
        %v6432 = vadd.f32 %v6431, %v6302
        %v6433 = vadd.f32 %v6432, %v6310
        %v6434 = vadd.f32 %v6433, %v6318
        %v6435 = vadd.f32 %v6434, %v6326
        %v6436 = vadd.f32 %v6435, %v6334
        %v6437 = vadd.f32 %v6436, %v6342
        %v6438 = vadd.f32 %v6437, %v6350
        %v6439 = vadd.f32 %v6438, %v6358
        %v6440 = vadd.f32 %v6439, %v6366
        %v6441 = vrot.slane %v6440, 4
        %v6442 = vadd.f32 %v6440, %v6441
        %v6443 = vrot.slane %v6442, 2
        %v6444 = vadd.f32 %v6442, %v6443
        %v6445 = vrot.slane %v6444, 1
        %v6446 = vadd.f32 %v6444, %v6445
        %v6447 = vadd.f32 %v6119, %v6127
        %v6448 = vadd.f32 %v6447, %v6135
        %v6449 = vadd.f32 %v6448, %v6143
        %v6450 = vadd.f32 %v6449, %v6151
        %v6451 = vadd.f32 %v6450, %v6159
        %v6452 = vadd.f32 %v6451, %v6167
        %v6453 = vadd.f32 %v6452, %v6175
        %v6454 = vadd.f32 %v6453, %v6183
        %v6455 = vadd.f32 %v6454, %v6191
        %v6456 = vadd.f32 %v6455, %v6199
        %v6457 = vadd.f32 %v6456, %v6207
        %v6458 = vadd.f32 %v6457, %v6215
        %v6459 = vadd.f32 %v6458, %v6223
        %v6460 = vadd.f32 %v6459, %v6231
        %v6461 = vadd.f32 %v6460, %v6239
        %v6462 = vadd.f32 %v6461, %v6247
        %v6463 = vadd.f32 %v6462, %v6255
        %v6464 = vadd.f32 %v6463, %v6263
        %v6465 = vadd.f32 %v6464, %v6271
        %v6466 = vadd.f32 %v6465, %v6279
        %v6467 = vadd.f32 %v6466, %v6287
        %v6468 = vadd.f32 %v6467, %v6295
        %v6469 = vadd.f32 %v6468, %v6303
        %v6470 = vadd.f32 %v6469, %v6311
        %v6471 = vadd.f32 %v6470, %v6319
        %v6472 = vadd.f32 %v6471, %v6327
        %v6473 = vadd.f32 %v6472, %v6335
        %v6474 = vadd.f32 %v6473, %v6343
        %v6475 = vadd.f32 %v6474, %v6351
        %v6476 = vadd.f32 %v6475, %v6359
        %v6477 = vadd.f32 %v6476, %v6367
        %v6478 = vrot.slane %v6477, 4
        %v6479 = vadd.f32 %v6477, %v6478
        %v6480 = vrot.slane %v6479, 2
        %v6481 = vadd.f32 %v6479, %v6480
        %v6482 = vrot.slane %v6481, 1
        %v6483 = vadd.f32 %v6481, %v6482
        %v6484 = vadd.f32 %v6120, %v6128
        %v6485 = vadd.f32 %v6484, %v6136
        %v6486 = vadd.f32 %v6485, %v6144
        %v6487 = vadd.f32 %v6486, %v6152
        %v6488 = vadd.f32 %v6487, %v6160
        %v6489 = vadd.f32 %v6488, %v6168
        %v6490 = vadd.f32 %v6489, %v6176
        %v6491 = vadd.f32 %v6490, %v6184
        %v6492 = vadd.f32 %v6491, %v6192
        %v6493 = vadd.f32 %v6492, %v6200
        %v6494 = vadd.f32 %v6493, %v6208
        %v6495 = vadd.f32 %v6494, %v6216
        %v6496 = vadd.f32 %v6495, %v6224
        %v6497 = vadd.f32 %v6496, %v6232
        %v6498 = vadd.f32 %v6497, %v6240
        %v6499 = vadd.f32 %v6498, %v6248
        %v6500 = vadd.f32 %v6499, %v6256
        %v6501 = vadd.f32 %v6500, %v6264
        %v6502 = vadd.f32 %v6501, %v6272
        %v6503 = vadd.f32 %v6502, %v6280
        %v6504 = vadd.f32 %v6503, %v6288
        %v6505 = vadd.f32 %v6504, %v6296
        %v6506 = vadd.f32 %v6505, %v6304
        %v6507 = vadd.f32 %v6506, %v6312
        %v6508 = vadd.f32 %v6507, %v6320
        %v6509 = vadd.f32 %v6508, %v6328
        %v6510 = vadd.f32 %v6509, %v6336
        %v6511 = vadd.f32 %v6510, %v6344
        %v6512 = vadd.f32 %v6511, %v6352
        %v6513 = vadd.f32 %v6512, %v6360
        %v6514 = vadd.f32 %v6513, %v6368
        %v6515 = vrot.slane %v6514, 4
        %v6516 = vadd.f32 %v6514, %v6515
        %v6517 = vrot.slane %v6516, 2
        %v6518 = vadd.f32 %v6516, %v6517
        %v6519 = vrot.slane %v6518, 1
        %v6520 = vadd.f32 %v6518, %v6519
        %v6521 = vadd.f32 %v6121, %v6129
        %v6522 = vadd.f32 %v6521, %v6137
        %v6523 = vadd.f32 %v6522, %v6145
        %v6524 = vadd.f32 %v6523, %v6153
        %v6525 = vadd.f32 %v6524, %v6161
        %v6526 = vadd.f32 %v6525, %v6169
        %v6527 = vadd.f32 %v6526, %v6177
        %v6528 = vadd.f32 %v6527, %v6185
        %v6529 = vadd.f32 %v6528, %v6193
        %v6530 = vadd.f32 %v6529, %v6201
        %v6531 = vadd.f32 %v6530, %v6209
        %v6532 = vadd.f32 %v6531, %v6217
        %v6533 = vadd.f32 %v6532, %v6225
        %v6534 = vadd.f32 %v6533, %v6233
        %v6535 = vadd.f32 %v6534, %v6241
        %v6536 = vadd.f32 %v6535, %v6249
        %v6537 = vadd.f32 %v6536, %v6257
        %v6538 = vadd.f32 %v6537, %v6265
        %v6539 = vadd.f32 %v6538, %v6273
        %v6540 = vadd.f32 %v6539, %v6281
        %v6541 = vadd.f32 %v6540, %v6289
        %v6542 = vadd.f32 %v6541, %v6297
        %v6543 = vadd.f32 %v6542, %v6305
        %v6544 = vadd.f32 %v6543, %v6313
        %v6545 = vadd.f32 %v6544, %v6321
        %v6546 = vadd.f32 %v6545, %v6329
        %v6547 = vadd.f32 %v6546, %v6337
        %v6548 = vadd.f32 %v6547, %v6345
        %v6549 = vadd.f32 %v6548, %v6353
        %v6550 = vadd.f32 %v6549, %v6361
        %v6551 = vadd.f32 %v6550, %v6369
        %v6552 = vrot.slane %v6551, 4
        %v6553 = vadd.f32 %v6551, %v6552
        %v6554 = vrot.slane %v6553, 2
        %v6555 = vadd.f32 %v6553, %v6554
        %v6556 = vrot.slane %v6555, 1
        %v6557 = vadd.f32 %v6555, %v6556
        %v6558 = vadd.f32 %v6122, %v6130
        %v6559 = vadd.f32 %v6558, %v6138
        %v6560 = vadd.f32 %v6559, %v6146
        %v6561 = vadd.f32 %v6560, %v6154
        %v6562 = vadd.f32 %v6561, %v6162
        %v6563 = vadd.f32 %v6562, %v6170
        %v6564 = vadd.f32 %v6563, %v6178
        %v6565 = vadd.f32 %v6564, %v6186
        %v6566 = vadd.f32 %v6565, %v6194
        %v6567 = vadd.f32 %v6566, %v6202
        %v6568 = vadd.f32 %v6567, %v6210
        %v6569 = vadd.f32 %v6568, %v6218
        %v6570 = vadd.f32 %v6569, %v6226
        %v6571 = vadd.f32 %v6570, %v6234
        %v6572 = vadd.f32 %v6571, %v6242
        %v6573 = vadd.f32 %v6572, %v6250
        %v6574 = vadd.f32 %v6573, %v6258
        %v6575 = vadd.f32 %v6574, %v6266
        %v6576 = vadd.f32 %v6575, %v6274
        %v6577 = vadd.f32 %v6576, %v6282
        %v6578 = vadd.f32 %v6577, %v6290
        %v6579 = vadd.f32 %v6578, %v6298
        %v6580 = vadd.f32 %v6579, %v6306
        %v6581 = vadd.f32 %v6580, %v6314
        %v6582 = vadd.f32 %v6581, %v6322
        %v6583 = vadd.f32 %v6582, %v6330
        %v6584 = vadd.f32 %v6583, %v6338
        %v6585 = vadd.f32 %v6584, %v6346
        %v6586 = vadd.f32 %v6585, %v6354
        %v6587 = vadd.f32 %v6586, %v6362
        %v6588 = vadd.f32 %v6587, %v6370
        %v6589 = vrot.slane %v6588, 4
        %v6590 = vadd.f32 %v6588, %v6589
        %v6591 = vrot.slane %v6590, 2
        %v6592 = vadd.f32 %v6590, %v6591
        %v6593 = vrot.slane %v6592, 1
        %v6594 = vadd.f32 %v6592, %v6593
        %v6595 = vadd.f32 %v6123, %v6131
        %v6596 = vadd.f32 %v6595, %v6139
        %v6597 = vadd.f32 %v6596, %v6147
        %v6598 = vadd.f32 %v6597, %v6155
        %v6599 = vadd.f32 %v6598, %v6163
        %v6600 = vadd.f32 %v6599, %v6171
        %v6601 = vadd.f32 %v6600, %v6179
        %v6602 = vadd.f32 %v6601, %v6187
        %v6603 = vadd.f32 %v6602, %v6195
        %v6604 = vadd.f32 %v6603, %v6203
        %v6605 = vadd.f32 %v6604, %v6211
        %v6606 = vadd.f32 %v6605, %v6219
        %v6607 = vadd.f32 %v6606, %v6227
        %v6608 = vadd.f32 %v6607, %v6235
        %v6609 = vadd.f32 %v6608, %v6243
        %v6610 = vadd.f32 %v6609, %v6251
        %v6611 = vadd.f32 %v6610, %v6259
        %v6612 = vadd.f32 %v6611, %v6267
        %v6613 = vadd.f32 %v6612, %v6275
        %v6614 = vadd.f32 %v6613, %v6283
        %v6615 = vadd.f32 %v6614, %v6291
        %v6616 = vadd.f32 %v6615, %v6299
        %v6617 = vadd.f32 %v6616, %v6307
        %v6618 = vadd.f32 %v6617, %v6315
        %v6619 = vadd.f32 %v6618, %v6323
        %v6620 = vadd.f32 %v6619, %v6331
        %v6621 = vadd.f32 %v6620, %v6339
        %v6622 = vadd.f32 %v6621, %v6347
        %v6623 = vadd.f32 %v6622, %v6355
        %v6624 = vadd.f32 %v6623, %v6363
        %v6625 = vadd.f32 %v6624, %v6371
        %v6626 = vrot.slane %v6625, 4
        %v6627 = vadd.f32 %v6625, %v6626
        %v6628 = vrot.slane %v6627, 2
        %v6629 = vadd.f32 %v6627, %v6628
        %v6630 = vrot.slane %v6629, 1
        %v6631 = vadd.f32 %v6629, %v6630
        %v6632 = vadd.f32 %v6124, %v6132
        %v6633 = vadd.f32 %v6632, %v6140
        %v6634 = vadd.f32 %v6633, %v6148
        %v6635 = vadd.f32 %v6634, %v6156
        %v6636 = vadd.f32 %v6635, %v6164
        %v6637 = vadd.f32 %v6636, %v6172
        %v6638 = vadd.f32 %v6637, %v6180
        %v6639 = vadd.f32 %v6638, %v6188
        %v6640 = vadd.f32 %v6639, %v6196
        %v6641 = vadd.f32 %v6640, %v6204
        %v6642 = vadd.f32 %v6641, %v6212
        %v6643 = vadd.f32 %v6642, %v6220
        %v6644 = vadd.f32 %v6643, %v6228
        %v6645 = vadd.f32 %v6644, %v6236
        %v6646 = vadd.f32 %v6645, %v6244
        %v6647 = vadd.f32 %v6646, %v6252
        %v6648 = vadd.f32 %v6647, %v6260
        %v6649 = vadd.f32 %v6648, %v6268
        %v6650 = vadd.f32 %v6649, %v6276
        %v6651 = vadd.f32 %v6650, %v6284
        %v6652 = vadd.f32 %v6651, %v6292
        %v6653 = vadd.f32 %v6652, %v6300
        %v6654 = vadd.f32 %v6653, %v6308
        %v6655 = vadd.f32 %v6654, %v6316
        %v6656 = vadd.f32 %v6655, %v6324
        %v6657 = vadd.f32 %v6656, %v6332
        %v6658 = vadd.f32 %v6657, %v6340
        %v6659 = vadd.f32 %v6658, %v6348
        %v6660 = vadd.f32 %v6659, %v6356
        %v6661 = vadd.f32 %v6660, %v6364
        %v6662 = vadd.f32 %v6661, %v6372
        %v6663 = vrot.slane %v6662, 4
        %v6664 = vadd.f32 %v6662, %v6663
        %v6665 = vrot.slane %v6664, 2
        %v6666 = vadd.f32 %v6664, %v6665
        %v6667 = vrot.slane %v6666, 1
        %v6668 = vadd.f32 %v6666, %v6667
        %v6669 = vmul.f32 %v6409, %v1532
        %v6670 = vmul.f32 %v6446, %v1532
        %v6671 = vmul.f32 %v6483, %v1532
        %v6672 = vmul.f32 %v6520, %v1532
        %v6673 = vmul.f32 %v6557, %v1532
        %v6674 = vmul.f32 %v6594, %v1532
        %v6675 = vmul.f32 %v6631, %v1532
        %v6676 = vmul.f32 %v6668, %v1532
        %v6677 = vmul.f32 %v6109, %v6109
        %v6678 = vmul.f32 %v6110, %v6110
        %v6679 = vmul.f32 %v6111, %v6111
        %v6680 = vmul.f32 %v6112, %v6112
        %v6681 = vmul.f32 %v6113, %v6113
        %v6682 = vmul.f32 %v6114, %v6114
        %v6683 = vmul.f32 %v6115, %v6115
        %v6684 = vmul.f32 %v6116, %v6116
        %v6685 = vsub.f32 %v6669, %v6677
        %v6686 = vsub.f32 %v6670, %v6678
        %v6687 = vsub.f32 %v6671, %v6679
        %v6688 = vsub.f32 %v6672, %v6680
        %v6689 = vsub.f32 %v6673, %v6681
        %v6690 = vsub.f32 %v6674, %v6682
        %v6691 = vsub.f32 %v6675, %v6683
        %v6692 = vsub.f32 %v6676, %v6684
        %v6693 = vmul.f32 %v5811, %v5810
        %v6694 = vmul.f32 %v5810, %v5810
        %v6696 = vlaneseq
        %v6697 = vshrl.u32 %v6696, 7
        %v6698 = vsub.s32 0, %v6697
        %v6699 = vrot.slane %v6694, %v6698
        %v6700 = vlaneseq
        %v6701 = vshrl.u32 %v6700, 7
        %v6702 = vsub.s32 1, %v6701
        %v6703 = vrot.slane %v6694, %v6702
        %v6704 = vlaneseq
        %v6705 = vshrl.u32 %v6704, 7
        %v6706 = vsub.s32 2, %v6705
        %v6707 = vrot.slane %v6694, %v6706
        %v6708 = vlaneseq
        %v6709 = vshrl.u32 %v6708, 7
        %v6710 = vsub.s32 3, %v6709
        %v6711 = vrot.slane %v6694, %v6710
        %v6712 = vlaneseq
        %v6713 = vshrl.u32 %v6712, 7
        %v6714 = vsub.s32 4, %v6713
        %v6715 = vrot.slane %v6694, %v6714
        %v6716 = vlaneseq
        %v6717 = vshrl.u32 %v6716, 7
        %v6718 = vsub.s32 5, %v6717
        %v6719 = vrot.slane %v6694, %v6718
        %v6720 = vlaneseq
        %v6721 = vshrl.u32 %v6720, 7
        %v6722 = vsub.s32 6, %v6721
        %v6723 = vrot.slane %v6694, %v6722
        %v6724 = vlaneseq
        %v6725 = vshrl.u32 %v6724, 7
        %v6726 = vsub.s32 7, %v6725
        %v6727 = vrot.slane %v6694, %v6726
        %v6736 = vmul.f32 %v6685, %v6699
        %v6737 = vmul.f32 %v6686, %v6703
        %v6738 = vmul.f32 %v6687, %v6707
        %v6739 = vmul.f32 %v6688, %v6711
        %v6740 = vmul.f32 %v6689, %v6715
        %v6741 = vmul.f32 %v6690, %v6719
        %v6742 = vmul.f32 %v6691, %v6723
        %v6743 = vmul.f32 %v6692, %v6727
        %v6744 = vadd.f32 %v6736, 0.8
        %v6745 = vadd.f32 %v6737, 0.8
        %v6746 = vadd.f32 %v6738, 0.8
        %v6747 = vadd.f32 %v6739, 0.8
        %v6748 = vadd.f32 %v6740, 0.8
        %v6749 = vadd.f32 %v6741, 0.8
        %v6750 = vadd.f32 %v6742, 0.8
        %v6751 = vadd.f32 %v6743, 0.8
        %v6752 = vrsqrt.pop %v6744
        %v6753 = vrsqrt.pop %v6745
        %v6754 = vrsqrt.pop %v6746
        %v6755 = vrsqrt.pop %v6747
        %v6756 = vrsqrt.pop %v6748
        %v6757 = vrsqrt.pop %v6749
        %v6758 = vrsqrt.pop %v6750
        %v6759 = vrsqrt.pop %v6751
        %v6768 = vcombine.low %v6752, %v6753
        %v6769 = vcombine.low %v6754, %v6755
        %v6770 = vcombine.low %v6756, %v6757
        %v6771 = vcombine.low %v6758, %v6759
        %v6773 = vunpack.c.l.s4 1966171168
        %v6774 = vunpack.c.0.s8 %v6773
        %v6775 = vlaneseq
        %v6776 = vshrl.u32 %v6775, 7
        %v6777 = vsub.s32 %v6774, %v6776
        %v6778 = vrot.slane %v6768, %v6777
        %v6780 = vunpack.c.l.s4 1966171168
        %v6781 = vunpack.c.0.s8 %v6780
        %v6782 = vlaneseq
        %v6783 = vshrl.u32 %v6782, 7
        %v6784 = vsub.s32 %v6781, %v6783
        %v6785 = vrot.slane %v6769, %v6784
        %v6787 = vunpack.c.l.s4 1966171168
        %v6788 = vunpack.c.0.s8 %v6787
        %v6789 = vlaneseq
        %v6790 = vshrl.u32 %v6789, 7
        %v6791 = vsub.s32 %v6788, %v6790
        %v6792 = vrot.slane %v6770, %v6791
        %v6794 = vunpack.c.l.s4 1966171168
        %v6795 = vunpack.c.0.s8 %v6794
        %v6796 = vlaneseq
        %v6797 = vshrl.u32 %v6796, 7
        %v6798 = vsub.s32 %v6795, %v6797
        %v6799 = vrot.slane %v6771, %v6798
        %v6800 = vcombine.low %v6778, %v6785
        %v6801 = vcombine.low %v6792, %v6799
        %v6803 = vunpack.c.l.s4 1966171168
        %v6804 = vunpack.c.0.s8 %v6803
        %v6805 = vlaneseq
        %v6806 = vshrl.u32 %v6805, 7
        %v6807 = vsub.s32 %v6804, %v6806
        %v6808 = vrot.slane %v6800, %v6807
        %v6810 = vunpack.c.l.s4 1966171168
        %v6811 = vunpack.c.0.s8 %v6810
        %v6812 = vlaneseq
        %v6813 = vshrl.u32 %v6812, 7
        %v6814 = vsub.s32 %v6811, %v6813
        %v6815 = vrot.slane %v6801, %v6814
        %v6816 = vcombine.low %v6808, %v6815
        %v6818 = vmul.f32 %v6693, %v6816
        %v6820 = vlaneseq
        %v6821 = vshrl.u32 %v6820, 7
        %v6822 = vsub.s32 0, %v6821
        %v6823 = vrot.slane %v6818, %v6822
        %v6824 = vlaneseq
        %v6825 = vshrl.u32 %v6824, 7
        %v6826 = vsub.s32 1, %v6825
        %v6827 = vrot.slane %v6818, %v6826
        %v6828 = vlaneseq
        %v6829 = vshrl.u32 %v6828, 7
        %v6830 = vsub.s32 2, %v6829
        %v6831 = vrot.slane %v6818, %v6830
        %v6832 = vlaneseq
        %v6833 = vshrl.u32 %v6832, 7
        %v6834 = vsub.s32 3, %v6833
        %v6835 = vrot.slane %v6818, %v6834
        %v6836 = vlaneseq
        %v6837 = vshrl.u32 %v6836, 7
        %v6838 = vsub.s32 4, %v6837
        %v6839 = vrot.slane %v6818, %v6838
        %v6840 = vlaneseq
        %v6841 = vshrl.u32 %v6840, 7
        %v6842 = vsub.s32 5, %v6841
        %v6843 = vrot.slane %v6818, %v6842
        %v6844 = vlaneseq
        %v6845 = vshrl.u32 %v6844, 7
        %v6846 = vsub.s32 6, %v6845
        %v6847 = vrot.slane %v6818, %v6846
        %v6848 = vlaneseq
        %v6849 = vshrl.u32 %v6848, 7
        %v6850 = vsub.s32 7, %v6849
        %v6851 = vrot.slane %v6818, %v6850
        %v6860 = vmul.f32 %v6109, %v6823
        %v6861 = vmul.f32 %v6110, %v6827
        %v6862 = vmul.f32 %v6111, %v6831
        %v6863 = vmul.f32 %v6112, %v6835
        %v6864 = vmul.f32 %v6113, %v6839
        %v6865 = vmul.f32 %v6114, %v6843
        %v6866 = vmul.f32 %v6115, %v6847
        %v6867 = vmul.f32 %v6116, %v6851
        %v6876 = vcombine.low %v6860, %v6861
        %v6877 = vcombine.low %v6862, %v6863
        %v6878 = vcombine.low %v6864, %v6865
        %v6879 = vcombine.low %v6866, %v6867
        %v6881 = vunpack.c.l.s4 1966171168
        %v6882 = vunpack.c.0.s8 %v6881
        %v6883 = vlaneseq
        %v6884 = vshrl.u32 %v6883, 7
        %v6885 = vsub.s32 %v6882, %v6884
        %v6886 = vrot.slane %v6876, %v6885
        %v6888 = vunpack.c.l.s4 1966171168
        %v6889 = vunpack.c.0.s8 %v6888
        %v6890 = vlaneseq
        %v6891 = vshrl.u32 %v6890, 7
        %v6892 = vsub.s32 %v6889, %v6891
        %v6893 = vrot.slane %v6877, %v6892
        %v6895 = vunpack.c.l.s4 1966171168
        %v6896 = vunpack.c.0.s8 %v6895
        %v6897 = vlaneseq
        %v6898 = vshrl.u32 %v6897, 7
        %v6899 = vsub.s32 %v6896, %v6898
        %v6900 = vrot.slane %v6878, %v6899
        %v6902 = vunpack.c.l.s4 1966171168
        %v6903 = vunpack.c.0.s8 %v6902
        %v6904 = vlaneseq
        %v6905 = vshrl.u32 %v6904, 7
        %v6906 = vsub.s32 %v6903, %v6905
        %v6907 = vrot.slane %v6879, %v6906
        %v6908 = vcombine.low %v6886, %v6893
        %v6909 = vcombine.low %v6900, %v6907
        %v6911 = vunpack.c.l.s4 1966171168
        %v6912 = vunpack.c.0.s8 %v6911
        %v6913 = vlaneseq
        %v6914 = vshrl.u32 %v6913, 7
        %v6915 = vsub.s32 %v6912, %v6914
        %v6916 = vrot.slane %v6908, %v6915
        %v6918 = vunpack.c.l.s4 1966171168
        %v6919 = vunpack.c.0.s8 %v6918
        %v6920 = vlaneseq
        %v6921 = vshrl.u32 %v6920, 7
        %v6922 = vsub.s32 %v6919, %v6921
        %v6923 = vrot.slane %v6909, %v6922
        %v6924 = vcombine.low %v6916, %v6923
        %v6926 = vsub.f32 %v5812, %v6924
        %v6927 = vmul.f32 %v4494, %v6823
        %v6928 = vmul.f32 %v4496, %v6827
        %v6929 = vmul.f32 %v4880, %v6831
        %v6930 = vmul.f32 %v4882, %v6835
        %v6931 = vmul.f32 %v5266, %v6839
        %v6932 = vmul.f32 %v5268, %v6843
        %v6933 = vmul.f32 %v5652, %v6847
        %v6934 = vmul.f32 %v5654, %v6851
        %v6935 = vmul.f32 %v4498, %v6823
        %v6936 = vmul.f32 %v4500, %v6827
        %v6937 = vmul.f32 %v4884, %v6831
        %v6938 = vmul.f32 %v4886, %v6835
        %v6939 = vmul.f32 %v5270, %v6839
        %v6940 = vmul.f32 %v5272, %v6843
        %v6941 = vmul.f32 %v5656, %v6847
        %v6942 = vmul.f32 %v5658, %v6851
        %v6943 = vmul.f32 %v4504, %v6823
        %v6944 = vmul.f32 %v4506, %v6827
        %v6945 = vmul.f32 %v4890, %v6831
        %v6946 = vmul.f32 %v4892, %v6835
        %v6947 = vmul.f32 %v5276, %v6839
        %v6948 = vmul.f32 %v5278, %v6843
        %v6949 = vmul.f32 %v5662, %v6847
        %v6950 = vmul.f32 %v5664, %v6851
        %v6951 = vmul.f32 %v4508, %v6823
        %v6952 = vmul.f32 %v4510, %v6827
        %v6953 = vmul.f32 %v4894, %v6831
        %v6954 = vmul.f32 %v4896, %v6835
        %v6955 = vmul.f32 %v5280, %v6839
        %v6956 = vmul.f32 %v5282, %v6843
        %v6957 = vmul.f32 %v5666, %v6847
        %v6958 = vmul.f32 %v5668, %v6851
        %v6959 = vmul.f32 %v4514, %v6823
        %v6960 = vmul.f32 %v4516, %v6827
        %v6961 = vmul.f32 %v4900, %v6831
        %v6962 = vmul.f32 %v4902, %v6835
        %v6963 = vmul.f32 %v5286, %v6839
        %v6964 = vmul.f32 %v5288, %v6843
        %v6965 = vmul.f32 %v5672, %v6847
        %v6966 = vmul.f32 %v5674, %v6851
        %v6967 = vmul.f32 %v4518, %v6823
        %v6968 = vmul.f32 %v4520, %v6827
        %v6969 = vmul.f32 %v4904, %v6831
        %v6970 = vmul.f32 %v4906, %v6835
        %v6971 = vmul.f32 %v5290, %v6839
        %v6972 = vmul.f32 %v5292, %v6843
        %v6973 = vmul.f32 %v5676, %v6847
        %v6974 = vmul.f32 %v5678, %v6851
        %v6975 = vmul.f32 %v4524, %v6823
        %v6976 = vmul.f32 %v4526, %v6827
        %v6977 = vmul.f32 %v4910, %v6831
        %v6978 = vmul.f32 %v4912, %v6835
        %v6979 = vmul.f32 %v5296, %v6839
        %v6980 = vmul.f32 %v5298, %v6843
        %v6981 = vmul.f32 %v5682, %v6847
        %v6982 = vmul.f32 %v5684, %v6851
        %v6983 = vmul.f32 %v4528, %v6823
        %v6984 = vmul.f32 %v4530, %v6827
        %v6985 = vmul.f32 %v4914, %v6831
        %v6986 = vmul.f32 %v4916, %v6835
        %v6987 = vmul.f32 %v5300, %v6839
        %v6988 = vmul.f32 %v5302, %v6843
        %v6989 = vmul.f32 %v5686, %v6847
        %v6990 = vmul.f32 %v5688, %v6851
        %v6991 = vmul.f32 %v4534, %v6823
        %v6992 = vmul.f32 %v4536, %v6827
        %v6993 = vmul.f32 %v4920, %v6831
        %v6994 = vmul.f32 %v4922, %v6835
        %v6995 = vmul.f32 %v5306, %v6839
        %v6996 = vmul.f32 %v5308, %v6843
        %v6997 = vmul.f32 %v5692, %v6847
        %v6998 = vmul.f32 %v5694, %v6851
        %v6999 = vmul.f32 %v4538, %v6823
        %v7000 = vmul.f32 %v4540, %v6827
        %v7001 = vmul.f32 %v4924, %v6831
        %v7002 = vmul.f32 %v4926, %v6835
        %v7003 = vmul.f32 %v5310, %v6839
        %v7004 = vmul.f32 %v5312, %v6843
        %v7005 = vmul.f32 %v5696, %v6847
        %v7006 = vmul.f32 %v5698, %v6851
        %v7007 = vmul.f32 %v4544, %v6823
        %v7008 = vmul.f32 %v4546, %v6827
        %v7009 = vmul.f32 %v4930, %v6831
        %v7010 = vmul.f32 %v4932, %v6835
        %v7011 = vmul.f32 %v5316, %v6839
        %v7012 = vmul.f32 %v5318, %v6843
        %v7013 = vmul.f32 %v5702, %v6847
        %v7014 = vmul.f32 %v5704, %v6851
        %v7015 = vmul.f32 %v4548, %v6823
        %v7016 = vmul.f32 %v4550, %v6827
        %v7017 = vmul.f32 %v4934, %v6831
        %v7018 = vmul.f32 %v4936, %v6835
        %v7019 = vmul.f32 %v5320, %v6839
        %v7020 = vmul.f32 %v5322, %v6843
        %v7021 = vmul.f32 %v5706, %v6847
        %v7022 = vmul.f32 %v5708, %v6851
        %v7023 = vmul.f32 %v4554, %v6823
        %v7024 = vmul.f32 %v4556, %v6827
        %v7025 = vmul.f32 %v4940, %v6831
        %v7026 = vmul.f32 %v4942, %v6835
        %v7027 = vmul.f32 %v5326, %v6839
        %v7028 = vmul.f32 %v5328, %v6843
        %v7029 = vmul.f32 %v5712, %v6847
        %v7030 = vmul.f32 %v5714, %v6851
        %v7031 = vmul.f32 %v4558, %v6823
        %v7032 = vmul.f32 %v4560, %v6827
        %v7033 = vmul.f32 %v4944, %v6831
        %v7034 = vmul.f32 %v4946, %v6835
        %v7035 = vmul.f32 %v5330, %v6839
        %v7036 = vmul.f32 %v5332, %v6843
        %v7037 = vmul.f32 %v5716, %v6847
        %v7038 = vmul.f32 %v5718, %v6851
        %v7039 = vmul.f32 %v4564, %v6823
        %v7040 = vmul.f32 %v4566, %v6827
        %v7041 = vmul.f32 %v4950, %v6831
        %v7042 = vmul.f32 %v4952, %v6835
        %v7043 = vmul.f32 %v5336, %v6839
        %v7044 = vmul.f32 %v5338, %v6843
        %v7045 = vmul.f32 %v5722, %v6847
        %v7046 = vmul.f32 %v5724, %v6851
        %v7047 = vmul.f32 %v4568, %v6823
        %v7048 = vmul.f32 %v4570, %v6827
        %v7049 = vmul.f32 %v4954, %v6831
        %v7050 = vmul.f32 %v4956, %v6835
        %v7051 = vmul.f32 %v5340, %v6839
        %v7052 = vmul.f32 %v5342, %v6843
        %v7053 = vmul.f32 %v5726, %v6847
        %v7054 = vmul.f32 %v5728, %v6851
        %v7055 = vmul.f32 %v4574, %v6823
        %v7056 = vmul.f32 %v4576, %v6827
        %v7057 = vmul.f32 %v4960, %v6831
        %v7058 = vmul.f32 %v4962, %v6835
        %v7059 = vmul.f32 %v5346, %v6839
        %v7060 = vmul.f32 %v5348, %v6843
        %v7061 = vmul.f32 %v5732, %v6847
        %v7062 = vmul.f32 %v5734, %v6851
        %v7063 = vmul.f32 %v4578, %v6823
        %v7064 = vmul.f32 %v4580, %v6827
        %v7065 = vmul.f32 %v4964, %v6831
        %v7066 = vmul.f32 %v4966, %v6835
        %v7067 = vmul.f32 %v5350, %v6839
        %v7068 = vmul.f32 %v5352, %v6843
        %v7069 = vmul.f32 %v5736, %v6847
        %v7070 = vmul.f32 %v5738, %v6851
        %v7071 = vmul.f32 %v4584, %v6823
        %v7072 = vmul.f32 %v4586, %v6827
        %v7073 = vmul.f32 %v4970, %v6831
        %v7074 = vmul.f32 %v4972, %v6835
        %v7075 = vmul.f32 %v5356, %v6839
        %v7076 = vmul.f32 %v5358, %v6843
        %v7077 = vmul.f32 %v5742, %v6847
        %v7078 = vmul.f32 %v5744, %v6851
        %v7079 = vmul.f32 %v4588, %v6823
        %v7080 = vmul.f32 %v4590, %v6827
        %v7081 = vmul.f32 %v4974, %v6831
        %v7082 = vmul.f32 %v4976, %v6835
        %v7083 = vmul.f32 %v5360, %v6839
        %v7084 = vmul.f32 %v5362, %v6843
        %v7085 = vmul.f32 %v5746, %v6847
        %v7086 = vmul.f32 %v5748, %v6851
        %v7087 = vmul.f32 %v4594, %v6823
        %v7088 = vmul.f32 %v4596, %v6827
        %v7089 = vmul.f32 %v4980, %v6831
        %v7090 = vmul.f32 %v4982, %v6835
        %v7091 = vmul.f32 %v5366, %v6839
        %v7092 = vmul.f32 %v5368, %v6843
        %v7093 = vmul.f32 %v5752, %v6847
        %v7094 = vmul.f32 %v5754, %v6851
        %v7095 = vmul.f32 %v4598, %v6823
        %v7096 = vmul.f32 %v4600, %v6827
        %v7097 = vmul.f32 %v4984, %v6831
        %v7098 = vmul.f32 %v4986, %v6835
        %v7099 = vmul.f32 %v5370, %v6839
        %v7100 = vmul.f32 %v5372, %v6843
        %v7101 = vmul.f32 %v5756, %v6847
        %v7102 = vmul.f32 %v5758, %v6851
        %v7103 = vmul.f32 %v4604, %v6823
        %v7104 = vmul.f32 %v4606, %v6827
        %v7105 = vmul.f32 %v4990, %v6831
        %v7106 = vmul.f32 %v4992, %v6835
        %v7107 = vmul.f32 %v5376, %v6839
        %v7108 = vmul.f32 %v5378, %v6843
        %v7109 = vmul.f32 %v5762, %v6847
        %v7110 = vmul.f32 %v5764, %v6851
        %v7111 = vmul.f32 %v4608, %v6823
        %v7112 = vmul.f32 %v4610, %v6827
        %v7113 = vmul.f32 %v4994, %v6831
        %v7114 = vmul.f32 %v4996, %v6835
        %v7115 = vmul.f32 %v5380, %v6839
        %v7116 = vmul.f32 %v5382, %v6843
        %v7117 = vmul.f32 %v5766, %v6847
        %v7118 = vmul.f32 %v5768, %v6851
        %v7119 = vmul.f32 %v4614, %v6823
        %v7120 = vmul.f32 %v4616, %v6827
        %v7121 = vmul.f32 %v5000, %v6831
        %v7122 = vmul.f32 %v5002, %v6835
        %v7123 = vmul.f32 %v5386, %v6839
        %v7124 = vmul.f32 %v5388, %v6843
        %v7125 = vmul.f32 %v5772, %v6847
        %v7126 = vmul.f32 %v5774, %v6851
        %v7127 = vmul.f32 %v4618, %v6823
        %v7128 = vmul.f32 %v4620, %v6827
        %v7129 = vmul.f32 %v5004, %v6831
        %v7130 = vmul.f32 %v5006, %v6835
        %v7131 = vmul.f32 %v5390, %v6839
        %v7132 = vmul.f32 %v5392, %v6843
        %v7133 = vmul.f32 %v5776, %v6847
        %v7134 = vmul.f32 %v5778, %v6851
        %v7135 = vmul.f32 %v4624, %v6823
        %v7136 = vmul.f32 %v4626, %v6827
        %v7137 = vmul.f32 %v5010, %v6831
        %v7138 = vmul.f32 %v5012, %v6835
        %v7139 = vmul.f32 %v5396, %v6839
        %v7140 = vmul.f32 %v5398, %v6843
        %v7141 = vmul.f32 %v5782, %v6847
        %v7142 = vmul.f32 %v5784, %v6851
        %v7143 = vmul.f32 %v4628, %v6823
        %v7144 = vmul.f32 %v4630, %v6827
        %v7145 = vmul.f32 %v5014, %v6831
        %v7146 = vmul.f32 %v5016, %v6835
        %v7147 = vmul.f32 %v5400, %v6839
        %v7148 = vmul.f32 %v5402, %v6843
        %v7149 = vmul.f32 %v5786, %v6847
        %v7150 = vmul.f32 %v5788, %v6851
        %v7151 = vmul.f32 %v4634, %v6823
        %v7152 = vmul.f32 %v4636, %v6827
        %v7153 = vmul.f32 %v5020, %v6831
        %v7154 = vmul.f32 %v5022, %v6835
        %v7155 = vmul.f32 %v5406, %v6839
        %v7156 = vmul.f32 %v5408, %v6843
        %v7157 = vmul.f32 %v5792, %v6847
        %v7158 = vmul.f32 %v5794, %v6851
        %v7159 = vmul.f32 %v4638, %v6823
        %v7160 = vmul.f32 %v4640, %v6827
        %v7161 = vmul.f32 %v5024, %v6831
        %v7162 = vmul.f32 %v5026, %v6835
        %v7163 = vmul.f32 %v5410, %v6839
        %v7164 = vmul.f32 %v5412, %v6843
        %v7165 = vmul.f32 %v5796, %v6847
        %v7166 = vmul.f32 %v5798, %v6851
        %v7167 = vmul.f32 %v4644, %v6823
        %v7168 = vmul.f32 %v4646, %v6827
        %v7169 = vmul.f32 %v5030, %v6831
        %v7170 = vmul.f32 %v5032, %v6835
        %v7171 = vmul.f32 %v5416, %v6839
        %v7172 = vmul.f32 %v5418, %v6843
        %v7173 = vmul.f32 %v5802, %v6847
        %v7174 = vmul.f32 %v5804, %v6851
        %v7175 = vmul.f32 %v4648, %v6823
        %v7176 = vmul.f32 %v4650, %v6827
        %v7177 = vmul.f32 %v5034, %v6831
        %v7178 = vmul.f32 %v5036, %v6835
        %v7179 = vmul.f32 %v5420, %v6839
        %v7180 = vmul.f32 %v5422, %v6843
        %v7181 = vmul.f32 %v5806, %v6847
        %v7182 = vmul.f32 %v5808, %v6851
        %v7184 = vlaneseq
        %v7185 = vshrl.u32 %v7184, 7
        %v7186 = vsub.s32 0, %v7185
        %v7187 = vrot.slane %v6926, %v7186
        %v7188 = vlaneseq
        %v7189 = vshrl.u32 %v7188, 7
        %v7190 = vsub.s32 1, %v7189
        %v7191 = vrot.slane %v6926, %v7190
        %v7192 = vlaneseq
        %v7193 = vshrl.u32 %v7192, 7
        %v7194 = vsub.s32 2, %v7193
        %v7195 = vrot.slane %v6926, %v7194
        %v7196 = vlaneseq
        %v7197 = vshrl.u32 %v7196, 7
        %v7198 = vsub.s32 3, %v7197
        %v7199 = vrot.slane %v6926, %v7198
        %v7200 = vlaneseq
        %v7201 = vshrl.u32 %v7200, 7
        %v7202 = vsub.s32 4, %v7201
        %v7203 = vrot.slane %v6926, %v7202
        %v7204 = vlaneseq
        %v7205 = vshrl.u32 %v7204, 7
        %v7206 = vsub.s32 5, %v7205
        %v7207 = vrot.slane %v6926, %v7206
        %v7208 = vlaneseq
        %v7209 = vshrl.u32 %v7208, 7
        %v7210 = vsub.s32 6, %v7209
        %v7211 = vrot.slane %v6926, %v7210
        %v7212 = vlaneseq
        %v7213 = vshrl.u32 %v7212, 7
        %v7214 = vsub.s32 7, %v7213
        %v7215 = vrot.slane %v6926, %v7214
        %v7224 = vadd.f32 %v6927, %v7187
        %v7225 = vadd.f32 %v6928, %v7191
        %v7226 = vadd.f32 %v6929, %v7195
        %v7227 = vadd.f32 %v6930, %v7199
        %v7228 = vadd.f32 %v6931, %v7203
        %v7229 = vadd.f32 %v6932, %v7207
        %v7230 = vadd.f32 %v6933, %v7211
        %v7231 = vadd.f32 %v6934, %v7215
        %v7232 = vadd.f32 %v6935, %v7187
        %v7233 = vadd.f32 %v6936, %v7191
        %v7234 = vadd.f32 %v6937, %v7195
        %v7235 = vadd.f32 %v6938, %v7199
        %v7236 = vadd.f32 %v6939, %v7203
        %v7237 = vadd.f32 %v6940, %v7207
        %v7238 = vadd.f32 %v6941, %v7211
        %v7239 = vadd.f32 %v6942, %v7215
        %v7240 = vadd.f32 %v6943, %v7187
        %v7241 = vadd.f32 %v6944, %v7191
        %v7242 = vadd.f32 %v6945, %v7195
        %v7243 = vadd.f32 %v6946, %v7199
        %v7244 = vadd.f32 %v6947, %v7203
        %v7245 = vadd.f32 %v6948, %v7207
        %v7246 = vadd.f32 %v6949, %v7211
        %v7247 = vadd.f32 %v6950, %v7215
        %v7248 = vadd.f32 %v6951, %v7187
        %v7249 = vadd.f32 %v6952, %v7191
        %v7250 = vadd.f32 %v6953, %v7195
        %v7251 = vadd.f32 %v6954, %v7199
        %v7252 = vadd.f32 %v6955, %v7203
        %v7253 = vadd.f32 %v6956, %v7207
        %v7254 = vadd.f32 %v6957, %v7211
        %v7255 = vadd.f32 %v6958, %v7215
        %v7256 = vadd.f32 %v6959, %v7187
        %v7257 = vadd.f32 %v6960, %v7191
        %v7258 = vadd.f32 %v6961, %v7195
        %v7259 = vadd.f32 %v6962, %v7199
        %v7260 = vadd.f32 %v6963, %v7203
        %v7261 = vadd.f32 %v6964, %v7207
        %v7262 = vadd.f32 %v6965, %v7211
        %v7263 = vadd.f32 %v6966, %v7215
        %v7264 = vadd.f32 %v6967, %v7187
        %v7265 = vadd.f32 %v6968, %v7191
        %v7266 = vadd.f32 %v6969, %v7195
        %v7267 = vadd.f32 %v6970, %v7199
        %v7268 = vadd.f32 %v6971, %v7203
        %v7269 = vadd.f32 %v6972, %v7207
        %v7270 = vadd.f32 %v6973, %v7211
        %v7271 = vadd.f32 %v6974, %v7215
        %v7272 = vadd.f32 %v6975, %v7187
        %v7273 = vadd.f32 %v6976, %v7191
        %v7274 = vadd.f32 %v6977, %v7195
        %v7275 = vadd.f32 %v6978, %v7199
        %v7276 = vadd.f32 %v6979, %v7203
        %v7277 = vadd.f32 %v6980, %v7207
        %v7278 = vadd.f32 %v6981, %v7211
        %v7279 = vadd.f32 %v6982, %v7215
        %v7280 = vadd.f32 %v6983, %v7187
        %v7281 = vadd.f32 %v6984, %v7191
        %v7282 = vadd.f32 %v6985, %v7195
        %v7283 = vadd.f32 %v6986, %v7199
        %v7284 = vadd.f32 %v6987, %v7203
        %v7285 = vadd.f32 %v6988, %v7207
        %v7286 = vadd.f32 %v6989, %v7211
        %v7287 = vadd.f32 %v6990, %v7215
        %v7288 = vadd.f32 %v6991, %v7187
        %v7289 = vadd.f32 %v6992, %v7191
        %v7290 = vadd.f32 %v6993, %v7195
        %v7291 = vadd.f32 %v6994, %v7199
        %v7292 = vadd.f32 %v6995, %v7203
        %v7293 = vadd.f32 %v6996, %v7207
        %v7294 = vadd.f32 %v6997, %v7211
        %v7295 = vadd.f32 %v6998, %v7215
        %v7296 = vadd.f32 %v6999, %v7187
        %v7297 = vadd.f32 %v7000, %v7191
        %v7298 = vadd.f32 %v7001, %v7195
        %v7299 = vadd.f32 %v7002, %v7199
        %v7300 = vadd.f32 %v7003, %v7203
        %v7301 = vadd.f32 %v7004, %v7207
        %v7302 = vadd.f32 %v7005, %v7211
        %v7303 = vadd.f32 %v7006, %v7215
        %v7304 = vadd.f32 %v7007, %v7187
        %v7305 = vadd.f32 %v7008, %v7191
        %v7306 = vadd.f32 %v7009, %v7195
        %v7307 = vadd.f32 %v7010, %v7199
        %v7308 = vadd.f32 %v7011, %v7203
        %v7309 = vadd.f32 %v7012, %v7207
        %v7310 = vadd.f32 %v7013, %v7211
        %v7311 = vadd.f32 %v7014, %v7215
        %v7312 = vadd.f32 %v7015, %v7187
        %v7313 = vadd.f32 %v7016, %v7191
        %v7314 = vadd.f32 %v7017, %v7195
        %v7315 = vadd.f32 %v7018, %v7199
        %v7316 = vadd.f32 %v7019, %v7203
        %v7317 = vadd.f32 %v7020, %v7207
        %v7318 = vadd.f32 %v7021, %v7211
        %v7319 = vadd.f32 %v7022, %v7215
        %v7320 = vadd.f32 %v7023, %v7187
        %v7321 = vadd.f32 %v7024, %v7191
        %v7322 = vadd.f32 %v7025, %v7195
        %v7323 = vadd.f32 %v7026, %v7199
        %v7324 = vadd.f32 %v7027, %v7203
        %v7325 = vadd.f32 %v7028, %v7207
        %v7326 = vadd.f32 %v7029, %v7211
        %v7327 = vadd.f32 %v7030, %v7215
        %v7328 = vadd.f32 %v7031, %v7187
        %v7329 = vadd.f32 %v7032, %v7191
        %v7330 = vadd.f32 %v7033, %v7195
        %v7331 = vadd.f32 %v7034, %v7199
        %v7332 = vadd.f32 %v7035, %v7203
        %v7333 = vadd.f32 %v7036, %v7207
        %v7334 = vadd.f32 %v7037, %v7211
        %v7335 = vadd.f32 %v7038, %v7215
        %v7336 = vadd.f32 %v7039, %v7187
        %v7337 = vadd.f32 %v7040, %v7191
        %v7338 = vadd.f32 %v7041, %v7195
        %v7339 = vadd.f32 %v7042, %v7199
        %v7340 = vadd.f32 %v7043, %v7203
        %v7341 = vadd.f32 %v7044, %v7207
        %v7342 = vadd.f32 %v7045, %v7211
        %v7343 = vadd.f32 %v7046, %v7215
        %v7344 = vadd.f32 %v7047, %v7187
        %v7345 = vadd.f32 %v7048, %v7191
        %v7346 = vadd.f32 %v7049, %v7195
        %v7347 = vadd.f32 %v7050, %v7199
        %v7348 = vadd.f32 %v7051, %v7203
        %v7349 = vadd.f32 %v7052, %v7207
        %v7350 = vadd.f32 %v7053, %v7211
        %v7351 = vadd.f32 %v7054, %v7215
        %v7352 = vadd.f32 %v7055, %v7187
        %v7353 = vadd.f32 %v7056, %v7191
        %v7354 = vadd.f32 %v7057, %v7195
        %v7355 = vadd.f32 %v7058, %v7199
        %v7356 = vadd.f32 %v7059, %v7203
        %v7357 = vadd.f32 %v7060, %v7207
        %v7358 = vadd.f32 %v7061, %v7211
        %v7359 = vadd.f32 %v7062, %v7215
        %v7360 = vadd.f32 %v7063, %v7187
        %v7361 = vadd.f32 %v7064, %v7191
        %v7362 = vadd.f32 %v7065, %v7195
        %v7363 = vadd.f32 %v7066, %v7199
        %v7364 = vadd.f32 %v7067, %v7203
        %v7365 = vadd.f32 %v7068, %v7207
        %v7366 = vadd.f32 %v7069, %v7211
        %v7367 = vadd.f32 %v7070, %v7215
        %v7368 = vadd.f32 %v7071, %v7187
        %v7369 = vadd.f32 %v7072, %v7191
        %v7370 = vadd.f32 %v7073, %v7195
        %v7371 = vadd.f32 %v7074, %v7199
        %v7372 = vadd.f32 %v7075, %v7203
        %v7373 = vadd.f32 %v7076, %v7207
        %v7374 = vadd.f32 %v7077, %v7211
        %v7375 = vadd.f32 %v7078, %v7215
        %v7376 = vadd.f32 %v7079, %v7187
        %v7377 = vadd.f32 %v7080, %v7191
        %v7378 = vadd.f32 %v7081, %v7195
        %v7379 = vadd.f32 %v7082, %v7199
        %v7380 = vadd.f32 %v7083, %v7203
        %v7381 = vadd.f32 %v7084, %v7207
        %v7382 = vadd.f32 %v7085, %v7211
        %v7383 = vadd.f32 %v7086, %v7215
        %v7384 = vadd.f32 %v7087, %v7187
        %v7385 = vadd.f32 %v7088, %v7191
        %v7386 = vadd.f32 %v7089, %v7195
        %v7387 = vadd.f32 %v7090, %v7199
        %v7388 = vadd.f32 %v7091, %v7203
        %v7389 = vadd.f32 %v7092, %v7207
        %v7390 = vadd.f32 %v7093, %v7211
        %v7391 = vadd.f32 %v7094, %v7215
        %v7392 = vadd.f32 %v7095, %v7187
        %v7393 = vadd.f32 %v7096, %v7191
        %v7394 = vadd.f32 %v7097, %v7195
        %v7395 = vadd.f32 %v7098, %v7199
        %v7396 = vadd.f32 %v7099, %v7203
        %v7397 = vadd.f32 %v7100, %v7207
        %v7398 = vadd.f32 %v7101, %v7211
        %v7399 = vadd.f32 %v7102, %v7215
        %v7400 = vadd.f32 %v7103, %v7187
        %v7401 = vadd.f32 %v7104, %v7191
        %v7402 = vadd.f32 %v7105, %v7195
        %v7403 = vadd.f32 %v7106, %v7199
        %v7404 = vadd.f32 %v7107, %v7203
        %v7405 = vadd.f32 %v7108, %v7207
        %v7406 = vadd.f32 %v7109, %v7211
        %v7407 = vadd.f32 %v7110, %v7215
        %v7408 = vadd.f32 %v7111, %v7187
        %v7409 = vadd.f32 %v7112, %v7191
        %v7410 = vadd.f32 %v7113, %v7195
        %v7411 = vadd.f32 %v7114, %v7199
        %v7412 = vadd.f32 %v7115, %v7203
        %v7413 = vadd.f32 %v7116, %v7207
        %v7414 = vadd.f32 %v7117, %v7211
        %v7415 = vadd.f32 %v7118, %v7215
        %v7416 = vadd.f32 %v7119, %v7187
        %v7417 = vadd.f32 %v7120, %v7191
        %v7418 = vadd.f32 %v7121, %v7195
        %v7419 = vadd.f32 %v7122, %v7199
        %v7420 = vadd.f32 %v7123, %v7203
        %v7421 = vadd.f32 %v7124, %v7207
        %v7422 = vadd.f32 %v7125, %v7211
        %v7423 = vadd.f32 %v7126, %v7215
        %v7424 = vadd.f32 %v7127, %v7187
        %v7425 = vadd.f32 %v7128, %v7191
        %v7426 = vadd.f32 %v7129, %v7195
        %v7427 = vadd.f32 %v7130, %v7199
        %v7428 = vadd.f32 %v7131, %v7203
        %v7429 = vadd.f32 %v7132, %v7207
        %v7430 = vadd.f32 %v7133, %v7211
        %v7431 = vadd.f32 %v7134, %v7215
        %v7432 = vadd.f32 %v7135, %v7187
        %v7433 = vadd.f32 %v7136, %v7191
        %v7434 = vadd.f32 %v7137, %v7195
        %v7435 = vadd.f32 %v7138, %v7199
        %v7436 = vadd.f32 %v7139, %v7203
        %v7437 = vadd.f32 %v7140, %v7207
        %v7438 = vadd.f32 %v7141, %v7211
        %v7439 = vadd.f32 %v7142, %v7215
        %v7440 = vadd.f32 %v7143, %v7187
        %v7441 = vadd.f32 %v7144, %v7191
        %v7442 = vadd.f32 %v7145, %v7195
        %v7443 = vadd.f32 %v7146, %v7199
        %v7444 = vadd.f32 %v7147, %v7203
        %v7445 = vadd.f32 %v7148, %v7207
        %v7446 = vadd.f32 %v7149, %v7211
        %v7447 = vadd.f32 %v7150, %v7215
        %v7448 = vadd.f32 %v7151, %v7187
        %v7449 = vadd.f32 %v7152, %v7191
        %v7450 = vadd.f32 %v7153, %v7195
        %v7451 = vadd.f32 %v7154, %v7199
        %v7452 = vadd.f32 %v7155, %v7203
        %v7453 = vadd.f32 %v7156, %v7207
        %v7454 = vadd.f32 %v7157, %v7211
        %v7455 = vadd.f32 %v7158, %v7215
        %v7456 = vadd.f32 %v7159, %v7187
        %v7457 = vadd.f32 %v7160, %v7191
        %v7458 = vadd.f32 %v7161, %v7195
        %v7459 = vadd.f32 %v7162, %v7199
        %v7460 = vadd.f32 %v7163, %v7203
        %v7461 = vadd.f32 %v7164, %v7207
        %v7462 = vadd.f32 %v7165, %v7211
        %v7463 = vadd.f32 %v7166, %v7215
        %v7464 = vadd.f32 %v7167, %v7187
        %v7465 = vadd.f32 %v7168, %v7191
        %v7466 = vadd.f32 %v7169, %v7195
        %v7467 = vadd.f32 %v7170, %v7199
        %v7468 = vadd.f32 %v7171, %v7203
        %v7469 = vadd.f32 %v7172, %v7207
        %v7470 = vadd.f32 %v7173, %v7211
        %v7471 = vadd.f32 %v7174, %v7215
        %v7472 = vadd.f32 %v7175, %v7187
        %v7473 = vadd.f32 %v7176, %v7191
        %v7474 = vadd.f32 %v7177, %v7195
        %v7475 = vadd.f32 %v7178, %v7199
        %v7476 = vadd.f32 %v7179, %v7203
        %v7477 = vadd.f32 %v7180, %v7207
        %v7478 = vadd.f32 %v7181, %v7211
        %v7479 = vadd.f32 %v7182, %v7215
        %vm7480 = vcmp.gt.f32.partialorder %v7224, 0.0
        %vm7481 = vcmp.gt.f32.partialorder %v7225, 0.0
        %vm7482 = vcmp.gt.f32.partialorder %v7226, 0.0
        %vm7483 = vcmp.gt.f32.partialorder %v7227, 0.0
        %vm7484 = vcmp.gt.f32.partialorder %v7228, 0.0
        %vm7485 = vcmp.gt.f32.partialorder %v7229, 0.0
        %vm7486 = vcmp.gt.f32.partialorder %v7230, 0.0
        %vm7487 = vcmp.gt.f32.partialorder %v7231, 0.0
        %vm7488 = vcmp.gt.f32.partialorder %v7232, 0.0
        %vm7489 = vcmp.gt.f32.partialorder %v7233, 0.0
        %vm7490 = vcmp.gt.f32.partialorder %v7234, 0.0
        %vm7491 = vcmp.gt.f32.partialorder %v7235, 0.0
        %vm7492 = vcmp.gt.f32.partialorder %v7236, 0.0
        %vm7493 = vcmp.gt.f32.partialorder %v7237, 0.0
        %vm7494 = vcmp.gt.f32.partialorder %v7238, 0.0
        %vm7495 = vcmp.gt.f32.partialorder %v7239, 0.0
        %vm7496 = vcmp.gt.f32.partialorder %v7240, 0.0
        %vm7497 = vcmp.gt.f32.partialorder %v7241, 0.0
        %vm7498 = vcmp.gt.f32.partialorder %v7242, 0.0
        %vm7499 = vcmp.gt.f32.partialorder %v7243, 0.0
        %vm7500 = vcmp.gt.f32.partialorder %v7244, 0.0
        %vm7501 = vcmp.gt.f32.partialorder %v7245, 0.0
        %vm7502 = vcmp.gt.f32.partialorder %v7246, 0.0
        %vm7503 = vcmp.gt.f32.partialorder %v7247, 0.0
        %vm7504 = vcmp.gt.f32.partialorder %v7248, 0.0
        %vm7505 = vcmp.gt.f32.partialorder %v7249, 0.0
        %vm7506 = vcmp.gt.f32.partialorder %v7250, 0.0
        %vm7507 = vcmp.gt.f32.partialorder %v7251, 0.0
        %vm7508 = vcmp.gt.f32.partialorder %v7252, 0.0
        %vm7509 = vcmp.gt.f32.partialorder %v7253, 0.0
        %vm7510 = vcmp.gt.f32.partialorder %v7254, 0.0
        %vm7511 = vcmp.gt.f32.partialorder %v7255, 0.0
        %vm7512 = vcmp.gt.f32.partialorder %v7256, 0.0
        %vm7513 = vcmp.gt.f32.partialorder %v7257, 0.0
        %vm7514 = vcmp.gt.f32.partialorder %v7258, 0.0
        %vm7515 = vcmp.gt.f32.partialorder %v7259, 0.0
        %vm7516 = vcmp.gt.f32.partialorder %v7260, 0.0
        %vm7517 = vcmp.gt.f32.partialorder %v7261, 0.0
        %vm7518 = vcmp.gt.f32.partialorder %v7262, 0.0
        %vm7519 = vcmp.gt.f32.partialorder %v7263, 0.0
        %vm7520 = vcmp.gt.f32.partialorder %v7264, 0.0
        %vm7521 = vcmp.gt.f32.partialorder %v7265, 0.0
        %vm7522 = vcmp.gt.f32.partialorder %v7266, 0.0
        %vm7523 = vcmp.gt.f32.partialorder %v7267, 0.0
        %vm7524 = vcmp.gt.f32.partialorder %v7268, 0.0
        %vm7525 = vcmp.gt.f32.partialorder %v7269, 0.0
        %vm7526 = vcmp.gt.f32.partialorder %v7270, 0.0
        %vm7527 = vcmp.gt.f32.partialorder %v7271, 0.0
        %vm7528 = vcmp.gt.f32.partialorder %v7272, 0.0
        %vm7529 = vcmp.gt.f32.partialorder %v7273, 0.0
        %vm7530 = vcmp.gt.f32.partialorder %v7274, 0.0
        %vm7531 = vcmp.gt.f32.partialorder %v7275, 0.0
        %vm7532 = vcmp.gt.f32.partialorder %v7276, 0.0
        %vm7533 = vcmp.gt.f32.partialorder %v7277, 0.0
        %vm7534 = vcmp.gt.f32.partialorder %v7278, 0.0
        %vm7535 = vcmp.gt.f32.partialorder %v7279, 0.0
        %vm7536 = vcmp.gt.f32.partialorder %v7280, 0.0
        %vm7537 = vcmp.gt.f32.partialorder %v7281, 0.0
        %vm7538 = vcmp.gt.f32.partialorder %v7282, 0.0
        %vm7539 = vcmp.gt.f32.partialorder %v7283, 0.0
        %vm7540 = vcmp.gt.f32.partialorder %v7284, 0.0
        %vm7541 = vcmp.gt.f32.partialorder %v7285, 0.0
        %vm7542 = vcmp.gt.f32.partialorder %v7286, 0.0
        %vm7543 = vcmp.gt.f32.partialorder %v7287, 0.0
        %vm7544 = vcmp.gt.f32.partialorder %v7288, 0.0
        %vm7545 = vcmp.gt.f32.partialorder %v7289, 0.0
        %vm7546 = vcmp.gt.f32.partialorder %v7290, 0.0
        %vm7547 = vcmp.gt.f32.partialorder %v7291, 0.0
        %vm7548 = vcmp.gt.f32.partialorder %v7292, 0.0
        %vm7549 = vcmp.gt.f32.partialorder %v7293, 0.0
        %vm7550 = vcmp.gt.f32.partialorder %v7294, 0.0
        %vm7551 = vcmp.gt.f32.partialorder %v7295, 0.0
        %vm7552 = vcmp.gt.f32.partialorder %v7296, 0.0
        %vm7553 = vcmp.gt.f32.partialorder %v7297, 0.0
        %vm7554 = vcmp.gt.f32.partialorder %v7298, 0.0
        %vm7555 = vcmp.gt.f32.partialorder %v7299, 0.0
        %vm7556 = vcmp.gt.f32.partialorder %v7300, 0.0
        %vm7557 = vcmp.gt.f32.partialorder %v7301, 0.0
        %vm7558 = vcmp.gt.f32.partialorder %v7302, 0.0
        %vm7559 = vcmp.gt.f32.partialorder %v7303, 0.0
        %vm7560 = vcmp.gt.f32.partialorder %v7304, 0.0
        %vm7561 = vcmp.gt.f32.partialorder %v7305, 0.0
        %vm7562 = vcmp.gt.f32.partialorder %v7306, 0.0
        %vm7563 = vcmp.gt.f32.partialorder %v7307, 0.0
        %vm7564 = vcmp.gt.f32.partialorder %v7308, 0.0
        %vm7565 = vcmp.gt.f32.partialorder %v7309, 0.0
        %vm7566 = vcmp.gt.f32.partialorder %v7310, 0.0
        %vm7567 = vcmp.gt.f32.partialorder %v7311, 0.0
        %vm7568 = vcmp.gt.f32.partialorder %v7312, 0.0
        %vm7569 = vcmp.gt.f32.partialorder %v7313, 0.0
        %vm7570 = vcmp.gt.f32.partialorder %v7314, 0.0
        %vm7571 = vcmp.gt.f32.partialorder %v7315, 0.0
        %vm7572 = vcmp.gt.f32.partialorder %v7316, 0.0
        %vm7573 = vcmp.gt.f32.partialorder %v7317, 0.0
        %vm7574 = vcmp.gt.f32.partialorder %v7318, 0.0
        %vm7575 = vcmp.gt.f32.partialorder %v7319, 0.0
        %vm7576 = vcmp.gt.f32.partialorder %v7320, 0.0
        %vm7577 = vcmp.gt.f32.partialorder %v7321, 0.0
        %vm7578 = vcmp.gt.f32.partialorder %v7322, 0.0
        %vm7579 = vcmp.gt.f32.partialorder %v7323, 0.0
        %vm7580 = vcmp.gt.f32.partialorder %v7324, 0.0
        %vm7581 = vcmp.gt.f32.partialorder %v7325, 0.0
        %vm7582 = vcmp.gt.f32.partialorder %v7326, 0.0
        %vm7583 = vcmp.gt.f32.partialorder %v7327, 0.0
        %vm7584 = vcmp.gt.f32.partialorder %v7328, 0.0
        %vm7585 = vcmp.gt.f32.partialorder %v7329, 0.0
        %vm7586 = vcmp.gt.f32.partialorder %v7330, 0.0
        %vm7587 = vcmp.gt.f32.partialorder %v7331, 0.0
        %vm7588 = vcmp.gt.f32.partialorder %v7332, 0.0
        %vm7589 = vcmp.gt.f32.partialorder %v7333, 0.0
        %vm7590 = vcmp.gt.f32.partialorder %v7334, 0.0
        %vm7591 = vcmp.gt.f32.partialorder %v7335, 0.0
        %vm7592 = vcmp.gt.f32.partialorder %v7336, 0.0
        %vm7593 = vcmp.gt.f32.partialorder %v7337, 0.0
        %vm7594 = vcmp.gt.f32.partialorder %v7338, 0.0
        %vm7595 = vcmp.gt.f32.partialorder %v7339, 0.0
        %vm7596 = vcmp.gt.f32.partialorder %v7340, 0.0
        %vm7597 = vcmp.gt.f32.partialorder %v7341, 0.0
        %vm7598 = vcmp.gt.f32.partialorder %v7342, 0.0
        %vm7599 = vcmp.gt.f32.partialorder %v7343, 0.0
        %vm7600 = vcmp.gt.f32.partialorder %v7344, 0.0
        %vm7601 = vcmp.gt.f32.partialorder %v7345, 0.0
        %vm7602 = vcmp.gt.f32.partialorder %v7346, 0.0
        %vm7603 = vcmp.gt.f32.partialorder %v7347, 0.0
        %vm7604 = vcmp.gt.f32.partialorder %v7348, 0.0
        %vm7605 = vcmp.gt.f32.partialorder %v7349, 0.0
        %vm7606 = vcmp.gt.f32.partialorder %v7350, 0.0
        %vm7607 = vcmp.gt.f32.partialorder %v7351, 0.0
        %vm7608 = vcmp.gt.f32.partialorder %v7352, 0.0
        %vm7609 = vcmp.gt.f32.partialorder %v7353, 0.0
        %vm7610 = vcmp.gt.f32.partialorder %v7354, 0.0
        %vm7611 = vcmp.gt.f32.partialorder %v7355, 0.0
        %vm7612 = vcmp.gt.f32.partialorder %v7356, 0.0
        %vm7613 = vcmp.gt.f32.partialorder %v7357, 0.0
        %vm7614 = vcmp.gt.f32.partialorder %v7358, 0.0
        %vm7615 = vcmp.gt.f32.partialorder %v7359, 0.0
        %vm7616 = vcmp.gt.f32.partialorder %v7360, 0.0
        %vm7617 = vcmp.gt.f32.partialorder %v7361, 0.0
        %vm7618 = vcmp.gt.f32.partialorder %v7362, 0.0
        %vm7619 = vcmp.gt.f32.partialorder %v7363, 0.0
        %vm7620 = vcmp.gt.f32.partialorder %v7364, 0.0
        %vm7621 = vcmp.gt.f32.partialorder %v7365, 0.0
        %vm7622 = vcmp.gt.f32.partialorder %v7366, 0.0
        %vm7623 = vcmp.gt.f32.partialorder %v7367, 0.0
        %vm7624 = vcmp.gt.f32.partialorder %v7368, 0.0
        %vm7625 = vcmp.gt.f32.partialorder %v7369, 0.0
        %vm7626 = vcmp.gt.f32.partialorder %v7370, 0.0
        %vm7627 = vcmp.gt.f32.partialorder %v7371, 0.0
        %vm7628 = vcmp.gt.f32.partialorder %v7372, 0.0
        %vm7629 = vcmp.gt.f32.partialorder %v7373, 0.0
        %vm7630 = vcmp.gt.f32.partialorder %v7374, 0.0
        %vm7631 = vcmp.gt.f32.partialorder %v7375, 0.0
        %vm7632 = vcmp.gt.f32.partialorder %v7376, 0.0
        %vm7633 = vcmp.gt.f32.partialorder %v7377, 0.0
        %vm7634 = vcmp.gt.f32.partialorder %v7378, 0.0
        %vm7635 = vcmp.gt.f32.partialorder %v7379, 0.0
        %vm7636 = vcmp.gt.f32.partialorder %v7380, 0.0
        %vm7637 = vcmp.gt.f32.partialorder %v7381, 0.0
        %vm7638 = vcmp.gt.f32.partialorder %v7382, 0.0
        %vm7639 = vcmp.gt.f32.partialorder %v7383, 0.0
        %vm7640 = vcmp.gt.f32.partialorder %v7384, 0.0
        %vm7641 = vcmp.gt.f32.partialorder %v7385, 0.0
        %vm7642 = vcmp.gt.f32.partialorder %v7386, 0.0
        %vm7643 = vcmp.gt.f32.partialorder %v7387, 0.0
        %vm7644 = vcmp.gt.f32.partialorder %v7388, 0.0
        %vm7645 = vcmp.gt.f32.partialorder %v7389, 0.0
        %vm7646 = vcmp.gt.f32.partialorder %v7390, 0.0
        %vm7647 = vcmp.gt.f32.partialorder %v7391, 0.0
        %vm7648 = vcmp.gt.f32.partialorder %v7392, 0.0
        %vm7649 = vcmp.gt.f32.partialorder %v7393, 0.0
        %vm7650 = vcmp.gt.f32.partialorder %v7394, 0.0
        %vm7651 = vcmp.gt.f32.partialorder %v7395, 0.0
        %vm7652 = vcmp.gt.f32.partialorder %v7396, 0.0
        %vm7653 = vcmp.gt.f32.partialorder %v7397, 0.0
        %vm7654 = vcmp.gt.f32.partialorder %v7398, 0.0
        %vm7655 = vcmp.gt.f32.partialorder %v7399, 0.0
        %vm7656 = vcmp.gt.f32.partialorder %v7400, 0.0
        %vm7657 = vcmp.gt.f32.partialorder %v7401, 0.0
        %vm7658 = vcmp.gt.f32.partialorder %v7402, 0.0
        %vm7659 = vcmp.gt.f32.partialorder %v7403, 0.0
        %vm7660 = vcmp.gt.f32.partialorder %v7404, 0.0
        %vm7661 = vcmp.gt.f32.partialorder %v7405, 0.0
        %vm7662 = vcmp.gt.f32.partialorder %v7406, 0.0
        %vm7663 = vcmp.gt.f32.partialorder %v7407, 0.0
        %vm7664 = vcmp.gt.f32.partialorder %v7408, 0.0
        %vm7665 = vcmp.gt.f32.partialorder %v7409, 0.0
        %vm7666 = vcmp.gt.f32.partialorder %v7410, 0.0
        %vm7667 = vcmp.gt.f32.partialorder %v7411, 0.0
        %vm7668 = vcmp.gt.f32.partialorder %v7412, 0.0
        %vm7669 = vcmp.gt.f32.partialorder %v7413, 0.0
        %vm7670 = vcmp.gt.f32.partialorder %v7414, 0.0
        %vm7671 = vcmp.gt.f32.partialorder %v7415, 0.0
        %vm7672 = vcmp.gt.f32.partialorder %v7416, 0.0
        %vm7673 = vcmp.gt.f32.partialorder %v7417, 0.0
        %vm7674 = vcmp.gt.f32.partialorder %v7418, 0.0
        %vm7675 = vcmp.gt.f32.partialorder %v7419, 0.0
        %vm7676 = vcmp.gt.f32.partialorder %v7420, 0.0
        %vm7677 = vcmp.gt.f32.partialorder %v7421, 0.0
        %vm7678 = vcmp.gt.f32.partialorder %v7422, 0.0
        %vm7679 = vcmp.gt.f32.partialorder %v7423, 0.0
        %vm7680 = vcmp.gt.f32.partialorder %v7424, 0.0
        %vm7681 = vcmp.gt.f32.partialorder %v7425, 0.0
        %vm7682 = vcmp.gt.f32.partialorder %v7426, 0.0
        %vm7683 = vcmp.gt.f32.partialorder %v7427, 0.0
        %vm7684 = vcmp.gt.f32.partialorder %v7428, 0.0
        %vm7685 = vcmp.gt.f32.partialorder %v7429, 0.0
        %vm7686 = vcmp.gt.f32.partialorder %v7430, 0.0
        %vm7687 = vcmp.gt.f32.partialorder %v7431, 0.0
        %vm7688 = vcmp.gt.f32.partialorder %v7432, 0.0
        %vm7689 = vcmp.gt.f32.partialorder %v7433, 0.0
        %vm7690 = vcmp.gt.f32.partialorder %v7434, 0.0
        %vm7691 = vcmp.gt.f32.partialorder %v7435, 0.0
        %vm7692 = vcmp.gt.f32.partialorder %v7436, 0.0
        %vm7693 = vcmp.gt.f32.partialorder %v7437, 0.0
        %vm7694 = vcmp.gt.f32.partialorder %v7438, 0.0
        %vm7695 = vcmp.gt.f32.partialorder %v7439, 0.0
        %vm7696 = vcmp.gt.f32.partialorder %v7440, 0.0
        %vm7697 = vcmp.gt.f32.partialorder %v7441, 0.0
        %vm7698 = vcmp.gt.f32.partialorder %v7442, 0.0
        %vm7699 = vcmp.gt.f32.partialorder %v7443, 0.0
        %vm7700 = vcmp.gt.f32.partialorder %v7444, 0.0
        %vm7701 = vcmp.gt.f32.partialorder %v7445, 0.0
        %vm7702 = vcmp.gt.f32.partialorder %v7446, 0.0
        %vm7703 = vcmp.gt.f32.partialorder %v7447, 0.0
        %vm7704 = vcmp.gt.f32.partialorder %v7448, 0.0
        %vm7705 = vcmp.gt.f32.partialorder %v7449, 0.0
        %vm7706 = vcmp.gt.f32.partialorder %v7450, 0.0
        %vm7707 = vcmp.gt.f32.partialorder %v7451, 0.0
        %vm7708 = vcmp.gt.f32.partialorder %v7452, 0.0
        %vm7709 = vcmp.gt.f32.partialorder %v7453, 0.0
        %vm7710 = vcmp.gt.f32.partialorder %v7454, 0.0
        %vm7711 = vcmp.gt.f32.partialorder %v7455, 0.0
        %vm7712 = vcmp.gt.f32.partialorder %v7456, 0.0
        %vm7713 = vcmp.gt.f32.partialorder %v7457, 0.0
        %vm7714 = vcmp.gt.f32.partialorder %v7458, 0.0
        %vm7715 = vcmp.gt.f32.partialorder %v7459, 0.0
        %vm7716 = vcmp.gt.f32.partialorder %v7460, 0.0
        %vm7717 = vcmp.gt.f32.partialorder %v7461, 0.0
        %vm7718 = vcmp.gt.f32.partialorder %v7462, 0.0
        %vm7719 = vcmp.gt.f32.partialorder %v7463, 0.0
        %vm7720 = vcmp.gt.f32.partialorder %v7464, 0.0
        %vm7721 = vcmp.gt.f32.partialorder %v7465, 0.0
        %vm7722 = vcmp.gt.f32.partialorder %v7466, 0.0
        %vm7723 = vcmp.gt.f32.partialorder %v7467, 0.0
        %vm7724 = vcmp.gt.f32.partialorder %v7468, 0.0
        %vm7725 = vcmp.gt.f32.partialorder %v7469, 0.0
        %vm7726 = vcmp.gt.f32.partialorder %v7470, 0.0
        %vm7727 = vcmp.gt.f32.partialorder %v7471, 0.0
        %vm7728 = vcmp.gt.f32.partialorder %v7472, 0.0
        %vm7729 = vcmp.gt.f32.partialorder %v7473, 0.0
        %vm7730 = vcmp.gt.f32.partialorder %v7474, 0.0
        %vm7731 = vcmp.gt.f32.partialorder %v7475, 0.0
        %vm7732 = vcmp.gt.f32.partialorder %v7476, 0.0
        %vm7733 = vcmp.gt.f32.partialorder %v7477, 0.0
        %vm7734 = vcmp.gt.f32.partialorder %v7478, 0.0
        %vm7735 = vcmp.gt.f32.partialorder %v7479, 0.0
        %v7736 = vmul.f32 %v7224, 0.2
        %v7737 = vmul.f32 %v7225, 0.2
        %v7738 = vmul.f32 %v7226, 0.2
        %v7739 = vmul.f32 %v7227, 0.2
        %v7740 = vmul.f32 %v7228, 0.2
        %v7741 = vmul.f32 %v7229, 0.2
        %v7742 = vmul.f32 %v7230, 0.2
        %v7743 = vmul.f32 %v7231, 0.2
        %v7744 = vmul.f32 %v7232, 0.2
        %v7745 = vmul.f32 %v7233, 0.2
        %v7746 = vmul.f32 %v7234, 0.2
        %v7747 = vmul.f32 %v7235, 0.2
        %v7748 = vmul.f32 %v7236, 0.2
        %v7749 = vmul.f32 %v7237, 0.2
        %v7750 = vmul.f32 %v7238, 0.2
        %v7751 = vmul.f32 %v7239, 0.2
        %v7752 = vmul.f32 %v7240, 0.2
        %v7753 = vmul.f32 %v7241, 0.2
        %v7754 = vmul.f32 %v7242, 0.2
        %v7755 = vmul.f32 %v7243, 0.2
        %v7756 = vmul.f32 %v7244, 0.2
        %v7757 = vmul.f32 %v7245, 0.2
        %v7758 = vmul.f32 %v7246, 0.2
        %v7759 = vmul.f32 %v7247, 0.2
        %v7760 = vmul.f32 %v7248, 0.2
        %v7761 = vmul.f32 %v7249, 0.2
        %v7762 = vmul.f32 %v7250, 0.2
        %v7763 = vmul.f32 %v7251, 0.2
        %v7764 = vmul.f32 %v7252, 0.2
        %v7765 = vmul.f32 %v7253, 0.2
        %v7766 = vmul.f32 %v7254, 0.2
        %v7767 = vmul.f32 %v7255, 0.2
        %v7768 = vmul.f32 %v7256, 0.2
        %v7769 = vmul.f32 %v7257, 0.2
        %v7770 = vmul.f32 %v7258, 0.2
        %v7771 = vmul.f32 %v7259, 0.2
        %v7772 = vmul.f32 %v7260, 0.2
        %v7773 = vmul.f32 %v7261, 0.2
        %v7774 = vmul.f32 %v7262, 0.2
        %v7775 = vmul.f32 %v7263, 0.2
        %v7776 = vmul.f32 %v7264, 0.2
        %v7777 = vmul.f32 %v7265, 0.2
        %v7778 = vmul.f32 %v7266, 0.2
        %v7779 = vmul.f32 %v7267, 0.2
        %v7780 = vmul.f32 %v7268, 0.2
        %v7781 = vmul.f32 %v7269, 0.2
        %v7782 = vmul.f32 %v7270, 0.2
        %v7783 = vmul.f32 %v7271, 0.2
        %v7784 = vmul.f32 %v7272, 0.2
        %v7785 = vmul.f32 %v7273, 0.2
        %v7786 = vmul.f32 %v7274, 0.2
        %v7787 = vmul.f32 %v7275, 0.2
        %v7788 = vmul.f32 %v7276, 0.2
        %v7789 = vmul.f32 %v7277, 0.2
        %v7790 = vmul.f32 %v7278, 0.2
        %v7791 = vmul.f32 %v7279, 0.2
        %v7792 = vmul.f32 %v7280, 0.2
        %v7793 = vmul.f32 %v7281, 0.2
        %v7794 = vmul.f32 %v7282, 0.2
        %v7795 = vmul.f32 %v7283, 0.2
        %v7796 = vmul.f32 %v7284, 0.2
        %v7797 = vmul.f32 %v7285, 0.2
        %v7798 = vmul.f32 %v7286, 0.2
        %v7799 = vmul.f32 %v7287, 0.2
        %v7800 = vmul.f32 %v7288, 0.2
        %v7801 = vmul.f32 %v7289, 0.2
        %v7802 = vmul.f32 %v7290, 0.2
        %v7803 = vmul.f32 %v7291, 0.2
        %v7804 = vmul.f32 %v7292, 0.2
        %v7805 = vmul.f32 %v7293, 0.2
        %v7806 = vmul.f32 %v7294, 0.2
        %v7807 = vmul.f32 %v7295, 0.2
        %v7808 = vmul.f32 %v7296, 0.2
        %v7809 = vmul.f32 %v7297, 0.2
        %v7810 = vmul.f32 %v7298, 0.2
        %v7811 = vmul.f32 %v7299, 0.2
        %v7812 = vmul.f32 %v7300, 0.2
        %v7813 = vmul.f32 %v7301, 0.2
        %v7814 = vmul.f32 %v7302, 0.2
        %v7815 = vmul.f32 %v7303, 0.2
        %v7816 = vmul.f32 %v7304, 0.2
        %v7817 = vmul.f32 %v7305, 0.2
        %v7818 = vmul.f32 %v7306, 0.2
        %v7819 = vmul.f32 %v7307, 0.2
        %v7820 = vmul.f32 %v7308, 0.2
        %v7821 = vmul.f32 %v7309, 0.2
        %v7822 = vmul.f32 %v7310, 0.2
        %v7823 = vmul.f32 %v7311, 0.2
        %v7824 = vmul.f32 %v7312, 0.2
        %v7825 = vmul.f32 %v7313, 0.2
        %v7826 = vmul.f32 %v7314, 0.2
        %v7827 = vmul.f32 %v7315, 0.2
        %v7828 = vmul.f32 %v7316, 0.2
        %v7829 = vmul.f32 %v7317, 0.2
        %v7830 = vmul.f32 %v7318, 0.2
        %v7831 = vmul.f32 %v7319, 0.2
        %v7832 = vmul.f32 %v7320, 0.2
        %v7833 = vmul.f32 %v7321, 0.2
        %v7834 = vmul.f32 %v7322, 0.2
        %v7835 = vmul.f32 %v7323, 0.2
        %v7836 = vmul.f32 %v7324, 0.2
        %v7837 = vmul.f32 %v7325, 0.2
        %v7838 = vmul.f32 %v7326, 0.2
        %v7839 = vmul.f32 %v7327, 0.2
        %v7840 = vmul.f32 %v7328, 0.2
        %v7841 = vmul.f32 %v7329, 0.2
        %v7842 = vmul.f32 %v7330, 0.2
        %v7843 = vmul.f32 %v7331, 0.2
        %v7844 = vmul.f32 %v7332, 0.2
        %v7845 = vmul.f32 %v7333, 0.2
        %v7846 = vmul.f32 %v7334, 0.2
        %v7847 = vmul.f32 %v7335, 0.2
        %v7848 = vmul.f32 %v7336, 0.2
        %v7849 = vmul.f32 %v7337, 0.2
        %v7850 = vmul.f32 %v7338, 0.2
        %v7851 = vmul.f32 %v7339, 0.2
        %v7852 = vmul.f32 %v7340, 0.2
        %v7853 = vmul.f32 %v7341, 0.2
        %v7854 = vmul.f32 %v7342, 0.2
        %v7855 = vmul.f32 %v7343, 0.2
        %v7856 = vmul.f32 %v7344, 0.2
        %v7857 = vmul.f32 %v7345, 0.2
        %v7858 = vmul.f32 %v7346, 0.2
        %v7859 = vmul.f32 %v7347, 0.2
        %v7860 = vmul.f32 %v7348, 0.2
        %v7861 = vmul.f32 %v7349, 0.2
        %v7862 = vmul.f32 %v7350, 0.2
        %v7863 = vmul.f32 %v7351, 0.2
        %v7864 = vmul.f32 %v7352, 0.2
        %v7865 = vmul.f32 %v7353, 0.2
        %v7866 = vmul.f32 %v7354, 0.2
        %v7867 = vmul.f32 %v7355, 0.2
        %v7868 = vmul.f32 %v7356, 0.2
        %v7869 = vmul.f32 %v7357, 0.2
        %v7870 = vmul.f32 %v7358, 0.2
        %v7871 = vmul.f32 %v7359, 0.2
        %v7872 = vmul.f32 %v7360, 0.2
        %v7873 = vmul.f32 %v7361, 0.2
        %v7874 = vmul.f32 %v7362, 0.2
        %v7875 = vmul.f32 %v7363, 0.2
        %v7876 = vmul.f32 %v7364, 0.2
        %v7877 = vmul.f32 %v7365, 0.2
        %v7878 = vmul.f32 %v7366, 0.2
        %v7879 = vmul.f32 %v7367, 0.2
        %v7880 = vmul.f32 %v7368, 0.2
        %v7881 = vmul.f32 %v7369, 0.2
        %v7882 = vmul.f32 %v7370, 0.2
        %v7883 = vmul.f32 %v7371, 0.2
        %v7884 = vmul.f32 %v7372, 0.2
        %v7885 = vmul.f32 %v7373, 0.2
        %v7886 = vmul.f32 %v7374, 0.2
        %v7887 = vmul.f32 %v7375, 0.2
        %v7888 = vmul.f32 %v7376, 0.2
        %v7889 = vmul.f32 %v7377, 0.2
        %v7890 = vmul.f32 %v7378, 0.2
        %v7891 = vmul.f32 %v7379, 0.2
        %v7892 = vmul.f32 %v7380, 0.2
        %v7893 = vmul.f32 %v7381, 0.2
        %v7894 = vmul.f32 %v7382, 0.2
        %v7895 = vmul.f32 %v7383, 0.2
        %v7896 = vmul.f32 %v7384, 0.2
        %v7897 = vmul.f32 %v7385, 0.2
        %v7898 = vmul.f32 %v7386, 0.2
        %v7899 = vmul.f32 %v7387, 0.2
        %v7900 = vmul.f32 %v7388, 0.2
        %v7901 = vmul.f32 %v7389, 0.2
        %v7902 = vmul.f32 %v7390, 0.2
        %v7903 = vmul.f32 %v7391, 0.2
        %v7904 = vmul.f32 %v7392, 0.2
        %v7905 = vmul.f32 %v7393, 0.2
        %v7906 = vmul.f32 %v7394, 0.2
        %v7907 = vmul.f32 %v7395, 0.2
        %v7908 = vmul.f32 %v7396, 0.2
        %v7909 = vmul.f32 %v7397, 0.2
        %v7910 = vmul.f32 %v7398, 0.2
        %v7911 = vmul.f32 %v7399, 0.2
        %v7912 = vmul.f32 %v7400, 0.2
        %v7913 = vmul.f32 %v7401, 0.2
        %v7914 = vmul.f32 %v7402, 0.2
        %v7915 = vmul.f32 %v7403, 0.2
        %v7916 = vmul.f32 %v7404, 0.2
        %v7917 = vmul.f32 %v7405, 0.2
        %v7918 = vmul.f32 %v7406, 0.2
        %v7919 = vmul.f32 %v7407, 0.2
        %v7920 = vmul.f32 %v7408, 0.2
        %v7921 = vmul.f32 %v7409, 0.2
        %v7922 = vmul.f32 %v7410, 0.2
        %v7923 = vmul.f32 %v7411, 0.2
        %v7924 = vmul.f32 %v7412, 0.2
        %v7925 = vmul.f32 %v7413, 0.2
        %v7926 = vmul.f32 %v7414, 0.2
        %v7927 = vmul.f32 %v7415, 0.2
        %v7928 = vmul.f32 %v7416, 0.2
        %v7929 = vmul.f32 %v7417, 0.2
        %v7930 = vmul.f32 %v7418, 0.2
        %v7931 = vmul.f32 %v7419, 0.2
        %v7932 = vmul.f32 %v7420, 0.2
        %v7933 = vmul.f32 %v7421, 0.2
        %v7934 = vmul.f32 %v7422, 0.2
        %v7935 = vmul.f32 %v7423, 0.2
        %v7936 = vmul.f32 %v7424, 0.2
        %v7937 = vmul.f32 %v7425, 0.2
        %v7938 = vmul.f32 %v7426, 0.2
        %v7939 = vmul.f32 %v7427, 0.2
        %v7940 = vmul.f32 %v7428, 0.2
        %v7941 = vmul.f32 %v7429, 0.2
        %v7942 = vmul.f32 %v7430, 0.2
        %v7943 = vmul.f32 %v7431, 0.2
        %v7944 = vmul.f32 %v7432, 0.2
        %v7945 = vmul.f32 %v7433, 0.2
        %v7946 = vmul.f32 %v7434, 0.2
        %v7947 = vmul.f32 %v7435, 0.2
        %v7948 = vmul.f32 %v7436, 0.2
        %v7949 = vmul.f32 %v7437, 0.2
        %v7950 = vmul.f32 %v7438, 0.2
        %v7951 = vmul.f32 %v7439, 0.2
        %v7952 = vmul.f32 %v7440, 0.2
        %v7953 = vmul.f32 %v7441, 0.2
        %v7954 = vmul.f32 %v7442, 0.2
        %v7955 = vmul.f32 %v7443, 0.2
        %v7956 = vmul.f32 %v7444, 0.2
        %v7957 = vmul.f32 %v7445, 0.2
        %v7958 = vmul.f32 %v7446, 0.2
        %v7959 = vmul.f32 %v7447, 0.2
        %v7960 = vmul.f32 %v7448, 0.2
        %v7961 = vmul.f32 %v7449, 0.2
        %v7962 = vmul.f32 %v7450, 0.2
        %v7963 = vmul.f32 %v7451, 0.2
        %v7964 = vmul.f32 %v7452, 0.2
        %v7965 = vmul.f32 %v7453, 0.2
        %v7966 = vmul.f32 %v7454, 0.2
        %v7967 = vmul.f32 %v7455, 0.2
        %v7968 = vmul.f32 %v7456, 0.2
        %v7969 = vmul.f32 %v7457, 0.2
        %v7970 = vmul.f32 %v7458, 0.2
        %v7971 = vmul.f32 %v7459, 0.2
        %v7972 = vmul.f32 %v7460, 0.2
        %v7973 = vmul.f32 %v7461, 0.2
        %v7974 = vmul.f32 %v7462, 0.2
        %v7975 = vmul.f32 %v7463, 0.2
        %v7976 = vmul.f32 %v7464, 0.2
        %v7977 = vmul.f32 %v7465, 0.2
        %v7978 = vmul.f32 %v7466, 0.2
        %v7979 = vmul.f32 %v7467, 0.2
        %v7980 = vmul.f32 %v7468, 0.2
        %v7981 = vmul.f32 %v7469, 0.2
        %v7982 = vmul.f32 %v7470, 0.2
        %v7983 = vmul.f32 %v7471, 0.2
        %v7984 = vmul.f32 %v7472, 0.2
        %v7985 = vmul.f32 %v7473, 0.2
        %v7986 = vmul.f32 %v7474, 0.2
        %v7987 = vmul.f32 %v7475, 0.2
        %v7988 = vmul.f32 %v7476, 0.2
        %v7989 = vmul.f32 %v7477, 0.2
        %v7990 = vmul.f32 %v7478, 0.2
        %v7991 = vmul.f32 %v7479, 0.2
        %v7992 = vsel %vm7480, %v7224, %v7736
        %v7993 = vsel %vm7481, %v7225, %v7737
        %v7994 = vsel %vm7482, %v7226, %v7738
        %v7995 = vsel %vm7483, %v7227, %v7739
        %v7996 = vsel %vm7484, %v7228, %v7740
        %v7997 = vsel %vm7485, %v7229, %v7741
        %v7998 = vsel %vm7486, %v7230, %v7742
        %v7999 = vsel %vm7487, %v7231, %v7743
        %v8000 = vsel %vm7488, %v7232, %v7744
        %v8001 = vsel %vm7489, %v7233, %v7745
        %v8002 = vsel %vm7490, %v7234, %v7746
        %v8003 = vsel %vm7491, %v7235, %v7747
        %v8004 = vsel %vm7492, %v7236, %v7748
        %v8005 = vsel %vm7493, %v7237, %v7749
        %v8006 = vsel %vm7494, %v7238, %v7750
        %v8007 = vsel %vm7495, %v7239, %v7751
        %v8008 = vsel %vm7496, %v7240, %v7752
        %v8009 = vsel %vm7497, %v7241, %v7753
        %v8010 = vsel %vm7498, %v7242, %v7754
        %v8011 = vsel %vm7499, %v7243, %v7755
        %v8012 = vsel %vm7500, %v7244, %v7756
        %v8013 = vsel %vm7501, %v7245, %v7757
        %v8014 = vsel %vm7502, %v7246, %v7758
        %v8015 = vsel %vm7503, %v7247, %v7759
        %v8016 = vsel %vm7504, %v7248, %v7760
        %v8017 = vsel %vm7505, %v7249, %v7761
        %v8018 = vsel %vm7506, %v7250, %v7762
        %v8019 = vsel %vm7507, %v7251, %v7763
        %v8020 = vsel %vm7508, %v7252, %v7764
        %v8021 = vsel %vm7509, %v7253, %v7765
        %v8022 = vsel %vm7510, %v7254, %v7766
        %v8023 = vsel %vm7511, %v7255, %v7767
        %v8024 = vsel %vm7512, %v7256, %v7768
        %v8025 = vsel %vm7513, %v7257, %v7769
        %v8026 = vsel %vm7514, %v7258, %v7770
        %v8027 = vsel %vm7515, %v7259, %v7771
        %v8028 = vsel %vm7516, %v7260, %v7772
        %v8029 = vsel %vm7517, %v7261, %v7773
        %v8030 = vsel %vm7518, %v7262, %v7774
        %v8031 = vsel %vm7519, %v7263, %v7775
        %v8032 = vsel %vm7520, %v7264, %v7776
        %v8033 = vsel %vm7521, %v7265, %v7777
        %v8034 = vsel %vm7522, %v7266, %v7778
        %v8035 = vsel %vm7523, %v7267, %v7779
        %v8036 = vsel %vm7524, %v7268, %v7780
        %v8037 = vsel %vm7525, %v7269, %v7781
        %v8038 = vsel %vm7526, %v7270, %v7782
        %v8039 = vsel %vm7527, %v7271, %v7783
        %v8040 = vsel %vm7528, %v7272, %v7784
        %v8041 = vsel %vm7529, %v7273, %v7785
        %v8042 = vsel %vm7530, %v7274, %v7786
        %v8043 = vsel %vm7531, %v7275, %v7787
        %v8044 = vsel %vm7532, %v7276, %v7788
        %v8045 = vsel %vm7533, %v7277, %v7789
        %v8046 = vsel %vm7534, %v7278, %v7790
        %v8047 = vsel %vm7535, %v7279, %v7791
        %v8048 = vsel %vm7536, %v7280, %v7792
        %v8049 = vsel %vm7537, %v7281, %v7793
        %v8050 = vsel %vm7538, %v7282, %v7794
        %v8051 = vsel %vm7539, %v7283, %v7795
        %v8052 = vsel %vm7540, %v7284, %v7796
        %v8053 = vsel %vm7541, %v7285, %v7797
        %v8054 = vsel %vm7542, %v7286, %v7798
        %v8055 = vsel %vm7543, %v7287, %v7799
        %v8056 = vsel %vm7544, %v7288, %v7800
        %v8057 = vsel %vm7545, %v7289, %v7801
        %v8058 = vsel %vm7546, %v7290, %v7802
        %v8059 = vsel %vm7547, %v7291, %v7803
        %v8060 = vsel %vm7548, %v7292, %v7804
        %v8061 = vsel %vm7549, %v7293, %v7805
        %v8062 = vsel %vm7550, %v7294, %v7806
        %v8063 = vsel %vm7551, %v7295, %v7807
        %v8064 = vsel %vm7552, %v7296, %v7808
        %v8065 = vsel %vm7553, %v7297, %v7809
        %v8066 = vsel %vm7554, %v7298, %v7810
        %v8067 = vsel %vm7555, %v7299, %v7811
        %v8068 = vsel %vm7556, %v7300, %v7812
        %v8069 = vsel %vm7557, %v7301, %v7813
        %v8070 = vsel %vm7558, %v7302, %v7814
        %v8071 = vsel %vm7559, %v7303, %v7815
        %v8072 = vsel %vm7560, %v7304, %v7816
        %v8073 = vsel %vm7561, %v7305, %v7817
        %v8074 = vsel %vm7562, %v7306, %v7818
        %v8075 = vsel %vm7563, %v7307, %v7819
        %v8076 = vsel %vm7564, %v7308, %v7820
        %v8077 = vsel %vm7565, %v7309, %v7821
        %v8078 = vsel %vm7566, %v7310, %v7822
        %v8079 = vsel %vm7567, %v7311, %v7823
        %v8080 = vsel %vm7568, %v7312, %v7824
        %v8081 = vsel %vm7569, %v7313, %v7825
        %v8082 = vsel %vm7570, %v7314, %v7826
        %v8083 = vsel %vm7571, %v7315, %v7827
        %v8084 = vsel %vm7572, %v7316, %v7828
        %v8085 = vsel %vm7573, %v7317, %v7829
        %v8086 = vsel %vm7574, %v7318, %v7830
        %v8087 = vsel %vm7575, %v7319, %v7831
        %v8088 = vsel %vm7576, %v7320, %v7832
        %v8089 = vsel %vm7577, %v7321, %v7833
        %v8090 = vsel %vm7578, %v7322, %v7834
        %v8091 = vsel %vm7579, %v7323, %v7835
        %v8092 = vsel %vm7580, %v7324, %v7836
        %v8093 = vsel %vm7581, %v7325, %v7837
        %v8094 = vsel %vm7582, %v7326, %v7838
        %v8095 = vsel %vm7583, %v7327, %v7839
        %v8096 = vsel %vm7584, %v7328, %v7840
        %v8097 = vsel %vm7585, %v7329, %v7841
        %v8098 = vsel %vm7586, %v7330, %v7842
        %v8099 = vsel %vm7587, %v7331, %v7843
        %v8100 = vsel %vm7588, %v7332, %v7844
        %v8101 = vsel %vm7589, %v7333, %v7845
        %v8102 = vsel %vm7590, %v7334, %v7846
        %v8103 = vsel %vm7591, %v7335, %v7847
        %v8104 = vsel %vm7592, %v7336, %v7848
        %v8105 = vsel %vm7593, %v7337, %v7849
        %v8106 = vsel %vm7594, %v7338, %v7850
        %v8107 = vsel %vm7595, %v7339, %v7851
        %v8108 = vsel %vm7596, %v7340, %v7852
        %v8109 = vsel %vm7597, %v7341, %v7853
        %v8110 = vsel %vm7598, %v7342, %v7854
        %v8111 = vsel %vm7599, %v7343, %v7855
        %v8112 = vsel %vm7600, %v7344, %v7856
        %v8113 = vsel %vm7601, %v7345, %v7857
        %v8114 = vsel %vm7602, %v7346, %v7858
        %v8115 = vsel %vm7603, %v7347, %v7859
        %v8116 = vsel %vm7604, %v7348, %v7860
        %v8117 = vsel %vm7605, %v7349, %v7861
        %v8118 = vsel %vm7606, %v7350, %v7862
        %v8119 = vsel %vm7607, %v7351, %v7863
        %v8120 = vsel %vm7608, %v7352, %v7864
        %v8121 = vsel %vm7609, %v7353, %v7865
        %v8122 = vsel %vm7610, %v7354, %v7866
        %v8123 = vsel %vm7611, %v7355, %v7867
        %v8124 = vsel %vm7612, %v7356, %v7868
        %v8125 = vsel %vm7613, %v7357, %v7869
        %v8126 = vsel %vm7614, %v7358, %v7870
        %v8127 = vsel %vm7615, %v7359, %v7871
        %v8128 = vsel %vm7616, %v7360, %v7872
        %v8129 = vsel %vm7617, %v7361, %v7873
        %v8130 = vsel %vm7618, %v7362, %v7874
        %v8131 = vsel %vm7619, %v7363, %v7875
        %v8132 = vsel %vm7620, %v7364, %v7876
        %v8133 = vsel %vm7621, %v7365, %v7877
        %v8134 = vsel %vm7622, %v7366, %v7878
        %v8135 = vsel %vm7623, %v7367, %v7879
        %v8136 = vsel %vm7624, %v7368, %v7880
        %v8137 = vsel %vm7625, %v7369, %v7881
        %v8138 = vsel %vm7626, %v7370, %v7882
        %v8139 = vsel %vm7627, %v7371, %v7883
        %v8140 = vsel %vm7628, %v7372, %v7884
        %v8141 = vsel %vm7629, %v7373, %v7885
        %v8142 = vsel %vm7630, %v7374, %v7886
        %v8143 = vsel %vm7631, %v7375, %v7887
        %v8144 = vsel %vm7632, %v7376, %v7888
        %v8145 = vsel %vm7633, %v7377, %v7889
        %v8146 = vsel %vm7634, %v7378, %v7890
        %v8147 = vsel %vm7635, %v7379, %v7891
        %v8148 = vsel %vm7636, %v7380, %v7892
        %v8149 = vsel %vm7637, %v7381, %v7893
        %v8150 = vsel %vm7638, %v7382, %v7894
        %v8151 = vsel %vm7639, %v7383, %v7895
        %v8152 = vsel %vm7640, %v7384, %v7896
        %v8153 = vsel %vm7641, %v7385, %v7897
        %v8154 = vsel %vm7642, %v7386, %v7898
        %v8155 = vsel %vm7643, %v7387, %v7899
        %v8156 = vsel %vm7644, %v7388, %v7900
        %v8157 = vsel %vm7645, %v7389, %v7901
        %v8158 = vsel %vm7646, %v7390, %v7902
        %v8159 = vsel %vm7647, %v7391, %v7903
        %v8160 = vsel %vm7648, %v7392, %v7904
        %v8161 = vsel %vm7649, %v7393, %v7905
        %v8162 = vsel %vm7650, %v7394, %v7906
        %v8163 = vsel %vm7651, %v7395, %v7907
        %v8164 = vsel %vm7652, %v7396, %v7908
        %v8165 = vsel %vm7653, %v7397, %v7909
        %v8166 = vsel %vm7654, %v7398, %v7910
        %v8167 = vsel %vm7655, %v7399, %v7911
        %v8168 = vsel %vm7656, %v7400, %v7912
        %v8169 = vsel %vm7657, %v7401, %v7913
        %v8170 = vsel %vm7658, %v7402, %v7914
        %v8171 = vsel %vm7659, %v7403, %v7915
        %v8172 = vsel %vm7660, %v7404, %v7916
        %v8173 = vsel %vm7661, %v7405, %v7917
        %v8174 = vsel %vm7662, %v7406, %v7918
        %v8175 = vsel %vm7663, %v7407, %v7919
        %v8176 = vsel %vm7664, %v7408, %v7920
        %v8177 = vsel %vm7665, %v7409, %v7921
        %v8178 = vsel %vm7666, %v7410, %v7922
        %v8179 = vsel %vm7667, %v7411, %v7923
        %v8180 = vsel %vm7668, %v7412, %v7924
        %v8181 = vsel %vm7669, %v7413, %v7925
        %v8182 = vsel %vm7670, %v7414, %v7926
        %v8183 = vsel %vm7671, %v7415, %v7927
        %v8184 = vsel %vm7672, %v7416, %v7928
        %v8185 = vsel %vm7673, %v7417, %v7929
        %v8186 = vsel %vm7674, %v7418, %v7930
        %v8187 = vsel %vm7675, %v7419, %v7931
        %v8188 = vsel %vm7676, %v7420, %v7932
        %v8189 = vsel %vm7677, %v7421, %v7933
        %v8190 = vsel %vm7678, %v7422, %v7934
        %v8191 = vsel %vm7679, %v7423, %v7935
        %v8192 = vsel %vm7680, %v7424, %v7936
        %v8193 = vsel %vm7681, %v7425, %v7937
        %v8194 = vsel %vm7682, %v7426, %v7938
        %v8195 = vsel %vm7683, %v7427, %v7939
        %v8196 = vsel %vm7684, %v7428, %v7940
        %v8197 = vsel %vm7685, %v7429, %v7941
        %v8198 = vsel %vm7686, %v7430, %v7942
        %v8199 = vsel %vm7687, %v7431, %v7943
        %v8200 = vsel %vm7688, %v7432, %v7944
        %v8201 = vsel %vm7689, %v7433, %v7945
        %v8202 = vsel %vm7690, %v7434, %v7946
        %v8203 = vsel %vm7691, %v7435, %v7947
        %v8204 = vsel %vm7692, %v7436, %v7948
        %v8205 = vsel %vm7693, %v7437, %v7949
        %v8206 = vsel %vm7694, %v7438, %v7950
        %v8207 = vsel %vm7695, %v7439, %v7951
        %v8208 = vsel %vm7696, %v7440, %v7952
        %v8209 = vsel %vm7697, %v7441, %v7953
        %v8210 = vsel %vm7698, %v7442, %v7954
        %v8211 = vsel %vm7699, %v7443, %v7955
        %v8212 = vsel %vm7700, %v7444, %v7956
        %v8213 = vsel %vm7701, %v7445, %v7957
        %v8214 = vsel %vm7702, %v7446, %v7958
        %v8215 = vsel %vm7703, %v7447, %v7959
        %v8216 = vsel %vm7704, %v7448, %v7960
        %v8217 = vsel %vm7705, %v7449, %v7961
        %v8218 = vsel %vm7706, %v7450, %v7962
        %v8219 = vsel %vm7707, %v7451, %v7963
        %v8220 = vsel %vm7708, %v7452, %v7964
        %v8221 = vsel %vm7709, %v7453, %v7965
        %v8222 = vsel %vm7710, %v7454, %v7966
        %v8223 = vsel %vm7711, %v7455, %v7967
        %v8224 = vsel %vm7712, %v7456, %v7968
        %v8225 = vsel %vm7713, %v7457, %v7969
        %v8226 = vsel %vm7714, %v7458, %v7970
        %v8227 = vsel %vm7715, %v7459, %v7971
        %v8228 = vsel %vm7716, %v7460, %v7972
        %v8229 = vsel %vm7717, %v7461, %v7973
        %v8230 = vsel %vm7718, %v7462, %v7974
        %v8231 = vsel %vm7719, %v7463, %v7975
        %v8232 = vsel %vm7720, %v7464, %v7976
        %v8233 = vsel %vm7721, %v7465, %v7977
        %v8234 = vsel %vm7722, %v7466, %v7978
        %v8235 = vsel %vm7723, %v7467, %v7979
        %v8236 = vsel %vm7724, %v7468, %v7980
        %v8237 = vsel %vm7725, %v7469, %v7981
        %v8238 = vsel %vm7726, %v7470, %v7982
        %v8239 = vsel %vm7727, %v7471, %v7983
        %v8240 = vsel %vm7728, %v7472, %v7984
        %v8241 = vsel %vm7729, %v7473, %v7985
        %v8242 = vsel %vm7730, %v7474, %v7986
        %v8243 = vsel %vm7731, %v7475, %v7987
        %v8244 = vsel %vm7732, %v7476, %v7988
        %v8245 = vsel %vm7733, %v7477, %v7989
        %v8246 = vsel %vm7734, %v7478, %v7990
        %v8247 = vsel %vm7735, %v7479, %v7991
        %v8248 = vpack.c.bf16 %v8000, %v7992
        %v8249 = vpack.c.bf16 %v8001, %v7993
        %v8250 = vpack.c.bf16 %v8002, %v7994
        %v8251 = vpack.c.bf16 %v8003, %v7995
        %v8252 = vpack.c.bf16 %v8004, %v7996
        %v8253 = vpack.c.bf16 %v8005, %v7997
        %v8254 = vpack.c.bf16 %v8006, %v7998
        %v8255 = vpack.c.bf16 %v8007, %v7999
        %v8256 = vpack.c.bf16 %v8016, %v8008
        %v8257 = vpack.c.bf16 %v8017, %v8009
        %v8258 = vpack.c.bf16 %v8018, %v8010
        %v8259 = vpack.c.bf16 %v8019, %v8011
        %v8260 = vpack.c.bf16 %v8020, %v8012
        %v8261 = vpack.c.bf16 %v8021, %v8013
        %v8262 = vpack.c.bf16 %v8022, %v8014
        %v8263 = vpack.c.bf16 %v8023, %v8015
        %v8264 = vpack.c.bf16 %v8032, %v8024
        %v8265 = vpack.c.bf16 %v8033, %v8025
        %v8266 = vpack.c.bf16 %v8034, %v8026
        %v8267 = vpack.c.bf16 %v8035, %v8027
        %v8268 = vpack.c.bf16 %v8036, %v8028
        %v8269 = vpack.c.bf16 %v8037, %v8029
        %v8270 = vpack.c.bf16 %v8038, %v8030
        %v8271 = vpack.c.bf16 %v8039, %v8031
        %v8272 = vpack.c.bf16 %v8048, %v8040
        %v8273 = vpack.c.bf16 %v8049, %v8041
        %v8274 = vpack.c.bf16 %v8050, %v8042
        %v8275 = vpack.c.bf16 %v8051, %v8043
        %v8276 = vpack.c.bf16 %v8052, %v8044
        %v8277 = vpack.c.bf16 %v8053, %v8045
        %v8278 = vpack.c.bf16 %v8054, %v8046
        %v8279 = vpack.c.bf16 %v8055, %v8047
        %v8280 = vpack.c.bf16 %v8064, %v8056
        %v8281 = vpack.c.bf16 %v8065, %v8057
        %v8282 = vpack.c.bf16 %v8066, %v8058
        %v8283 = vpack.c.bf16 %v8067, %v8059
        %v8284 = vpack.c.bf16 %v8068, %v8060
        %v8285 = vpack.c.bf16 %v8069, %v8061
        %v8286 = vpack.c.bf16 %v8070, %v8062
        %v8287 = vpack.c.bf16 %v8071, %v8063
        %v8288 = vpack.c.bf16 %v8080, %v8072
        %v8289 = vpack.c.bf16 %v8081, %v8073
        %v8290 = vpack.c.bf16 %v8082, %v8074
        %v8291 = vpack.c.bf16 %v8083, %v8075
        %v8292 = vpack.c.bf16 %v8084, %v8076
        %v8293 = vpack.c.bf16 %v8085, %v8077
        %v8294 = vpack.c.bf16 %v8086, %v8078
        %v8295 = vpack.c.bf16 %v8087, %v8079
        %v8296 = vpack.c.bf16 %v8096, %v8088
        %v8297 = vpack.c.bf16 %v8097, %v8089
        %v8298 = vpack.c.bf16 %v8098, %v8090
        %v8299 = vpack.c.bf16 %v8099, %v8091
        %v8300 = vpack.c.bf16 %v8100, %v8092
        %v8301 = vpack.c.bf16 %v8101, %v8093
        %v8302 = vpack.c.bf16 %v8102, %v8094
        %v8303 = vpack.c.bf16 %v8103, %v8095
        %v8304 = vpack.c.bf16 %v8112, %v8104
        %v8305 = vpack.c.bf16 %v8113, %v8105
        %v8306 = vpack.c.bf16 %v8114, %v8106
        %v8307 = vpack.c.bf16 %v8115, %v8107
        %v8308 = vpack.c.bf16 %v8116, %v8108
        %v8309 = vpack.c.bf16 %v8117, %v8109
        %v8310 = vpack.c.bf16 %v8118, %v8110
        %v8311 = vpack.c.bf16 %v8119, %v8111
        %v8312 = vpack.c.bf16 %v8128, %v8120
        %v8313 = vpack.c.bf16 %v8129, %v8121
        %v8314 = vpack.c.bf16 %v8130, %v8122
        %v8315 = vpack.c.bf16 %v8131, %v8123
        %v8316 = vpack.c.bf16 %v8132, %v8124
        %v8317 = vpack.c.bf16 %v8133, %v8125
        %v8318 = vpack.c.bf16 %v8134, %v8126
        %v8319 = vpack.c.bf16 %v8135, %v8127
        %v8320 = vpack.c.bf16 %v8144, %v8136
        %v8321 = vpack.c.bf16 %v8145, %v8137
        %v8322 = vpack.c.bf16 %v8146, %v8138
        %v8323 = vpack.c.bf16 %v8147, %v8139
        %v8324 = vpack.c.bf16 %v8148, %v8140
        %v8325 = vpack.c.bf16 %v8149, %v8141
        %v8326 = vpack.c.bf16 %v8150, %v8142
        %v8327 = vpack.c.bf16 %v8151, %v8143
        %v8328 = vpack.c.bf16 %v8160, %v8152
        %v8329 = vpack.c.bf16 %v8161, %v8153
        %v8330 = vpack.c.bf16 %v8162, %v8154
        %v8331 = vpack.c.bf16 %v8163, %v8155
        %v8332 = vpack.c.bf16 %v8164, %v8156
        %v8333 = vpack.c.bf16 %v8165, %v8157
        %v8334 = vpack.c.bf16 %v8166, %v8158
        %v8335 = vpack.c.bf16 %v8167, %v8159
        %v8336 = vpack.c.bf16 %v8176, %v8168
        %v8337 = vpack.c.bf16 %v8177, %v8169
        %v8338 = vpack.c.bf16 %v8178, %v8170
        %v8339 = vpack.c.bf16 %v8179, %v8171
        %v8340 = vpack.c.bf16 %v8180, %v8172
        %v8341 = vpack.c.bf16 %v8181, %v8173
        %v8342 = vpack.c.bf16 %v8182, %v8174
        %v8343 = vpack.c.bf16 %v8183, %v8175
        %v8344 = vpack.c.bf16 %v8192, %v8184
        %v8345 = vpack.c.bf16 %v8193, %v8185
        %v8346 = vpack.c.bf16 %v8194, %v8186
        %v8347 = vpack.c.bf16 %v8195, %v8187
        %v8348 = vpack.c.bf16 %v8196, %v8188
        %v8349 = vpack.c.bf16 %v8197, %v8189
        %v8350 = vpack.c.bf16 %v8198, %v8190
        %v8351 = vpack.c.bf16 %v8199, %v8191
        %v8352 = vpack.c.bf16 %v8208, %v8200
        %v8353 = vpack.c.bf16 %v8209, %v8201
        %v8354 = vpack.c.bf16 %v8210, %v8202
        %v8355 = vpack.c.bf16 %v8211, %v8203
        %v8356 = vpack.c.bf16 %v8212, %v8204
        %v8357 = vpack.c.bf16 %v8213, %v8205
        %v8358 = vpack.c.bf16 %v8214, %v8206
        %v8359 = vpack.c.bf16 %v8215, %v8207
        %v8360 = vpack.c.bf16 %v8224, %v8216
        %v8361 = vpack.c.bf16 %v8225, %v8217
        %v8362 = vpack.c.bf16 %v8226, %v8218
        %v8363 = vpack.c.bf16 %v8227, %v8219
        %v8364 = vpack.c.bf16 %v8228, %v8220
        %v8365 = vpack.c.bf16 %v8229, %v8221
        %v8366 = vpack.c.bf16 %v8230, %v8222
        %v8367 = vpack.c.bf16 %v8231, %v8223
        %v8368 = vpack.c.bf16 %v8240, %v8232
        %v8369 = vpack.c.bf16 %v8241, %v8233
        %v8370 = vpack.c.bf16 %v8242, %v8234
        %v8371 = vpack.c.bf16 %v8243, %v8235
        %v8372 = vpack.c.bf16 %v8244, %v8236
        %v8373 = vpack.c.bf16 %v8245, %v8237
        %v8374 = vpack.c.bf16 %v8246, %v8238
        %v8375 = vpack.c.bf16 %v8247, %v8239
        %v8376 = vld [vmem:[#allocation17] sm:$0xff]
        %v8377 = vld [vmem:[#allocation17 + $0x8] sm:$0xff]
        %v8378 = vld [vmem:[#allocation17 + $0x10] sm:$0xff]
        %v8379 = vld [vmem:[#allocation17 + $0x18] sm:$0xff]
        %v8380 = vld [vmem:[#allocation17 + $0x20] sm:$0xff]
        %v8381 = vld [vmem:[#allocation17 + $0x28] sm:$0xff]
        %v8382 = vld [vmem:[#allocation17 + $0x30] sm:$0xff]
        %v8383 = vld [vmem:[#allocation17 + $0x38] sm:$0xff]
        %v8384 = vld [vmem:[#allocation17 + $0x40] sm:$0xff]
        %v8385 = vld [vmem:[#allocation17 + $0x48] sm:$0xff]
        %v8386 = vld [vmem:[#allocation17 + $0x50] sm:$0xff]
        %v8387 = vld [vmem:[#allocation17 + $0x58] sm:$0xff]
        %v8388 = vld [vmem:[#allocation17 + $0x60] sm:$0xff]
        %v8389 = vld [vmem:[#allocation17 + $0x68] sm:$0xff]
        %v8390 = vld [vmem:[#allocation17 + $0x70] sm:$0xff]
        %v8391 = vld [vmem:[#allocation17 + $0x78] sm:$0xff]
        %v8392 = vld [vmem:[#allocation17 + $0x80] sm:$0xff]
        %v8393 = vld [vmem:[#allocation17 + $0x88] sm:$0xff]
        %v8394 = vld [vmem:[#allocation17 + $0x90] sm:$0xff]
        %v8395 = vld [vmem:[#allocation17 + $0x98] sm:$0xff]
        %v8396 = vld [vmem:[#allocation17 + $0xa0] sm:$0xff]
        %v8397 = vld [vmem:[#allocation17 + $0xa8] sm:$0xff]
        %v8398 = vld [vmem:[#allocation17 + $0xb0] sm:$0xff]
        %v8399 = vld [vmem:[#allocation17 + $0xb8] sm:$0xff]
        %v8400 = vld [vmem:[#allocation17 + $0xc0] sm:$0xff]
        %v8401 = vld [vmem:[#allocation17 + $0xc8] sm:$0xff]
        %v8402 = vld [vmem:[#allocation17 + $0xd0] sm:$0xff]
        %v8403 = vld [vmem:[#allocation17 + $0xd8] sm:$0xff]
        %v8404 = vld [vmem:[#allocation17 + $0xe0] sm:$0xff]
        %v8405 = vld [vmem:[#allocation17 + $0xe8] sm:$0xff]
        %v8406 = vld [vmem:[#allocation17 + $0xf0] sm:$0xff]
        %v8407 = vld [vmem:[#allocation17 + $0xf8] sm:$0xff]
        %v8408 = vunpack.c.l.s8.bf16 %v8376
        %v8409 = vunpack.c.h.s8.bf16 %v8376
        %v8410 = vunpack.c.l.s8.bf16 %v8377
        %v8411 = vunpack.c.h.s8.bf16 %v8377
        %v8412 = vunpack.c.l.s8.bf16 %v8378
        %v8413 = vunpack.c.h.s8.bf16 %v8378
        %v8414 = vunpack.c.l.s8.bf16 %v8379
        %v8415 = vunpack.c.h.s8.bf16 %v8379
        %v8416 = vunpack.c.l.s8.bf16 %v8380
        %v8417 = vunpack.c.h.s8.bf16 %v8380
        %v8418 = vunpack.c.l.s8.bf16 %v8381
        %v8419 = vunpack.c.h.s8.bf16 %v8381
        %v8420 = vunpack.c.l.s8.bf16 %v8382
        %v8421 = vunpack.c.h.s8.bf16 %v8382
        %v8422 = vunpack.c.l.s8.bf16 %v8383
        %v8423 = vunpack.c.h.s8.bf16 %v8383
        %v8424 = vunpack.c.l.s8.bf16 %v8384
        %v8425 = vunpack.c.h.s8.bf16 %v8384
        %v8426 = vunpack.c.l.s8.bf16 %v8385
        %v8427 = vunpack.c.h.s8.bf16 %v8385
        %v8428 = vunpack.c.l.s8.bf16 %v8386
        %v8429 = vunpack.c.h.s8.bf16 %v8386
        %v8430 = vunpack.c.l.s8.bf16 %v8387
        %v8431 = vunpack.c.h.s8.bf16 %v8387
        %v8432 = vunpack.c.l.s8.bf16 %v8388
        %v8433 = vunpack.c.h.s8.bf16 %v8388
        %v8434 = vunpack.c.l.s8.bf16 %v8389
        %v8435 = vunpack.c.h.s8.bf16 %v8389
        %v8436 = vunpack.c.l.s8.bf16 %v8390
        %v8437 = vunpack.c.h.s8.bf16 %v8390
        %v8438 = vunpack.c.l.s8.bf16 %v8391
        %v8439 = vunpack.c.h.s8.bf16 %v8391
        %v8440 = vunpack.c.l.s8.bf16 %v8392
        %v8441 = vunpack.c.h.s8.bf16 %v8392
        %v8442 = vunpack.c.l.s8.bf16 %v8393
        %v8443 = vunpack.c.h.s8.bf16 %v8393
        %v8444 = vunpack.c.l.s8.bf16 %v8394
        %v8445 = vunpack.c.h.s8.bf16 %v8394
        %v8446 = vunpack.c.l.s8.bf16 %v8395
        %v8447 = vunpack.c.h.s8.bf16 %v8395
        %v8448 = vunpack.c.l.s8.bf16 %v8396
        %v8449 = vunpack.c.h.s8.bf16 %v8396
        %v8450 = vunpack.c.l.s8.bf16 %v8397
        %v8451 = vunpack.c.h.s8.bf16 %v8397
        %v8452 = vunpack.c.l.s8.bf16 %v8398
        %v8453 = vunpack.c.h.s8.bf16 %v8398
        %v8454 = vunpack.c.l.s8.bf16 %v8399
        %v8455 = vunpack.c.h.s8.bf16 %v8399
        %v8456 = vunpack.c.l.s8.bf16 %v8400
        %v8457 = vunpack.c.h.s8.bf16 %v8400
        %v8458 = vunpack.c.l.s8.bf16 %v8401
        %v8459 = vunpack.c.h.s8.bf16 %v8401
        %v8460 = vunpack.c.l.s8.bf16 %v8402
        %v8461 = vunpack.c.h.s8.bf16 %v8402
        %v8462 = vunpack.c.l.s8.bf16 %v8403
        %v8463 = vunpack.c.h.s8.bf16 %v8403
        %v8464 = vunpack.c.l.s8.bf16 %v8404
        %v8465 = vunpack.c.h.s8.bf16 %v8404
        %v8466 = vunpack.c.l.s8.bf16 %v8405
        %v8467 = vunpack.c.h.s8.bf16 %v8405
        %v8468 = vunpack.c.l.s8.bf16 %v8406
        %v8469 = vunpack.c.h.s8.bf16 %v8406
        %v8470 = vunpack.c.l.s8.bf16 %v8407
        %v8471 = vunpack.c.h.s8.bf16 %v8407
        %8472 = vmatprep.subr.bf16.mxu0 0
        %8473 = vmatpush1.bf16.msra.mxu0 %v8408
        %8474 = vmatprep.subr.bf16.mxu0 0
        %8475 = vmatpush1.bf16.msra.mxu0 %v8409
        %8476 = vmatprep.subr.bf16.mxu0 0
        %8477 = vmatpush1.bf16.msra.mxu0 %v8410
        %8478 = vmatprep.subr.bf16.mxu0 0
        %8479 = vmatpush1.bf16.msra.mxu0 %v8411
        %8480 = vmatprep.subr.bf16.mxu0 0
        %8481 = vmatpush1.bf16.msra.mxu0 %v8412
        %8482 = vmatprep.subr.bf16.mxu0 0
        %8483 = vmatpush1.bf16.msra.mxu0 %v8413
        %8484 = vmatprep.subr.bf16.mxu0 0
        %8485 = vmatpush1.bf16.msra.mxu0 %v8414
        %8486 = vmatprep.subr.bf16.mxu0 0
        %8487 = vmatpush1.bf16.msra.mxu0 %v8415
        %8488 = vmatprep.subr.bf16.mxu0 0
        %8489 = vmatpush1.bf16.msra.mxu0 %v8416
        %8490 = vmatprep.subr.bf16.mxu0 0
        %8491 = vmatpush1.bf16.msra.mxu0 %v8417
        %8492 = vmatprep.subr.bf16.mxu0 0
        %8493 = vmatpush1.bf16.msra.mxu0 %v8418
        %8494 = vmatprep.subr.bf16.mxu0 0
        %8495 = vmatpush1.bf16.msra.mxu0 %v8419
        %8496 = vmatprep.subr.bf16.mxu0 0
        %8497 = vmatpush1.bf16.msra.mxu0 %v8420
        %8498 = vmatprep.subr.bf16.mxu0 0
        %8499 = vmatpush1.bf16.msra.mxu0 %v8421
        %8500 = vmatprep.subr.bf16.mxu0 0
        %8501 = vmatpush1.bf16.msra.mxu0 %v8422
        %8502 = vmatprep.subr.bf16.mxu0 0
        %8503 = vmatpush1.bf16.msra.mxu0 %v8423
        %8504 = vmatprep.mubr.bf16.mxu0 %v8249
        %8505 = vmatmul.mubr.bf16.gmra.mrb[0].mxu0 %v8248
        %v8506 = vpop.f32.mrb[0].mxu0
        %v8507 = vadd.f32 0.0, %v8506
        %v8508 = vpop.f32.mrb[0].mxu0
        %v8509 = vpop.f32.mrb[0].mxu0
        %v8510 = vadd.f32 0.0, %v8509
        %v8511 = vpop.f32.mrb[0].mxu0
        %8512 = vmatprep.mubr.bf16.mxu0 %v8257
        %8513 = vmatmul.mubr.bf16.gmra.mrb[0].mxu0 %v8256
        %v8514 = vpop.f32.mrb[0].mxu0
        %v8515 = vadd.f32 0.0, %v8514
        %v8516 = vpop.f32.mrb[0].mxu0
        %v8517 = vpop.f32.mrb[0].mxu0
        %v8518 = vadd.f32 0.0, %v8517
        %v8519 = vpop.f32.mrb[0].mxu0
        %8520 = vmatprep.mubr.bf16.mxu0 %v8265
        %8521 = vmatmul.mubr.bf16.gmra.mrb[0].mxu0 %v8264
        %v8522 = vpop.f32.mrb[0].mxu0
        %v8523 = vadd.f32 0.0, %v8522
        %v8524 = vpop.f32.mrb[0].mxu0
        %v8525 = vpop.f32.mrb[0].mxu0
        %v8526 = vadd.f32 0.0, %v8525
        %v8527 = vpop.f32.mrb[0].mxu0
        %8528 = vmatprep.mubr.bf16.mxu0 %v8273
        %8529 = vmatmul.mubr.bf16.gmra.mrb[0].mxu0 %v8272
        %v8530 = vpop.f32.mrb[0].mxu0
        %v8531 = vadd.f32 0.0, %v8530
        %v8532 = vpop.f32.mrb[0].mxu0
        %v8533 = vpop.f32.mrb[0].mxu0
        %v8534 = vadd.f32 0.0, %v8533
        %v8535 = vpop.f32.mrb[0].mxu0
        %8536 = vmatprep.mubr.bf16.mxu0 %v8281
        %8537 = vmatmul.mubr.bf16.gmra.mrb[0].mxu0 %v8280
        %v8538 = vpop.f32.mrb[0].mxu0
        %v8539 = vadd.f32 0.0, %v8538
        %v8540 = vpop.f32.mrb[0].mxu0
        %v8541 = vpop.f32.mrb[0].mxu0
        %v8542 = vadd.f32 0.0, %v8541
        %v8543 = vpop.f32.mrb[0].mxu0
        %8544 = vmatprep.mubr.bf16.mxu0 %v8289
        %8545 = vmatmul.mubr.bf16.gmra.mrb[0].mxu0 %v8288
        %v8546 = vpop.f32.mrb[0].mxu0
        %v8547 = vadd.f32 0.0, %v8546
        %v8548 = vpop.f32.mrb[0].mxu0
        %v8549 = vpop.f32.mrb[0].mxu0
        %v8550 = vadd.f32 0.0, %v8549
        %v8551 = vpop.f32.mrb[0].mxu0
        %8552 = vmatprep.mubr.bf16.mxu0 %v8297
        %8553 = vmatmul.mubr.bf16.gmra.mrb[0].mxu0 %v8296
        %v8554 = vpop.f32.mrb[0].mxu0
        %v8555 = vadd.f32 0.0, %v8554
        %v8556 = vpop.f32.mrb[0].mxu0
        %v8557 = vpop.f32.mrb[0].mxu0
        %v8558 = vadd.f32 0.0, %v8557
        %v8559 = vpop.f32.mrb[0].mxu0
        %8560 = vmatprep.mubr.bf16.mxu0 %v8305
        %8561 = vmatmul.mubr.bf16.gmra.mrb[0].mxu0 %v8304
        %v8562 = vpop.f32.mrb[0].mxu0
        %v8563 = vadd.f32 0.0, %v8562
        %v8564 = vpop.f32.mrb[0].mxu0
        %v8565 = vpop.f32.mrb[0].mxu0
        %v8566 = vadd.f32 0.0, %v8565
        %v8567 = vpop.f32.mrb[0].mxu0
        %8568 = vmatprep.mubr.bf16.mxu0 %v8313
        %8569 = vmatmul.mubr.bf16.gmra.mrb[0].mxu0 %v8312
        %v8570 = vpop.f32.mrb[0].mxu0
        %v8571 = vadd.f32 0.0, %v8570
        %v8572 = vpop.f32.mrb[0].mxu0
        %v8573 = vpop.f32.mrb[0].mxu0
        %v8574 = vadd.f32 0.0, %v8573
        %v8575 = vpop.f32.mrb[0].mxu0
        %8576 = vmatprep.mubr.bf16.mxu0 %v8321
        %8577 = vmatmul.mubr.bf16.gmra.mrb[0].mxu0 %v8320
        %v8578 = vpop.f32.mrb[0].mxu0
        %v8579 = vadd.f32 0.0, %v8578
        %v8580 = vpop.f32.mrb[0].mxu0
        %v8581 = vpop.f32.mrb[0].mxu0
        %v8582 = vadd.f32 0.0, %v8581
        %v8583 = vpop.f32.mrb[0].mxu0
        %8584 = vmatprep.mubr.bf16.mxu0 %v8329
        %8585 = vmatmul.mubr.bf16.gmra.mrb[0].mxu0 %v8328
        %v8586 = vpop.f32.mrb[0].mxu0
        %v8587 = vadd.f32 0.0, %v8586
        %v8588 = vpop.f32.mrb[0].mxu0
        %v8589 = vpop.f32.mrb[0].mxu0
        %v8590 = vadd.f32 0.0, %v8589
        %v8591 = vpop.f32.mrb[0].mxu0
        %8592 = vmatprep.mubr.bf16.mxu0 %v8337
        %8593 = vmatmul.mubr.bf16.gmra.mrb[0].mxu0 %v8336
        %v8594 = vpop.f32.mrb[0].mxu0
        %v8595 = vadd.f32 0.0, %v8594
        %v8596 = vpop.f32.mrb[0].mxu0
        %v8597 = vpop.f32.mrb[0].mxu0
        %v8598 = vadd.f32 0.0, %v8597
        %v8599 = vpop.f32.mrb[0].mxu0
        %8600 = vmatprep.mubr.bf16.mxu0 %v8345
        %8601 = vmatmul.mubr.bf16.gmra.mrb[0].mxu0 %v8344
        %v8602 = vpop.f32.mrb[0].mxu0
        %v8603 = vadd.f32 0.0, %v8602
        %v8604 = vpop.f32.mrb[0].mxu0
        %v8605 = vpop.f32.mrb[0].mxu0
        %v8606 = vadd.f32 0.0, %v8605
        %v8607 = vpop.f32.mrb[0].mxu0
        %8608 = vmatprep.mubr.bf16.mxu0 %v8353
        %8609 = vmatmul.mubr.bf16.gmra.mrb[0].mxu0 %v8352
        %v8610 = vpop.f32.mrb[0].mxu0
        %v8611 = vadd.f32 0.0, %v8610
        %v8612 = vpop.f32.mrb[0].mxu0
        %v8613 = vpop.f32.mrb[0].mxu0
        %v8614 = vadd.f32 0.0, %v8613
        %v8615 = vpop.f32.mrb[0].mxu0
        %8616 = vmatprep.mubr.bf16.mxu0 %v8361
        %8617 = vmatmul.mubr.bf16.gmra.mrb[0].mxu0 %v8360
        %v8618 = vpop.f32.mrb[0].mxu0
        %v8619 = vadd.f32 0.0, %v8618
        %v8620 = vpop.f32.mrb[0].mxu0
        %v8621 = vpop.f32.mrb[0].mxu0
        %v8622 = vadd.f32 0.0, %v8621
        %v8623 = vpop.f32.mrb[0].mxu0
        %8624 = vmatprep.mubr.bf16.mxu0 %v8369
        %8625 = vmatmul.mubr.bf16.gmra.mrb[0].mxu0 %v8368
        %v8626 = vpop.f32.mrb[0].mxu0
        %v8627 = vadd.f32 0.0, %v8626
        %v8628 = vpop.f32.mrb[0].mxu0
        %v8629 = vpop.f32.mrb[0].mxu0
        %v8630 = vadd.f32 0.0, %v8629
        %v8631 = vpop.f32.mrb[0].mxu0
        %8632 = vdwg.mxu0
        %8633 = vmatprep.subr.bf16.mxu0 0
        %8634 = vmatpush1.bf16.msra.mxu0 %v8424
        %8635 = vmatprep.subr.bf16.mxu0 0
        %8636 = vmatpush1.bf16.msra.mxu0 %v8425
        %8637 = vmatprep.subr.bf16.mxu0 0
        %8638 = vmatpush1.bf16.msra.mxu0 %v8426
        %8639 = vmatprep.subr.bf16.mxu0 0
        %8640 = vmatpush1.bf16.msra.mxu0 %v8427
        %8641 = vmatprep.subr.bf16.mxu0 0
        %8642 = vmatpush1.bf16.msra.mxu0 %v8428
        %8643 = vmatprep.subr.bf16.mxu0 0
        %8644 = vmatpush1.bf16.msra.mxu0 %v8429
        %8645 = vmatprep.subr.bf16.mxu0 0
        %8646 = vmatpush1.bf16.msra.mxu0 %v8430
        %8647 = vmatprep.subr.bf16.mxu0 0
        %8648 = vmatpush1.bf16.msra.mxu0 %v8431
        %8649 = vmatprep.subr.bf16.mxu0 0
        %8650 = vmatpush1.bf16.msra.mxu0 %v8432
        %8651 = vmatprep.subr.bf16.mxu0 0
        %8652 = vmatpush1.bf16.msra.mxu0 %v8433
        %8653 = vmatprep.subr.bf16.mxu0 0
        %8654 = vmatpush1.bf16.msra.mxu0 %v8434
        %8655 = vmatprep.subr.bf16.mxu0 0
        %8656 = vmatpush1.bf16.msra.mxu0 %v8435
        %8657 = vmatprep.subr.bf16.mxu0 0
        %8658 = vmatpush1.bf16.msra.mxu0 %v8436
        %8659 = vmatprep.subr.bf16.mxu0 0
        %8660 = vmatpush1.bf16.msra.mxu0 %v8437
        %8661 = vmatprep.subr.bf16.mxu0 0
        %8662 = vmatpush1.bf16.msra.mxu0 %v8438
        %8663 = vmatprep.subr.bf16.mxu0 0
        %8664 = vmatpush1.bf16.msra.mxu0 %v8439
        %8665 = vmatprep.mubr.bf16.mxu0 %v8251
        %8666 = vmatmul.mubr.bf16.gmra.mrb[0].mxu0 %v8250
        %v8667 = vpop.f32.mrb[0].mxu0
        %v8668 = vadd.f32 %v8507, %v8667
        %v8669 = vpop.f32.mrb[0].mxu0
        %v8670 = vpop.f32.mrb[0].mxu0
        %v8671 = vadd.f32 %v8510, %v8670
        %v8672 = vpop.f32.mrb[0].mxu0
        %8673 = vmatprep.mubr.bf16.mxu0 %v8259
        %8674 = vmatmul.mubr.bf16.gmra.mrb[0].mxu0 %v8258
        %v8675 = vpop.f32.mrb[0].mxu0
        %v8676 = vadd.f32 %v8515, %v8675
        %v8677 = vpop.f32.mrb[0].mxu0
        %v8678 = vpop.f32.mrb[0].mxu0
        %v8679 = vadd.f32 %v8518, %v8678
        %v8680 = vpop.f32.mrb[0].mxu0
        %8681 = vmatprep.mubr.bf16.mxu0 %v8267
        %8682 = vmatmul.mubr.bf16.gmra.mrb[0].mxu0 %v8266
        %v8683 = vpop.f32.mrb[0].mxu0
        %v8684 = vadd.f32 %v8523, %v8683
        %v8685 = vpop.f32.mrb[0].mxu0
        %v8686 = vpop.f32.mrb[0].mxu0
        %v8687 = vadd.f32 %v8526, %v8686
        %v8688 = vpop.f32.mrb[0].mxu0
        %8689 = vmatprep.mubr.bf16.mxu0 %v8275
        %8690 = vmatmul.mubr.bf16.gmra.mrb[0].mxu0 %v8274
        %v8691 = vpop.f32.mrb[0].mxu0
        %v8692 = vadd.f32 %v8531, %v8691
        %v8693 = vpop.f32.mrb[0].mxu0
        %v8694 = vpop.f32.mrb[0].mxu0
        %v8695 = vadd.f32 %v8534, %v8694
        %v8696 = vpop.f32.mrb[0].mxu0
        %8697 = vmatprep.mubr.bf16.mxu0 %v8283
        %8698 = vmatmul.mubr.bf16.gmra.mrb[0].mxu0 %v8282
        %v8699 = vpop.f32.mrb[0].mxu0
        %v8700 = vadd.f32 %v8539, %v8699
        %v8701 = vpop.f32.mrb[0].mxu0
        %v8702 = vpop.f32.mrb[0].mxu0
        %v8703 = vadd.f32 %v8542, %v8702
        %v8704 = vpop.f32.mrb[0].mxu0
        %8705 = vmatprep.mubr.bf16.mxu0 %v8291
        %8706 = vmatmul.mubr.bf16.gmra.mrb[0].mxu0 %v8290
        %v8707 = vpop.f32.mrb[0].mxu0
        %v8708 = vadd.f32 %v8547, %v8707
        %v8709 = vpop.f32.mrb[0].mxu0
        %v8710 = vpop.f32.mrb[0].mxu0
        %v8711 = vadd.f32 %v8550, %v8710
        %v8712 = vpop.f32.mrb[0].mxu0
        %8713 = vmatprep.mubr.bf16.mxu0 %v8299
        %8714 = vmatmul.mubr.bf16.gmra.mrb[0].mxu0 %v8298
        %v8715 = vpop.f32.mrb[0].mxu0
        %v8716 = vadd.f32 %v8555, %v8715
        %v8717 = vpop.f32.mrb[0].mxu0
        %v8718 = vpop.f32.mrb[0].mxu0
        %v8719 = vadd.f32 %v8558, %v8718
        %v8720 = vpop.f32.mrb[0].mxu0
        %8721 = vmatprep.mubr.bf16.mxu0 %v8307
        %8722 = vmatmul.mubr.bf16.gmra.mrb[0].mxu0 %v8306
        %v8723 = vpop.f32.mrb[0].mxu0
        %v8724 = vadd.f32 %v8563, %v8723
        %v8725 = vpop.f32.mrb[0].mxu0
        %v8726 = vpop.f32.mrb[0].mxu0
        %v8727 = vadd.f32 %v8566, %v8726
        %v8728 = vpop.f32.mrb[0].mxu0
        %8729 = vmatprep.mubr.bf16.mxu0 %v8315
        %8730 = vmatmul.mubr.bf16.gmra.mrb[0].mxu0 %v8314
        %v8731 = vpop.f32.mrb[0].mxu0
        %v8732 = vadd.f32 %v8571, %v8731
        %v8733 = vpop.f32.mrb[0].mxu0
        %v8734 = vpop.f32.mrb[0].mxu0
        %v8735 = vadd.f32 %v8574, %v8734
        %v8736 = vpop.f32.mrb[0].mxu0
        %8737 = vmatprep.mubr.bf16.mxu0 %v8323
        %8738 = vmatmul.mubr.bf16.gmra.mrb[0].mxu0 %v8322
        %v8739 = vpop.f32.mrb[0].mxu0
        %v8740 = vadd.f32 %v8579, %v8739
        %v8741 = vpop.f32.mrb[0].mxu0
        %v8742 = vpop.f32.mrb[0].mxu0
        %v8743 = vadd.f32 %v8582, %v8742
        %v8744 = vpop.f32.mrb[0].mxu0
        %8745 = vmatprep.mubr.bf16.mxu0 %v8331
        %8746 = vmatmul.mubr.bf16.gmra.mrb[0].mxu0 %v8330
        %v8747 = vpop.f32.mrb[0].mxu0
        %v8748 = vadd.f32 %v8587, %v8747
        %v8749 = vpop.f32.mrb[0].mxu0
        %v8750 = vpop.f32.mrb[0].mxu0
        %v8751 = vadd.f32 %v8590, %v8750
        %v8752 = vpop.f32.mrb[0].mxu0
        %8753 = vmatprep.mubr.bf16.mxu0 %v8339
        %8754 = vmatmul.mubr.bf16.gmra.mrb[0].mxu0 %v8338
        %v8755 = vpop.f32.mrb[0].mxu0
        %v8756 = vadd.f32 %v8595, %v8755
        %v8757 = vpop.f32.mrb[0].mxu0
        %v8758 = vpop.f32.mrb[0].mxu0
        %v8759 = vadd.f32 %v8598, %v8758
        %v8760 = vpop.f32.mrb[0].mxu0
        %8761 = vmatprep.mubr.bf16.mxu0 %v8347
        %8762 = vmatmul.mubr.bf16.gmra.mrb[0].mxu0 %v8346
        %v8763 = vpop.f32.mrb[0].mxu0
        %v8764 = vadd.f32 %v8603, %v8763
        %v8765 = vpop.f32.mrb[0].mxu0
        %v8766 = vpop.f32.mrb[0].mxu0
        %v8767 = vadd.f32 %v8606, %v8766
        %v8768 = vpop.f32.mrb[0].mxu0
        %8769 = vmatprep.mubr.bf16.mxu0 %v8355
        %8770 = vmatmul.mubr.bf16.gmra.mrb[0].mxu0 %v8354
        %v8771 = vpop.f32.mrb[0].mxu0
        %v8772 = vadd.f32 %v8611, %v8771
        %v8773 = vpop.f32.mrb[0].mxu0
        %v8774 = vpop.f32.mrb[0].mxu0
        %v8775 = vadd.f32 %v8614, %v8774
        %v8776 = vpop.f32.mrb[0].mxu0
        %8777 = vmatprep.mubr.bf16.mxu0 %v8363
        %8778 = vmatmul.mubr.bf16.gmra.mrb[0].mxu0 %v8362
        %v8779 = vpop.f32.mrb[0].mxu0
        %v8780 = vadd.f32 %v8619, %v8779
        %v8781 = vpop.f32.mrb[0].mxu0
        %v8782 = vpop.f32.mrb[0].mxu0
        %v8783 = vadd.f32 %v8622, %v8782
        %v8784 = vpop.f32.mrb[0].mxu0
        %8785 = vmatprep.mubr.bf16.mxu0 %v8371
        %8786 = vmatmul.mubr.bf16.gmra.mrb[0].mxu0 %v8370
        %v8787 = vpop.f32.mrb[0].mxu0
        %v8788 = vadd.f32 %v8627, %v8787
        %v8789 = vpop.f32.mrb[0].mxu0
        %v8790 = vpop.f32.mrb[0].mxu0
        %v8791 = vadd.f32 %v8630, %v8790
        %v8792 = vpop.f32.mrb[0].mxu0
        %8793 = vdwg.mxu0
        %8794 = vmatprep.subr.bf16.mxu0 0
        %8795 = vmatpush1.bf16.msra.mxu0 %v8440
        %8796 = vmatprep.subr.bf16.mxu0 0
        %8797 = vmatpush1.bf16.msra.mxu0 %v8441
        %8798 = vmatprep.subr.bf16.mxu0 0
        %8799 = vmatpush1.bf16.msra.mxu0 %v8442
        %8800 = vmatprep.subr.bf16.mxu0 0
        %8801 = vmatpush1.bf16.msra.mxu0 %v8443
        %8802 = vmatprep.subr.bf16.mxu0 0
        %8803 = vmatpush1.bf16.msra.mxu0 %v8444
        %8804 = vmatprep.subr.bf16.mxu0 0
        %8805 = vmatpush1.bf16.msra.mxu0 %v8445
        %8806 = vmatprep.subr.bf16.mxu0 0
        %8807 = vmatpush1.bf16.msra.mxu0 %v8446
        %8808 = vmatprep.subr.bf16.mxu0 0
        %8809 = vmatpush1.bf16.msra.mxu0 %v8447
        %8810 = vmatprep.subr.bf16.mxu0 0
        %8811 = vmatpush1.bf16.msra.mxu0 %v8448
        %8812 = vmatprep.subr.bf16.mxu0 0
        %8813 = vmatpush1.bf16.msra.mxu0 %v8449
        %8814 = vmatprep.subr.bf16.mxu0 0
        %8815 = vmatpush1.bf16.msra.mxu0 %v8450
        %8816 = vmatprep.subr.bf16.mxu0 0
        %8817 = vmatpush1.bf16.msra.mxu0 %v8451
        %8818 = vmatprep.subr.bf16.mxu0 0
        %8819 = vmatpush1.bf16.msra.mxu0 %v8452
        %8820 = vmatprep.subr.bf16.mxu0 0
        %8821 = vmatpush1.bf16.msra.mxu0 %v8453
        %8822 = vmatprep.subr.bf16.mxu0 0
        %8823 = vmatpush1.bf16.msra.mxu0 %v8454
        %8824 = vmatprep.subr.bf16.mxu0 0
        %8825 = vmatpush1.bf16.msra.mxu0 %v8455
        %8826 = vmatprep.mubr.bf16.mxu0 %v8253
        %8827 = vmatmul.mubr.bf16.gmra.mrb[0].mxu0 %v8252
        %v8828 = vpop.f32.mrb[0].mxu0
        %v8829 = vadd.f32 %v8668, %v8828
        %v8830 = vpop.f32.mrb[0].mxu0
        %v8831 = vpop.f32.mrb[0].mxu0
        %v8832 = vadd.f32 %v8671, %v8831
        %v8833 = vpop.f32.mrb[0].mxu0
        %8834 = vmatprep.mubr.bf16.mxu0 %v8261
        %8835 = vmatmul.mubr.bf16.gmra.mrb[0].mxu0 %v8260
        %v8836 = vpop.f32.mrb[0].mxu0
        %v8837 = vadd.f32 %v8676, %v8836
        %v8838 = vpop.f32.mrb[0].mxu0
        %v8839 = vpop.f32.mrb[0].mxu0
        %v8840 = vadd.f32 %v8679, %v8839
        %v8841 = vpop.f32.mrb[0].mxu0
        %8842 = vmatprep.mubr.bf16.mxu0 %v8269
        %8843 = vmatmul.mubr.bf16.gmra.mrb[0].mxu0 %v8268
        %v8844 = vpop.f32.mrb[0].mxu0
        %v8845 = vadd.f32 %v8684, %v8844
        %v8846 = vpop.f32.mrb[0].mxu0
        %v8847 = vpop.f32.mrb[0].mxu0
        %v8848 = vadd.f32 %v8687, %v8847
        %v8849 = vpop.f32.mrb[0].mxu0
        %8850 = vmatprep.mubr.bf16.mxu0 %v8277
        %8851 = vmatmul.mubr.bf16.gmra.mrb[0].mxu0 %v8276
        %v8852 = vpop.f32.mrb[0].mxu0
        %v8853 = vadd.f32 %v8692, %v8852
        %v8854 = vpop.f32.mrb[0].mxu0
        %v8855 = vpop.f32.mrb[0].mxu0
        %v8856 = vadd.f32 %v8695, %v8855
        %v8857 = vpop.f32.mrb[0].mxu0
        %8858 = vmatprep.mubr.bf16.mxu0 %v8285
        %8859 = vmatmul.mubr.bf16.gmra.mrb[0].mxu0 %v8284
        %v8860 = vpop.f32.mrb[0].mxu0
        %v8861 = vadd.f32 %v8700, %v8860
        %v8862 = vpop.f32.mrb[0].mxu0
        %v8863 = vpop.f32.mrb[0].mxu0
        %v8864 = vadd.f32 %v8703, %v8863
        %v8865 = vpop.f32.mrb[0].mxu0
        %8866 = vmatprep.mubr.bf16.mxu0 %v8293
        %8867 = vmatmul.mubr.bf16.gmra.mrb[0].mxu0 %v8292
        %v8868 = vpop.f32.mrb[0].mxu0
        %v8869 = vadd.f32 %v8708, %v8868
        %v8870 = vpop.f32.mrb[0].mxu0
        %v8871 = vpop.f32.mrb[0].mxu0
        %v8872 = vadd.f32 %v8711, %v8871
        %v8873 = vpop.f32.mrb[0].mxu0
        %8874 = vmatprep.mubr.bf16.mxu0 %v8301
        %8875 = vmatmul.mubr.bf16.gmra.mrb[0].mxu0 %v8300
        %v8876 = vpop.f32.mrb[0].mxu0
        %v8877 = vadd.f32 %v8716, %v8876
        %v8878 = vpop.f32.mrb[0].mxu0
        %v8879 = vpop.f32.mrb[0].mxu0
        %v8880 = vadd.f32 %v8719, %v8879
        %v8881 = vpop.f32.mrb[0].mxu0
        %8882 = vmatprep.mubr.bf16.mxu0 %v8309
        %8883 = vmatmul.mubr.bf16.gmra.mrb[0].mxu0 %v8308
        %v8884 = vpop.f32.mrb[0].mxu0
        %v8885 = vadd.f32 %v8724, %v8884
        %v8886 = vpop.f32.mrb[0].mxu0
        %v8887 = vpop.f32.mrb[0].mxu0
        %v8888 = vadd.f32 %v8727, %v8887
        %v8889 = vpop.f32.mrb[0].mxu0
        %8890 = vmatprep.mubr.bf16.mxu0 %v8317
        %8891 = vmatmul.mubr.bf16.gmra.mrb[0].mxu0 %v8316
        %v8892 = vpop.f32.mrb[0].mxu0
        %v8893 = vadd.f32 %v8732, %v8892
        %v8894 = vpop.f32.mrb[0].mxu0
        %v8895 = vpop.f32.mrb[0].mxu0
        %v8896 = vadd.f32 %v8735, %v8895
        %v8897 = vpop.f32.mrb[0].mxu0
        %8898 = vmatprep.mubr.bf16.mxu0 %v8325
        %8899 = vmatmul.mubr.bf16.gmra.mrb[0].mxu0 %v8324
        %v8900 = vpop.f32.mrb[0].mxu0
        %v8901 = vadd.f32 %v8740, %v8900
        %v8902 = vpop.f32.mrb[0].mxu0
        %v8903 = vpop.f32.mrb[0].mxu0
        %v8904 = vadd.f32 %v8743, %v8903
        %v8905 = vpop.f32.mrb[0].mxu0
        %8906 = vmatprep.mubr.bf16.mxu0 %v8333
        %8907 = vmatmul.mubr.bf16.gmra.mrb[0].mxu0 %v8332
        %v8908 = vpop.f32.mrb[0].mxu0
        %v8909 = vadd.f32 %v8748, %v8908
        %v8910 = vpop.f32.mrb[0].mxu0
        %v8911 = vpop.f32.mrb[0].mxu0
        %v8912 = vadd.f32 %v8751, %v8911
        %v8913 = vpop.f32.mrb[0].mxu0
        %8914 = vmatprep.mubr.bf16.mxu0 %v8341
        %8915 = vmatmul.mubr.bf16.gmra.mrb[0].mxu0 %v8340
        %v8916 = vpop.f32.mrb[0].mxu0
        %v8917 = vadd.f32 %v8756, %v8916
        %v8918 = vpop.f32.mrb[0].mxu0
        %v8919 = vpop.f32.mrb[0].mxu0
        %v8920 = vadd.f32 %v8759, %v8919
        %v8921 = vpop.f32.mrb[0].mxu0
        %8922 = vmatprep.mubr.bf16.mxu0 %v8349
        %8923 = vmatmul.mubr.bf16.gmra.mrb[0].mxu0 %v8348
        %v8924 = vpop.f32.mrb[0].mxu0
        %v8925 = vadd.f32 %v8764, %v8924
        %v8926 = vpop.f32.mrb[0].mxu0
        %v8927 = vpop.f32.mrb[0].mxu0
        %v8928 = vadd.f32 %v8767, %v8927
        %v8929 = vpop.f32.mrb[0].mxu0
        %8930 = vmatprep.mubr.bf16.mxu0 %v8357
        %8931 = vmatmul.mubr.bf16.gmra.mrb[0].mxu0 %v8356
        %v8932 = vpop.f32.mrb[0].mxu0
        %v8933 = vadd.f32 %v8772, %v8932
        %v8934 = vpop.f32.mrb[0].mxu0
        %v8935 = vpop.f32.mrb[0].mxu0
        %v8936 = vadd.f32 %v8775, %v8935
        %v8937 = vpop.f32.mrb[0].mxu0
        %8938 = vmatprep.mubr.bf16.mxu0 %v8365
        %8939 = vmatmul.mubr.bf16.gmra.mrb[0].mxu0 %v8364
        %v8940 = vpop.f32.mrb[0].mxu0
        %v8941 = vadd.f32 %v8780, %v8940
        %v8942 = vpop.f32.mrb[0].mxu0
        %v8943 = vpop.f32.mrb[0].mxu0
        %v8944 = vadd.f32 %v8783, %v8943
        %v8945 = vpop.f32.mrb[0].mxu0
        %8946 = vmatprep.mubr.bf16.mxu0 %v8373
        %8947 = vmatmul.mubr.bf16.gmra.mrb[0].mxu0 %v8372
        %v8948 = vpop.f32.mrb[0].mxu0
        %v8949 = vadd.f32 %v8788, %v8948
        %v8950 = vpop.f32.mrb[0].mxu0
        %v8951 = vpop.f32.mrb[0].mxu0
        %v8952 = vadd.f32 %v8791, %v8951
        %v8953 = vpop.f32.mrb[0].mxu0
        %8954 = vdwg.mxu0
        %8955 = vmatprep.subr.bf16.mxu0 0
        %8956 = vmatpush1.bf16.msra.mxu0 %v8456
        %8957 = vmatprep.subr.bf16.mxu0 0
        %8958 = vmatpush1.bf16.msra.mxu0 %v8457
        %8959 = vmatprep.subr.bf16.mxu0 0
        %8960 = vmatpush1.bf16.msra.mxu0 %v8458
        %8961 = vmatprep.subr.bf16.mxu0 0
        %8962 = vmatpush1.bf16.msra.mxu0 %v8459
        %8963 = vmatprep.subr.bf16.mxu0 0
        %8964 = vmatpush1.bf16.msra.mxu0 %v8460
        %8965 = vmatprep.subr.bf16.mxu0 0
        %8966 = vmatpush1.bf16.msra.mxu0 %v8461
        %8967 = vmatprep.subr.bf16.mxu0 0
        %8968 = vmatpush1.bf16.msra.mxu0 %v8462
        %8969 = vmatprep.subr.bf16.mxu0 0
        %8970 = vmatpush1.bf16.msra.mxu0 %v8463
        %8971 = vmatprep.subr.bf16.mxu0 0
        %8972 = vmatpush1.bf16.msra.mxu0 %v8464
        %8973 = vmatprep.subr.bf16.mxu0 0
        %8974 = vmatpush1.bf16.msra.mxu0 %v8465
        %8975 = vmatprep.subr.bf16.mxu0 0
        %8976 = vmatpush1.bf16.msra.mxu0 %v8466
        %8977 = vmatprep.subr.bf16.mxu0 0
        %8978 = vmatpush1.bf16.msra.mxu0 %v8467
        %8979 = vmatprep.subr.bf16.mxu0 0
        %8980 = vmatpush1.bf16.msra.mxu0 %v8468
        %8981 = vmatprep.subr.bf16.mxu0 0
        %8982 = vmatpush1.bf16.msra.mxu0 %v8469
        %8983 = vmatprep.subr.bf16.mxu0 0
        %8984 = vmatpush1.bf16.msra.mxu0 %v8470
        %8985 = vmatprep.subr.bf16.mxu0 0
        %8986 = vmatpush1.bf16.msra.mxu0 %v8471
        %8987 = vmatprep.mubr.bf16.mxu0 %v8255
        %8988 = vmatmul.mubr.bf16.gmra.mrb[0].mxu0 %v8254
        %v8989 = vpop.f32.mrb[0].mxu0
        %v8990 = vadd.f32 %v8829, %v8989
        %v8991 = vpop.f32.mrb[0].mxu0
        %v8992 = vpop.f32.mrb[0].mxu0
        %v8993 = vadd.f32 %v8832, %v8992
        %v8994 = vpop.f32.mrb[0].mxu0
        %8995 = vmatprep.mubr.bf16.mxu0 %v8263
        %8996 = vmatmul.mubr.bf16.gmra.mrb[0].mxu0 %v8262
        %v8997 = vpop.f32.mrb[0].mxu0
        %v8998 = vadd.f32 %v8837, %v8997
        %v8999 = vpop.f32.mrb[0].mxu0
        %v9000 = vpop.f32.mrb[0].mxu0
        %v9001 = vadd.f32 %v8840, %v9000
        %v9002 = vpop.f32.mrb[0].mxu0
        %9003 = vmatprep.mubr.bf16.mxu0 %v8271
        %9004 = vmatmul.mubr.bf16.gmra.mrb[0].mxu0 %v8270
        %v9005 = vpop.f32.mrb[0].mxu0
        %v9006 = vadd.f32 %v8845, %v9005
        %v9007 = vpop.f32.mrb[0].mxu0
        %v9008 = vpop.f32.mrb[0].mxu0
        %v9009 = vadd.f32 %v8848, %v9008
        %v9010 = vpop.f32.mrb[0].mxu0
        %9011 = vmatprep.mubr.bf16.mxu0 %v8279
        %9012 = vmatmul.mubr.bf16.gmra.mrb[0].mxu0 %v8278
        %v9013 = vpop.f32.mrb[0].mxu0
        %v9014 = vadd.f32 %v8853, %v9013
        %v9015 = vpop.f32.mrb[0].mxu0
        %v9016 = vpop.f32.mrb[0].mxu0
        %v9017 = vadd.f32 %v8856, %v9016
        %v9018 = vpop.f32.mrb[0].mxu0
        %9019 = vmatprep.mubr.bf16.mxu0 %v8287
        %9020 = vmatmul.mubr.bf16.gmra.mrb[0].mxu0 %v8286
        %v9021 = vpop.f32.mrb[0].mxu0
        %v9022 = vadd.f32 %v8861, %v9021
        %v9023 = vpop.f32.mrb[0].mxu0
        %v9024 = vpop.f32.mrb[0].mxu0
        %v9025 = vadd.f32 %v8864, %v9024
        %v9026 = vpop.f32.mrb[0].mxu0
        %9027 = vmatprep.mubr.bf16.mxu0 %v8295
        %9028 = vmatmul.mubr.bf16.gmra.mrb[0].mxu0 %v8294
        %v9029 = vpop.f32.mrb[0].mxu0
        %v9030 = vadd.f32 %v8869, %v9029
        %v9031 = vpop.f32.mrb[0].mxu0
        %v9032 = vpop.f32.mrb[0].mxu0
        %v9033 = vadd.f32 %v8872, %v9032
        %v9034 = vpop.f32.mrb[0].mxu0
        %9035 = vmatprep.mubr.bf16.mxu0 %v8303
        %9036 = vmatmul.mubr.bf16.gmra.mrb[0].mxu0 %v8302
        %v9037 = vpop.f32.mrb[0].mxu0
        %v9038 = vadd.f32 %v8877, %v9037
        %v9039 = vpop.f32.mrb[0].mxu0
        %v9040 = vpop.f32.mrb[0].mxu0
        %v9041 = vadd.f32 %v8880, %v9040
        %v9042 = vpop.f32.mrb[0].mxu0
        %9043 = vmatprep.mubr.bf16.mxu0 %v8311
        %9044 = vmatmul.mubr.bf16.gmra.mrb[0].mxu0 %v8310
        %v9045 = vpop.f32.mrb[0].mxu0
        %v9046 = vadd.f32 %v8885, %v9045
        %v9047 = vpop.f32.mrb[0].mxu0
        %v9048 = vpop.f32.mrb[0].mxu0
        %v9049 = vadd.f32 %v8888, %v9048
        %v9050 = vpop.f32.mrb[0].mxu0
        %9051 = vmatprep.mubr.bf16.mxu0 %v8319
        %9052 = vmatmul.mubr.bf16.gmra.mrb[0].mxu0 %v8318
        %v9053 = vpop.f32.mrb[0].mxu0
        %v9054 = vadd.f32 %v8893, %v9053
        %v9055 = vpop.f32.mrb[0].mxu0
        %v9056 = vpop.f32.mrb[0].mxu0
        %v9057 = vadd.f32 %v8896, %v9056
        %v9058 = vpop.f32.mrb[0].mxu0
        %9059 = vmatprep.mubr.bf16.mxu0 %v8327
        %9060 = vmatmul.mubr.bf16.gmra.mrb[0].mxu0 %v8326
        %v9061 = vpop.f32.mrb[0].mxu0
        %v9062 = vadd.f32 %v8901, %v9061
        %v9063 = vpop.f32.mrb[0].mxu0
        %v9064 = vpop.f32.mrb[0].mxu0
        %v9065 = vadd.f32 %v8904, %v9064
        %v9066 = vpop.f32.mrb[0].mxu0
        %9067 = vmatprep.mubr.bf16.mxu0 %v8335
        %9068 = vmatmul.mubr.bf16.gmra.mrb[0].mxu0 %v8334
        %v9069 = vpop.f32.mrb[0].mxu0
        %v9070 = vadd.f32 %v8909, %v9069
        %v9071 = vpop.f32.mrb[0].mxu0
        %v9072 = vpop.f32.mrb[0].mxu0
        %v9073 = vadd.f32 %v8912, %v9072
        %v9074 = vpop.f32.mrb[0].mxu0
        %9075 = vmatprep.mubr.bf16.mxu0 %v8343
        %9076 = vmatmul.mubr.bf16.gmra.mrb[0].mxu0 %v8342
        %v9077 = vpop.f32.mrb[0].mxu0
        %v9078 = vadd.f32 %v8917, %v9077
        %v9079 = vpop.f32.mrb[0].mxu0
        %v9080 = vpop.f32.mrb[0].mxu0
        %v9081 = vadd.f32 %v8920, %v9080
        %v9082 = vpop.f32.mrb[0].mxu0
        %9083 = vmatprep.mubr.bf16.mxu0 %v8351
        %9084 = vmatmul.mubr.bf16.gmra.mrb[0].mxu0 %v8350
        %v9085 = vpop.f32.mrb[0].mxu0
        %v9086 = vadd.f32 %v8925, %v9085
        %v9087 = vpop.f32.mrb[0].mxu0
        %v9088 = vpop.f32.mrb[0].mxu0
        %v9089 = vadd.f32 %v8928, %v9088
        %v9090 = vpop.f32.mrb[0].mxu0
        %9091 = vmatprep.mubr.bf16.mxu0 %v8359
        %9092 = vmatmul.mubr.bf16.gmra.mrb[0].mxu0 %v8358
        %v9093 = vpop.f32.mrb[0].mxu0
        %v9094 = vadd.f32 %v8933, %v9093
        %v9095 = vpop.f32.mrb[0].mxu0
        %v9096 = vpop.f32.mrb[0].mxu0
        %v9097 = vadd.f32 %v8936, %v9096
        %v9098 = vpop.f32.mrb[0].mxu0
        %9099 = vmatprep.mubr.bf16.mxu0 %v8367
        %9100 = vmatmul.mubr.bf16.gmra.mrb[0].mxu0 %v8366
        %v9101 = vpop.f32.mrb[0].mxu0
        %v9102 = vadd.f32 %v8941, %v9101
        %v9103 = vpop.f32.mrb[0].mxu0
        %v9104 = vpop.f32.mrb[0].mxu0
        %v9105 = vadd.f32 %v8944, %v9104
        %v9106 = vpop.f32.mrb[0].mxu0
        %9107 = vmatprep.mubr.bf16.mxu0 %v8375
        %9108 = vmatmul.mubr.bf16.gmra.mrb[0].mxu0 %v8374
        %v9109 = vpop.f32.mrb[0].mxu0
        %v9110 = vadd.f32 %v8949, %v9109
        %v9111 = vpop.f32.mrb[0].mxu0
        %v9112 = vpop.f32.mrb[0].mxu0
        %v9113 = vadd.f32 %v8952, %v9112
        %v9114 = vpop.f32.mrb[0].mxu0
        %9115 = vdwg.mxu0
        %v9116 = vld [vmem:[%s17] sm:$0x1]
        %v9118 = vlaneseq
        %v9119 = vshrl.u32 %v9118, 7
        %v9120 = vsub.s32 0, %v9119
        %v9121 = vrot.slane %v9116, %v9120
        %v9123 = vmul.f32 %v8990, %v9121
        %v9124 = vmul.f32 %v8993, %v9121
        %v9125 = vmul.f32 %v8998, %v9121
        %v9126 = vmul.f32 %v9001, %v9121
        %v9127 = vmul.f32 %v9006, %v9121
        %v9128 = vmul.f32 %v9009, %v9121
        %v9129 = vmul.f32 %v9014, %v9121
        %v9130 = vmul.f32 %v9017, %v9121
        %v9131 = vmul.f32 %v9022, %v9121
        %v9132 = vmul.f32 %v9025, %v9121
        %v9133 = vmul.f32 %v9030, %v9121
        %v9134 = vmul.f32 %v9033, %v9121
        %v9135 = vmul.f32 %v9038, %v9121
        %v9136 = vmul.f32 %v9041, %v9121
        %v9137 = vmul.f32 %v9046, %v9121
        %v9138 = vmul.f32 %v9049, %v9121
        %v9139 = vmul.f32 %v9054, %v9121
        %v9140 = vmul.f32 %v9057, %v9121
        %v9141 = vmul.f32 %v9062, %v9121
        %v9142 = vmul.f32 %v9065, %v9121
        %v9143 = vmul.f32 %v9070, %v9121
        %v9144 = vmul.f32 %v9073, %v9121
        %v9145 = vmul.f32 %v9078, %v9121
        %v9146 = vmul.f32 %v9081, %v9121
        %v9147 = vmul.f32 %v9086, %v9121
        %v9148 = vmul.f32 %v9089, %v9121
        %v9149 = vmul.f32 %v9094, %v9121
        %v9150 = vmul.f32 %v9097, %v9121
        %v9151 = vmul.f32 %v9102, %v9121
        %v9152 = vmul.f32 %v9105, %v9121
        %v9153 = vmul.f32 %v9110, %v9121
        %v9154 = vmul.f32 %v9113, %v9121
        %v9155 = vld [vmem:[%s18] sm:$0x1]
        %v9157 = vlaneseq
        %v9158 = vshrl.u32 %v9157, 7
        %v9159 = vsub.s32 0, %v9158
        %v9160 = vrot.slane %v9155, %v9159
        %v9162 = vadd.f32 %v9123, %v9160
        %v9163 = vadd.f32 %v9124, %v9160
        %v9164 = vadd.f32 %v9125, %v9160
        %v9165 = vadd.f32 %v9126, %v9160
        %v9166 = vadd.f32 %v9127, %v9160
        %v9167 = vadd.f32 %v9128, %v9160
        %v9168 = vadd.f32 %v9129, %v9160
        %v9169 = vadd.f32 %v9130, %v9160
        %v9170 = vadd.f32 %v9131, %v9160
        %v9171 = vadd.f32 %v9132, %v9160
        %v9172 = vadd.f32 %v9133, %v9160
        %v9173 = vadd.f32 %v9134, %v9160
        %v9174 = vadd.f32 %v9135, %v9160
        %v9175 = vadd.f32 %v9136, %v9160
        %v9176 = vadd.f32 %v9137, %v9160
        %v9177 = vadd.f32 %v9138, %v9160
        %v9178 = vadd.f32 %v9139, %v9160
        %v9179 = vadd.f32 %v9140, %v9160
        %v9180 = vadd.f32 %v9141, %v9160
        %v9181 = vadd.f32 %v9142, %v9160
        %v9182 = vadd.f32 %v9143, %v9160
        %v9183 = vadd.f32 %v9144, %v9160
        %v9184 = vadd.f32 %v9145, %v9160
        %v9185 = vadd.f32 %v9146, %v9160
        %v9186 = vadd.f32 %v9147, %v9160
        %v9187 = vadd.f32 %v9148, %v9160
        %v9188 = vadd.f32 %v9149, %v9160
        %v9189 = vadd.f32 %v9150, %v9160
        %v9190 = vadd.f32 %v9151, %v9160
        %v9191 = vadd.f32 %v9152, %v9160
        %v9192 = vadd.f32 %v9153, %v9160
        %v9193 = vadd.f32 %v9154, %v9160
        %v9194 = vxor.u32 %v9162, 2147483648
        %v9195 = vxor.u32 %v9163, 2147483648
        %v9196 = vxor.u32 %v9164, 2147483648
        %v9197 = vxor.u32 %v9165, 2147483648
        %v9198 = vxor.u32 %v9166, 2147483648
        %v9199 = vxor.u32 %v9167, 2147483648
        %v9200 = vxor.u32 %v9168, 2147483648
        %v9201 = vxor.u32 %v9169, 2147483648
        %v9202 = vxor.u32 %v9170, 2147483648
        %v9203 = vxor.u32 %v9171, 2147483648
        %v9204 = vxor.u32 %v9172, 2147483648
        %v9205 = vxor.u32 %v9173, 2147483648
        %v9206 = vxor.u32 %v9174, 2147483648
        %v9207 = vxor.u32 %v9175, 2147483648
        %v9208 = vxor.u32 %v9176, 2147483648
        %v9209 = vxor.u32 %v9177, 2147483648
        %v9210 = vxor.u32 %v9178, 2147483648
        %v9211 = vxor.u32 %v9179, 2147483648
        %v9212 = vxor.u32 %v9180, 2147483648
        %v9213 = vxor.u32 %v9181, 2147483648
        %v9214 = vxor.u32 %v9182, 2147483648
        %v9215 = vxor.u32 %v9183, 2147483648
        %v9216 = vxor.u32 %v9184, 2147483648
        %v9217 = vxor.u32 %v9185, 2147483648
        %v9218 = vxor.u32 %v9186, 2147483648
        %v9219 = vxor.u32 %v9187, 2147483648
        %v9220 = vxor.u32 %v9188, 2147483648
        %v9221 = vxor.u32 %v9189, 2147483648
        %v9222 = vxor.u32 %v9190, 2147483648
        %v9223 = vxor.u32 %v9191, 2147483648
        %v9224 = vxor.u32 %v9192, 2147483648
        %v9225 = vxor.u32 %v9193, 2147483648
        %v9226 = vmul.f32 %v9194, 1.442695
        %v9227 = vpow.pop %v9226
        %v9228 = vmul.f32 %v9195, 1.442695
        %v9229 = vpow.pop %v9228
        %v9230 = vmul.f32 %v9196, 1.442695
        %v9231 = vpow.pop %v9230
        %v9232 = vmul.f32 %v9197, 1.442695
        %v9233 = vpow.pop %v9232
        %v9234 = vmul.f32 %v9198, 1.442695
        %v9235 = vpow.pop %v9234
        %v9236 = vmul.f32 %v9199, 1.442695
        %v9237 = vpow.pop %v9236
        %v9238 = vmul.f32 %v9200, 1.442695
        %v9239 = vpow.pop %v9238
        %v9240 = vmul.f32 %v9201, 1.442695
        %v9241 = vpow.pop %v9240
        %v9242 = vmul.f32 %v9202, 1.442695
        %v9243 = vpow.pop %v9242
        %v9244 = vmul.f32 %v9203, 1.442695
        %v9245 = vpow.pop %v9244
        %v9246 = vmul.f32 %v9204, 1.442695
        %v9247 = vpow.pop %v9246
        %v9248 = vmul.f32 %v9205, 1.442695
        %v9249 = vpow.pop %v9248
        %v9250 = vmul.f32 %v9206, 1.442695
        %v9251 = vpow.pop %v9250
        %v9252 = vmul.f32 %v9207, 1.442695
        %v9253 = vpow.pop %v9252
        %v9254 = vmul.f32 %v9208, 1.442695
        %v9255 = vpow.pop %v9254
        %v9256 = vmul.f32 %v9209, 1.442695
        %v9257 = vpow.pop %v9256
        %v9258 = vmul.f32 %v9210, 1.442695
        %v9259 = vpow.pop %v9258
        %v9260 = vmul.f32 %v9211, 1.442695
        %v9261 = vpow.pop %v9260
        %v9262 = vmul.f32 %v9212, 1.442695
        %v9263 = vpow.pop %v9262
        %v9264 = vmul.f32 %v9213, 1.442695
        %v9265 = vpow.pop %v9264
        %v9266 = vmul.f32 %v9214, 1.442695
        %v9267 = vpow.pop %v9266
        %v9268 = vmul.f32 %v9215, 1.442695
        %v9269 = vpow.pop %v9268
        %v9270 = vmul.f32 %v9216, 1.442695
        %v9271 = vpow.pop %v9270
        %v9272 = vmul.f32 %v9217, 1.442695
        %v9273 = vpow.pop %v9272
        %v9274 = vmul.f32 %v9218, 1.442695
        %v9275 = vpow.pop %v9274
        %v9276 = vmul.f32 %v9219, 1.442695
        %v9277 = vpow.pop %v9276
        %v9278 = vmul.f32 %v9220, 1.442695
        %v9279 = vpow.pop %v9278
        %v9280 = vmul.f32 %v9221, 1.442695
        %v9281 = vpow.pop %v9280
        %v9282 = vmul.f32 %v9222, 1.442695
        %v9283 = vpow.pop %v9282
        %v9284 = vmul.f32 %v9223, 1.442695
        %v9285 = vpow.pop %v9284
        %v9286 = vmul.f32 %v9224, 1.442695
        %v9287 = vpow.pop %v9286
        %v9288 = vmul.f32 %v9225, 1.442695
        %v9289 = vpow.pop %v9288
        %v9290 = vadd.f32 %v9227, 1.0
        %v9291 = vadd.f32 %v9229, 1.0
        %v9292 = vadd.f32 %v9231, 1.0
        %v9293 = vadd.f32 %v9233, 1.0
        %v9294 = vadd.f32 %v9235, 1.0
        %v9295 = vadd.f32 %v9237, 1.0
        %v9296 = vadd.f32 %v9239, 1.0
        %v9297 = vadd.f32 %v9241, 1.0
        %v9298 = vadd.f32 %v9243, 1.0
        %v9299 = vadd.f32 %v9245, 1.0
        %v9300 = vadd.f32 %v9247, 1.0
        %v9301 = vadd.f32 %v9249, 1.0
        %v9302 = vadd.f32 %v9251, 1.0
        %v9303 = vadd.f32 %v9253, 1.0
        %v9304 = vadd.f32 %v9255, 1.0
        %v9305 = vadd.f32 %v9257, 1.0
        %v9306 = vadd.f32 %v9259, 1.0
        %v9307 = vadd.f32 %v9261, 1.0
        %v9308 = vadd.f32 %v9263, 1.0
        %v9309 = vadd.f32 %v9265, 1.0
        %v9310 = vadd.f32 %v9267, 1.0
        %v9311 = vadd.f32 %v9269, 1.0
        %v9312 = vadd.f32 %v9271, 1.0
        %v9313 = vadd.f32 %v9273, 1.0
        %v9314 = vadd.f32 %v9275, 1.0
        %v9315 = vadd.f32 %v9277, 1.0
        %v9316 = vadd.f32 %v9279, 1.0
        %v9317 = vadd.f32 %v9281, 1.0
        %v9318 = vadd.f32 %v9283, 1.0
        %v9319 = vadd.f32 %v9285, 1.0
        %v9320 = vadd.f32 %v9287, 1.0
        %v9321 = vadd.f32 %v9289, 1.0
        %v9322 = vrcp.pop %v9290
        %v9323 = vmul.f32 1.0, %v9322
        %v9324 = vrcp.pop %v9291
        %v9325 = vmul.f32 1.0, %v9324
        %v9326 = vrcp.pop %v9292
        %v9327 = vmul.f32 1.0, %v9326
        %v9328 = vrcp.pop %v9293
        %v9329 = vmul.f32 1.0, %v9328
        %v9330 = vrcp.pop %v9294
        %v9331 = vmul.f32 1.0, %v9330
        %v9332 = vrcp.pop %v9295
        %v9333 = vmul.f32 1.0, %v9332
        %v9334 = vrcp.pop %v9296
        %v9335 = vmul.f32 1.0, %v9334
        %v9336 = vrcp.pop %v9297
        %v9337 = vmul.f32 1.0, %v9336
        %v9338 = vrcp.pop %v9298
        %v9339 = vmul.f32 1.0, %v9338
        %v9340 = vrcp.pop %v9299
        %v9341 = vmul.f32 1.0, %v9340
        %v9342 = vrcp.pop %v9300
        %v9343 = vmul.f32 1.0, %v9342
        %v9344 = vrcp.pop %v9301
        %v9345 = vmul.f32 1.0, %v9344
        %v9346 = vrcp.pop %v9302
        %v9347 = vmul.f32 1.0, %v9346
        %v9348 = vrcp.pop %v9303
        %v9349 = vmul.f32 1.0, %v9348
        %v9350 = vrcp.pop %v9304
        %v9351 = vmul.f32 1.0, %v9350
        %v9352 = vrcp.pop %v9305
        %v9353 = vmul.f32 1.0, %v9352
        %v9354 = vrcp.pop %v9306
        %v9355 = vmul.f32 1.0, %v9354
        %v9356 = vrcp.pop %v9307
        %v9357 = vmul.f32 1.0, %v9356
        %v9358 = vrcp.pop %v9308
        %v9359 = vmul.f32 1.0, %v9358
        %v9360 = vrcp.pop %v9309
        %v9361 = vmul.f32 1.0, %v9360
        %v9362 = vrcp.pop %v9310
        %v9363 = vmul.f32 1.0, %v9362
        %v9364 = vrcp.pop %v9311
        %v9365 = vmul.f32 1.0, %v9364
        %v9366 = vrcp.pop %v9312
        %v9367 = vmul.f32 1.0, %v9366
        %v9368 = vrcp.pop %v9313
        %v9369 = vmul.f32 1.0, %v9368
        %v9370 = vrcp.pop %v9314
        %v9371 = vmul.f32 1.0, %v9370
        %v9372 = vrcp.pop %v9315
        %v9373 = vmul.f32 1.0, %v9372
        %v9374 = vrcp.pop %v9316
        %v9375 = vmul.f32 1.0, %v9374
        %v9376 = vrcp.pop %v9317
        %v9377 = vmul.f32 1.0, %v9376
        %v9378 = vrcp.pop %v9318
        %v9379 = vmul.f32 1.0, %v9378
        %v9380 = vrcp.pop %v9319
        %v9381 = vmul.f32 1.0, %v9380
        %v9382 = vrcp.pop %v9320
        %v9383 = vmul.f32 1.0, %v9382
        %v9384 = vrcp.pop %v9321
        %v9385 = vmul.f32 1.0, %v9384
        %v9386 = vpack.c.bf16 %v9325, %v9323
        %v9387 = vpack.c.bf16 %v9329, %v9327
        %v9388 = vpack.c.bf16 %v9333, %v9331
        %v9389 = vpack.c.bf16 %v9337, %v9335
        %v9390 = vpack.c.bf16 %v9341, %v9339
        %v9391 = vpack.c.bf16 %v9345, %v9343
        %v9392 = vpack.c.bf16 %v9349, %v9347
        %v9393 = vpack.c.bf16 %v9353, %v9351
        %v9394 = vpack.c.bf16 %v9357, %v9355
        %v9395 = vpack.c.bf16 %v9361, %v9359
        %v9396 = vpack.c.bf16 %v9365, %v9363
        %v9397 = vpack.c.bf16 %v9369, %v9367
        %v9398 = vpack.c.bf16 %v9373, %v9371
        %v9399 = vpack.c.bf16 %v9377, %v9375
        %v9400 = vpack.c.bf16 %v9381, %v9379
        %v9401 = vpack.c.bf16 %v9385, %v9383
        %v9418 = vunpack.c.l.b16 %v9386
        %v9419 = vunpack.c.h.b16 %v9386
        %v9420 = vunpack.c.l.b16 %v9387
        %v9421 = vunpack.c.h.b16 %v9387
        %v9422 = vunpack.c.l.b16 %v9388
        %v9423 = vunpack.c.h.b16 %v9388
        %v9424 = vunpack.c.l.b16 %v9389
        %v9425 = vunpack.c.h.b16 %v9389
        %v9426 = vunpack.c.l.b16 %v9390
        %v9427 = vunpack.c.h.b16 %v9390
        %v9428 = vunpack.c.l.b16 %v9391
        %v9429 = vunpack.c.h.b16 %v9391
        %v9430 = vunpack.c.l.b16 %v9392
        %v9431 = vunpack.c.h.b16 %v9392
        %v9432 = vunpack.c.l.b16 %v9393
        %v9433 = vunpack.c.h.b16 %v9393
        %v9434 = vunpack.c.l.b16 %v9394
        %v9435 = vunpack.c.h.b16 %v9394
        %v9436 = vunpack.c.l.b16 %v9395
        %v9437 = vunpack.c.h.b16 %v9395
        %v9438 = vunpack.c.l.b16 %v9396
        %v9439 = vunpack.c.h.b16 %v9396
        %v9440 = vunpack.c.l.b16 %v9397
        %v9441 = vunpack.c.h.b16 %v9397
        %v9442 = vunpack.c.l.b16 %v9398
        %v9443 = vunpack.c.h.b16 %v9398
        %v9444 = vunpack.c.l.b16 %v9399
        %v9445 = vunpack.c.h.b16 %v9399
        %v9446 = vunpack.c.l.b16 %v9400
        %v9447 = vunpack.c.h.b16 %v9400
        %v9448 = vunpack.c.l.b16 %v9401
        %v9449 = vunpack.c.h.b16 %v9401
        %v9450 = vpack.c.b16 %v9418, %v9418
        %v9451 = vpack.c.b16 %v9419, %v9419
        %v9452 = vpack.c.b16 %v9420, %v9420
        %v9453 = vpack.c.b16 %v9421, %v9421
        %v9454 = vpack.c.b16 %v9422, %v9422
        %v9455 = vpack.c.b16 %v9423, %v9423
        %v9456 = vpack.c.b16 %v9424, %v9424
        %v9457 = vpack.c.b16 %v9425, %v9425
        %v9458 = vpack.c.b16 %v9426, %v9426
        %v9459 = vpack.c.b16 %v9427, %v9427
        %v9460 = vpack.c.b16 %v9428, %v9428
        %v9461 = vpack.c.b16 %v9429, %v9429
        %v9462 = vpack.c.b16 %v9430, %v9430
        %v9463 = vpack.c.b16 %v9431, %v9431
        %v9464 = vpack.c.b16 %v9432, %v9432
        %v9465 = vpack.c.b16 %v9433, %v9433
        %v9466 = vpack.c.b16 %v9434, %v9434
        %v9467 = vpack.c.b16 %v9435, %v9435
        %v9468 = vpack.c.b16 %v9436, %v9436
        %v9469 = vpack.c.b16 %v9437, %v9437
        %v9470 = vpack.c.b16 %v9438, %v9438
        %v9471 = vpack.c.b16 %v9439, %v9439
        %v9472 = vpack.c.b16 %v9440, %v9440
        %v9473 = vpack.c.b16 %v9441, %v9441
        %v9474 = vpack.c.b16 %v9442, %v9442
        %v9475 = vpack.c.b16 %v9443, %v9443
        %v9476 = vpack.c.b16 %v9444, %v9444
        %v9477 = vpack.c.b16 %v9445, %v9445
        %v9478 = vpack.c.b16 %v9446, %v9446
        %v9479 = vpack.c.b16 %v9447, %v9447
        %v9480 = vpack.c.b16 %v9448, %v9448
        %v9481 = vpack.c.b16 %v9449, %v9449
        %9514 = vst [vmem:[%s743] sm:$0xf] %v9450
        %9515 = vst [vmem:[%s743 + $0x4] sm:$0xf] %v9451
        %9516 = vst [vmem:[%s743 + $0x8] sm:$0xf] %v9452
        %9517 = vst [vmem:[%s743 + $0xc] sm:$0xf] %v9453
        %9518 = vst [vmem:[%s743 + $0x10] sm:$0xf] %v9454
        %9519 = vst [vmem:[%s743 + $0x14] sm:$0xf] %v9455
        %9520 = vst [vmem:[%s743 + $0x18] sm:$0xf] %v9456
        %9521 = vst [vmem:[%s743 + $0x1c] sm:$0xf] %v9457
        %9522 = vst [vmem:[%s743 + $0x20] sm:$0xf] %v9458
        %9523 = vst [vmem:[%s743 + $0x24] sm:$0xf] %v9459
        %9524 = vst [vmem:[%s743 + $0x28] sm:$0xf] %v9460
        %9525 = vst [vmem:[%s743 + $0x2c] sm:$0xf] %v9461
        %9526 = vst [vmem:[%s743 + $0x30] sm:$0xf] %v9462
        %9527 = vst [vmem:[%s743 + $0x34] sm:$0xf] %v9463
        %9528 = vst [vmem:[%s743 + $0x38] sm:$0xf] %v9464
        %9529 = vst [vmem:[%s743 + $0x3c] sm:$0xf] %v9465
        %9530 = vst [vmem:[%s743 + $0x40] sm:$0xf] %v9466
        %9531 = vst [vmem:[%s743 + $0x44] sm:$0xf] %v9467
        %9532 = vst [vmem:[%s743 + $0x48] sm:$0xf] %v9468
        %9533 = vst [vmem:[%s743 + $0x4c] sm:$0xf] %v9469
        %9534 = vst [vmem:[%s743 + $0x50] sm:$0xf] %v9470
        %9535 = vst [vmem:[%s743 + $0x54] sm:$0xf] %v9471
        %9536 = vst [vmem:[%s743 + $0x58] sm:$0xf] %v9472
        %9537 = vst [vmem:[%s743 + $0x5c] sm:$0xf] %v9473
        %9538 = vst [vmem:[%s743 + $0x60] sm:$0xf] %v9474
        %9539 = vst [vmem:[%s743 + $0x64] sm:$0xf] %v9475
        %9540 = vst [vmem:[%s743 + $0x68] sm:$0xf] %v9476
        %9541 = vst [vmem:[%s743 + $0x6c] sm:$0xf] %v9477
        %9542 = vst [vmem:[%s743 + $0x70] sm:$0xf] %v9478
        %9543 = vst [vmem:[%s743 + $0x74] sm:$0xf] %v9479
        %9544 = vst [vmem:[%s743 + $0x78] sm:$0xf] %v9480
        %9545 = vst [vmem:[%s743 + $0x7c] sm:$0xf] %v9481
        %s9546 = sand.u32 %s453, 1
        %s9547 = scalar_lea.sflag [#allocation4], %s9546
        %s9548 = sand.u32 %s453, 1
        %s9549 = smul.addr %s9548, 128
        %s9550 = scalar_lea.vmem [#allocation19], %s9549
        // Predicated region
        $region137: #{tpu_custom_call.1} parent=95 // pred_check
          %p9551 = pneg %p463
        $region138: #{tpu_custom_call.1} parent=95 // pred_check_branch
          %9553 = sbr.rel (%p9551) target = $region140
        $region139: #{tpu_custom_call.1} parent=95 // pred_region
          %s9554 = smul.u32 32, %s41
          %s9556 = ssub.s32 2048, 2048
          %9557 = vsyncadd %s9547, %s9556
          %s9558 = smul.addr %s9554, 64
          %s9559 = scalar_lea.hbm %s19, %s9558
          %s9560 = sshll.u32 %s9550, 4
          %s9561 = int_to_ptr.vmem [resolvable:$true] %s9560
          %9566 = dma.vmem_to_hbm [thread:$0]  %s9561, 2048, %s9559, %s9547, 64, 64, 4
        $region140: #{tpu_custom_call.1} parent=95 // pred_fallthru
          _
      $region96: #{tpu_custom_call.1} parent=5 // pred_fallthru
        _
      %p9567 = scmp.le.s32.totalorder 2, %s36
      // Predicated region
      $region141: #{tpu_custom_call.1} parent=5 // pred_check
        %p9568 = pneg %p9567
      $region142: #{tpu_custom_call.1} parent=5 // pred_check_branch
        %9570 = sbr.rel (%p9568) target = $region144
      $region143: #{tpu_custom_call.1} parent=5 // pred_region
        %s9571 = ssub.s32 %s36, 2
        // Predicated region
        $region145: #{tpu_custom_call.1} parent=143 // pred_check
          %p9572 = pneg %p469
        $region146: #{tpu_custom_call.1} parent=143 // pred_check_branch
          %9574 = sbr.rel (%p9572) target = $region148
        $region147: #{tpu_custom_call.1} parent=143 // pred_region
          %s9575 = sand.u32 %s454, 1
          %s9576 = scalar_lea.sflag [#allocation4], %s9575
          %s9577 = sand.u32 %s454, 1
          %s9578 = smul.addr %s9577, 128
          %s9579 = scalar_lea.vmem [#allocation19], %s9578
          %9580 = dma.done %s9576, 2048
        $region148: #{tpu_custom_call.1} parent=143 // pred_fallthru
          _
      $region144: #{tpu_custom_call.1} parent=5 // pred_fallthru
        _
    $region6: #{tpu_custom_call.1} parent=1 // loop_footer
      %s40 = sadd.s32 1, %s36
    $region7: #{tpu_custom_call.1} parent=1 // loop_footer_branch
      %35 = sbr.rel target = $region3
    $region8: #{tpu_custom_call.1} parent=1 // loop_exit
      _
    %9581 = vsyncpa [#allocation3], 1
    %s9582 = scalar_lea.sflag [#allocation3], 1
    %9583 = vsyncpa %s9582, 1
    %9584 = vsyncpa [#allocation6], 1
    %9585 = vsyncpa [#allocation9], 1
    %9586 = vsyncpa [#allocation12], 1
    %9587 = vsyncpa [#allocation15], 1
    %9588 = vsyncpa [#allocation18], 1
    %9589 = vsyncpa [#allocation4], 1
    %s9590 = scalar_lea.sflag [#allocation4], 1
    %9591 = vsyncpa %s9590, 1

</llo_original>
